<compile_context>
chip_gen: v5e
topology: v5e:2x2
jax: 0.10.0
libtpu: 0.0.40
codegen_flags: <defaults>
</compile_context>

<pallas_src>
import functools

import jax
import jax.numpy as jnp
import numpy as np
from jax.experimental import pallas as pl
from jax.experimental.pallas import tpu as pltpu


def _round_up(x, m):
    return ((x + m - 1) // m) * m


def _pick_row_tile(hout, target=16):
    """Largest divisor of hout that is <= target."""
    for t in range(min(target, hout), 0, -1):
        if hout % t == 0:
            return t
    return hout


def _tap(v, y0, x0, nr, nc, s):
    """Static (optionally strided) spatial slice of a (R, W, C) value."""
    c = v.shape[-1]
    if s == 1:
        return jax.lax.slice(v, (y0, x0, 0), (y0 + nr, x0 + nc, c))
    return jax.lax.slice(
        v, (y0, x0, 0),
        (y0 + s * (nr - 1) + 1, x0 + s * (nc - 1) + 1, c),
        (s, s, 1))


def _basic_block_kernel(s, th, wout, has_proj,
                        xp_ref, w1_ref, b1_ref, w2_ref, b2_ref, *rest):
    """One (batch, row-tile) grid step.

    xp_ref : (Hp, Wp, Cpad)   input image, spatially padded by (stride+1), lane-padded
    w1_ref : (9, Cpad, Ppad)  conv1 per-tap weights, BN1 scale folded in
    w2_ref : (9, Ppad, Ppad)  conv2 per-tap weights, BN2 scale folded in
    b1/b2  : (1, Ppad)        folded BN biases (f32)
    [ws_ref: (Cpad, Ppad), bs_ref: (1, Ppad)]  projection shortcut (only if has_proj)
    out_ref: (TH, Wout, Ppad) output row tile
    mid_ref: (TH+2, Wout+2, Ppad) VMEM scratch holding conv1 output + zero ring
    """
    if has_proj:
        ws_ref, bs_ref, out_ref, mid_ref = rest
    else:
        out_ref, mid_ref = rest
        ws_ref = bs_ref = None

    cpad = xp_ref.shape[-1]
    ppad = out_ref.shape[-1]
    he, we = th + 2, wout + 2                 # conv1 tile extended by conv2's 1-px halo
    mdt = mid_ref.dtype

    j = pl.program_id(1)
    slab_rows = (th + 1) * s + 3              # input rows needed by the extended tile
    row_start = pl.multiple_of(j * (th * s), th * s)
    slab = xp_ref[pl.ds(row_start, slab_rows)]        # (slab_rows, Wp, Cpad)

    # ---- conv1 (3x3, stride s) + BN1 + ReLU ----
    # Accumulating per-tap matmuls (K = Cpad each) instead of one concatenated
    # im2col matmul: the only VMEM traffic is the tap slices themselves.
    acc1 = None
    for dy in range(3):
        for dx in range(3):
            tap = _tap(slab, dy, dx, he, we, s).reshape(he * we, cpad)
            p = jnp.dot(tap, w1_ref[dy * 3 + dx],
                        preferred_element_type=jnp.float32)
            acc1 = p if acc1 is None else acc1 + p
    o1 = jnp.maximum(acc1 + b1_ref[...], 0.0).reshape(he, we, ppad)

    # conv2's zero-padding ring: columns 0 / we-1 are always outside the image
    # (static mask, no dynamic row compare); boundary rows are zeroed only on the
    # first / last row tile via pl.when.
    ci = jax.lax.broadcasted_iota(jnp.int32, (1, we, 1), 1)
    col_keep = jnp.logical_and(ci >= 1, ci <= wout)
    mid_ref[...] = jnp.where(col_keep, o1, 0.0).astype(mdt)

    zrow = jnp.zeros((we, ppad), mdt)

    @pl.when(j == 0)
    def _():
        mid_ref[0] = zrow

    @pl.when(j == pl.num_programs(1) - 1)
    def _():
        mid_ref[he - 1] = zrow

    # ---- conv2 (3x3, stride 1) + BN2 : accumulating per-tap matmuls (K = Ppad) ----
    acc2 = None
    for dy in range(3):
        for dx in range(3):
            tap = mid_ref[dy:dy + th, dx:dx + wout, :].reshape(th * wout, ppad)
            p = jnp.dot(tap, w2_ref[dy * 3 + dx],
                        preferred_element_type=jnp.float32)
            acc2 = p if acc2 is None else acc2 + p
    o2 = acc2 + b2_ref[...]

    # ---- shortcut (taken from the un-recast input slab) ----
    xs = _tap(slab, s + 1, s + 1, th, wout, s).reshape(th * wout, cpad)
    if has_proj:
        sc = jnp.dot(xs, ws_ref[...], preferred_element_type=jnp.float32) + bs_ref[...]
    else:
        sc = xs.astype(jnp.float32)           # identity shortcut: no matmul

    # ---- FloatFunctional.add + ReLU ----
    y = jnp.maximum(o2 + sc, 0.0)
    out_ref[...] = y.reshape(th, wout, ppad).astype(out_ref.dtype)


def _fold_bn(gamma, beta, mean, var, eps=1e-5):
    scale = gamma / jnp.sqrt(var + eps)
    bias = beta - mean * scale
    return scale, bias


def _prep3x3(w, scale, cin_pad, cout_pad):
    """OIHW (Cout, Cin, 3, 3) -> (9, cin_pad, cout_pad) per-tap weights, BN folded."""
    cout, cin = w.shape[0], w.shape[1]
    wt = jnp.transpose(w, (2, 3, 1, 0)) * scale               # (3, 3, Cin, Cout)
    wt = jnp.pad(wt, ((0, 0), (0, 0), (0, cin_pad - cin), (0, cout_pad - cout)))
    return wt.reshape(9, cin_pad, cout_pad)                   # tap index = dy*3 + dx


def prepare_block_params(params, stride, compute_dtype=jnp.bfloat16):
    """Fold BN into the conv weights and pad to the lane-dense layout (done once)."""
    P, Cin = params['w1'].shape[0], params['w1'].shape[1]
    Cpad, Ppad = _round_up(Cin, 128), _round_up(P, 128)
    s1, b1 = _fold_bn(*params['bn1'])
    s2, b2 = _fold_bn(*params['bn2'])
    prepped = {
        'w1': _prep3x3(params['w1'], s1, Cpad, Ppad).astype(compute_dtype),
        'w2': _prep3x3(params['w2'], s2, Ppad, Ppad).astype(compute_dtype),
        'b1': jnp.pad(b1, (0, Ppad - P)).reshape(1, Ppad).astype(jnp.float32),
        'b2': jnp.pad(b2, (0, Ppad - P)).reshape(1, Ppad).astype(jnp.float32),
        'cin': Cin, 'planes': P, 'cpad': Cpad, 'ppad': Ppad, 'stride': int(stride),
    }
    if 'ws' in params:
        ss, bs = _fold_bn(*params['bns'])
        ws = jnp.transpose(params['ws'][:, :, 0, 0], (1, 0)) * ss      # (Cin, P)
        prepped['ws'] = jnp.pad(ws, ((0, Cpad - Cin), (0, Ppad - P))).astype(compute_dtype)
        prepped['bs'] = jnp.pad(bs, (0, Ppad - P)).reshape(1, Ppad).astype(jnp.float32)
    else:
        assert int(stride) == 1 and Cin == P, \
            "identity shortcut requires stride==1 and in_planes==planes"
    return prepped


def basic_block_nhwc(x_nhwc, prepped, *, row_tile_target=16):
    """Fused BasicBlock on activations in the persistent layout:
    x_nhwc: (N, H, W, Cpad), channels zero-padded to a multiple of 128, compute dtype.
    Returns (N, Hout, Wout, Ppad) in the same layout (padded channels stay zero)."""
    N, H, W, Cpad = x_nhwc.shape
    assert Cpad == prepped['cpad']
    s = prepped['stride']
    Ppad = prepped['ppad']
    Hout = (H - 1) // s + 1
    Wout = (W - 1) // s + 1
    pad = s + 1
    # TODO(synk): this spatial halo pad is one extra HBM pass; in a full network it
    # can be absorbed into the previous block's output store.
    xp = jnp.pad(x_nhwc, ((0, 0), (pad, pad), (pad, pad), (0, 0)))
    Hp, Wp = H + 2 * pad, W + 2 * pad

    has_proj = 'ws' in prepped
    TH = _pick_row_tile(Hout, row_tile_target)
    grid = (N, Hout // TH)
    he, we = TH + 2, Wout + 2

    inputs = [xp, prepped['w1'], prepped['b1'], prepped['w2'], prepped['b2']]
    if has_proj:
        inputs += [prepped['ws'], prepped['bs']]

    kernel = functools.partial(_basic_block_kernel, s, TH, Wout, has_proj)

    itemsize = x_nhwc.dtype.itemsize
    bytes_w = sum(int(np.prod(a.shape)) * a.dtype.itemsize for a in inputs[1:])
    bytes_in = int(np.prod(xp.shape)) * itemsize
    bytes_out = N * Hout * Wout * Ppad * itemsize
    flops = 2 * N * Hout * Wout * 9 * (Cpad * Ppad + Ppad * Ppad)
    if has_proj:
        flops += 2 * N * Hout * Wout * Cpad * Ppad
    cost = pl.CostEstimate(flops=int(flops), transcendentals=0,
                           bytes_accessed=int(bytes_in + bytes_w + bytes_out))

    # VMEM budget: double-buffered input image + single-buffered weights +
    # double-buffered output tile + mid scratch + working-set margin.
    need = (2 * Hp * Wp * Cpad * itemsize + bytes_w
            + 2 * TH * Wout * Ppad * itemsize
            + he * we * Ppad * itemsize
            + 6 * he * we * max(Cpad, Ppad) * 4)
    vmem_limit = int(min(max(need * 3 // 2, 16 * 2**20), 48 * 2**20))

    out_shape = jax.ShapeDtypeStruct((N, Hout, Wout, Ppad), x_nhwc.dtype)
    out_spec = pl.BlockSpec((None, TH, Wout, Ppad), lambda n, j: (n, j, 0, 0))
    scratch = [pltpu.VMEM((he, we, Ppad), x_nhwc.dtype)]

    def build(single_buffer_weights):
        def const_spec(shape):
            nz = (0,) * len(shape)
            if single_buffer_weights:
                # Grid-invariant operand: single buffer (halves its VMEM footprint).
                return pl.BlockSpec(shape, lambda n, j, _nz=nz: _nz,
                                    pipeline_mode=pl.Buffered(1))
            return pl.BlockSpec(shape, lambda n, j, _nz=nz: _nz)

        in_specs = [pl.BlockSpec((None, Hp, Wp, Cpad), lambda n, j: (n, 0, 0, 0)),
                    const_spec((9, Cpad, Ppad)),
                    const_spec((1, Ppad)),
                    const_spec((9, Ppad, Ppad)),
                    const_spec((1, Ppad))]
        if has_proj:
            in_specs += [const_spec((Cpad, Ppad)), const_spec((1, Ppad))]
        return pl.pallas_call(
            kernel,
            out_shape=out_shape,
            grid=grid,
            in_specs=in_specs,
            out_specs=out_spec,
            scratch_shapes=scratch,
            cost_estimate=cost,
            compiler_params=pltpu.CompilerParams(
                dimension_semantics=("parallel", "parallel"),
                vmem_limit_bytes=vmem_limit),
        )

    try:
        return build(single_buffer_weights=True)(*inputs)
    except Exception:
        # Fallback for JAX versions that reject pipeline_mode=pl.Buffered(1).
        return build(single_buffer_weights=False)(*inputs)


def basic_block_forward(x_nchw, params, stride=1, compute_dtype=jnp.bfloat16,
                        row_tile_target=16):
    """PyTorch-layout convenience wrapper: NCHW f32 in -> NCHW f32 out (eval-mode BN)."""
    N, Cin, H, W = x_nchw.shape
    prepped = prepare_block_params(params, stride, compute_dtype)
    Cpad, P = prepped['cpad'], prepped['planes']
    x = jnp.transpose(x_nchw, (0, 2, 3, 1)).astype(compute_dtype)
    x = jnp.pad(x, ((0, 0), (0, 0), (0, 0), (0, Cpad - Cin)))
    out = basic_block_nhwc(x, prepped, row_tile_target=row_tile_target)
    out = out[:, :, :, :P].astype(jnp.float32)
    return jnp.transpose(out, (0, 3, 1, 2))


def ref_forward(x, params, stride=1, eps=1e-5):
    """Plain-JAX reference (NCHW), mirroring the PyTorch forward in eval mode."""
    def conv(x, w, s, pad):
        return jax.lax.conv_general_dilated(
            x, w, (s, s), ((pad, pad), (pad, pad)),
            dimension_numbers=('NCHW', 'OIHW', 'NCHW'),
            precision=jax.lax.Precision.HIGHEST)

    def bn(x, p):
        gamma, beta, mean, var = p
        sc = gamma / jnp.sqrt(var + eps)
        return x * sc[None, :, None, None] + (beta - mean * sc)[None, :, None, None]

    out = jax.nn.relu(bn(conv(x, params['w1'], stride, 1), params['bn1']))
    out = bn(conv(out, params['w2'], 1, 1), params['bn2'])
    sc = bn(conv(x, params['ws'], stride, 0), params['bns']) if 'ws' in params else x
    return jax.nn.relu(sc + out)


if __name__ == "__main__":
    key = jax.random.PRNGKey(0)
    ks = jax.random.split(key, 12)

    def make_bn(k, c):
        k1, k2, k3, k4 = jax.random.split(k, 4)
        return (jax.random.uniform(k1, (c,), minval=0.5, maxval=1.5),
                jax.random.normal(k2, (c,)) * 0.1,
                jax.random.normal(k3, (c,)) * 0.1,
                jax.random.uniform(k4, (c,), minval=0.5, maxval=1.5))

    N, Cin, H, W = 2, 4, 16, 16
    x = jax.random.normal(ks[0], (N, Cin, H, W), jnp.float32)

    # ---- case 1: identity shortcut (stride=1, in_planes == planes) ----
    planes, stride = 4, 1
    params = {
        'w1': jax.random.normal(ks[1], (planes, Cin, 3, 3), jnp.float32) * 0.1,
        'bn1': make_bn(ks[2], planes),
        'w2': jax.random.normal(ks[3], (planes, planes, 3, 3), jnp.float32) * 0.1,
        'bn2': make_bn(ks[4], planes),
    }
    ref = ref_forward(x, params, stride)

    # f32 compute path with small row tiles (exercises interior + boundary row tiles).
    # Tolerance is loose enough to be robust to TPU matmul precision modes; a tap /
    # halo / stride indexing bug would produce O(1) errors, far above it.
    out_f32 = jax.block_until_ready(
        basic_block_forward(x, params, stride, compute_dtype=jnp.float32,
                            row_tile_target=4))
    np.testing.assert_allclose(np.asarray(out_f32), np.asarray(ref),
                               atol=2e-2, rtol=2e-2)

    # fast path: bf16 activations + weights, f32 accumulation.
    out_bf = jax.block_until_ready(basic_block_forward(x, params, stride))
    assert out_bf.shape == ref.shape == (N, planes, H, W)
    np.testing.assert_allclose(np.asarray(out_bf), np.asarray(ref),
                               atol=5e-2, rtol=5e-2)

    # ---- case 2: projection shortcut (in_planes != planes), stride=1 ----
    planes2 = 8
    params2 = {
        'w1': jax.random.normal(ks[5], (planes2, Cin, 3, 3), jnp.float32) * 0.1,
        'bn1': make_bn(ks[6], planes2),
        'w2': jax.random.normal(ks[7], (planes2, planes2, 3, 3), jnp.float32) * 0.1,
        'bn2': make_bn(ks[8], planes2),
        'ws': jax.random.normal(ks[9], (planes2, Cin, 1, 1), jnp.float32) * 0.3,
        'bns': make_bn(ks[10], planes2),
    }
    ref2 = ref_forward(x, params2, 1)
    out2 = jax.block_until_ready(basic_block_forward(x, params2, 1))
    assert out2.shape == ref2.shape == (N, planes2, H, W)
    np.testing.assert_allclose(np.asarray(out2), np.asarray(ref2),
                               atol=5e-2, rtol=5e-2)

    print("KERNEL_OK")
</pallas_src>

<mosaic_0001>
module attributes {stable_mosaic.version = 11 : i64} {
  func.func @_basic_block_kernel(%arg0: i32, %arg1: i32, %arg2: memref<1x20x20x128xf32, #tpu.memory_space<vmem>>, %arg3: memref<9x128x128xf32, #tpu.memory_space<vmem>>, %arg4: memref<1x128xf32, #tpu.memory_space<vmem>>, %arg5: memref<9x128x128xf32, #tpu.memory_space<vmem>>, %arg6: memref<1x128xf32, #tpu.memory_space<vmem>>, %arg7: memref<1x4x16x128xf32, #tpu.memory_space<vmem>>, %arg8: memref<6x18x128xf32, #tpu.memory_space<vmem>>) attributes {dimension_semantics = [#tpu.dimension_semantics<parallel>, #tpu.dimension_semantics<parallel>], iteration_bounds = array<i64: 2, 4>, scalar_prefetch = 0 : i64, scratch_operands = 1 : i64, tpu.core_type = #tpu.core_type<tc>, window_params = [{transform_indices = @transform_0, window_bounds = array<i64: 1, 20, 20, 128>}, {pipeline_mode = #tpu.pipeline_mode<synchronous>, transform_indices = @transform_1, window_bounds = array<i64: 9, 128, 128>}, {pipeline_mode = #tpu.pipeline_mode<synchronous>, transform_indices = @transform_2, window_bounds = array<i64: 1, 128>}, {pipeline_mode = #tpu.pipeline_mode<synchronous>, transform_indices = @transform_3, window_bounds = array<i64: 9, 128, 128>}, {pipeline_mode = #tpu.pipeline_mode<synchronous>, transform_indices = @transform_4, window_bounds = array<i64: 1, 128>}, {transform_indices = @transform_5, window_bounds = array<i64: 1, 4, 16, 128>}]} {
    %c4_i32 = arith.constant 4 : i32
    %0 = arith.muli %arg1, %c4_i32 : i32
    %1 = tpu.assume_multiple %0, 4 : i32
    %c0 = arith.constant 0 : index
    %2 = arith.index_cast %1 : i32 to index
    %c0_0 = arith.constant 0 : index
    %c0_1 = arith.constant 0 : index
    %3 = vector.load %arg2[%c0, %2, %c0_0, %c0_1] : memref<1x20x20x128xf32, #tpu.memory_space<vmem>>, vector<1x8x20x128xf32>
    %4 = vector.shape_cast %3 : vector<1x8x20x128xf32> to vector<8x20x128xf32>
    %5 = vector.extract_strided_slice %4 {offsets = [0, 0, 0], sizes = [6, 18, 128], strides = [1, 1, 1]} : vector<8x20x128xf32> to vector<6x18x128xf32>
    %6 = vector.shape_cast %5 : vector<6x18x128xf32> to vector<108x128xf32>
    %c0_2 = arith.constant 0 : index
    %c0_3 = arith.constant 0 : index
    %c0_4 = arith.constant 0 : index
    %7 = vector.load %arg3[%c0_2, %c0_3, %c0_4] : memref<9x128x128xf32, #tpu.memory_space<vmem>>, vector<1x128x128xf32>
    %8 = vector.shape_cast %7 : vector<1x128x128xf32> to vector<128x128xf32>
    %cst = arith.constant dense<0.000000e+00> : vector<108x128xf32>
    %9 = tpu.matmul %6, %8, %cst {dimension_numbers = #tpu.dot_dimension_numbers<[1], [0], [0], [1], [0, 0, 1, 1], [], []>} : vector<108x128xf32>, vector<128x128xf32>, vector<108x128xf32> -> vector<108x128xf32>
    %10 = vector.extract_strided_slice %4 {offsets = [0, 1, 0], sizes = [6, 18, 128], strides = [1, 1, 1]} : vector<8x20x128xf32> to vector<6x18x128xf32>
    %11 = vector.shape_cast %10 : vector<6x18x128xf32> to vector<108x128xf32>
    %c1 = arith.constant 1 : index
    %c0_5 = arith.constant 0 : index
    %c0_6 = arith.constant 0 : index
    %12 = vector.load %arg3[%c1, %c0_5, %c0_6] : memref<9x128x128xf32, #tpu.memory_space<vmem>>, vector<1x128x128xf32>
    %13 = vector.shape_cast %12 : vector<1x128x128xf32> to vector<128x128xf32>
    %cst_7 = arith.constant dense<0.000000e+00> : vector<108x128xf32>
    %14 = tpu.matmul %11, %13, %cst_7 {dimension_numbers = #tpu.dot_dimension_numbers<[1], [0], [0], [1], [0, 0, 1, 1], [], []>} : vector<108x128xf32>, vector<128x128xf32>, vector<108x128xf32> -> vector<108x128xf32>
    %15 = arith.addf %9, %14 : vector<108x128xf32>
    %16 = vector.extract_strided_slice %4 {offsets = [0, 2, 0], sizes = [6, 18, 128], strides = [1, 1, 1]} : vector<8x20x128xf32> to vector<6x18x128xf32>
    %17 = vector.shape_cast %16 : vector<6x18x128xf32> to vector<108x128xf32>
    %c2 = arith.constant 2 : index
    %c0_8 = arith.constant 0 : index
    %c0_9 = arith.constant 0 : index
    %18 = vector.load %arg3[%c2, %c0_8, %c0_9] : memref<9x128x128xf32, #tpu.memory_space<vmem>>, vector<1x128x128xf32>
    %19 = vector.shape_cast %18 : vector<1x128x128xf32> to vector<128x128xf32>
    %cst_10 = arith.constant dense<0.000000e+00> : vector<108x128xf32>
    %20 = tpu.matmul %17, %19, %cst_10 {dimension_numbers = #tpu.dot_dimension_numbers<[1], [0], [0], [1], [0, 0, 1, 1], [], []>} : vector<108x128xf32>, vector<128x128xf32>, vector<108x128xf32> -> vector<108x128xf32>
    %21 = arith.addf %15, %20 : vector<108x128xf32>
    %22 = vector.extract_strided_slice %4 {offsets = [1, 0, 0], sizes = [6, 18, 128], strides = [1, 1, 1]} : vector<8x20x128xf32> to vector<6x18x128xf32>
    %23 = vector.shape_cast %22 : vector<6x18x128xf32> to vector<108x128xf32>
    %c3 = arith.constant 3 : index
    %c0_11 = arith.constant 0 : index
    %c0_12 = arith.constant 0 : index
    %24 = vector.load %arg3[%c3, %c0_11, %c0_12] : memref<9x128x128xf32, #tpu.memory_space<vmem>>, vector<1x128x128xf32>
    %25 = vector.shape_cast %24 : vector<1x128x128xf32> to vector<128x128xf32>
    %cst_13 = arith.constant dense<0.000000e+00> : vector<108x128xf32>
    %26 = tpu.matmul %23, %25, %cst_13 {dimension_numbers = #tpu.dot_dimension_numbers<[1], [0], [0], [1], [0, 0, 1, 1], [], []>} : vector<108x128xf32>, vector<128x128xf32>, vector<108x128xf32> -> vector<108x128xf32>
    %27 = arith.addf %21, %26 : vector<108x128xf32>
    %28 = vector.extract_strided_slice %4 {offsets = [1, 1, 0], sizes = [6, 18, 128], strides = [1, 1, 1]} : vector<8x20x128xf32> to vector<6x18x128xf32>
    %29 = vector.shape_cast %28 : vector<6x18x128xf32> to vector<108x128xf32>
    %c4 = arith.constant 4 : index
    %c0_14 = arith.constant 0 : index
    %c0_15 = arith.constant 0 : index
    %30 = vector.load %arg3[%c4, %c0_14, %c0_15] : memref<9x128x128xf32, #tpu.memory_space<vmem>>, vector<1x128x128xf32>
    %31 = vector.shape_cast %30 : vector<1x128x128xf32> to vector<128x128xf32>
    %cst_16 = arith.constant dense<0.000000e+00> : vector<108x128xf32>
    %32 = tpu.matmul %29, %31, %cst_16 {dimension_numbers = #tpu.dot_dimension_numbers<[1], [0], [0], [1], [0, 0, 1, 1], [], []>} : vector<108x128xf32>, vector<128x128xf32>, vector<108x128xf32> -> vector<108x128xf32>
    %33 = arith.addf %27, %32 : vector<108x128xf32>
    %34 = vector.extract_strided_slice %4 {offsets = [1, 2, 0], sizes = [6, 18, 128], strides = [1, 1, 1]} : vector<8x20x128xf32> to vector<6x18x128xf32>
    %35 = vector.shape_cast %34 : vector<6x18x128xf32> to vector<108x128xf32>
    %c5 = arith.constant 5 : index
    %c0_17 = arith.constant 0 : index
    %c0_18 = arith.constant 0 : index
    %36 = vector.load %arg3[%c5, %c0_17, %c0_18] : memref<9x128x128xf32, #tpu.memory_space<vmem>>, vector<1x128x128xf32>
    %37 = vector.shape_cast %36 : vector<1x128x128xf32> to vector<128x128xf32>
    %cst_19 = arith.constant dense<0.000000e+00> : vector<108x128xf32>
    %38 = tpu.matmul %35, %37, %cst_19 {dimension_numbers = #tpu.dot_dimension_numbers<[1], [0], [0], [1], [0, 0, 1, 1], [], []>} : vector<108x128xf32>, vector<128x128xf32>, vector<108x128xf32> -> vector<108x128xf32>
    %39 = arith.addf %33, %38 : vector<108x128xf32>
    %40 = vector.extract_strided_slice %4 {offsets = [2, 0, 0], sizes = [6, 18, 128], strides = [1, 1, 1]} : vector<8x20x128xf32> to vector<6x18x128xf32>
    %41 = vector.shape_cast %40 : vector<6x18x128xf32> to vector<108x128xf32>
    %c6 = arith.constant 6 : index
    %c0_20 = arith.constant 0 : index
    %c0_21 = arith.constant 0 : index
    %42 = vector.load %arg3[%c6, %c0_20, %c0_21] : memref<9x128x128xf32, #tpu.memory_space<vmem>>, vector<1x128x128xf32>
    %43 = vector.shape_cast %42 : vector<1x128x128xf32> to vector<128x128xf32>
    %cst_22 = arith.constant dense<0.000000e+00> : vector<108x128xf32>
    %44 = tpu.matmul %41, %43, %cst_22 {dimension_numbers = #tpu.dot_dimension_numbers<[1], [0], [0], [1], [0, 0, 1, 1], [], []>} : vector<108x128xf32>, vector<128x128xf32>, vector<108x128xf32> -> vector<108x128xf32>
    %45 = arith.addf %39, %44 : vector<108x128xf32>
    %46 = vector.extract_strided_slice %4 {offsets = [2, 1, 0], sizes = [6, 18, 128], strides = [1, 1, 1]} : vector<8x20x128xf32> to vector<6x18x128xf32>
    %47 = vector.shape_cast %46 : vector<6x18x128xf32> to vector<108x128xf32>
    %c7 = arith.constant 7 : index
    %c0_23 = arith.constant 0 : index
    %c0_24 = arith.constant 0 : index
    %48 = vector.load %arg3[%c7, %c0_23, %c0_24] : memref<9x128x128xf32, #tpu.memory_space<vmem>>, vector<1x128x128xf32>
    %49 = vector.shape_cast %48 : vector<1x128x128xf32> to vector<128x128xf32>
    %cst_25 = arith.constant dense<0.000000e+00> : vector<108x128xf32>
    %50 = tpu.matmul %47, %49, %cst_25 {dimension_numbers = #tpu.dot_dimension_numbers<[1], [0], [0], [1], [0, 0, 1, 1], [], []>} : vector<108x128xf32>, vector<128x128xf32>, vector<108x128xf32> -> vector<108x128xf32>
    %51 = arith.addf %45, %50 : vector<108x128xf32>
    %52 = vector.extract_strided_slice %4 {offsets = [2, 2, 0], sizes = [6, 18, 128], strides = [1, 1, 1]} : vector<8x20x128xf32> to vector<6x18x128xf32>
    %53 = vector.shape_cast %52 : vector<6x18x128xf32> to vector<108x128xf32>
    %c8 = arith.constant 8 : index
    %c0_26 = arith.constant 0 : index
    %c0_27 = arith.constant 0 : index
    %54 = vector.load %arg3[%c8, %c0_26, %c0_27] : memref<9x128x128xf32, #tpu.memory_space<vmem>>, vector<1x128x128xf32>
    %55 = vector.shape_cast %54 : vector<1x128x128xf32> to vector<128x128xf32>
    %cst_28 = arith.constant dense<0.000000e+00> : vector<108x128xf32>
    %56 = tpu.matmul %53, %55, %cst_28 {dimension_numbers = #tpu.dot_dimension_numbers<[1], [0], [0], [1], [0, 0, 1, 1], [], []>} : vector<108x128xf32>, vector<128x128xf32>, vector<108x128xf32> -> vector<108x128xf32>
    %57 = arith.addf %51, %56 : vector<108x128xf32>
    %c0_29 = arith.constant 0 : index
    %c0_30 = arith.constant 0 : index
    %58 = vector.load %arg4[%c0_29, %c0_30] : memref<1x128xf32, #tpu.memory_space<vmem>>, vector<1x128xf32>
    %59 = vector.broadcast %58 : vector<1x128xf32> to vector<108x128xf32>
    %60 = arith.addf %57, %59 : vector<108x128xf32>
    %cst_31 = arith.constant 0.000000e+00 : f32
    %61 = vector.broadcast %cst_31 : f32 to vector<108x128xf32>
    %62 = arith.maximumf %60, %61 : vector<108x128xf32>
    %63 = vector.shape_cast %62 : vector<108x128xf32> to vector<6x18x128xf32>
    %64 = tpu.iota {dimensions = array<i32: 1>} : vector<1x18x1xi32>
    %c1_i32 = arith.constant 1 : i32
    %65 = vector.broadcast %c1_i32 : i32 to vector<1x18x1xi32>
    %66 = arith.cmpi sge, %64, %65 : vector<1x18x1xi32>
    %c16_i32 = arith.constant 16 : i32
    %67 = vector.broadcast %c16_i32 : i32 to vector<1x18x1xi32>
    %68 = arith.cmpi sle, %64, %67 : vector<1x18x1xi32>
    %69 = arith.andi %66, %68 : vector<1x18x1xi1>
    %cst_32 = arith.constant 0.000000e+00 : f32
    %70 = vector.shape_cast %69 : vector<1x18x1xi1> to vector<1x18x1xi1>
    %71 = vector.broadcast %70 : vector<1x18x1xi1> to vector<6x18x128xi1>
    %72 = vector.broadcast %cst_32 : f32 to vector<6x18x128xf32>
    %73 = arith.select %71, %63, %72 : vector<6x18x128xi1>, vector<6x18x128xf32>
    %c0_33 = arith.constant 0 : index
    %c0_34 = arith.constant 0 : index
    %c0_35 = arith.constant 0 : index
    %74 = vector.load %arg8[%c0_33, %c0_34, %c0_35] : memref<6x18x128xf32, #tpu.memory_space<vmem>>, vector<6x18x128xf32>
    tpu.vector_store %arg8[%c0_33, %c0_34, %c0_35], %73 {strides = array<i32>} : memref<6x18x128xf32, #tpu.memory_space<vmem>>, vector<6x18x128xf32>,
    %cst_36 = arith.constant 0.000000e+00 : f32
    %75 = vector.broadcast %cst_36 : f32 to vector<18x128xf32>
    %c0_i32 = arith.constant 0 : i32
    %76 = arith.cmpi eq, %arg1, %c0_i32 : i32
    %77 = arith.extui %76 : i1 to i32
    %c0_i32_37 = arith.constant 0 : i32
    %78 = arith.cmpi ne, %77, %c0_i32_37 : i32
    scf.if %78 {
      %c0_109 = arith.constant 0 : index
      %c0_110 = arith.constant 0 : index
      %c0_111 = arith.constant 0 : index
      %147 = vector.load %arg8[%c0_109, %c0_110, %c0_111] : memref<6x18x128xf32, #tpu.memory_space<vmem>>, vector<1x18x128xf32>
      %148 = vector.shape_cast %147 : vector<1x18x128xf32> to vector<18x128xf32>
      %149 = vector.shape_cast %75 : vector<18x128xf32> to vector<1x18x128xf32>
      tpu.vector_store %arg8[%c0_109, %c0_110, %c0_111], %149 {strides = array<i32>} : memref<6x18x128xf32, #tpu.memory_space<vmem>>, vector<1x18x128xf32>,
    } else {
    }
    %c3_i32 = arith.constant 3 : i32
    %79 = arith.cmpi eq, %arg1, %c3_i32 : i32
    %80 = arith.extui %79 : i1 to i32
    %c0_i32_38 = arith.constant 0 : i32
    %81 = arith.cmpi ne, %80, %c0_i32_38 : i32
    scf.if %81 {
      %c5_109 = arith.constant 5 : index
      %c0_110 = arith.constant 0 : index
      %c0_111 = arith.constant 0 : index
      %147 = vector.load %arg8[%c5_109, %c0_110, %c0_111] : memref<6x18x128xf32, #tpu.memory_space<vmem>>, vector<1x18x128xf32>
      %148 = vector.shape_cast %147 : vector<1x18x128xf32> to vector<18x128xf32>
      %149 = vector.shape_cast %75 : vector<18x128xf32> to vector<1x18x128xf32>
      tpu.vector_store %arg8[%c5_109, %c0_110, %c0_111], %149 {strides = array<i32>} : memref<6x18x128xf32, #tpu.memory_space<vmem>>, vector<1x18x128xf32>,
    } else {
    }
    %c0_39 = arith.constant 0 : index
    %c0_40 = arith.constant 0 : index
    %c0_41 = arith.constant 0 : index
    %82 = vector.load %arg8[%c0_39, %c0_40, %c0_41] : memref<6x18x128xf32, #tpu.memory_space<vmem>>, vector<4x16x128xf32>
    %83 = vector.shape_cast %82 : vector<4x16x128xf32> to vector<64x128xf32>
    %c0_42 = arith.constant 0 : index
    %c0_43 = arith.constant 0 : index
    %c0_44 = arith.constant 0 : index
    %84 = vector.load %arg5[%c0_42, %c0_43, %c0_44] : memref<9x128x128xf32, #tpu.memory_space<vmem>>, vector<1x128x128xf32>
    %85 = vector.shape_cast %84 : vector<1x128x128xf32> to vector<128x128xf32>
    %cst_45 = arith.constant dense<0.000000e+00> : vector<64x128xf32>
    %86 = tpu.matmul %83, %85, %cst_45 {dimension_numbers = #tpu.dot_dimension_numbers<[1], [0], [0], [1], [0, 0, 1, 1], [], []>} : vector<64x128xf32>, vector<128x128xf32>, vector<64x128xf32> -> vector<64x128xf32>
    %c0_46 = arith.constant 0 : index
    %c1_47 = arith.constant 1 : index
    %c0_48 = arith.constant 0 : index
    %87 = vector.load %arg8[%c0_46, %c1_47, %c0_48] : memref<6x18x128xf32, #tpu.memory_space<vmem>>, vector<4x16x128xf32>
    %88 = vector.shape_cast %87 : vector<4x16x128xf32> to vector<64x128xf32>
    %c1_49 = arith.constant 1 : index
    %c0_50 = arith.constant 0 : index
    %c0_51 = arith.constant 0 : index
    %89 = vector.load %arg5[%c1_49, %c0_50, %c0_51] : memref<9x128x128xf32, #tpu.memory_space<vmem>>, vector<1x128x128xf32>
    %90 = vector.shape_cast %89 : vector<1x128x128xf32> to vector<128x128xf32>
    %cst_52 = arith.constant dense<0.000000e+00> : vector<64x128xf32>
    %91 = tpu.matmul %88, %90, %cst_52 {dimension_numbers = #tpu.dot_dimension_numbers<[1], [0], [0], [1], [0, 0, 1, 1], [], []>} : vector<64x128xf32>, vector<128x128xf32>, vector<64x128xf32> -> vector<64x128xf32>
    %92 = arith.addf %86, %91 : vector<64x128xf32>
    %c0_53 = arith.constant 0 : index
    %c2_54 = arith.constant 2 : index
    %c0_55 = arith.constant 0 : index
    %93 = vector.load %arg8[%c0_53, %c2_54, %c0_55] : memref<6x18x128xf32, #tpu.memory_space<vmem>>, vector<4x16x128xf32>
    %94 = vector.shape_cast %93 : vector<4x16x128xf32> to vector<64x128xf32>
    %c2_56 = arith.constant 2 : index
    %c0_57 = arith.constant 0 : index
    %c0_58 = arith.constant 0 : index
    %95 = vector.load %arg5[%c2_56, %c0_57, %c0_58] : memref<9x128x128xf32, #tpu.memory_space<vmem>>, vector<1x128x128xf32>
    %96 = vector.shape_cast %95 : vector<1x128x128xf32> to vector<128x128xf32>
    %cst_59 = arith.constant dense<0.000000e+00> : vector<64x128xf32>
    %97 = tpu.matmul %94, %96, %cst_59 {dimension_numbers = #tpu.dot_dimension_numbers<[1], [0], [0], [1], [0, 0, 1, 1], [], []>} : vector<64x128xf32>, vector<128x128xf32>, vector<64x128xf32> -> vector<64x128xf32>
    %98 = arith.addf %92, %97 : vector<64x128xf32>
    %c1_60 = arith.constant 1 : index
    %c0_61 = arith.constant 0 : index
    %c0_62 = arith.constant 0 : index
    %99 = vector.load %arg8[%c1_60, %c0_61, %c0_62] : memref<6x18x128xf32, #tpu.memory_space<vmem>>, vector<4x16x128xf32>
    %100 = vector.shape_cast %99 : vector<4x16x128xf32> to vector<64x128xf32>
    %c3_63 = arith.constant 3 : index
    %c0_64 = arith.constant 0 : index
    %c0_65 = arith.constant 0 : index
    %101 = vector.load %arg5[%c3_63, %c0_64, %c0_65] : memref<9x128x128xf32, #tpu.memory_space<vmem>>, vector<1x128x128xf32>
    %102 = vector.shape_cast %101 : vector<1x128x128xf32> to vector<128x128xf32>
    %cst_66 = arith.constant dense<0.000000e+00> : vector<64x128xf32>
    %103 = tpu.matmul %100, %102, %cst_66 {dimension_numbers = #tpu.dot_dimension_numbers<[1], [0], [0], [1], [0, 0, 1, 1], [], []>} : vector<64x128xf32>, vector<128x128xf32>, vector<64x128xf32> -> vector<64x128xf32>
    %104 = arith.addf %98, %103 : vector<64x128xf32>
    %c1_67 = arith.constant 1 : index
    %c1_68 = arith.constant 1 : index
    %c0_69 = arith.constant 0 : index
    %105 = vector.load %arg8[%c1_67, %c1_68, %c0_69] : memref<6x18x128xf32, #tpu.memory_space<vmem>>, vector<4x16x128xf32>
    %106 = vector.shape_cast %105 : vector<4x16x128xf32> to vector<64x128xf32>
    %c4_70 = arith.constant 4 : index
    %c0_71 = arith.constant 0 : index
    %c0_72 = arith.constant 0 : index
    %107 = vector.load %arg5[%c4_70, %c0_71, %c0_72] : memref<9x128x128xf32, #tpu.memory_space<vmem>>, vector<1x128x128xf32>
    %108 = vector.shape_cast %107 : vector<1x128x128xf32> to vector<128x128xf32>
    %cst_73 = arith.constant dense<0.000000e+00> : vector<64x128xf32>
    %109 = tpu.matmul %106, %108, %cst_73 {dimension_numbers = #tpu.dot_dimension_numbers<[1], [0], [0], [1], [0, 0, 1, 1], [], []>} : vector<64x128xf32>, vector<128x128xf32>, vector<64x128xf32> -> vector<64x128xf32>
    %110 = arith.addf %104, %109 : vector<64x128xf32>
    %c1_74 = arith.constant 1 : index
    %c2_75 = arith.constant 2 : index
    %c0_76 = arith.constant 0 : index
    %111 = vector.load %arg8[%c1_74, %c2_75, %c0_76] : memref<6x18x128xf32, #tpu.memory_space<vmem>>, vector<4x16x128xf32>
    %112 = vector.shape_cast %111 : vector<4x16x128xf32> to vector<64x128xf32>
    %c5_77 = arith.constant 5 : index
    %c0_78 = arith.constant 0 : index
    %c0_79 = arith.constant 0 : index
    %113 = vector.load %arg5[%c5_77, %c0_78, %c0_79] : memref<9x128x128xf32, #tpu.memory_space<vmem>>, vector<1x128x128xf32>
    %114 = vector.shape_cast %113 : vector<1x128x128xf32> to vector<128x128xf32>
    %cst_80 = arith.constant dense<0.000000e+00> : vector<64x128xf32>
    %115 = tpu.matmul %112, %114, %cst_80 {dimension_numbers = #tpu.dot_dimension_numbers<[1], [0], [0], [1], [0, 0, 1, 1], [], []>} : vector<64x128xf32>, vector<128x128xf32>, vector<64x128xf32> -> vector<64x128xf32>
    %116 = arith.addf %110, %115 : vector<64x128xf32>
    %c2_81 = arith.constant 2 : index
    %c0_82 = arith.constant 0 : index
    %c0_83 = arith.constant 0 : index
    %117 = vector.load %arg8[%c2_81, %c0_82, %c0_83] : memref<6x18x128xf32, #tpu.memory_space<vmem>>, vector<4x16x128xf32>
    %118 = vector.shape_cast %117 : vector<4x16x128xf32> to vector<64x128xf32>
    %c6_84 = arith.constant 6 : index
    %c0_85 = arith.constant 0 : index
    %c0_86 = arith.constant 0 : index
    %119 = vector.load %arg5[%c6_84, %c0_85, %c0_86] : memref<9x128x128xf32, #tpu.memory_space<vmem>>, vector<1x128x128xf32>
    %120 = vector.shape_cast %119 : vector<1x128x128xf32> to vector<128x128xf32>
    %cst_87 = arith.constant dense<0.000000e+00> : vector<64x128xf32>
    %121 = tpu.matmul %118, %120, %cst_87 {dimension_numbers = #tpu.dot_dimension_numbers<[1], [0], [0], [1], [0, 0, 1, 1], [], []>} : vector<64x128xf32>, vector<128x128xf32>, vector<64x128xf32> -> vector<64x128xf32>
    %122 = arith.addf %116, %121 : vector<64x128xf32>
    %c2_88 = arith.constant 2 : index
    %c1_89 = arith.constant 1 : index
    %c0_90 = arith.constant 0 : index
    %123 = vector.load %arg8[%c2_88, %c1_89, %c0_90] : memref<6x18x128xf32, #tpu.memory_space<vmem>>, vector<4x16x128xf32>
    %124 = vector.shape_cast %123 : vector<4x16x128xf32> to vector<64x128xf32>
    %c7_91 = arith.constant 7 : index
    %c0_92 = arith.constant 0 : index
    %c0_93 = arith.constant 0 : index
    %125 = vector.load %arg5[%c7_91, %c0_92, %c0_93] : memref<9x128x128xf32, #tpu.memory_space<vmem>>, vector<1x128x128xf32>
    %126 = vector.shape_cast %125 : vector<1x128x128xf32> to vector<128x128xf32>
    %cst_94 = arith.constant dense<0.000000e+00> : vector<64x128xf32>
    %127 = tpu.matmul %124, %126, %cst_94 {dimension_numbers = #tpu.dot_dimension_numbers<[1], [0], [0], [1], [0, 0, 1, 1], [], []>} : vector<64x128xf32>, vector<128x128xf32>, vector<64x128xf32> -> vector<64x128xf32>
    %128 = arith.addf %122, %127 : vector<64x128xf32>
    %c2_95 = arith.constant 2 : index
    %c2_96 = arith.constant 2 : index
    %c0_97 = arith.constant 0 : index
    %129 = vector.load %arg8[%c2_95, %c2_96, %c0_97] : memref<6x18x128xf32, #tpu.memory_space<vmem>>, vector<4x16x128xf32>
    %130 = vector.shape_cast %129 : vector<4x16x128xf32> to vector<64x128xf32>
    %c8_98 = arith.constant 8 : index
    %c0_99 = arith.constant 0 : index
    %c0_100 = arith.constant 0 : index
    %131 = vector.load %arg5[%c8_98, %c0_99, %c0_100] : memref<9x128x128xf32, #tpu.memory_space<vmem>>, vector<1x128x128xf32>
    %132 = vector.shape_cast %131 : vector<1x128x128xf32> to vector<128x128xf32>
    %cst_101 = arith.constant dense<0.000000e+00> : vector<64x128xf32>
    %133 = tpu.matmul %130, %132, %cst_101 {dimension_numbers = #tpu.dot_dimension_numbers<[1], [0], [0], [1], [0, 0, 1, 1], [], []>} : vector<64x128xf32>, vector<128x128xf32>, vector<64x128xf32> -> vector<64x128xf32>
    %134 = arith.addf %128, %133 : vector<64x128xf32>
    %c0_102 = arith.constant 0 : index
    %c0_103 = arith.constant 0 : index
    %135 = vector.load %arg6[%c0_102, %c0_103] : memref<1x128xf32, #tpu.memory_space<vmem>>, vector<1x128xf32>
    %136 = vector.broadcast %135 : vector<1x128xf32> to vector<64x128xf32>
    %137 = arith.addf %134, %136 : vector<64x128xf32>
    %138 = vector.extract_strided_slice %4 {offsets = [2, 2, 0], sizes = [4, 16, 128], strides = [1, 1, 1]} : vector<8x20x128xf32> to vector<4x16x128xf32>
    %139 = vector.shape_cast %138 : vector<4x16x128xf32> to vector<64x128xf32>
    %140 = arith.addf %137, %139 : vector<64x128xf32>
    %cst_104 = arith.constant 0.000000e+00 : f32
    %141 = vector.broadcast %cst_104 : f32 to vector<64x128xf32>
    %142 = arith.maximumf %140, %141 : vector<64x128xf32>
    %143 = vector.shape_cast %142 : vector<64x128xf32> to vector<4x16x128xf32>
    %c0_105 = arith.constant 0 : index
    %c0_106 = arith.constant 0 : index
    %c0_107 = arith.constant 0 : index
    %c0_108 = arith.constant 0 : index
    %144 = vector.load %arg7[%c0_105, %c0_106, %c0_107, %c0_108] : memref<1x4x16x128xf32, #tpu.memory_space<vmem>>, vector<1x4x16x128xf32>
    %145 = vector.shape_cast %144 : vector<1x4x16x128xf32> to vector<4x16x128xf32>
    %146 = vector.shape_cast %143 : vector<4x16x128xf32> to vector<1x4x16x128xf32>
    tpu.vector_store %arg7[%c0_105, %c0_106, %c0_107, %c0_108], %146 {strides = array<i32>} : memref<1x4x16x128xf32, #tpu.memory_space<vmem>>, vector<1x4x16x128xf32>,
    return
  }
  func.func @transform_0(%arg0: i32, %arg1: i32) -> (i32, i32, i32, i32) {
    %c0_i32 = arith.constant 0 : i32
    %c0_i32_0 = arith.constant 0 : i32
    %c0_i32_1 = arith.constant 0 : i32
    %c0_i32_2 = arith.constant 0 : i32
    return %arg0, %c0_i32, %c0_i32_0, %c0_i32_1 : i32, i32, i32, i32
  }
  func.func @transform_1(%arg0: i32, %arg1: i32) -> (i32, i32, i32) {
    %c0_i32 = arith.constant 0 : i32
    %c0_i32_0 = arith.constant 0 : i32
    %c0_i32_1 = arith.constant 0 : i32
    %c0_i32_2 = arith.constant 0 : i32
    return %c0_i32, %c0_i32_0, %c0_i32_1 : i32, i32, i32
  }
  func.func @transform_2(%arg0: i32, %arg1: i32) -> (i32, i32) {
    %c0_i32 = arith.constant 0 : i32
    %c0_i32_0 = arith.constant 0 : i32
    %c0_i32_1 = arith.constant 0 : i32
    return %c0_i32, %c0_i32_0 : i32, i32
  }
  func.func @transform_3(%arg0: i32, %arg1: i32) -> (i32, i32, i32) {
    %c0_i32 = arith.constant 0 : i32
    %c0_i32_0 = arith.constant 0 : i32
    %c0_i32_1 = arith.constant 0 : i32
    %c0_i32_2 = arith.constant 0 : i32
    return %c0_i32, %c0_i32_0, %c0_i32_1 : i32, i32, i32
  }
  func.func @transform_4(%arg0: i32, %arg1: i32) -> (i32, i32) {
    %c0_i32 = arith.constant 0 : i32
    %c0_i32_0 = arith.constant 0 : i32
    %c0_i32_1 = arith.constant 0 : i32
    return %c0_i32, %c0_i32_0 : i32, i32
  }
  func.func @transform_5(%arg0: i32, %arg1: i32) -> (i32, i32, i32, i32) {
    %c0_i32 = arith.constant 0 : i32
    %c0_i32_0 = arith.constant 0 : i32
    %c0_i32_1 = arith.constant 0 : i32
    return %arg0, %arg1, %c0_i32, %c0_i32_0 : i32, i32, i32, i32
  }
}

module attributes {stable_mosaic.version = 11 : i64} {
  func.func @_basic_block_kernel(%arg0: i32, %arg1: i32, %arg2: memref<1x20x20x128xf32, #tpu.memory_space<vmem>>, %arg3: memref<9x128x128xf32, #tpu.memory_space<vmem>>, %arg4: memref<1x128xf32, #tpu.memory_space<vmem>>, %arg5: memref<9x128x128xf32, #tpu.memory_space<vmem>>, %arg6: memref<1x128xf32, #tpu.memory_space<vmem>>, %arg7: memref<1x4x16x128xf32, #tpu.memory_space<vmem>>, %arg8: memref<6x18x128xf32, #tpu.memory_space<vmem>>) attributes {dimension_semantics = [#tpu.dimension_semantics<parallel>, #tpu.dimension_semantics<parallel>], iteration_bounds = array<i64: 2, 4>, scalar_prefetch = 0 : i64, scratch_operands = 1 : i64, tpu.core_type = #tpu.core_type<tc>, window_params = [{transform_indices = @transform_0, window_bounds = array<i64: 1, 20, 20, 128>}, {pipeline_mode = #tpu.pipeline_mode<synchronous>, transform_indices = @transform_1, window_bounds = array<i64: 9, 128, 128>}, {pipeline_mode = #tpu.pipeline_mode<synchronous>, transform_indices = @transform_2, window_bounds = array<i64: 1, 128>}, {pipeline_mode = #tpu.pipeline_mode<synchronous>, transform_indices = @transform_3, window_bounds = array<i64: 9, 128, 128>}, {pipeline_mode = #tpu.pipeline_mode<synchronous>, transform_indices = @transform_4, window_bounds = array<i64: 1, 128>}, {transform_indices = @transform_5, window_bounds = array<i64: 1, 4, 16, 128>}]} {
    %c4_i32 = arith.constant 4 : i32
    %0 = arith.muli %arg1, %c4_i32 : i32
    %1 = tpu.assume_multiple %0, 4 : i32
    %c0 = arith.constant 0 : index
    %2 = arith.index_cast %1 : i32 to index
    %c0_0 = arith.constant 0 : index
    %c0_1 = arith.constant 0 : index
    %3 = vector.load %arg2[%c0, %2, %c0_0, %c0_1] : memref<1x20x20x128xf32, #tpu.memory_space<vmem>>, vector<1x8x20x128xf32>
    %4 = vector.shape_cast %3 : vector<1x8x20x128xf32> to vector<8x20x128xf32>
    %5 = vector.extract_strided_slice %4 {offsets = [0, 0, 0], sizes = [6, 18, 128], strides = [1, 1, 1]} : vector<8x20x128xf32> to vector<6x18x128xf32>
    %6 = vector.shape_cast %5 : vector<6x18x128xf32> to vector<108x128xf32>
    %c0_2 = arith.constant 0 : index
    %c0_3 = arith.constant 0 : index
    %c0_4 = arith.constant 0 : index
    %7 = vector.load %arg3[%c0_2, %c0_3, %c0_4] : memref<9x128x128xf32, #tpu.memory_space<vmem>>, vector<1x128x128xf32>
    %8 = vector.shape_cast %7 : vector<1x128x128xf32> to vector<128x128xf32>
    %cst = arith.constant dense<0.000000e+00> : vector<108x128xf32>
    %9 = tpu.matmul %6, %8, %cst {dimension_numbers = #tpu.dot_dimension_numbers<[1], [0], [0], [1], [0, 0, 1, 1], [], []>} : vector<108x128xf32>, vector<128x128xf32>, vector<108x128xf32> -> vector<108x128xf32>
    %10 = vector.extract_strided_slice %4 {offsets = [0, 1, 0], sizes = [6, 18, 128], strides = [1, 1, 1]} : vector<8x20x128xf32> to vector<6x18x128xf32>
    %11 = vector.shape_cast %10 : vector<6x18x128xf32> to vector<108x128xf32>
    %c1 = arith.constant 1 : index
    %c0_5 = arith.constant 0 : index
    %c0_6 = arith.constant 0 : index
    %12 = vector.load %arg3[%c1, %c0_5, %c0_6] : memref<9x128x128xf32, #tpu.memory_space<vmem>>, vector<1x128x128xf32>
    %13 = vector.shape_cast %12 : vector<1x128x128xf32> to vector<128x128xf32>
    %cst_7 = arith.constant dense<0.000000e+00> : vector<108x128xf32>
    %14 = tpu.matmul %11, %13, %cst_7 {dimension_numbers = #tpu.dot_dimension_numbers<[1], [0], [0], [1], [0, 0, 1, 1], [], []>} : vector<108x128xf32>, vector<128x128xf32>, vector<108x128xf32> -> vector<108x128xf32>
    %15 = arith.addf %9, %14 : vector<108x128xf32>
    %16 = vector.extract_strided_slice %4 {offsets = [0, 2, 0], sizes = [6, 18, 128], strides = [1, 1, 1]} : vector<8x20x128xf32> to vector<6x18x128xf32>
    %17 = vector.shape_cast %16 : vector<6x18x128xf32> to vector<108x128xf32>
    %c2 = arith.constant 2 : index
    %c0_8 = arith.constant 0 : index
    %c0_9 = arith.constant 0 : index
    %18 = vector.load %arg3[%c2, %c0_8, %c0_9] : memref<9x128x128xf32, #tpu.memory_space<vmem>>, vector<1x128x128xf32>
    %19 = vector.shape_cast %18 : vector<1x128x128xf32> to vector<128x128xf32>
    %cst_10 = arith.constant dense<0.000000e+00> : vector<108x128xf32>
    %20 = tpu.matmul %17, %19, %cst_10 {dimension_numbers = #tpu.dot_dimension_numbers<[1], [0], [0], [1], [0, 0, 1, 1], [], []>} : vector<108x128xf32>, vector<128x128xf32>, vector<108x128xf32> -> vector<108x128xf32>
    %21 = arith.addf %15, %20 : vector<108x128xf32>
    %22 = vector.extract_strided_slice %4 {offsets = [1, 0, 0], sizes = [6, 18, 128], strides = [1, 1, 1]} : vector<8x20x128xf32> to vector<6x18x128xf32>
    %23 = vector.shape_cast %22 : vector<6x18x128xf32> to vector<108x128xf32>
    %c3 = arith.constant 3 : index
    %c0_11 = arith.constant 0 : index
    %c0_12 = arith.constant 0 : index
    %24 = vector.load %arg3[%c3, %c0_11, %c0_12] : memref<9x128x128xf32, #tpu.memory_space<vmem>>, vector<1x128x128xf32>
    %25 = vector.shape_cast %24 : vector<1x128x128xf32> to vector<128x128xf32>
    %cst_13 = arith.constant dense<0.000000e+00> : vector<108x128xf32>
    %26 = tpu.matmul %23, %25, %cst_13 {dimension_numbers = #tpu.dot_dimension_numbers<[1], [0], [0], [1], [0, 0, 1, 1], [], []>} : vector<108x128xf32>, vector<128x128xf32>, vector<108x128xf32> -> vector<108x128xf32>
    %27 = arith.addf %21, %26 : vector<108x128xf32>
    %28 = vector.extract_strided_slice %4 {offsets = [1, 1, 0], sizes = [6, 18, 128], strides = [1, 1, 1]} : vector<8x20x128xf32> to vector<6x18x128xf32>
    %29 = vector.shape_cast %28 : vector<6x18x128xf32> to vector<108x128xf32>
    %c4 = arith.constant 4 : index
    %c0_14 = arith.constant 0 : index
    %c0_15 = arith.constant 0 : index
    %30 = vector.load %arg3[%c4, %c0_14, %c0_15] : memref<9x128x128xf32, #tpu.memory_space<vmem>>, vector<1x128x128xf32>
    %31 = vector.shape_cast %30 : vector<1x128x128xf32> to vector<128x128xf32>
    %cst_16 = arith.constant dense<0.000000e+00> : vector<108x128xf32>
    %32 = tpu.matmul %29, %31, %cst_16 {dimension_numbers = #tpu.dot_dimension_numbers<[1], [0], [0], [1], [0, 0, 1, 1], [], []>} : vector<108x128xf32>, vector<128x128xf32>, vector<108x128xf32> -> vector<108x128xf32>
    %33 = arith.addf %27, %32 : vector<108x128xf32>
    %34 = vector.extract_strided_slice %4 {offsets = [1, 2, 0], sizes = [6, 18, 128], strides = [1, 1, 1]} : vector<8x20x128xf32> to vector<6x18x128xf32>
    %35 = vector.shape_cast %34 : vector<6x18x128xf32> to vector<108x128xf32>
    %c5 = arith.constant 5 : index
    %c0_17 = arith.constant 0 : index
    %c0_18 = arith.constant 0 : index
    %36 = vector.load %arg3[%c5, %c0_17, %c0_18] : memref<9x128x128xf32, #tpu.memory_space<vmem>>, vector<1x128x128xf32>
    %37 = vector.shape_cast %36 : vector<1x128x128xf32> to vector<128x128xf32>
    %cst_19 = arith.constant dense<0.000000e+00> : vector<108x128xf32>
    %38 = tpu.matmul %35, %37, %cst_19 {dimension_numbers = #tpu.dot_dimension_numbers<[1], [0], [0], [1], [0, 0, 1, 1], [], []>} : vector<108x128xf32>, vector<128x128xf32>, vector<108x128xf32> -> vector<108x128xf32>
    %39 = arith.addf %33, %38 : vector<108x128xf32>
    %40 = vector.extract_strided_slice %4 {offsets = [2, 0, 0], sizes = [6, 18, 128], strides = [1, 1, 1]} : vector<8x20x128xf32> to vector<6x18x128xf32>
    %41 = vector.shape_cast %40 : vector<6x18x128xf32> to vector<108x128xf32>
    %c6 = arith.constant 6 : index
    %c0_20 = arith.constant 0 : index
    %c0_21 = arith.constant 0 : index
    %42 = vector.load %arg3[%c6, %c0_20, %c0_21] : memref<9x128x128xf32, #tpu.memory_space<vmem>>, vector<1x128x128xf32>
    %43 = vector.shape_cast %42 : vector<1x128x128xf32> to vector<128x128xf32>
    %cst_22 = arith.constant dense<0.000000e+00> : vector<108x128xf32>
    %44 = tpu.matmul %41, %43, %cst_22 {dimension_numbers = #tpu.dot_dimension_numbers<[1], [0], [0], [1], [0, 0, 1, 1], [], []>} : vector<108x128xf32>, vector<128x128xf32>, vector<108x128xf32> -> vector<108x128xf32>
    %45 = arith.addf %39, %44 : vector<108x128xf32>
    %46 = vector.extract_strided_slice %4 {offsets = [2, 1, 0], sizes = [6, 18, 128], strides = [1, 1, 1]} : vector<8x20x128xf32> to vector<6x18x128xf32>
    %47 = vector.shape_cast %46 : vector<6x18x128xf32> to vector<108x128xf32>
    %c7 = arith.constant 7 : index
    %c0_23 = arith.constant 0 : index
    %c0_24 = arith.constant 0 : index
    %48 = vector.load %arg3[%c7, %c0_23, %c0_24] : memref<9x128x128xf32, #tpu.memory_space<vmem>>, vector<1x128x128xf32>
    %49 = vector.shape_cast %48 : vector<1x128x128xf32> to vector<128x128xf32>
    %cst_25 = arith.constant dense<0.000000e+00> : vector<108x128xf32>
    %50 = tpu.matmul %47, %49, %cst_25 {dimension_numbers = #tpu.dot_dimension_numbers<[1], [0], [0], [1], [0, 0, 1, 1], [], []>} : vector<108x128xf32>, vector<128x128xf32>, vector<108x128xf32> -> vector<108x128xf32>
    %51 = arith.addf %45, %50 : vector<108x128xf32>
    %52 = vector.extract_strided_slice %4 {offsets = [2, 2, 0], sizes = [6, 18, 128], strides = [1, 1, 1]} : vector<8x20x128xf32> to vector<6x18x128xf32>
    %53 = vector.shape_cast %52 : vector<6x18x128xf32> to vector<108x128xf32>
    %c8 = arith.constant 8 : index
    %c0_26 = arith.constant 0 : index
    %c0_27 = arith.constant 0 : index
    %54 = vector.load %arg3[%c8, %c0_26, %c0_27] : memref<9x128x128xf32, #tpu.memory_space<vmem>>, vector<1x128x128xf32>
    %55 = vector.shape_cast %54 : vector<1x128x128xf32> to vector<128x128xf32>
    %cst_28 = arith.constant dense<0.000000e+00> : vector<108x128xf32>
    %56 = tpu.matmul %53, %55, %cst_28 {dimension_numbers = #tpu.dot_dimension_numbers<[1], [0], [0], [1], [0, 0, 1, 1], [], []>} : vector<108x128xf32>, vector<128x128xf32>, vector<108x128xf32> -> vector<108x128xf32>
    %57 = arith.addf %51, %56 : vector<108x128xf32>
    %c0_29 = arith.constant 0 : index
    %c0_30 = arith.constant 0 : index
    %58 = vector.load %arg4[%c0_29, %c0_30] : memref<1x128xf32, #tpu.memory_space<vmem>>, vector<1x128xf32>
    %59 = vector.broadcast %58 : vector<1x128xf32> to vector<108x128xf32>
    %60 = arith.addf %57, %59 : vector<108x128xf32>
    %cst_31 = arith.constant 0.000000e+00 : f32
    %61 = vector.broadcast %cst_31 : f32 to vector<108x128xf32>
    %62 = arith.maximumf %60, %61 : vector<108x128xf32>
    %63 = vector.shape_cast %62 : vector<108x128xf32> to vector<6x18x128xf32>
    %64 = tpu.iota {dimensions = array<i32: 1>} : vector<1x18x1xi32>
    %c1_i32 = arith.constant 1 : i32
    %65 = vector.broadcast %c1_i32 : i32 to vector<1x18x1xi32>
    %66 = arith.cmpi sge, %64, %65 : vector<1x18x1xi32>
    %c16_i32 = arith.constant 16 : i32
    %67 = vector.broadcast %c16_i32 : i32 to vector<1x18x1xi32>
    %68 = arith.cmpi sle, %64, %67 : vector<1x18x1xi32>
    %69 = arith.andi %66, %68 : vector<1x18x1xi1>
    %cst_32 = arith.constant 0.000000e+00 : f32
    %70 = vector.shape_cast %69 : vector<1x18x1xi1> to vector<1x18x1xi1>
    %71 = vector.broadcast %70 : vector<1x18x1xi1> to vector<6x18x128xi1>
    %72 = vector.broadcast %cst_32 : f32 to vector<6x18x128xf32>
    %73 = arith.select %71, %63, %72 : vector<6x18x128xi1>, vector<6x18x128xf32>
    %c0_33 = arith.constant 0 : index
    %c0_34 = arith.constant 0 : index
    %c0_35 = arith.constant 0 : index
    %74 = vector.load %arg8[%c0_33, %c0_34, %c0_35] : memref<6x18x128xf32, #tpu.memory_space<vmem>>, vector<6x18x128xf32>
    tpu.vector_store %arg8[%c0_33, %c0_34, %c0_35], %73 {strides = array<i32>} : memref<6x18x128xf32, #tpu.memory_space<vmem>>, vector<6x18x128xf32>,
    %cst_36 = arith.constant 0.000000e+00 : f32
    %75 = vector.broadcast %cst_36 : f32 to vector<18x128xf32>
    %c0_i32 = arith.constant 0 : i32
    %76 = arith.cmpi eq, %arg1, %c0_i32 : i32
    %77 = arith.extui %76 : i1 to i32
    %c0_i32_37 = arith.constant 0 : i32
    %78 = arith.cmpi ne, %77, %c0_i32_37 : i32
    scf.if %78 {
      %c0_109 = arith.constant 0 : index
      %c0_110 = arith.constant 0 : index
      %c0_111 = arith.constant 0 : index
      %147 = vector.load %arg8[%c0_109, %c0_110, %c0_111] : memref<6x18x128xf32, #tpu.memory_space<vmem>>, vector<1x18x128xf32>
      %148 = vector.shape_cast %147 : vector<1x18x128xf32> to vector<18x128xf32>
      %149 = vector.shape_cast %75 : vector<18x128xf32> to vector<1x18x128xf32>
      tpu.vector_store %arg8[%c0_109, %c0_110, %c0_111], %149 {strides = array<i32>} : memref<6x18x128xf32, #tpu.memory_space<vmem>>, vector<1x18x128xf32>,
    } else {
    }
    %c3_i32 = arith.constant 3 : i32
    %79 = arith.cmpi eq, %arg1, %c3_i32 : i32
    %80 = arith.extui %79 : i1 to i32
    %c0_i32_38 = arith.constant 0 : i32
    %81 = arith.cmpi ne, %80, %c0_i32_38 : i32
    scf.if %81 {
      %c5_109 = arith.constant 5 : index
      %c0_110 = arith.constant 0 : index
      %c0_111 = arith.constant 0 : index
      %147 = vector.load %arg8[%c5_109, %c0_110, %c0_111] : memref<6x18x128xf32, #tpu.memory_space<vmem>>, vector<1x18x128xf32>
      %148 = vector.shape_cast %147 : vector<1x18x128xf32> to vector<18x128xf32>
      %149 = vector.shape_cast %75 : vector<18x128xf32> to vector<1x18x128xf32>
      tpu.vector_store %arg8[%c5_109, %c0_110, %c0_111], %149 {strides = array<i32>} : memref<6x18x128xf32, #tpu.memory_space<vmem>>, vector<1x18x128xf32>,
    } else {
    }
    %c0_39 = arith.constant 0 : index
    %c0_40 = arith.constant 0 : index
    %c0_41 = arith.constant 0 : index
    %82 = vector.load %arg8[%c0_39, %c0_40, %c0_41] : memref<6x18x128xf32, #tpu.memory_space<vmem>>, vector<4x16x128xf32>
    %83 = vector.shape_cast %82 : vector<4x16x128xf32> to vector<64x128xf32>
    %c0_42 = arith.constant 0 : index
    %c0_43 = arith.constant 0 : index
    %c0_44 = arith.constant 0 : index
    %84 = vector.load %arg5[%c0_42, %c0_43, %c0_44] : memref<9x128x128xf32, #tpu.memory_space<vmem>>, vector<1x128x128xf32>
    %85 = vector.shape_cast %84 : vector<1x128x128xf32> to vector<128x128xf32>
    %cst_45 = arith.constant dense<0.000000e+00> : vector<64x128xf32>
    %86 = tpu.matmul %83, %85, %cst_45 {dimension_numbers = #tpu.dot_dimension_numbers<[1], [0], [0], [1], [0, 0, 1, 1], [], []>} : vector<64x128xf32>, vector<128x128xf32>, vector<64x128xf32> -> vector<64x128xf32>
    %c0_46 = arith.constant 0 : index
    %c1_47 = arith.constant 1 : index
    %c0_48 = arith.constant 0 : index
    %87 = vector.load %arg8[%c0_46, %c1_47, %c0_48] : memref<6x18x128xf32, #tpu.memory_space<vmem>>, vector<4x16x128xf32>
    %88 = vector.shape_cast %87 : vector<4x16x128xf32> to vector<64x128xf32>
    %c1_49 = arith.constant 1 : index
    %c0_50 = arith.constant 0 : index
    %c0_51 = arith.constant 0 : index
    %89 = vector.load %arg5[%c1_49, %c0_50, %c0_51] : memref<9x128x128xf32, #tpu.memory_space<vmem>>, vector<1x128x128xf32>
    %90 = vector.shape_cast %89 : vector<1x128x128xf32> to vector<128x128xf32>
    %cst_52 = arith.constant dense<0.000000e+00> : vector<64x128xf32>
    %91 = tpu.matmul %88, %90, %cst_52 {dimension_numbers = #tpu.dot_dimension_numbers<[1], [0], [0], [1], [0, 0, 1, 1], [], []>} : vector<64x128xf32>, vector<128x128xf32>, vector<64x128xf32> -> vector<64x128xf32>
    %92 = arith.addf %86, %91 : vector<64x128xf32>
    %c0_53 = arith.constant 0 : index
    %c2_54 = arith.constant 2 : index
    %c0_55 = arith.constant 0 : index
    %93 = vector.load %arg8[%c0_53, %c2_54, %c0_55] : memref<6x18x128xf32, #tpu.memory_space<vmem>>, vector<4x16x128xf32>
    %94 = vector.shape_cast %93 : vector<4x16x128xf32> to vector<64x128xf32>
    %c2_56 = arith.constant 2 : index
    %c0_57 = arith.constant 0 : index
    %c0_58 = arith.constant 0 : index
    %95 = vector.load %arg5[%c2_56, %c0_57, %c0_58] : memref<9x128x128xf32, #tpu.memory_space<vmem>>, vector<1x128x128xf32>
    %96 = vector.shape_cast %95 : vector<1x128x128xf32> to vector<128x128xf32>
    %cst_59 = arith.constant dense<0.000000e+00> : vector<64x128xf32>
    %97 = tpu.matmul %94, %96, %cst_59 {dimension_numbers = #tpu.dot_dimension_numbers<[1], [0], [0], [1], [0, 0, 1, 1], [], []>} : vector<64x128xf32>, vector<128x128xf32>, vector<64x128xf32> -> vector<64x128xf32>
    %98 = arith.addf %92, %97 : vector<64x128xf32>
    %c1_60 = arith.constant 1 : index
    %c0_61 = arith.constant 0 : index
    %c0_62 = arith.constant 0 : index
    %99 = vector.load %arg8[%c1_60, %c0_61, %c0_62] : memref<6x18x128xf32, #tpu.memory_space<vmem>>, vector<4x16x128xf32>
    %100 = vector.shape_cast %99 : vector<4x16x128xf32> to vector<64x128xf32>
    %c3_63 = arith.constant 3 : index
    %c0_64 = arith.constant 0 : index
    %c0_65 = arith.constant 0 : index
    %101 = vector.load %arg5[%c3_63, %c0_64, %c0_65] : memref<9x128x128xf32, #tpu.memory_space<vmem>>, vector<1x128x128xf32>
    %102 = vector.shape_cast %101 : vector<1x128x128xf32> to vector<128x128xf32>
    %cst_66 = arith.constant dense<0.000000e+00> : vector<64x128xf32>
    %103 = tpu.matmul %100, %102, %cst_66 {dimension_numbers = #tpu.dot_dimension_numbers<[1], [0], [0], [1], [0, 0, 1, 1], [], []>} : vector<64x128xf32>, vector<128x128xf32>, vector<64x128xf32> -> vector<64x128xf32>
    %104 = arith.addf %98, %103 : vector<64x128xf32>
    %c1_67 = arith.constant 1 : index
    %c1_68 = arith.constant 1 : index
    %c0_69 = arith.constant 0 : index
    %105 = vector.load %arg8[%c1_67, %c1_68, %c0_69] : memref<6x18x128xf32, #tpu.memory_space<vmem>>, vector<4x16x128xf32>
    %106 = vector.shape_cast %105 : vector<4x16x128xf32> to vector<64x128xf32>
    %c4_70 = arith.constant 4 : index
    %c0_71 = arith.constant 0 : index
    %c0_72 = arith.constant 0 : index
    %107 = vector.load %arg5[%c4_70, %c0_71, %c0_72] : memref<9x128x128xf32, #tpu.memory_space<vmem>>, vector<1x128x128xf32>
    %108 = vector.shape_cast %107 : vector<1x128x128xf32> to vector<128x128xf32>
    %cst_73 = arith.constant dense<0.000000e+00> : vector<64x128xf32>
    %109 = tpu.matmul %106, %108, %cst_73 {dimension_numbers = #tpu.dot_dimension_numbers<[1], [0], [0], [1], [0, 0, 1, 1], [], []>} : vector<64x128xf32>, vector<128x128xf32>, vector<64x128xf32> -> vector<64x128xf32>
    %110 = arith.addf %104, %109 : vector<64x128xf32>
    %c1_74 = arith.constant 1 : index
    %c2_75 = arith.constant 2 : index
    %c0_76 = arith.constant 0 : index
    %111 = vector.load %arg8[%c1_74, %c2_75, %c0_76] : memref<6x18x128xf32, #tpu.memory_space<vmem>>, vector<4x16x128xf32>
    %112 = vector.shape_cast %111 : vector<4x16x128xf32> to vector<64x128xf32>
    %c5_77 = arith.constant 5 : index
    %c0_78 = arith.constant 0 : index
    %c0_79 = arith.constant 0 : index
    %113 = vector.load %arg5[%c5_77, %c0_78, %c0_79] : memref<9x128x128xf32, #tpu.memory_space<vmem>>, vector<1x128x128xf32>
    %114 = vector.shape_cast %113 : vector<1x128x128xf32> to vector<128x128xf32>
    %cst_80 = arith.constant dense<0.000000e+00> : vector<64x128xf32>
    %115 = tpu.matmul %112, %114, %cst_80 {dimension_numbers = #tpu.dot_dimension_numbers<[1], [0], [0], [1], [0, 0, 1, 1], [], []>} : vector<64x128xf32>, vector<128x128xf32>, vector<64x128xf32> -> vector<64x128xf32>
    %116 = arith.addf %110, %115 : vector<64x128xf32>
    %c2_81 = arith.constant 2 : index
    %c0_82 = arith.constant 0 : index
    %c0_83 = arith.constant 0 : index
    %117 = vector.load %arg8[%c2_81, %c0_82, %c0_83] : memref<6x18x128xf32, #tpu.memory_space<vmem>>, vector<4x16x128xf32>
    %118 = vector.shape_cast %117 : vector<4x16x128xf32> to vector<64x128xf32>
    %c6_84 = arith.constant 6 : index
    %c0_85 = arith.constant 0 : index
    %c0_86 = arith.constant 0 : index
    %119 = vector.load %arg5[%c6_84, %c0_85, %c0_86] : memref<9x128x128xf32, #tpu.memory_space<vmem>>, vector<1x128x128xf32>
    %120 = vector.shape_cast %119 : vector<1x128x128xf32> to vector<128x128xf32>
    %cst_87 = arith.constant dense<0.000000e+00> : vector<64x128xf32>
    %121 = tpu.matmul %118, %120, %cst_87 {dimension_numbers = #tpu.dot_dimension_numbers<[1], [0], [0], [1], [0, 0, 1, 1], [], []>} : vector<64x128xf32>, vector<128x128xf32>, vector<64x128xf32> -> vector<64x128xf32>
    %122 = arith.addf %116, %121 : vector<64x128xf32>
    %c2_88 = arith.constant 2 : index
    %c1_89 = arith.constant 1 : index
    %c0_90 = arith.constant 0 : index
    %123 = vector.load %arg8[%c2_88, %c1_89, %c0_90] : memref<6x18x128xf32, #tpu.memory_space<vmem>>, vector<4x16x128xf32>
    %124 = vector.shape_cast %123 : vector<4x16x128xf32> to vector<64x128xf32>
    %c7_91 = arith.constant 7 : index
    %c0_92 = arith.constant 0 : index
    %c0_93 = arith.constant 0 : index
    %125 = vector.load %arg5[%c7_91, %c0_92, %c0_93] : memref<9x128x128xf32, #tpu.memory_space<vmem>>, vector<1x128x128xf32>
    %126 = vector.shape_cast %125 : vector<1x128x128xf32> to vector<128x128xf32>
    %cst_94 = arith.constant dense<0.000000e+00> : vector<64x128xf32>
    %127 = tpu.matmul %124, %126, %cst_94 {dimension_numbers = #tpu.dot_dimension_numbers<[1], [0], [0], [1], [0, 0, 1, 1], [], []>} : vector<64x128xf32>, vector<128x128xf32>, vector<64x128xf32> -> vector<64x128xf32>
    %128 = arith.addf %122, %127 : vector<64x128xf32>
    %c2_95 = arith.constant 2 : index
    %c2_96 = arith.constant 2 : index
    %c0_97 = arith.constant 0 : index
    %129 = vector.load %arg8[%c2_95, %c2_96, %c0_97] : memref<6x18x128xf32, #tpu.memory_space<vmem>>, vector<4x16x128xf32>
    %130 = vector.shape_cast %129 : vector<4x16x128xf32> to vector<64x128xf32>
    %c8_98 = arith.constant 8 : index
    %c0_99 = arith.constant 0 : index
    %c0_100 = arith.constant 0 : index
    %131 = vector.load %arg5[%c8_98, %c0_99, %c0_100] : memref<9x128x128xf32, #tpu.memory_space<vmem>>, vector<1x128x128xf32>
    %132 = vector.shape_cast %131 : vector<1x128x128xf32> to vector<128x128xf32>
    %cst_101 = arith.constant dense<0.000000e+00> : vector<64x128xf32>
    %133 = tpu.matmul %130, %132, %cst_101 {dimension_numbers = #tpu.dot_dimension_numbers<[1], [0], [0], [1], [0, 0, 1, 1], [], []>} : vector<64x128xf32>, vector<128x128xf32>, vector<64x128xf32> -> vector<64x128xf32>
    %134 = arith.addf %128, %133 : vector<64x128xf32>
    %c0_102 = arith.constant 0 : index
    %c0_103 = arith.constant 0 : index
    %135 = vector.load %arg6[%c0_102, %c0_103] : memref<1x128xf32, #tpu.memory_space<vmem>>, vector<1x128xf32>
    %136 = vector.broadcast %135 : vector<1x128xf32> to vector<64x128xf32>
    %137 = arith.addf %134, %136 : vector<64x128xf32>
    %138 = vector.extract_strided_slice %4 {offsets = [2, 2, 0], sizes = [4, 16, 128], strides = [1, 1, 1]} : vector<8x20x128xf32> to vector<4x16x128xf32>
    %139 = vector.shape_cast %138 : vector<4x16x128xf32> to vector<64x128xf32>
    %140 = arith.addf %137, %139 : vector<64x128xf32>
    %cst_104 = arith.constant 0.000000e+00 : f32
    %141 = vector.broadcast %cst_104 : f32 to vector<64x128xf32>
    %142 = arith.maximumf %140, %141 : vector<64x128xf32>
    %143 = vector.shape_cast %142 : vector<64x128xf32> to vector<4x16x128xf32>
    %c0_105 = arith.constant 0 : index
    %c0_106 = arith.constant 0 : index
    %c0_107 = arith.constant 0 : index
    %c0_108 = arith.constant 0 : index
    %144 = vector.load %arg7[%c0_105, %c0_106, %c0_107, %c0_108] : memref<1x4x16x128xf32, #tpu.memory_space<vmem>>, vector<1x4x16x128xf32>
    %145 = vector.shape_cast %144 : vector<1x4x16x128xf32> to vector<4x16x128xf32>
    %146 = vector.shape_cast %143 : vector<4x16x128xf32> to vector<1x4x16x128xf32>
    tpu.vector_store %arg7[%c0_105, %c0_106, %c0_107, %c0_108], %146 {strides = array<i32>} : memref<1x4x16x128xf32, #tpu.memory_space<vmem>>, vector<1x4x16x128xf32>,
    return
  }
  func.func @transform_0(%arg0: i32, %arg1: i32) -> (i32, i32, i32, i32) {
    %c0_i32 = arith.constant 0 : i32
    %c0_i32_0 = arith.constant 0 : i32
    %c0_i32_1 = arith.constant 0 : i32
    %c0_i32_2 = arith.constant 0 : i32
    return %arg0, %c0_i32, %c0_i32_0, %c0_i32_1 : i32, i32, i32, i32
  }
  func.func @transform_1(%arg0: i32, %arg1: i32) -> (i32, i32, i32) {
    %c0_i32 = arith.constant 0 : i32
    %c0_i32_0 = arith.constant 0 : i32
    %c0_i32_1 = arith.constant 0 : i32
    %c0_i32_2 = arith.constant 0 : i32
    return %c0_i32, %c0_i32_0, %c0_i32_1 : i32, i32, i32
  }
  func.func @transform_2(%arg0: i32, %arg1: i32) -> (i32, i32) {
    %c0_i32 = arith.constant 0 : i32
    %c0_i32_0 = arith.constant 0 : i32
    %c0_i32_1 = arith.constant 0 : i32
    return %c0_i32, %c0_i32_0 : i32, i32
  }
  func.func @transform_3(%arg0: i32, %arg1: i32) -> (i32, i32, i32) {
    %c0_i32 = arith.constant 0 : i32
    %c0_i32_0 = arith.constant 0 : i32
    %c0_i32_1 = arith.constant 0 : i32
    %c0_i32_2 = arith.constant 0 : i32
    return %c0_i32, %c0_i32_0, %c0_i32_1 : i32, i32, i32
  }
  func.func @transform_4(%arg0: i32, %arg1: i32) -> (i32, i32) {
    %c0_i32 = arith.constant 0 : i32
    %c0_i32_0 = arith.constant 0 : i32
    %c0_i32_1 = arith.constant 0 : i32
    return %c0_i32, %c0_i32_0 : i32, i32
  }
  func.func @transform_5(%arg0: i32, %arg1: i32) -> (i32, i32, i32, i32) {
    %c0_i32 = arith.constant 0 : i32
    %c0_i32_0 = arith.constant 0 : i32
    %c0_i32_1 = arith.constant 0 : i32
    return %arg0, %arg1, %c0_i32, %c0_i32_0 : i32, i32, i32, i32
  }
}

</mosaic_0001>

<llo_original>
// kernel: tpu_custom_call.1
$region0: #{tpu_custom_call.1}
  #allocation0 [shape = 'u32[]', space=smem, size = 0x4, offset = 0x4, fixed_abs, tag = 'smem constant byte address 0x4 - core index']
  #allocation1 [shape = 'u32[72,128]{1,0:T(1,128)}', space=vmem, size = 0x9000, scoped, tag = 'internal scratch']
  #allocation2 [shape = 'f32[6,18,128]{2,1,0:T(8,128)}', space=vmem, size = 0x12000, scoped, tag = 'scratch operand']
  %s0 = inlined_call_operand.vmem [shape: f32[2,20,20,128], index: 0, kind: input, shape index: {}]
  %s1 = inlined_call_operand.vmem [shape: f32[9,128,128], index: 1, kind: input, shape index: {}]
  %s2 = inlined_call_operand.vmem [shape: f32[1,128], index: 2, kind: input, shape index: {}]
  %s3 = inlined_call_operand.hbm [shape: f32[9,128,128], index: 3, kind: input, shape index: {}]
  %s4 = inlined_call_operand.vmem [shape: f32[1,128], index: 4, kind: input, shape index: {}]
  %s5 = inlined_call_operand.hbm [shape: f32[2,16,16,128], index: 5, kind: output, shape index: {}]
  %s6 = sld [smem:[#allocation0]]
  $region65: #{tpu_custom_call.1} parent=0
    _
  %s8 = ssub.s32 1, %s6
  %s9 = scalar_select 0, %s8, %s6
  $region1: #{tpu_custom_call.1} parent=0
    #allocation3 [shape = 'u8[589824]{0}', space=vmem, size = 0x90000, scoped, tag = 'input window, operand 3, single buffered']
    #allocation4 [shape = 's32[2]{0}', space=sflag, size = 0x8, scoped, tag = 'scoped memory for tpu_custom_call.1']
    #allocation5 [shape = 's32[2]{0}', space=sflag, size = 0x8, scoped, tag = 'scoped memory for tpu_custom_call.1']
    #allocation6 [shape = 'u8[65536]{0}', space=vmem, size = 0x10000, scoped, tag = 'output window, operand 0']
    %10 = vsyncpa [#allocation4], 0
    %11 = vsyncpa [#allocation5], 0
    %s12 = scalar_lea.sflag [#allocation5], 1
    %13 = vsyncpa %s12, 0
    loop: start=0, step=1, limit=10
    $region2: #{tpu_custom_call.1} parent=1 // loop_pre_header
      _
    $region3: #{tpu_custom_call.1} parent=1 // loop_header
      %s15 = sphi 0, %s19
      %p16 = scmp.ge.s32.totalorder %s15, 10
      %s22 = sphi 0, %s34
      %s23 = sphi 0, %s30
      %s24 = sphi 0, %s22
      %s25 = sphi 0, %s23
      %s26 = sphi 0, %s24
      %s27 = sphi 0, %s25
      %s37 = sphi 0, %s39
      %s40 = sphi 0, %s37
      %s41 = sphi 0, %s40
      %s57 = sphi 0, %s41
      %s61 = sphi 0, %s61
      %s63 = sphi 0, %s61
      %s64 = sphi 0, %s63
      %s78 = sphi 0, %s64
      %s82 = sphi 0, %s82
      %s84 = sphi 0, %s82
      %s85 = sphi 0, %s84
      %s99 = sphi 0, %s85
      %s103 = sphi 0, %s103
      %s105 = sphi 0, %s103
      %s106 = sphi 0, %s105
      %s120 = sphi 0, %s106
      %s124 = sphi 0, %s124
      %s126 = sphi 0, %s124
      %s127 = sphi 0, %s126
      %s141 = sphi 0, %s127
      %s149 = sphi 0, %s151
      %s152 = sphi 0, %s149
      %s153 = sphi 0, %s152
      %s169 = sphi 0, %s153
    $region4: #{tpu_custom_call.1} parent=1 // loop_header_branch
      %18 = sbr.rel (%p16) target = $region8
    $region5: #{tpu_custom_call.1} parent=1 // loop_body
      %s20 = ssub.s32 %s15, 1
      %s21 = ssub.s32 %s15, 2
      %s28 = sadd.s32 1, %s23
      %p29 = scmp.ge.s32.totalorder %s28, 4
      %s30 = scalar_select %p29, 0, %s28
      %s31 = sadd.s32 1, %s22
      %s32 = scalar_select %p29, %s31, %s22
      %p33 = scmp.ge.s32.totalorder %s32, 2
      %s34 = scalar_select %p33, 0, %s32
      %s35 = ssub.s32 %s22, %s34
      %p36 = scmp.eq.s32.totalorder %s35, 0
      %s38 = sadd.s32 %s37, 1
      %s39 = scalar_select %p36, %s37, %s38
      %p42 = pneg %p36
      %p43 = scmp.eq.s32.totalorder %s15, 7
      %p44 = por %p42, %p43
      %p45 = scmp.ne.s32.totalorder %s37, %s40
      %p46 = scmp.eq.s32.totalorder %s15, 0
      %p47 = por %p45, %p46
      %p48 = scmp.ne.s32.totalorder %s37, %s40
      %p49 = scmp.eq.s32.totalorder %s20, 7
      %p50 = por %p48, %p49
      %p51 = scmp.ne.s32.totalorder %s40, %s41
      %p52 = scmp.eq.s32.totalorder %s20, 0
      %p53 = por %p51, %p52
      %p54 = scmp.ne.s32.totalorder %s40, %s41
      %p55 = scmp.eq.s32.totalorder %s21, 7
      %p56 = por %p54, %p55
      %p58 = scmp.ne.s32.totalorder %s41, %s57
      %p59 = scmp.eq.s32.totalorder %s21, 0
      %p60 = por %p58, %p59
      %s62 = sadd.s32 %s61, 1
      %p65 = scmp.eq.s32.totalorder %s15, 7
      %p66 = scmp.ne.s32.totalorder %s61, %s63
      %p67 = scmp.eq.s32.totalorder %s15, 0
      %p68 = por %p66, %p67
      %p69 = scmp.ne.s32.totalorder %s61, %s63
      %p70 = scmp.eq.s32.totalorder %s20, 7
      %p71 = por %p69, %p70
      %p72 = scmp.ne.s32.totalorder %s63, %s64
      %p73 = scmp.eq.s32.totalorder %s20, 0
      %p74 = por %p72, %p73
      %p75 = scmp.ne.s32.totalorder %s63, %s64
      %p76 = scmp.eq.s32.totalorder %s21, 7
      %p77 = por %p75, %p76
      %p79 = scmp.ne.s32.totalorder %s64, %s78
      %p80 = scmp.eq.s32.totalorder %s21, 0
      %p81 = por %p79, %p80
      %s83 = sadd.s32 %s82, 1
      %p86 = scmp.eq.s32.totalorder %s15, 7
      %p87 = scmp.ne.s32.totalorder %s82, %s84
      %p88 = scmp.eq.s32.totalorder %s15, 0
      %p89 = por %p87, %p88
      %p90 = scmp.ne.s32.totalorder %s82, %s84
      %p91 = scmp.eq.s32.totalorder %s20, 7
      %p92 = por %p90, %p91
      %p93 = scmp.ne.s32.totalorder %s84, %s85
      %p94 = scmp.eq.s32.totalorder %s20, 0
      %p95 = por %p93, %p94
      %p96 = scmp.ne.s32.totalorder %s84, %s85
      %p97 = scmp.eq.s32.totalorder %s21, 7
      %p98 = por %p96, %p97
      %p100 = scmp.ne.s32.totalorder %s85, %s99
      %p101 = scmp.eq.s32.totalorder %s21, 0
      %p102 = por %p100, %p101
      %s104 = sadd.s32 %s103, 1
      %p107 = scmp.eq.s32.totalorder %s15, 7
      %p108 = scmp.ne.s32.totalorder %s103, %s105
      %p109 = scmp.eq.s32.totalorder %s15, 0
      %p110 = por %p108, %p109
      %p111 = scmp.ne.s32.totalorder %s103, %s105
      %p112 = scmp.eq.s32.totalorder %s20, 7
      %p113 = por %p111, %p112
      %p114 = scmp.ne.s32.totalorder %s105, %s106
      %p115 = scmp.eq.s32.totalorder %s20, 0
      %p116 = por %p114, %p115
      %p117 = scmp.ne.s32.totalorder %s105, %s106
      %p118 = scmp.eq.s32.totalorder %s21, 7
      %p119 = por %p117, %p118
      %p121 = scmp.ne.s32.totalorder %s106, %s120
      %p122 = scmp.eq.s32.totalorder %s21, 0
      %p123 = por %p121, %p122
      %s125 = sadd.s32 %s124, 1
      %p128 = scmp.eq.s32.totalorder %s15, 7
      %p129 = scmp.ne.s32.totalorder %s124, %s126
      %p130 = scmp.eq.s32.totalorder %s15, 0
      %p131 = por %p129, %p130
      %p132 = scmp.ne.s32.totalorder %s124, %s126
      %p133 = scmp.eq.s32.totalorder %s20, 7
      %p134 = por %p132, %p133
      %p135 = scmp.ne.s32.totalorder %s126, %s127
      %p136 = scmp.eq.s32.totalorder %s20, 0
      %p137 = por %p135, %p136
      %p138 = scmp.ne.s32.totalorder %s126, %s127
      %p139 = scmp.eq.s32.totalorder %s21, 7
      %p140 = por %p138, %p139
      %p142 = scmp.ne.s32.totalorder %s127, %s141
      %p143 = scmp.eq.s32.totalorder %s21, 0
      %p144 = por %p142, %p143
      %s145 = ssub.s32 %s22, %s34
      %s146 = ssub.s32 %s23, %s30
      %s147 = sor.u32 %s145, %s146
      %p148 = scmp.eq.s32.totalorder %s147, 0
      %s150 = sadd.s32 %s149, 1
      %s151 = scalar_select %p148, %s149, %s150
      %p154 = pneg %p148
      %p155 = scmp.eq.s32.totalorder %s15, 7
      %p156 = por %p154, %p155
      %p157 = scmp.ne.s32.totalorder %s149, %s152
      %p158 = scmp.eq.s32.totalorder %s15, 0
      %p159 = por %p157, %p158
      %p160 = scmp.ne.s32.totalorder %s149, %s152
      %p161 = scmp.eq.s32.totalorder %s20, 7
      %p162 = por %p160, %p161
      %p163 = scmp.ne.s32.totalorder %s152, %s153
      %p164 = scmp.eq.s32.totalorder %s20, 0
      %p165 = por %p163, %p164
      %p166 = scmp.ne.s32.totalorder %s152, %s153
      %p167 = scmp.eq.s32.totalorder %s21, 7
      %p168 = por %p166, %p167
      %p170 = scmp.ne.s32.totalorder %s153, %s169
      %p171 = scmp.eq.s32.totalorder %s21, 0
      %p172 = por %p170, %p171
      %p173 = scmp.le.s32.totalorder 1, %s15
      %p174 = scmp.lt.s32.totalorder %s15, 9
      %p175 = pnand %p173, %p174
      %p176 = pneg %p175
      // Predicated region
      $region9: #{tpu_custom_call.1} parent=5 // pred_check
        _
      $region10: #{tpu_custom_call.1} parent=5 // pred_check_branch
        %178 = sbr.rel (%p175) target = $region12
      $region11: #{tpu_custom_call.1} parent=5 // pred_region
        %s179 = ssub.s32 %s15, 1
        // Predicated region
        $region13: #{tpu_custom_call.1} parent=11 // pred_check
          %p180 = pneg %p74
        $region14: #{tpu_custom_call.1} parent=11 // pred_check_branch
          %182 = sbr.rel (%p180) target = $region16
        $region15: #{tpu_custom_call.1} parent=11 // pred_region
          _
        $region16: #{tpu_custom_call.1} parent=11 // pred_fallthru
          _
        // Predicated region
        $region17: #{tpu_custom_call.1} parent=11 // pred_check
          %p183 = pneg %p95
        $region18: #{tpu_custom_call.1} parent=11 // pred_check_branch
          %185 = sbr.rel (%p183) target = $region20
        $region19: #{tpu_custom_call.1} parent=11 // pred_region
          _
        $region20: #{tpu_custom_call.1} parent=11 // pred_fallthru
          _
        // Predicated region
        $region21: #{tpu_custom_call.1} parent=11 // pred_check
          %p186 = pneg %p116
        $region22: #{tpu_custom_call.1} parent=11 // pred_check_branch
          %188 = sbr.rel (%p186) target = $region24
        $region23: #{tpu_custom_call.1} parent=11 // pred_region
          %190 = vsyncadd [#allocation4], 0
          %s191 = sshll.u32 %s3, 4
          %s192 = int_to_ptr.hbm [resolvable:$true] %s191
          %s193 = sshll.u32 [#allocation3], 4
          %s194 = int_to_ptr.vmem [resolvable:$true] %s193
          %199 = dma.hbm_to_vmem [thread:$0]  %s192, 18432, %s194, [#allocation4], 128, 128, 8
        $region24: #{tpu_custom_call.1} parent=11 // pred_fallthru
          _
        // Predicated region
        $region25: #{tpu_custom_call.1} parent=11 // pred_check
          %p200 = pneg %p137
        $region26: #{tpu_custom_call.1} parent=11 // pred_check_branch
          %202 = sbr.rel (%p200) target = $region28
        $region27: #{tpu_custom_call.1} parent=11 // pred_region
          _
        $region28: #{tpu_custom_call.1} parent=11 // pred_fallthru
          _
      $region12: #{tpu_custom_call.1} parent=5 // pred_fallthru
        _
      %p203 = scmp.lt.s32.totalorder %s15, 8
      // Predicated region
      $region29: #{tpu_custom_call.1} parent=5 // pred_check
        %p204 = pneg %p203
      $region30: #{tpu_custom_call.1} parent=5 // pred_check_branch
        %206 = sbr.rel (%p204) target = $region32
      $region31: #{tpu_custom_call.1} parent=5 // pred_region
        // Predicated region
        $region33: #{tpu_custom_call.1} parent=31 // pred_check
          %p207 = pneg %p47
        $region34: #{tpu_custom_call.1} parent=31 // pred_check_branch
          %209 = sbr.rel (%p207) target = $region36
        $region35: #{tpu_custom_call.1} parent=31 // pred_region
          %p210 = scmp.lt.s32.totalorder %s22, 1
          %s211 = scalar_select %p210, %s22, 1
          %s212 = smul.addr %s211, 60
          %s213 = smul.addr %s212, 8
          %s214 = scalar_lea.vmem %s0, %s213
        $region36: #{tpu_custom_call.1} parent=31 // pred_fallthru
          _
      $region32: #{tpu_custom_call.1} parent=5 // pred_fallthru
        _
      %p215 = scmp.le.s32.totalorder 1, %s15
      %p216 = scmp.lt.s32.totalorder %s15, 9
      %p217 = pnand %p215, %p216
      %p218 = pneg %p217
      // Predicated region
      $region37: #{tpu_custom_call.1} parent=5 // pred_check
        _
      $region38: #{tpu_custom_call.1} parent=5 // pred_check_branch
        %220 = sbr.rel (%p217) target = $region40
      $region39: #{tpu_custom_call.1} parent=5 // pred_region
        %s221 = ssub.s32 %s15, 1
        // Predicated region
        $region41: #{tpu_custom_call.1} parent=39 // pred_check
          %p222 = pneg %p116
        $region42: #{tpu_custom_call.1} parent=39 // pred_check_branch
          %224 = sbr.rel (%p222) target = $region44
        $region43: #{tpu_custom_call.1} parent=39 // pred_region
          %226 = dma.done [#allocation4], 18432
        $region44: #{tpu_custom_call.1} parent=39 // pred_fallthru
          _
        %p227 = scmp.lt.s32.totalorder %s24, 1
        %s228 = scalar_select %p227, %s24, 1
        %s229 = smul.addr %s228, 60
        %s230 = smul.addr %s229, 8
        %s231 = scalar_lea.vmem %s0, %s230
        %p232 = pneg %p53
        %p233 = pneg %p50
        %p234 = pneg %p74
        %p235 = pneg %p71
        %p236 = pneg %p95
        %p237 = pneg %p92
        %p238 = pneg %p116
        %p239 = pneg %p113
        %p240 = pneg %p137
        %p241 = pneg %p134
        %p242 = pneg %p165
        %p243 = pneg %p162
        %s244 = sand.u32 %s152, 1
        %s245 = scalar_lea.sflag [#allocation5], %s244
        %s246 = sand.u32 %s152, 1
        %s247 = smul.addr %s246, 64
        %s248 = scalar_lea.vmem [#allocation6], %s247
        %p249 = scmp.lt.s32.totalorder %s24, 1
        %s250 = scalar_select %p249, %s24, 1
        %s251 = smul.addr %s250, 60
        %s252 = smul.addr %s251, 8
        %s253 = scalar_lea.vmem %s0, %s252
        %s254 = smul.u32 4, %s25
        %s255 = smul.u32 %s25, 4
        %s256 = smul.u32 %s255, 24
        %s257 = scalar_lea.vmem %s253, %s256
        %v258 = vld [vmem:[%s257] sm:$0xff]
        %v259 = vld [vmem:[%s257 + $0x8] sm:$0xff]
        %v260 = vld [vmem:[%s257 + $0x10] sm:$0xf]
        %v261 = vld [vmem:[%s257 + $0x18] sm:$0xff]
        %v262 = vld [vmem:[%s257 + $0x20] sm:$0xff]
        %v263 = vld [vmem:[%s257 + $0x28] sm:$0xf]
        %v264 = vld [vmem:[%s257 + $0x30] sm:$0xff]
        %v265 = vld [vmem:[%s257 + $0x38] sm:$0xff]
        %v266 = vld [vmem:[%s257 + $0x40] sm:$0xf]
        %v267 = vld [vmem:[%s257 + $0x48] sm:$0xff]
        %v268 = vld [vmem:[%s257 + $0x50] sm:$0xff]
        %v269 = vld [vmem:[%s257 + $0x58] sm:$0xf]
        %v270 = vld [vmem:[%s257 + $0x60] sm:$0xff]
        %v271 = vld [vmem:[%s257 + $0x68] sm:$0xff]
        %v272 = vld [vmem:[%s257 + $0x70] sm:$0xf]
        %v273 = vld [vmem:[%s257 + $0x78] sm:$0xff]
        %v274 = vld [vmem:[%s257 + $0x80] sm:$0xff]
        %v275 = vld [vmem:[%s257 + $0x88] sm:$0xf]
        %v276 = vld [vmem:[%s257 + $0x90] sm:$0xff]
        %v277 = vld [vmem:[%s257 + $0x98] sm:$0xff]
        %v278 = vld [vmem:[%s257 + $0xa0] sm:$0xf]
        %v279 = vld [vmem:[%s257 + $0xa8] sm:$0xff]
        %v280 = vld [vmem:[%s257 + $0xb0] sm:$0xff]
        %v281 = vld [vmem:[%s257 + $0xb8] sm:$0xf]
        %v300 = vrot.slane %v258, 2
        %v301 = vrot.slane %v258, 4
        %v302 = vrot.slane %v258, 6
        %v303 = vrot.slane %v259, 2
        %v304 = vrot.slane %v259, 4
        %v305 = vrot.slane %v259, 6
        %v306 = vrot.slane %v261, 2
        %v307 = vrot.slane %v261, 4
        %v308 = vrot.slane %v261, 6
        %v309 = vrot.slane %v262, 2
        %v310 = vrot.slane %v262, 4
        %v311 = vrot.slane %v262, 6
        %v312 = vrot.slane %v264, 2
        %v313 = vrot.slane %v264, 4
        %v314 = vrot.slane %v264, 6
        %v315 = vrot.slane %v265, 2
        %v316 = vrot.slane %v265, 4
        %v317 = vrot.slane %v265, 6
        %v318 = vrot.slane %v267, 2
        %v319 = vrot.slane %v267, 4
        %v320 = vrot.slane %v267, 6
        %v321 = vrot.slane %v268, 2
        %v322 = vrot.slane %v268, 4
        %v323 = vrot.slane %v268, 6
        %v324 = vrot.slane %v270, 2
        %v325 = vrot.slane %v270, 4
        %v326 = vrot.slane %v270, 6
        %v327 = vrot.slane %v271, 2
        %v328 = vrot.slane %v271, 4
        %v329 = vrot.slane %v271, 6
        %v330 = vrot.slane %v273, 2
        %v331 = vrot.slane %v273, 4
        %v332 = vrot.slane %v273, 6
        %v333 = vrot.slane %v274, 2
        %v334 = vrot.slane %v274, 4
        %v335 = vrot.slane %v274, 6
        %v336 = vld [vmem:[%s1] sm:$0xff]
        %v337 = vld [vmem:[%s1 + $0x8] sm:$0xff]
        %v338 = vld [vmem:[%s1 + $0x10] sm:$0xff]
        %v339 = vld [vmem:[%s1 + $0x18] sm:$0xff]
        %v340 = vld [vmem:[%s1 + $0x20] sm:$0xff]
        %v341 = vld [vmem:[%s1 + $0x28] sm:$0xff]
        %v342 = vld [vmem:[%s1 + $0x30] sm:$0xff]
        %v343 = vld [vmem:[%s1 + $0x38] sm:$0xff]
        %v344 = vld [vmem:[%s1 + $0x40] sm:$0xff]
        %v345 = vld [vmem:[%s1 + $0x48] sm:$0xff]
        %v346 = vld [vmem:[%s1 + $0x50] sm:$0xff]
        %v347 = vld [vmem:[%s1 + $0x58] sm:$0xff]
        %v348 = vld [vmem:[%s1 + $0x60] sm:$0xff]
        %v349 = vld [vmem:[%s1 + $0x68] sm:$0xff]
        %v350 = vld [vmem:[%s1 + $0x70] sm:$0xff]
        %v351 = vld [vmem:[%s1 + $0x78] sm:$0xff]
        %v352 = vrot.slane %v260, 2
        %v353 = vrot.slane %v263, 2
        %v354 = vrot.slane %v266, 2
        %v355 = vrot.slane %v269, 2
        %v356 = vrot.slane %v272, 2
        %v357 = vrot.slane %v275, 2
        %vm358 = vcmask 1040384
        %vm359 = vcmask 1042434
        %vm360 = vmor %vm358, %vm359
        %vm361 = vcmask 1044484
        %vm362 = vmor %vm360, %vm361
        %vm363 = vcmask 1046534
        %vm364 = vmor %vm362, %vm363
        %v365 = vrot.slane %v258, 7
        %v366 = vrot.slane %v365, 2
        %v367 = vrot.slane %v300, 7
        %v368 = vsel %vm364, %v366, %v367
        %v369 = vrot.slane %v367, 2
        %v370 = vrot.slane %v301, 7
        %v371 = vsel %vm364, %v369, %v370
        %v372 = vrot.slane %v370, 2
        %v373 = vrot.slane %v302, 7
        %v374 = vsel %vm364, %v372, %v373
        %v375 = vrot.slane %v373, 2
        %v376 = vrot.slane %v259, 7
        %v377 = vsel %vm364, %v375, %v376
        %v378 = vrot.slane %v376, 2
        %v379 = vrot.slane %v303, 7
        %v380 = vsel %vm364, %v378, %v379
        %v381 = vrot.slane %v379, 2
        %v382 = vrot.slane %v304, 7
        %v383 = vsel %vm364, %v381, %v382
        %v384 = vrot.slane %v382, 2
        %v385 = vrot.slane %v305, 7
        %v386 = vsel %vm364, %v384, %v385
        %v387 = vrot.slane %v385, 2
        %v388 = vrot.slane %v260, 7
        %v389 = vsel %vm364, %v387, %v388
        %v390 = vrot.slane %v388, 2
        %v391 = vrot.slane %v352, 7
        %v392 = vsel %vm364, %v390, %v391
        %v393 = vrot.slane %v261, 7
        %v394 = vrot.slane %v393, 2
        %v395 = vrot.slane %v306, 7
        %v396 = vsel %vm364, %v394, %v395
        %v397 = vrot.slane %v395, 2
        %v398 = vrot.slane %v307, 7
        %v399 = vsel %vm364, %v397, %v398
        %v400 = vrot.slane %v398, 2
        %v401 = vrot.slane %v308, 7
        %v402 = vsel %vm364, %v400, %v401
        %v403 = vrot.slane %v401, 2
        %v404 = vrot.slane %v262, 7
        %v405 = vsel %vm364, %v403, %v404
        %v406 = vrot.slane %v404, 2
        %v407 = vrot.slane %v309, 7
        %v408 = vsel %vm364, %v406, %v407
        %v409 = vrot.slane %v407, 2
        %v410 = vrot.slane %v310, 7
        %v411 = vsel %vm364, %v409, %v410
        %v412 = vrot.slane %v410, 2
        %v413 = vrot.slane %v311, 7
        %v414 = vsel %vm364, %v412, %v413
        %v415 = vrot.slane %v413, 2
        %v416 = vrot.slane %v263, 7
        %v417 = vsel %vm364, %v415, %v416
        %v418 = vrot.slane %v416, 2
        %v419 = vrot.slane %v353, 7
        %v420 = vsel %vm364, %v418, %v419
        %v421 = vrot.slane %v264, 7
        %v422 = vrot.slane %v421, 2
        %v423 = vrot.slane %v312, 7
        %v424 = vsel %vm364, %v422, %v423
        %v425 = vrot.slane %v423, 2
        %v426 = vrot.slane %v313, 7
        %v427 = vsel %vm364, %v425, %v426
        %v428 = vrot.slane %v426, 2
        %v429 = vrot.slane %v314, 7
        %v430 = vsel %vm364, %v428, %v429
        %v431 = vrot.slane %v429, 2
        %v432 = vrot.slane %v265, 7
        %v433 = vsel %vm364, %v431, %v432
        %v434 = vrot.slane %v432, 2
        %v435 = vrot.slane %v315, 7
        %v436 = vsel %vm364, %v434, %v435
        %v437 = vrot.slane %v435, 2
        %v438 = vrot.slane %v316, 7
        %v439 = vsel %vm364, %v437, %v438
        %v440 = vrot.slane %v438, 2
        %v441 = vrot.slane %v317, 7
        %v442 = vsel %vm364, %v440, %v441
        %v443 = vrot.slane %v441, 2
        %v444 = vrot.slane %v266, 7
        %v445 = vsel %vm364, %v443, %v444
        %v446 = vrot.slane %v444, 2
        %v447 = vrot.slane %v354, 7
        %v448 = vsel %vm364, %v446, %v447
        %v449 = vrot.slane %v267, 7
        %v450 = vrot.slane %v449, 2
        %v451 = vrot.slane %v318, 7
        %v452 = vsel %vm364, %v450, %v451
        %v453 = vrot.slane %v451, 2
        %v454 = vrot.slane %v319, 7
        %v455 = vsel %vm364, %v453, %v454
        %v456 = vrot.slane %v454, 2
        %v457 = vrot.slane %v320, 7
        %v458 = vsel %vm364, %v456, %v457
        %v459 = vrot.slane %v457, 2
        %v460 = vrot.slane %v268, 7
        %v461 = vsel %vm364, %v459, %v460
        %v462 = vrot.slane %v460, 2
        %v463 = vrot.slane %v321, 7
        %v464 = vsel %vm364, %v462, %v463
        %v465 = vrot.slane %v463, 2
        %v466 = vrot.slane %v322, 7
        %v467 = vsel %vm364, %v465, %v466
        %v468 = vrot.slane %v466, 2
        %v469 = vrot.slane %v323, 7
        %v470 = vsel %vm364, %v468, %v469
        %v471 = vrot.slane %v469, 2
        %v472 = vrot.slane %v269, 7
        %v473 = vsel %vm364, %v471, %v472
        %v474 = vrot.slane %v472, 2
        %v475 = vrot.slane %v355, 7
        %v476 = vsel %vm364, %v474, %v475
        %v477 = vrot.slane %v270, 7
        %v478 = vrot.slane %v477, 2
        %v479 = vrot.slane %v324, 7
        %v480 = vsel %vm364, %v478, %v479
        %v481 = vrot.slane %v479, 2
        %v482 = vrot.slane %v325, 7
        %v483 = vsel %vm364, %v481, %v482
        %v484 = vrot.slane %v482, 2
        %v485 = vrot.slane %v326, 7
        %v486 = vsel %vm364, %v484, %v485
        %v487 = vrot.slane %v485, 2
        %v488 = vrot.slane %v271, 7
        %v489 = vsel %vm364, %v487, %v488
        %v490 = vrot.slane %v488, 2
        %v491 = vrot.slane %v327, 7
        %v492 = vsel %vm364, %v490, %v491
        %v493 = vrot.slane %v491, 2
        %v494 = vrot.slane %v328, 7
        %v495 = vsel %vm364, %v493, %v494
        %v496 = vrot.slane %v494, 2
        %v497 = vrot.slane %v329, 7
        %v498 = vsel %vm364, %v496, %v497
        %v499 = vrot.slane %v497, 2
        %v500 = vrot.slane %v272, 7
        %v501 = vsel %vm364, %v499, %v500
        %v502 = vrot.slane %v500, 2
        %v503 = vrot.slane %v356, 7
        %v504 = vsel %vm364, %v502, %v503
        %v505 = vrot.slane %v273, 7
        %v506 = vrot.slane %v505, 2
        %v507 = vrot.slane %v330, 7
        %v508 = vsel %vm364, %v506, %v507
        %v509 = vrot.slane %v507, 2
        %v510 = vrot.slane %v331, 7
        %v511 = vsel %vm364, %v509, %v510
        %v512 = vrot.slane %v510, 2
        %v513 = vrot.slane %v332, 7
        %v514 = vsel %vm364, %v512, %v513
        %v515 = vrot.slane %v513, 2
        %v516 = vrot.slane %v274, 7
        %v517 = vsel %vm364, %v515, %v516
        %v518 = vrot.slane %v516, 2
        %v519 = vrot.slane %v333, 7
        %v520 = vsel %vm364, %v518, %v519
        %v521 = vrot.slane %v519, 2
        %v522 = vrot.slane %v334, 7
        %v523 = vsel %vm364, %v521, %v522
        %v524 = vrot.slane %v522, 2
        %v525 = vrot.slane %v335, 7
        %v526 = vsel %vm364, %v524, %v525
        %v527 = vrot.slane %v525, 2
        %v528 = vrot.slane %v275, 7
        %v529 = vsel %vm364, %v527, %v528
        %v530 = vrot.slane %v528, 2
        %v531 = vrot.slane %v357, 7
        %v532 = vsel %vm364, %v530, %v531
        %s533 = scalar_lea.vmem %s1, 128
        %v534 = vld [vmem:[%s533] sm:$0xff]
        %v535 = vld [vmem:[%s533 + $0x8] sm:$0xff]
        %v536 = vld [vmem:[%s533 + $0x10] sm:$0xff]
        %v537 = vld [vmem:[%s533 + $0x18] sm:$0xff]
        %v538 = vld [vmem:[%s533 + $0x20] sm:$0xff]
        %v539 = vld [vmem:[%s533 + $0x28] sm:$0xff]
        %v540 = vld [vmem:[%s533 + $0x30] sm:$0xff]
        %v541 = vld [vmem:[%s533 + $0x38] sm:$0xff]
        %v542 = vld [vmem:[%s533 + $0x40] sm:$0xff]
        %v543 = vld [vmem:[%s533 + $0x48] sm:$0xff]
        %v544 = vld [vmem:[%s533 + $0x50] sm:$0xff]
        %v545 = vld [vmem:[%s533 + $0x58] sm:$0xff]
        %v546 = vld [vmem:[%s533 + $0x60] sm:$0xff]
        %v547 = vld [vmem:[%s533 + $0x68] sm:$0xff]
        %v548 = vld [vmem:[%s533 + $0x70] sm:$0xff]
        %v549 = vld [vmem:[%s533 + $0x78] sm:$0xff]
        %550 = vst [vmem:[#allocation1] ss:$4 sm:$0xff] %v368
        %s551 = scalar_lea.vmem [#allocation1], 1
        %552 = vst [vmem:[%s551] ss:$4 sm:$0xff] %v371
        %s553 = scalar_lea.vmem [#allocation1], 2
        %554 = vst [vmem:[%s553] ss:$4 sm:$0xff] %v374
        %s555 = scalar_lea.vmem [#allocation1], 3
        %556 = vst [vmem:[%s555] ss:$4 sm:$0xff] %v377
        %s557 = scalar_lea.vmem [#allocation1], 32
        %558 = vst [vmem:[%s557] ss:$4 sm:$0xff] %v380
        %s559 = scalar_lea.vmem [#allocation1], 33
        %560 = vst [vmem:[%s559] ss:$4 sm:$0xff] %v383
        %s561 = scalar_lea.vmem [#allocation1], 34
        %562 = vst [vmem:[%s561] ss:$4 sm:$0xff] %v386
        %s563 = scalar_lea.vmem [#allocation1], 35
        %564 = vst [vmem:[%s563] ss:$4 sm:$0xff] %v389
        %v565 = vld.sshfl [vmem:[#allocation1] sm:$0xff pattern:$0x73625140]
        %v566 = vld.sshfl [vmem:[#allocation1 + $0x20] sm:$0xff pattern:$0x73625140]
        %567 = vst [vmem:[#allocation1] ss:$4 sm:$0xff] %v392
        %568 = vst [vmem:[%s551] ss:$4 sm:$0xff] %v396
        %569 = vst [vmem:[%s553] ss:$4 sm:$0xff] %v399
        %570 = vst [vmem:[%s555] ss:$4 sm:$0xff] %v402
        %571 = vst [vmem:[%s557] ss:$4 sm:$0xff] %v405
        %572 = vst [vmem:[%s559] ss:$4 sm:$0xff] %v408
        %573 = vst [vmem:[%s561] ss:$4 sm:$0xff] %v411
        %574 = vst [vmem:[%s563] ss:$4 sm:$0xff] %v414
        %v575 = vld.sshfl [vmem:[#allocation1] sm:$0xff pattern:$0x73625140]
        %v576 = vld.sshfl [vmem:[#allocation1 + $0x20] sm:$0xff pattern:$0x73625140]
        %577 = vst [vmem:[#allocation1] ss:$4 sm:$0xff] %v417
        %578 = vst [vmem:[%s551] ss:$4 sm:$0xff] %v420
        %579 = vst [vmem:[%s553] ss:$4 sm:$0xff] %v424
        %580 = vst [vmem:[%s555] ss:$4 sm:$0xff] %v427
        %581 = vst [vmem:[%s557] ss:$4 sm:$0xff] %v430
        %582 = vst [vmem:[%s559] ss:$4 sm:$0xff] %v433
        %583 = vst [vmem:[%s561] ss:$4 sm:$0xff] %v436
        %584 = vst [vmem:[%s563] ss:$4 sm:$0xff] %v439
        %v585 = vld.sshfl [vmem:[#allocation1] sm:$0xff pattern:$0x73625140]
        %v586 = vld.sshfl [vmem:[#allocation1 + $0x20] sm:$0xff pattern:$0x73625140]
        %587 = vst [vmem:[#allocation1] ss:$4 sm:$0xff] %v442
        %588 = vst [vmem:[%s551] ss:$4 sm:$0xff] %v445
        %589 = vst [vmem:[%s553] ss:$4 sm:$0xff] %v448
        %590 = vst [vmem:[%s555] ss:$4 sm:$0xff] %v452
        %591 = vst [vmem:[%s557] ss:$4 sm:$0xff] %v455
        %592 = vst [vmem:[%s559] ss:$4 sm:$0xff] %v458
        %593 = vst [vmem:[%s561] ss:$4 sm:$0xff] %v461
        %594 = vst [vmem:[%s563] ss:$4 sm:$0xff] %v464
        %v595 = vld.sshfl [vmem:[#allocation1] sm:$0xff pattern:$0x73625140]
        %v596 = vld.sshfl [vmem:[#allocation1 + $0x20] sm:$0xff pattern:$0x73625140]
        %597 = vst [vmem:[#allocation1] ss:$4 sm:$0xff] %v467
        %598 = vst [vmem:[%s551] ss:$4 sm:$0xff] %v470
        %599 = vst [vmem:[%s553] ss:$4 sm:$0xff] %v473
        %600 = vst [vmem:[%s555] ss:$4 sm:$0xff] %v476
        %601 = vst [vmem:[%s557] ss:$4 sm:$0xff] %v480
        %602 = vst [vmem:[%s559] ss:$4 sm:$0xff] %v483
        %603 = vst [vmem:[%s561] ss:$4 sm:$0xff] %v486
        %604 = vst [vmem:[%s563] ss:$4 sm:$0xff] %v489
        %v605 = vld.sshfl [vmem:[#allocation1] sm:$0xff pattern:$0x73625140]
        %v606 = vld.sshfl [vmem:[#allocation1 + $0x20] sm:$0xff pattern:$0x73625140]
        %607 = vst [vmem:[#allocation1] ss:$4 sm:$0xff] %v492
        %608 = vst [vmem:[%s551] ss:$4 sm:$0xff] %v495
        %609 = vst [vmem:[%s553] ss:$4 sm:$0xff] %v498
        %610 = vst [vmem:[%s555] ss:$4 sm:$0xff] %v501
        %611 = vst [vmem:[%s557] ss:$4 sm:$0xff] %v504
        %612 = vst [vmem:[%s559] ss:$4 sm:$0xff] %v508
        %613 = vst [vmem:[%s561] ss:$4 sm:$0xff] %v511
        %614 = vst [vmem:[%s563] ss:$4 sm:$0xff] %v514
        %v615 = vld.sshfl [vmem:[#allocation1] sm:$0xff pattern:$0x73625140]
        %v616 = vld.sshfl [vmem:[#allocation1 + $0x20] sm:$0xff pattern:$0x73625140]
        %617 = vst [vmem:[#allocation1] ss:$4 sm:$0xff] %v517
        %618 = vst [vmem:[%s551] ss:$4 sm:$0xff] %v520
        %619 = vst [vmem:[%s553] ss:$4 sm:$0xff] %v523
        %620 = vst [vmem:[%s555] ss:$4 sm:$0xff] %v526
        %621 = vst [vmem:[%s557] ss:$4 sm:$0xff] %v529
        %622 = vst [vmem:[%s559] ss:$4 sm:$0xff] %v532
        %v623 = vld.sshfl [vmem:[#allocation1] sm:$0xff pattern:$0x73625140]
        %v624 = vld.sshfl [vmem:[#allocation1 + $0x20] sm:$0xff pattern:$0x73625140]
        %639 = vmatpush.msra.mxu0 %v549
        %640 = vmatpush.msra.mxu0 %v548
        %641 = vmatpush.msra.mxu0 %v547
        %642 = vmatpush.msra.mxu0 %v546
        %643 = vmatpush.msra.mxu0 %v545
        %644 = vmatpush.msra.mxu0 %v544
        %645 = vmatpush.msra.mxu0 %v543
        %646 = vmatpush.msra.mxu0 %v542
        %647 = vmatpush.msra.mxu0 %v541
        %648 = vmatpush.msra.mxu0 %v540
        %649 = vmatpush.msra.mxu0 %v539
        %650 = vmatpush.msra.mxu0 %v538
        %651 = vmatpush.msra.mxu0 %v537
        %652 = vmatpush.msra.mxu0 %v536
        %653 = vmatpush.msra.mxu0 %v535
        %654 = vmatpush.msra.mxu0 %v534
        %655 = vmatmul.f32.gmra.mxu0 %v565
        %v656 = vpop.f32.mrf.mxu0
        %v657 = vadd.f32 0.0, %v656
        %658 = vmatmul.f32.gmra.mxu0 %v566
        %v659 = vpop.f32.mrf.mxu0
        %v660 = vadd.f32 0.0, %v659
        %661 = vmatmul.f32.gmra.mxu0 %v575
        %v662 = vpop.f32.mrf.mxu0
        %v663 = vadd.f32 0.0, %v662
        %664 = vmatmul.f32.gmra.mxu0 %v576
        %v665 = vpop.f32.mrf.mxu0
        %v666 = vadd.f32 0.0, %v665
        %667 = vmatmul.f32.gmra.mxu0 %v585
        %v668 = vpop.f32.mrf.mxu0
        %v669 = vadd.f32 0.0, %v668
        %670 = vmatmul.f32.gmra.mxu0 %v586
        %v671 = vpop.f32.mrf.mxu0
        %v672 = vadd.f32 0.0, %v671
        %673 = vmatmul.f32.gmra.mxu0 %v595
        %v674 = vpop.f32.mrf.mxu0
        %v675 = vadd.f32 0.0, %v674
        %676 = vmatmul.f32.gmra.mxu0 %v596
        %v677 = vpop.f32.mrf.mxu0
        %v678 = vadd.f32 0.0, %v677
        %679 = vmatmul.f32.gmra.mxu0 %v605
        %v680 = vpop.f32.mrf.mxu0
        %v681 = vadd.f32 0.0, %v680
        %682 = vmatmul.f32.gmra.mxu0 %v606
        %v683 = vpop.f32.mrf.mxu0
        %v684 = vadd.f32 0.0, %v683
        %685 = vmatmul.f32.gmra.mxu0 %v615
        %v686 = vpop.f32.mrf.mxu0
        %v687 = vadd.f32 0.0, %v686
        %688 = vmatmul.f32.gmra.mxu0 %v616
        %v689 = vpop.f32.mrf.mxu0
        %v690 = vadd.f32 0.0, %v689
        %691 = vmatmul.f32.gmra.mxu0 %v623
        %v692 = vpop.f32.mrf.mxu0
        %v693 = vadd.f32 0.0, %v692
        %694 = vmatmul.f32.gmra.mxu0 %v624
        %v695 = vpop.f32.mrf.mxu0
        %v696 = vadd.f32 0.0, %v695
        %697 = vdwg.mxu0
        %698 = vst [vmem:[#allocation1] ss:$4 sm:$0xff] %v258
        %s699 = scalar_lea.vmem [#allocation1], 1
        %700 = vst [vmem:[%s699] ss:$4 sm:$0xff] %v300
        %s701 = scalar_lea.vmem [#allocation1], 2
        %702 = vst [vmem:[%s701] ss:$4 sm:$0xff] %v301
        %s703 = scalar_lea.vmem [#allocation1], 3
        %704 = vst [vmem:[%s703] ss:$4 sm:$0xff] %v302
        %s705 = scalar_lea.vmem [#allocation1], 32
        %706 = vst [vmem:[%s705] ss:$4 sm:$0xff] %v259
        %s707 = scalar_lea.vmem [#allocation1], 33
        %708 = vst [vmem:[%s707] ss:$4 sm:$0xff] %v303
        %s709 = scalar_lea.vmem [#allocation1], 34
        %710 = vst [vmem:[%s709] ss:$4 sm:$0xff] %v304
        %s711 = scalar_lea.vmem [#allocation1], 35
        %712 = vst [vmem:[%s711] ss:$4 sm:$0xff] %v305
        %v713 = vld.sshfl [vmem:[#allocation1] sm:$0xff pattern:$0x73625140]
        %v714 = vld.sshfl [vmem:[#allocation1 + $0x20] sm:$0xff pattern:$0x73625140]
        %715 = vst [vmem:[#allocation1] ss:$4 sm:$0xff] %v260
        %716 = vst [vmem:[%s699] ss:$4 sm:$0xff] %v261
        %717 = vst [vmem:[%s701] ss:$4 sm:$0xff] %v306
        %718 = vst [vmem:[%s703] ss:$4 sm:$0xff] %v307
        %719 = vst [vmem:[%s705] ss:$4 sm:$0xff] %v308
        %720 = vst [vmem:[%s707] ss:$4 sm:$0xff] %v262
        %721 = vst [vmem:[%s709] ss:$4 sm:$0xff] %v309
        %722 = vst [vmem:[%s711] ss:$4 sm:$0xff] %v310
        %v723 = vld.sshfl [vmem:[#allocation1] sm:$0xff pattern:$0x73625140]
        %v724 = vld.sshfl [vmem:[#allocation1 + $0x20] sm:$0xff pattern:$0x73625140]
        %725 = vst [vmem:[#allocation1] ss:$4 sm:$0xff] %v311
        %726 = vst [vmem:[%s699] ss:$4 sm:$0xff] %v263
        %727 = vst [vmem:[%s701] ss:$4 sm:$0xff] %v264
        %728 = vst [vmem:[%s703] ss:$4 sm:$0xff] %v312
        %729 = vst [vmem:[%s705] ss:$4 sm:$0xff] %v313
        %730 = vst [vmem:[%s707] ss:$4 sm:$0xff] %v314
        %731 = vst [vmem:[%s709] ss:$4 sm:$0xff] %v265
        %732 = vst [vmem:[%s711] ss:$4 sm:$0xff] %v315
        %v733 = vld.sshfl [vmem:[#allocation1] sm:$0xff pattern:$0x73625140]
        %v734 = vld.sshfl [vmem:[#allocation1 + $0x20] sm:$0xff pattern:$0x73625140]
        %735 = vst [vmem:[#allocation1] ss:$4 sm:$0xff] %v316
        %736 = vst [vmem:[%s699] ss:$4 sm:$0xff] %v317
        %737 = vst [vmem:[%s701] ss:$4 sm:$0xff] %v266
        %738 = vst [vmem:[%s703] ss:$4 sm:$0xff] %v267
        %739 = vst [vmem:[%s705] ss:$4 sm:$0xff] %v318
        %740 = vst [vmem:[%s707] ss:$4 sm:$0xff] %v319
        %741 = vst [vmem:[%s709] ss:$4 sm:$0xff] %v320
        %742 = vst [vmem:[%s711] ss:$4 sm:$0xff] %v268
        %v743 = vld.sshfl [vmem:[#allocation1] sm:$0xff pattern:$0x73625140]
        %v744 = vld.sshfl [vmem:[#allocation1 + $0x20] sm:$0xff pattern:$0x73625140]
        %745 = vst [vmem:[#allocation1] ss:$4 sm:$0xff] %v321
        %746 = vst [vmem:[%s699] ss:$4 sm:$0xff] %v322
        %747 = vst [vmem:[%s701] ss:$4 sm:$0xff] %v323
        %748 = vst [vmem:[%s703] ss:$4 sm:$0xff] %v269
        %749 = vst [vmem:[%s705] ss:$4 sm:$0xff] %v270
        %750 = vst [vmem:[%s707] ss:$4 sm:$0xff] %v324
        %751 = vst [vmem:[%s709] ss:$4 sm:$0xff] %v325
        %752 = vst [vmem:[%s711] ss:$4 sm:$0xff] %v326
        %v753 = vld.sshfl [vmem:[#allocation1] sm:$0xff pattern:$0x73625140]
        %v754 = vld.sshfl [vmem:[#allocation1 + $0x20] sm:$0xff pattern:$0x73625140]
        %755 = vst [vmem:[#allocation1] ss:$4 sm:$0xff] %v271
        %756 = vst [vmem:[%s699] ss:$4 sm:$0xff] %v327
        %757 = vst [vmem:[%s701] ss:$4 sm:$0xff] %v328
        %758 = vst [vmem:[%s703] ss:$4 sm:$0xff] %v329
        %759 = vst [vmem:[%s705] ss:$4 sm:$0xff] %v272
        %760 = vst [vmem:[%s707] ss:$4 sm:$0xff] %v273
        %761 = vst [vmem:[%s709] ss:$4 sm:$0xff] %v330
        %762 = vst [vmem:[%s711] ss:$4 sm:$0xff] %v331
        %v763 = vld.sshfl [vmem:[#allocation1] sm:$0xff pattern:$0x73625140]
        %v764 = vld.sshfl [vmem:[#allocation1 + $0x20] sm:$0xff pattern:$0x73625140]
        %765 = vst [vmem:[#allocation1] ss:$4 sm:$0xff] %v332
        %766 = vst [vmem:[%s699] ss:$4 sm:$0xff] %v274
        %767 = vst [vmem:[%s701] ss:$4 sm:$0xff] %v333
        %768 = vst [vmem:[%s703] ss:$4 sm:$0xff] %v334
        %769 = vst [vmem:[%s705] ss:$4 sm:$0xff] %v335
        %770 = vst [vmem:[%s707] ss:$4 sm:$0xff] %v275
        %v771 = vld.sshfl [vmem:[#allocation1] sm:$0xff pattern:$0x73625140]
        %v772 = vld.sshfl [vmem:[#allocation1 + $0x20] sm:$0xff pattern:$0x73625140]
        %787 = vmatpush.msra.mxu0 %v351
        %788 = vmatpush.msra.mxu0 %v350
        %789 = vmatpush.msra.mxu0 %v349
        %790 = vmatpush.msra.mxu0 %v348
        %791 = vmatpush.msra.mxu0 %v347
        %792 = vmatpush.msra.mxu0 %v346
        %793 = vmatpush.msra.mxu0 %v345
        %794 = vmatpush.msra.mxu0 %v344
        %795 = vmatpush.msra.mxu0 %v343
        %796 = vmatpush.msra.mxu0 %v342
        %797 = vmatpush.msra.mxu0 %v341
        %798 = vmatpush.msra.mxu0 %v340
        %799 = vmatpush.msra.mxu0 %v339
        %800 = vmatpush.msra.mxu0 %v338
        %801 = vmatpush.msra.mxu0 %v337
        %802 = vmatpush.msra.mxu0 %v336
        %803 = vmatmul.f32.gmra.mxu0 %v713
        %v804 = vpop.f32.mrf.mxu0
        %v805 = vadd.f32 %v657, %v804
        %806 = vmatmul.f32.gmra.mxu0 %v714
        %v807 = vpop.f32.mrf.mxu0
        %v808 = vadd.f32 %v660, %v807
        %809 = vmatmul.f32.gmra.mxu0 %v723
        %v810 = vpop.f32.mrf.mxu0
        %v811 = vadd.f32 %v663, %v810
        %812 = vmatmul.f32.gmra.mxu0 %v724
        %v813 = vpop.f32.mrf.mxu0
        %v814 = vadd.f32 %v666, %v813
        %815 = vmatmul.f32.gmra.mxu0 %v733
        %v816 = vpop.f32.mrf.mxu0
        %v817 = vadd.f32 %v669, %v816
        %818 = vmatmul.f32.gmra.mxu0 %v734
        %v819 = vpop.f32.mrf.mxu0
        %v820 = vadd.f32 %v672, %v819
        %821 = vmatmul.f32.gmra.mxu0 %v743
        %v822 = vpop.f32.mrf.mxu0
        %v823 = vadd.f32 %v675, %v822
        %824 = vmatmul.f32.gmra.mxu0 %v744
        %v825 = vpop.f32.mrf.mxu0
        %v826 = vadd.f32 %v678, %v825
        %827 = vmatmul.f32.gmra.mxu0 %v753
        %v828 = vpop.f32.mrf.mxu0
        %v829 = vadd.f32 %v681, %v828
        %830 = vmatmul.f32.gmra.mxu0 %v754
        %v831 = vpop.f32.mrf.mxu0
        %v832 = vadd.f32 %v684, %v831
        %833 = vmatmul.f32.gmra.mxu0 %v763
        %v834 = vpop.f32.mrf.mxu0
        %v835 = vadd.f32 %v687, %v834
        %836 = vmatmul.f32.gmra.mxu0 %v764
        %v837 = vpop.f32.mrf.mxu0
        %v838 = vadd.f32 %v690, %v837
        %839 = vmatmul.f32.gmra.mxu0 %v771
        %v840 = vpop.f32.mrf.mxu0
        %v841 = vadd.f32 %v693, %v840
        %842 = vmatmul.f32.gmra.mxu0 %v772
        %v843 = vpop.f32.mrf.mxu0
        %v844 = vadd.f32 %v696, %v843
        %845 = vdwg.mxu0
        %846 = vst.sshfl [vmem:[#allocation1] sm:$0xff pattern:$0x73625140] %v258
        %847 = vst.sshfl [vmem:[#allocation1 + $0x20] sm:$0xff pattern:$0x73625140] %v259
        %s848 = scalar_lea.vmem [#allocation1], 1
        %v849 = vld [vmem:[%s848] ss:$4 sm:$0xff]
        %s850 = scalar_lea.vmem [#allocation1], 2
        %v851 = vld [vmem:[%s850] ss:$4 sm:$0xff]
        %s852 = scalar_lea.vmem [#allocation1], 3
        %v853 = vld [vmem:[%s852] ss:$4 sm:$0xff]
        %s854 = scalar_lea.vmem [#allocation1], 32
        %v855 = vld [vmem:[%s854] ss:$4 sm:$0xff]
        %s856 = scalar_lea.vmem [#allocation1], 33
        %v857 = vld [vmem:[%s856] ss:$4 sm:$0xff]
        %s858 = scalar_lea.vmem [#allocation1], 34
        %v859 = vld [vmem:[%s858] ss:$4 sm:$0xff]
        %s860 = scalar_lea.vmem [#allocation1], 35
        %v861 = vld [vmem:[%s860] ss:$4 sm:$0xff]
        %862 = vst.sshfl [vmem:[#allocation1] sm:$0xff pattern:$0x73625140] %v260
        %v863 = vld [vmem:[#allocation1] ss:$4 sm:$0xff]
        %v864 = vld [vmem:[%s848] ss:$4 sm:$0xff]
        %865 = vst.sshfl [vmem:[#allocation1 + $0x20] sm:$0xff pattern:$0x73625140] %v261
        %v866 = vld [vmem:[%s856] ss:$4 sm:$0xff]
        %v867 = vld [vmem:[%s858] ss:$4 sm:$0xff]
        %v868 = vld [vmem:[%s860] ss:$4 sm:$0xff]
        %869 = vst.sshfl [vmem:[#allocation1] sm:$0xff pattern:$0x73625140] %v262
        %870 = vst.sshfl [vmem:[#allocation1 + $0x20] sm:$0xff pattern:$0x73625140] %v263
        %v871 = vld [vmem:[#allocation1] ss:$4 sm:$0xff]
        %v872 = vld [vmem:[%s848] ss:$4 sm:$0xff]
        %v873 = vld [vmem:[%s850] ss:$4 sm:$0xff]
        %v874 = vld [vmem:[%s852] ss:$4 sm:$0xff]
        %v875 = vld [vmem:[%s854] ss:$4 sm:$0xff]
        %v876 = vld [vmem:[%s856] ss:$4 sm:$0xff]
        %877 = vst.sshfl [vmem:[#allocation1] sm:$0xff pattern:$0x73625140] %v264
        %878 = vst.sshfl [vmem:[#allocation1 + $0x20] sm:$0xff pattern:$0x73625140] %v265
        %v879 = vld [vmem:[%s848] ss:$4 sm:$0xff]
        %v880 = vld [vmem:[%s850] ss:$4 sm:$0xff]
        %v881 = vld [vmem:[%s852] ss:$4 sm:$0xff]
        %v882 = vld [vmem:[%s854] ss:$4 sm:$0xff]
        %v883 = vld [vmem:[%s856] ss:$4 sm:$0xff]
        %v884 = vld [vmem:[%s858] ss:$4 sm:$0xff]
        %v885 = vld [vmem:[%s860] ss:$4 sm:$0xff]
        %886 = vst.sshfl [vmem:[#allocation1] sm:$0xff pattern:$0x73625140] %v266
        %v887 = vld [vmem:[#allocation1] ss:$4 sm:$0xff]
        %v888 = vld [vmem:[%s848] ss:$4 sm:$0xff]
        %889 = vst.sshfl [vmem:[#allocation1 + $0x20] sm:$0xff pattern:$0x73625140] %v267
        %v890 = vld [vmem:[%s856] ss:$4 sm:$0xff]
        %v891 = vld [vmem:[%s858] ss:$4 sm:$0xff]
        %v892 = vld [vmem:[%s860] ss:$4 sm:$0xff]
        %893 = vst.sshfl [vmem:[#allocation1] sm:$0xff pattern:$0x73625140] %v268
        %894 = vst.sshfl [vmem:[#allocation1 + $0x20] sm:$0xff pattern:$0x73625140] %v269
        %v895 = vld [vmem:[#allocation1] ss:$4 sm:$0xff]
        %v896 = vld [vmem:[%s848] ss:$4 sm:$0xff]
        %v897 = vld [vmem:[%s850] ss:$4 sm:$0xff]
        %v898 = vld [vmem:[%s852] ss:$4 sm:$0xff]
        %v899 = vld [vmem:[%s854] ss:$4 sm:$0xff]
        %v900 = vld [vmem:[%s856] ss:$4 sm:$0xff]
        %901 = vst.sshfl [vmem:[#allocation1] sm:$0xff pattern:$0x73625140] %v270
        %902 = vst.sshfl [vmem:[#allocation1 + $0x20] sm:$0xff pattern:$0x73625140] %v271
        %v903 = vld [vmem:[%s848] ss:$4 sm:$0xff]
        %v904 = vld [vmem:[%s850] ss:$4 sm:$0xff]
        %v905 = vld [vmem:[%s852] ss:$4 sm:$0xff]
        %v906 = vld [vmem:[%s854] ss:$4 sm:$0xff]
        %v907 = vld [vmem:[%s856] ss:$4 sm:$0xff]
        %v908 = vld [vmem:[%s858] ss:$4 sm:$0xff]
        %v909 = vld [vmem:[%s860] ss:$4 sm:$0xff]
        %910 = vst.sshfl [vmem:[#allocation1] sm:$0xff pattern:$0x73625140] %v272
        %v911 = vld [vmem:[#allocation1] ss:$4 sm:$0xff]
        %v912 = vld [vmem:[%s848] ss:$4 sm:$0xff]
        %913 = vst.sshfl [vmem:[#allocation1 + $0x20] sm:$0xff pattern:$0x73625140] %v273
        %v914 = vld [vmem:[%s856] ss:$4 sm:$0xff]
        %v915 = vld [vmem:[%s858] ss:$4 sm:$0xff]
        %v916 = vld [vmem:[%s860] ss:$4 sm:$0xff]
        %917 = vst.sshfl [vmem:[#allocation1] sm:$0xff pattern:$0x73625140] %v274
        %918 = vst.sshfl [vmem:[#allocation1 + $0x20] sm:$0xff pattern:$0x73625140] %v275
        %v919 = vld [vmem:[#allocation1] ss:$4 sm:$0xff]
        %v920 = vld [vmem:[%s848] ss:$4 sm:$0xff]
        %v921 = vld [vmem:[%s850] ss:$4 sm:$0xff]
        %v922 = vld [vmem:[%s852] ss:$4 sm:$0xff]
        %v923 = vld [vmem:[%s854] ss:$4 sm:$0xff]
        %v924 = vld [vmem:[%s856] ss:$4 sm:$0xff]
        %s925 = scalar_lea.vmem %s1, 256
        %v926 = vld [vmem:[%s925] sm:$0xff]
        %v927 = vld [vmem:[%s925 + $0x8] sm:$0xff]
        %v928 = vld [vmem:[%s925 + $0x10] sm:$0xff]
        %v929 = vld [vmem:[%s925 + $0x18] sm:$0xff]
        %v930 = vld [vmem:[%s925 + $0x20] sm:$0xff]
        %v931 = vld [vmem:[%s925 + $0x28] sm:$0xff]
        %v932 = vld [vmem:[%s925 + $0x30] sm:$0xff]
        %v933 = vld [vmem:[%s925 + $0x38] sm:$0xff]
        %v934 = vld [vmem:[%s925 + $0x40] sm:$0xff]
        %v935 = vld [vmem:[%s925 + $0x48] sm:$0xff]
        %v936 = vld [vmem:[%s925 + $0x50] sm:$0xff]
        %v937 = vld [vmem:[%s925 + $0x58] sm:$0xff]
        %v938 = vld [vmem:[%s925 + $0x60] sm:$0xff]
        %v939 = vld [vmem:[%s925 + $0x68] sm:$0xff]
        %v940 = vld [vmem:[%s925 + $0x70] sm:$0xff]
        %v941 = vld [vmem:[%s925 + $0x78] sm:$0xff]
        %942 = vst [vmem:[#allocation1] ss:$4 sm:$0xff] %v849
        %s943 = scalar_lea.vmem [#allocation1], 1
        %944 = vst [vmem:[%s943] ss:$4 sm:$0xff] %v851
        %s945 = scalar_lea.vmem [#allocation1], 2
        %946 = vst [vmem:[%s945] ss:$4 sm:$0xff] %v853
        %s947 = scalar_lea.vmem [#allocation1], 3
        %948 = vst [vmem:[%s947] ss:$4 sm:$0xff] %v855
        %s949 = scalar_lea.vmem [#allocation1], 32
        %950 = vst [vmem:[%s949] ss:$4 sm:$0xff] %v857
        %s951 = scalar_lea.vmem [#allocation1], 33
        %952 = vst [vmem:[%s951] ss:$4 sm:$0xff] %v859
        %s953 = scalar_lea.vmem [#allocation1], 34
        %954 = vst [vmem:[%s953] ss:$4 sm:$0xff] %v861
        %s955 = scalar_lea.vmem [#allocation1], 35
        %956 = vst [vmem:[%s955] ss:$4 sm:$0xff] %v863
        %v957 = vld.sshfl [vmem:[#allocation1] sm:$0xff pattern:$0x73625140]
        %v958 = vld.sshfl [vmem:[#allocation1 + $0x20] sm:$0xff pattern:$0x73625140]
        %959 = vst [vmem:[#allocation1] ss:$4 sm:$0xff] %v864
        %960 = vst [vmem:[%s943] ss:$4 sm:$0xff] %v866
        %961 = vst [vmem:[%s945] ss:$4 sm:$0xff] %v867
        %962 = vst [vmem:[%s947] ss:$4 sm:$0xff] %v868
        %963 = vst [vmem:[%s949] ss:$4 sm:$0xff] %v871
        %964 = vst [vmem:[%s951] ss:$4 sm:$0xff] %v872
        %965 = vst [vmem:[%s953] ss:$4 sm:$0xff] %v873
        %966 = vst [vmem:[%s955] ss:$4 sm:$0xff] %v874
        %v967 = vld.sshfl [vmem:[#allocation1] sm:$0xff pattern:$0x73625140]
        %v968 = vld.sshfl [vmem:[#allocation1 + $0x20] sm:$0xff pattern:$0x73625140]
        %969 = vst [vmem:[#allocation1] ss:$4 sm:$0xff] %v875
        %970 = vst [vmem:[%s943] ss:$4 sm:$0xff] %v876
        %971 = vst [vmem:[%s945] ss:$4 sm:$0xff] %v879
        %972 = vst [vmem:[%s947] ss:$4 sm:$0xff] %v880
        %973 = vst [vmem:[%s949] ss:$4 sm:$0xff] %v881
        %974 = vst [vmem:[%s951] ss:$4 sm:$0xff] %v882
        %975 = vst [vmem:[%s953] ss:$4 sm:$0xff] %v883
        %976 = vst [vmem:[%s955] ss:$4 sm:$0xff] %v884
        %v977 = vld.sshfl [vmem:[#allocation1] sm:$0xff pattern:$0x73625140]
        %v978 = vld.sshfl [vmem:[#allocation1 + $0x20] sm:$0xff pattern:$0x73625140]
        %979 = vst [vmem:[#allocation1] ss:$4 sm:$0xff] %v885
        %980 = vst [vmem:[%s943] ss:$4 sm:$0xff] %v887
        %981 = vst [vmem:[%s945] ss:$4 sm:$0xff] %v888
        %982 = vst [vmem:[%s947] ss:$4 sm:$0xff] %v890
        %983 = vst [vmem:[%s949] ss:$4 sm:$0xff] %v891
        %984 = vst [vmem:[%s951] ss:$4 sm:$0xff] %v892
        %985 = vst [vmem:[%s953] ss:$4 sm:$0xff] %v895
        %986 = vst [vmem:[%s955] ss:$4 sm:$0xff] %v896
        %v987 = vld.sshfl [vmem:[#allocation1] sm:$0xff pattern:$0x73625140]
        %v988 = vld.sshfl [vmem:[#allocation1 + $0x20] sm:$0xff pattern:$0x73625140]
        %989 = vst [vmem:[#allocation1] ss:$4 sm:$0xff] %v897
        %990 = vst [vmem:[%s943] ss:$4 sm:$0xff] %v898
        %991 = vst [vmem:[%s945] ss:$4 sm:$0xff] %v899
        %992 = vst [vmem:[%s947] ss:$4 sm:$0xff] %v900
        %993 = vst [vmem:[%s949] ss:$4 sm:$0xff] %v903
        %994 = vst [vmem:[%s951] ss:$4 sm:$0xff] %v904
        %995 = vst [vmem:[%s953] ss:$4 sm:$0xff] %v905
        %996 = vst [vmem:[%s955] ss:$4 sm:$0xff] %v906
        %v997 = vld.sshfl [vmem:[#allocation1] sm:$0xff pattern:$0x73625140]
        %v998 = vld.sshfl [vmem:[#allocation1 + $0x20] sm:$0xff pattern:$0x73625140]
        %999 = vst [vmem:[#allocation1] ss:$4 sm:$0xff] %v907
        %1000 = vst [vmem:[%s943] ss:$4 sm:$0xff] %v908
        %1001 = vst [vmem:[%s945] ss:$4 sm:$0xff] %v909
        %1002 = vst [vmem:[%s947] ss:$4 sm:$0xff] %v911
        %1003 = vst [vmem:[%s949] ss:$4 sm:$0xff] %v912
        %1004 = vst [vmem:[%s951] ss:$4 sm:$0xff] %v914
        %1005 = vst [vmem:[%s953] ss:$4 sm:$0xff] %v915
        %1006 = vst [vmem:[%s955] ss:$4 sm:$0xff] %v916
        %v1007 = vld.sshfl [vmem:[#allocation1] sm:$0xff pattern:$0x73625140]
        %v1008 = vld.sshfl [vmem:[#allocation1 + $0x20] sm:$0xff pattern:$0x73625140]
        %1009 = vst [vmem:[#allocation1] ss:$4 sm:$0xff] %v919
        %1010 = vst [vmem:[%s943] ss:$4 sm:$0xff] %v920
        %1011 = vst [vmem:[%s945] ss:$4 sm:$0xff] %v921
        %1012 = vst [vmem:[%s947] ss:$4 sm:$0xff] %v922
        %1013 = vst [vmem:[%s949] ss:$4 sm:$0xff] %v923
        %1014 = vst [vmem:[%s951] ss:$4 sm:$0xff] %v924
        %v1015 = vld.sshfl [vmem:[#allocation1] sm:$0xff pattern:$0x73625140]
        %v1016 = vld.sshfl [vmem:[#allocation1 + $0x20] sm:$0xff pattern:$0x73625140]
        %1031 = vmatpush.msra.mxu0 %v941
        %1032 = vmatpush.msra.mxu0 %v940
        %1033 = vmatpush.msra.mxu0 %v939
        %1034 = vmatpush.msra.mxu0 %v938
        %1035 = vmatpush.msra.mxu0 %v937
        %1036 = vmatpush.msra.mxu0 %v936
        %1037 = vmatpush.msra.mxu0 %v935
        %1038 = vmatpush.msra.mxu0 %v934
        %1039 = vmatpush.msra.mxu0 %v933
        %1040 = vmatpush.msra.mxu0 %v932
        %1041 = vmatpush.msra.mxu0 %v931
        %1042 = vmatpush.msra.mxu0 %v930
        %1043 = vmatpush.msra.mxu0 %v929
        %1044 = vmatpush.msra.mxu0 %v928
        %1045 = vmatpush.msra.mxu0 %v927
        %1046 = vmatpush.msra.mxu0 %v926
        %1047 = vmatmul.f32.gmra.mxu0 %v957
        %v1048 = vpop.f32.mrf.mxu0
        %v1049 = vadd.f32 0.0, %v1048
        %1050 = vmatmul.f32.gmra.mxu0 %v958
        %v1051 = vpop.f32.mrf.mxu0
        %v1052 = vadd.f32 0.0, %v1051
        %1053 = vmatmul.f32.gmra.mxu0 %v967
        %v1054 = vpop.f32.mrf.mxu0
        %v1055 = vadd.f32 0.0, %v1054
        %1056 = vmatmul.f32.gmra.mxu0 %v968
        %v1057 = vpop.f32.mrf.mxu0
        %v1058 = vadd.f32 0.0, %v1057
        %1059 = vmatmul.f32.gmra.mxu0 %v977
        %v1060 = vpop.f32.mrf.mxu0
        %v1061 = vadd.f32 0.0, %v1060
        %1062 = vmatmul.f32.gmra.mxu0 %v978
        %v1063 = vpop.f32.mrf.mxu0
        %v1064 = vadd.f32 0.0, %v1063
        %1065 = vmatmul.f32.gmra.mxu0 %v987
        %v1066 = vpop.f32.mrf.mxu0
        %v1067 = vadd.f32 0.0, %v1066
        %1068 = vmatmul.f32.gmra.mxu0 %v988
        %v1069 = vpop.f32.mrf.mxu0
        %v1070 = vadd.f32 0.0, %v1069
        %1071 = vmatmul.f32.gmra.mxu0 %v997
        %v1072 = vpop.f32.mrf.mxu0
        %v1073 = vadd.f32 0.0, %v1072
        %1074 = vmatmul.f32.gmra.mxu0 %v998
        %v1075 = vpop.f32.mrf.mxu0
        %v1076 = vadd.f32 0.0, %v1075
        %1077 = vmatmul.f32.gmra.mxu0 %v1007
        %v1078 = vpop.f32.mrf.mxu0
        %v1079 = vadd.f32 0.0, %v1078
        %1080 = vmatmul.f32.gmra.mxu0 %v1008
        %v1081 = vpop.f32.mrf.mxu0
        %v1082 = vadd.f32 0.0, %v1081
        %1083 = vmatmul.f32.gmra.mxu0 %v1015
        %v1084 = vpop.f32.mrf.mxu0
        %v1085 = vadd.f32 0.0, %v1084
        %1086 = vmatmul.f32.gmra.mxu0 %v1016
        %v1087 = vpop.f32.mrf.mxu0
        %v1088 = vadd.f32 0.0, %v1087
        %1089 = vdwg.mxu0
        %v1090 = vadd.f32 %v805, %v1049
        %v1091 = vadd.f32 %v808, %v1052
        %v1092 = vadd.f32 %v811, %v1055
        %v1093 = vadd.f32 %v814, %v1058
        %v1094 = vadd.f32 %v817, %v1061
        %v1095 = vadd.f32 %v820, %v1064
        %v1096 = vadd.f32 %v823, %v1067
        %v1097 = vadd.f32 %v826, %v1070
        %v1098 = vadd.f32 %v829, %v1073
        %v1099 = vadd.f32 %v832, %v1076
        %v1100 = vadd.f32 %v835, %v1079
        %v1101 = vadd.f32 %v838, %v1082
        %v1102 = vadd.f32 %v841, %v1085
        %v1103 = vadd.f32 %v844, %v1088
        %v1107 = vrot.slane %v276, 2
        %v1108 = vrot.slane %v276, 4
        %v1109 = vrot.slane %v276, 6
        %v1110 = vrot.slane %v277, 2
        %v1111 = vrot.slane %v277, 4
        %v1112 = vrot.slane %v277, 6
        %s1113 = scalar_lea.vmem %s1, 384
        %v1114 = vld [vmem:[%s1113] sm:$0xff]
        %v1115 = vld [vmem:[%s1113 + $0x8] sm:$0xff]
        %v1116 = vld [vmem:[%s1113 + $0x10] sm:$0xff]
        %v1117 = vld [vmem:[%s1113 + $0x18] sm:$0xff]
        %v1118 = vld [vmem:[%s1113 + $0x20] sm:$0xff]
        %v1119 = vld [vmem:[%s1113 + $0x28] sm:$0xff]
        %v1120 = vld [vmem:[%s1113 + $0x30] sm:$0xff]
        %v1121 = vld [vmem:[%s1113 + $0x38] sm:$0xff]
        %v1122 = vld [vmem:[%s1113 + $0x40] sm:$0xff]
        %v1123 = vld [vmem:[%s1113 + $0x48] sm:$0xff]
        %v1124 = vld [vmem:[%s1113 + $0x50] sm:$0xff]
        %v1125 = vld [vmem:[%s1113 + $0x58] sm:$0xff]
        %v1126 = vld [vmem:[%s1113 + $0x60] sm:$0xff]
        %v1127 = vld [vmem:[%s1113 + $0x68] sm:$0xff]
        %v1128 = vld [vmem:[%s1113 + $0x70] sm:$0xff]
        %v1129 = vld [vmem:[%s1113 + $0x78] sm:$0xff]
        %1130 = vst [vmem:[#allocation1] ss:$4 sm:$0xff] %v261
        %s1131 = scalar_lea.vmem [#allocation1], 1
        %1132 = vst [vmem:[%s1131] ss:$4 sm:$0xff] %v306
        %s1133 = scalar_lea.vmem [#allocation1], 2
        %1134 = vst [vmem:[%s1133] ss:$4 sm:$0xff] %v307
        %s1135 = scalar_lea.vmem [#allocation1], 3
        %1136 = vst [vmem:[%s1135] ss:$4 sm:$0xff] %v308
        %s1137 = scalar_lea.vmem [#allocation1], 32
        %1138 = vst [vmem:[%s1137] ss:$4 sm:$0xff] %v262
        %s1139 = scalar_lea.vmem [#allocation1], 33
        %1140 = vst [vmem:[%s1139] ss:$4 sm:$0xff] %v309
        %s1141 = scalar_lea.vmem [#allocation1], 34
        %1142 = vst [vmem:[%s1141] ss:$4 sm:$0xff] %v310
        %s1143 = scalar_lea.vmem [#allocation1], 35
        %1144 = vst [vmem:[%s1143] ss:$4 sm:$0xff] %v311
        %v1145 = vld.sshfl [vmem:[#allocation1] sm:$0xff pattern:$0x73625140]
        %v1146 = vld.sshfl [vmem:[#allocation1 + $0x20] sm:$0xff pattern:$0x73625140]
        %1147 = vst [vmem:[#allocation1] ss:$4 sm:$0xff] %v263
        %1148 = vst [vmem:[%s1131] ss:$4 sm:$0xff] %v264
        %1149 = vst [vmem:[%s1133] ss:$4 sm:$0xff] %v312
        %1150 = vst [vmem:[%s1135] ss:$4 sm:$0xff] %v313
        %1151 = vst [vmem:[%s1137] ss:$4 sm:$0xff] %v314
        %1152 = vst [vmem:[%s1139] ss:$4 sm:$0xff] %v265
        %1153 = vst [vmem:[%s1141] ss:$4 sm:$0xff] %v315
        %1154 = vst [vmem:[%s1143] ss:$4 sm:$0xff] %v316
        %v1155 = vld.sshfl [vmem:[#allocation1] sm:$0xff pattern:$0x73625140]
        %v1156 = vld.sshfl [vmem:[#allocation1 + $0x20] sm:$0xff pattern:$0x73625140]
        %1157 = vst [vmem:[#allocation1] ss:$4 sm:$0xff] %v317
        %1158 = vst [vmem:[%s1131] ss:$4 sm:$0xff] %v266
        %1159 = vst [vmem:[%s1133] ss:$4 sm:$0xff] %v267
        %1160 = vst [vmem:[%s1135] ss:$4 sm:$0xff] %v318
        %1161 = vst [vmem:[%s1137] ss:$4 sm:$0xff] %v319
        %1162 = vst [vmem:[%s1139] ss:$4 sm:$0xff] %v320
        %1163 = vst [vmem:[%s1141] ss:$4 sm:$0xff] %v268
        %1164 = vst [vmem:[%s1143] ss:$4 sm:$0xff] %v321
        %v1165 = vld.sshfl [vmem:[#allocation1] sm:$0xff pattern:$0x73625140]
        %v1166 = vld.sshfl [vmem:[#allocation1 + $0x20] sm:$0xff pattern:$0x73625140]
        %1167 = vst [vmem:[#allocation1] ss:$4 sm:$0xff] %v322
        %1168 = vst [vmem:[%s1131] ss:$4 sm:$0xff] %v323
        %1169 = vst [vmem:[%s1133] ss:$4 sm:$0xff] %v269
        %1170 = vst [vmem:[%s1135] ss:$4 sm:$0xff] %v270
        %1171 = vst [vmem:[%s1137] ss:$4 sm:$0xff] %v324
        %1172 = vst [vmem:[%s1139] ss:$4 sm:$0xff] %v325
        %1173 = vst [vmem:[%s1141] ss:$4 sm:$0xff] %v326
        %1174 = vst [vmem:[%s1143] ss:$4 sm:$0xff] %v271
        %v1175 = vld.sshfl [vmem:[#allocation1] sm:$0xff pattern:$0x73625140]
        %v1176 = vld.sshfl [vmem:[#allocation1 + $0x20] sm:$0xff pattern:$0x73625140]
        %1177 = vst [vmem:[#allocation1] ss:$4 sm:$0xff] %v327
        %1178 = vst [vmem:[%s1131] ss:$4 sm:$0xff] %v328
        %1179 = vst [vmem:[%s1133] ss:$4 sm:$0xff] %v329
        %1180 = vst [vmem:[%s1135] ss:$4 sm:$0xff] %v272
        %1181 = vst [vmem:[%s1137] ss:$4 sm:$0xff] %v273
        %1182 = vst [vmem:[%s1139] ss:$4 sm:$0xff] %v330
        %1183 = vst [vmem:[%s1141] ss:$4 sm:$0xff] %v331
        %1184 = vst [vmem:[%s1143] ss:$4 sm:$0xff] %v332
        %v1185 = vld.sshfl [vmem:[#allocation1] sm:$0xff pattern:$0x73625140]
        %v1186 = vld.sshfl [vmem:[#allocation1 + $0x20] sm:$0xff pattern:$0x73625140]
        %1187 = vst [vmem:[#allocation1] ss:$4 sm:$0xff] %v274
        %1188 = vst [vmem:[%s1131] ss:$4 sm:$0xff] %v333
        %1189 = vst [vmem:[%s1133] ss:$4 sm:$0xff] %v334
        %1190 = vst [vmem:[%s1135] ss:$4 sm:$0xff] %v335
        %1191 = vst [vmem:[%s1137] ss:$4 sm:$0xff] %v275
        %1192 = vst [vmem:[%s1139] ss:$4 sm:$0xff] %v276
        %1193 = vst [vmem:[%s1141] ss:$4 sm:$0xff] %v1107
        %1194 = vst [vmem:[%s1143] ss:$4 sm:$0xff] %v1108
        %v1195 = vld.sshfl [vmem:[#allocation1] sm:$0xff pattern:$0x73625140]
        %v1196 = vld.sshfl [vmem:[#allocation1 + $0x20] sm:$0xff pattern:$0x73625140]
        %1197 = vst [vmem:[#allocation1] ss:$4 sm:$0xff] %v1109
        %1198 = vst [vmem:[%s1131] ss:$4 sm:$0xff] %v277
        %1199 = vst [vmem:[%s1133] ss:$4 sm:$0xff] %v1110
        %1200 = vst [vmem:[%s1135] ss:$4 sm:$0xff] %v1111
        %1201 = vst [vmem:[%s1137] ss:$4 sm:$0xff] %v1112
        %1202 = vst [vmem:[%s1139] ss:$4 sm:$0xff] %v278
        %v1203 = vld.sshfl [vmem:[#allocation1] sm:$0xff pattern:$0x73625140]
        %v1204 = vld.sshfl [vmem:[#allocation1 + $0x20] sm:$0xff pattern:$0x73625140]
        %1219 = vmatpush.msra.mxu0 %v1129
        %1220 = vmatpush.msra.mxu0 %v1128
        %1221 = vmatpush.msra.mxu0 %v1127
        %1222 = vmatpush.msra.mxu0 %v1126
        %1223 = vmatpush.msra.mxu0 %v1125
        %1224 = vmatpush.msra.mxu0 %v1124
        %1225 = vmatpush.msra.mxu0 %v1123
        %1226 = vmatpush.msra.mxu0 %v1122
        %1227 = vmatpush.msra.mxu0 %v1121
        %1228 = vmatpush.msra.mxu0 %v1120
        %1229 = vmatpush.msra.mxu0 %v1119
        %1230 = vmatpush.msra.mxu0 %v1118
        %1231 = vmatpush.msra.mxu0 %v1117
        %1232 = vmatpush.msra.mxu0 %v1116
        %1233 = vmatpush.msra.mxu0 %v1115
        %1234 = vmatpush.msra.mxu0 %v1114
        %1235 = vmatmul.f32.gmra.mxu0 %v1145
        %v1236 = vpop.f32.mrf.mxu0
        %v1237 = vadd.f32 0.0, %v1236
        %1238 = vmatmul.f32.gmra.mxu0 %v1146
        %v1239 = vpop.f32.mrf.mxu0
        %v1240 = vadd.f32 0.0, %v1239
        %1241 = vmatmul.f32.gmra.mxu0 %v1155
        %v1242 = vpop.f32.mrf.mxu0
        %v1243 = vadd.f32 0.0, %v1242
        %1244 = vmatmul.f32.gmra.mxu0 %v1156
        %v1245 = vpop.f32.mrf.mxu0
        %v1246 = vadd.f32 0.0, %v1245
        %1247 = vmatmul.f32.gmra.mxu0 %v1165
        %v1248 = vpop.f32.mrf.mxu0
        %v1249 = vadd.f32 0.0, %v1248
        %1250 = vmatmul.f32.gmra.mxu0 %v1166
        %v1251 = vpop.f32.mrf.mxu0
        %v1252 = vadd.f32 0.0, %v1251
        %1253 = vmatmul.f32.gmra.mxu0 %v1175
        %v1254 = vpop.f32.mrf.mxu0
        %v1255 = vadd.f32 0.0, %v1254
        %1256 = vmatmul.f32.gmra.mxu0 %v1176
        %v1257 = vpop.f32.mrf.mxu0
        %v1258 = vadd.f32 0.0, %v1257
        %1259 = vmatmul.f32.gmra.mxu0 %v1185
        %v1260 = vpop.f32.mrf.mxu0
        %v1261 = vadd.f32 0.0, %v1260
        %1262 = vmatmul.f32.gmra.mxu0 %v1186
        %v1263 = vpop.f32.mrf.mxu0
        %v1264 = vadd.f32 0.0, %v1263
        %1265 = vmatmul.f32.gmra.mxu0 %v1195
        %v1266 = vpop.f32.mrf.mxu0
        %v1267 = vadd.f32 0.0, %v1266
        %1268 = vmatmul.f32.gmra.mxu0 %v1196
        %v1269 = vpop.f32.mrf.mxu0
        %v1270 = vadd.f32 0.0, %v1269
        %1271 = vmatmul.f32.gmra.mxu0 %v1203
        %v1272 = vpop.f32.mrf.mxu0
        %v1273 = vadd.f32 0.0, %v1272
        %1274 = vmatmul.f32.gmra.mxu0 %v1204
        %v1275 = vpop.f32.mrf.mxu0
        %v1276 = vadd.f32 0.0, %v1275
        %1277 = vdwg.mxu0
        %v1278 = vadd.f32 %v1090, %v1237
        %v1279 = vadd.f32 %v1091, %v1240
        %v1280 = vadd.f32 %v1092, %v1243
        %v1281 = vadd.f32 %v1093, %v1246
        %v1282 = vadd.f32 %v1094, %v1249
        %v1283 = vadd.f32 %v1095, %v1252
        %v1284 = vadd.f32 %v1096, %v1255
        %v1285 = vadd.f32 %v1097, %v1258
        %v1286 = vadd.f32 %v1098, %v1261
        %v1287 = vadd.f32 %v1099, %v1264
        %v1288 = vadd.f32 %v1100, %v1267
        %v1289 = vadd.f32 %v1101, %v1270
        %v1290 = vadd.f32 %v1102, %v1273
        %v1291 = vadd.f32 %v1103, %v1276
        %v1292 = vrot.slane %v278, 2
        %v1293 = vrot.slane %v276, 7
        %v1294 = vrot.slane %v1293, 2
        %v1295 = vrot.slane %v1107, 7
        %v1296 = vsel %vm364, %v1294, %v1295
        %v1297 = vrot.slane %v1295, 2
        %v1298 = vrot.slane %v1108, 7
        %v1299 = vsel %vm364, %v1297, %v1298
        %v1300 = vrot.slane %v1298, 2
        %v1301 = vrot.slane %v1109, 7
        %v1302 = vsel %vm364, %v1300, %v1301
        %v1303 = vrot.slane %v1301, 2
        %v1304 = vrot.slane %v277, 7
        %v1305 = vsel %vm364, %v1303, %v1304
        %v1306 = vrot.slane %v1304, 2
        %v1307 = vrot.slane %v1110, 7
        %v1308 = vsel %vm364, %v1306, %v1307
        %v1309 = vrot.slane %v1307, 2
        %v1310 = vrot.slane %v1111, 7
        %v1311 = vsel %vm364, %v1309, %v1310
        %v1312 = vrot.slane %v1310, 2
        %v1313 = vrot.slane %v1112, 7
        %v1314 = vsel %vm364, %v1312, %v1313
        %v1315 = vrot.slane %v1313, 2
        %v1316 = vrot.slane %v278, 7
        %v1317 = vsel %vm364, %v1315, %v1316
        %v1318 = vrot.slane %v1316, 2
        %v1319 = vrot.slane %v1292, 7
        %v1320 = vsel %vm364, %v1318, %v1319
        %s1321 = scalar_lea.vmem %s1, 512
        %v1322 = vld [vmem:[%s1321] sm:$0xff]
        %v1323 = vld [vmem:[%s1321 + $0x8] sm:$0xff]
        %v1324 = vld [vmem:[%s1321 + $0x10] sm:$0xff]
        %v1325 = vld [vmem:[%s1321 + $0x18] sm:$0xff]
        %v1326 = vld [vmem:[%s1321 + $0x20] sm:$0xff]
        %v1327 = vld [vmem:[%s1321 + $0x28] sm:$0xff]
        %v1328 = vld [vmem:[%s1321 + $0x30] sm:$0xff]
        %v1329 = vld [vmem:[%s1321 + $0x38] sm:$0xff]
        %v1330 = vld [vmem:[%s1321 + $0x40] sm:$0xff]
        %v1331 = vld [vmem:[%s1321 + $0x48] sm:$0xff]
        %v1332 = vld [vmem:[%s1321 + $0x50] sm:$0xff]
        %v1333 = vld [vmem:[%s1321 + $0x58] sm:$0xff]
        %v1334 = vld [vmem:[%s1321 + $0x60] sm:$0xff]
        %v1335 = vld [vmem:[%s1321 + $0x68] sm:$0xff]
        %v1336 = vld [vmem:[%s1321 + $0x70] sm:$0xff]
        %v1337 = vld [vmem:[%s1321 + $0x78] sm:$0xff]
        %1338 = vst [vmem:[#allocation1] ss:$4 sm:$0xff] %v396
        %s1339 = scalar_lea.vmem [#allocation1], 1
        %1340 = vst [vmem:[%s1339] ss:$4 sm:$0xff] %v399
        %s1341 = scalar_lea.vmem [#allocation1], 2
        %1342 = vst [vmem:[%s1341] ss:$4 sm:$0xff] %v402
        %s1343 = scalar_lea.vmem [#allocation1], 3
        %1344 = vst [vmem:[%s1343] ss:$4 sm:$0xff] %v405
        %s1345 = scalar_lea.vmem [#allocation1], 32
        %1346 = vst [vmem:[%s1345] ss:$4 sm:$0xff] %v408
        %s1347 = scalar_lea.vmem [#allocation1], 33
        %1348 = vst [vmem:[%s1347] ss:$4 sm:$0xff] %v411
        %s1349 = scalar_lea.vmem [#allocation1], 34
        %1350 = vst [vmem:[%s1349] ss:$4 sm:$0xff] %v414
        %s1351 = scalar_lea.vmem [#allocation1], 35
        %1352 = vst [vmem:[%s1351] ss:$4 sm:$0xff] %v417
        %v1353 = vld.sshfl [vmem:[#allocation1] sm:$0xff pattern:$0x73625140]
        %v1354 = vld.sshfl [vmem:[#allocation1 + $0x20] sm:$0xff pattern:$0x73625140]
        %1355 = vst [vmem:[#allocation1] ss:$4 sm:$0xff] %v420
        %1356 = vst [vmem:[%s1339] ss:$4 sm:$0xff] %v424
        %1357 = vst [vmem:[%s1341] ss:$4 sm:$0xff] %v427
        %1358 = vst [vmem:[%s1343] ss:$4 sm:$0xff] %v430
        %1359 = vst [vmem:[%s1345] ss:$4 sm:$0xff] %v433
        %1360 = vst [vmem:[%s1347] ss:$4 sm:$0xff] %v436
        %1361 = vst [vmem:[%s1349] ss:$4 sm:$0xff] %v439
        %1362 = vst [vmem:[%s1351] ss:$4 sm:$0xff] %v442
        %v1363 = vld.sshfl [vmem:[#allocation1] sm:$0xff pattern:$0x73625140]
        %v1364 = vld.sshfl [vmem:[#allocation1 + $0x20] sm:$0xff pattern:$0x73625140]
        %1365 = vst [vmem:[#allocation1] ss:$4 sm:$0xff] %v445
        %1366 = vst [vmem:[%s1339] ss:$4 sm:$0xff] %v448
        %1367 = vst [vmem:[%s1341] ss:$4 sm:$0xff] %v452
        %1368 = vst [vmem:[%s1343] ss:$4 sm:$0xff] %v455
        %1369 = vst [vmem:[%s1345] ss:$4 sm:$0xff] %v458
        %1370 = vst [vmem:[%s1347] ss:$4 sm:$0xff] %v461
        %1371 = vst [vmem:[%s1349] ss:$4 sm:$0xff] %v464
        %1372 = vst [vmem:[%s1351] ss:$4 sm:$0xff] %v467
        %v1373 = vld.sshfl [vmem:[#allocation1] sm:$0xff pattern:$0x73625140]
        %v1374 = vld.sshfl [vmem:[#allocation1 + $0x20] sm:$0xff pattern:$0x73625140]
        %1375 = vst [vmem:[#allocation1] ss:$4 sm:$0xff] %v470
        %1376 = vst [vmem:[%s1339] ss:$4 sm:$0xff] %v473
        %1377 = vst [vmem:[%s1341] ss:$4 sm:$0xff] %v476
        %1378 = vst [vmem:[%s1343] ss:$4 sm:$0xff] %v480
        %1379 = vst [vmem:[%s1345] ss:$4 sm:$0xff] %v483
        %1380 = vst [vmem:[%s1347] ss:$4 sm:$0xff] %v486
        %1381 = vst [vmem:[%s1349] ss:$4 sm:$0xff] %v489
        %1382 = vst [vmem:[%s1351] ss:$4 sm:$0xff] %v492
        %v1383 = vld.sshfl [vmem:[#allocation1] sm:$0xff pattern:$0x73625140]
        %v1384 = vld.sshfl [vmem:[#allocation1 + $0x20] sm:$0xff pattern:$0x73625140]
        %1385 = vst [vmem:[#allocation1] ss:$4 sm:$0xff] %v495
        %1386 = vst [vmem:[%s1339] ss:$4 sm:$0xff] %v498
        %1387 = vst [vmem:[%s1341] ss:$4 sm:$0xff] %v501
        %1388 = vst [vmem:[%s1343] ss:$4 sm:$0xff] %v504
        %1389 = vst [vmem:[%s1345] ss:$4 sm:$0xff] %v508
        %1390 = vst [vmem:[%s1347] ss:$4 sm:$0xff] %v511
        %1391 = vst [vmem:[%s1349] ss:$4 sm:$0xff] %v514
        %1392 = vst [vmem:[%s1351] ss:$4 sm:$0xff] %v517
        %v1393 = vld.sshfl [vmem:[#allocation1] sm:$0xff pattern:$0x73625140]
        %v1394 = vld.sshfl [vmem:[#allocation1 + $0x20] sm:$0xff pattern:$0x73625140]
        %1395 = vst [vmem:[#allocation1] ss:$4 sm:$0xff] %v520
        %1396 = vst [vmem:[%s1339] ss:$4 sm:$0xff] %v523
        %1397 = vst [vmem:[%s1341] ss:$4 sm:$0xff] %v526
        %1398 = vst [vmem:[%s1343] ss:$4 sm:$0xff] %v529
        %1399 = vst [vmem:[%s1345] ss:$4 sm:$0xff] %v532
        %1400 = vst [vmem:[%s1347] ss:$4 sm:$0xff] %v1296
        %1401 = vst [vmem:[%s1349] ss:$4 sm:$0xff] %v1299
        %1402 = vst [vmem:[%s1351] ss:$4 sm:$0xff] %v1302
        %v1403 = vld.sshfl [vmem:[#allocation1] sm:$0xff pattern:$0x73625140]
        %v1404 = vld.sshfl [vmem:[#allocation1 + $0x20] sm:$0xff pattern:$0x73625140]
        %1405 = vst [vmem:[#allocation1] ss:$4 sm:$0xff] %v1305
        %1406 = vst [vmem:[%s1339] ss:$4 sm:$0xff] %v1308
        %1407 = vst [vmem:[%s1341] ss:$4 sm:$0xff] %v1311
        %1408 = vst [vmem:[%s1343] ss:$4 sm:$0xff] %v1314
        %1409 = vst [vmem:[%s1345] ss:$4 sm:$0xff] %v1317
        %1410 = vst [vmem:[%s1347] ss:$4 sm:$0xff] %v1320
        %v1411 = vld.sshfl [vmem:[#allocation1] sm:$0xff pattern:$0x73625140]
        %v1412 = vld.sshfl [vmem:[#allocation1 + $0x20] sm:$0xff pattern:$0x73625140]
        %1427 = vmatpush.msra.mxu0 %v1337
        %1428 = vmatpush.msra.mxu0 %v1336
        %1429 = vmatpush.msra.mxu0 %v1335
        %1430 = vmatpush.msra.mxu0 %v1334
        %1431 = vmatpush.msra.mxu0 %v1333
        %1432 = vmatpush.msra.mxu0 %v1332
        %1433 = vmatpush.msra.mxu0 %v1331
        %1434 = vmatpush.msra.mxu0 %v1330
        %1435 = vmatpush.msra.mxu0 %v1329
        %1436 = vmatpush.msra.mxu0 %v1328
        %1437 = vmatpush.msra.mxu0 %v1327
        %1438 = vmatpush.msra.mxu0 %v1326
        %1439 = vmatpush.msra.mxu0 %v1325
        %1440 = vmatpush.msra.mxu0 %v1324
        %1441 = vmatpush.msra.mxu0 %v1323
        %1442 = vmatpush.msra.mxu0 %v1322
        %1443 = vmatmul.f32.gmra.mxu0 %v1353
        %v1444 = vpop.f32.mrf.mxu0
        %v1445 = vadd.f32 0.0, %v1444
        %1446 = vmatmul.f32.gmra.mxu0 %v1354
        %v1447 = vpop.f32.mrf.mxu0
        %v1448 = vadd.f32 0.0, %v1447
        %1449 = vmatmul.f32.gmra.mxu0 %v1363
        %v1450 = vpop.f32.mrf.mxu0
        %v1451 = vadd.f32 0.0, %v1450
        %1452 = vmatmul.f32.gmra.mxu0 %v1364
        %v1453 = vpop.f32.mrf.mxu0
        %v1454 = vadd.f32 0.0, %v1453
        %1455 = vmatmul.f32.gmra.mxu0 %v1373
        %v1456 = vpop.f32.mrf.mxu0
        %v1457 = vadd.f32 0.0, %v1456
        %1458 = vmatmul.f32.gmra.mxu0 %v1374
        %v1459 = vpop.f32.mrf.mxu0
        %v1460 = vadd.f32 0.0, %v1459
        %1461 = vmatmul.f32.gmra.mxu0 %v1383
        %v1462 = vpop.f32.mrf.mxu0
        %v1463 = vadd.f32 0.0, %v1462
        %1464 = vmatmul.f32.gmra.mxu0 %v1384
        %v1465 = vpop.f32.mrf.mxu0
        %v1466 = vadd.f32 0.0, %v1465
        %1467 = vmatmul.f32.gmra.mxu0 %v1393
        %v1468 = vpop.f32.mrf.mxu0
        %v1469 = vadd.f32 0.0, %v1468
        %1470 = vmatmul.f32.gmra.mxu0 %v1394
        %v1471 = vpop.f32.mrf.mxu0
        %v1472 = vadd.f32 0.0, %v1471
        %1473 = vmatmul.f32.gmra.mxu0 %v1403
        %v1474 = vpop.f32.mrf.mxu0
        %v1475 = vadd.f32 0.0, %v1474
        %1476 = vmatmul.f32.gmra.mxu0 %v1404
        %v1477 = vpop.f32.mrf.mxu0
        %v1478 = vadd.f32 0.0, %v1477
        %1479 = vmatmul.f32.gmra.mxu0 %v1411
        %v1480 = vpop.f32.mrf.mxu0
        %v1481 = vadd.f32 0.0, %v1480
        %1482 = vmatmul.f32.gmra.mxu0 %v1412
        %v1483 = vpop.f32.mrf.mxu0
        %v1484 = vadd.f32 0.0, %v1483
        %1485 = vdwg.mxu0
        %v1486 = vadd.f32 %v1278, %v1445
        %v1487 = vadd.f32 %v1279, %v1448
        %v1488 = vadd.f32 %v1280, %v1451
        %v1489 = vadd.f32 %v1281, %v1454
        %v1490 = vadd.f32 %v1282, %v1457
        %v1491 = vadd.f32 %v1283, %v1460
        %v1492 = vadd.f32 %v1284, %v1463
        %v1493 = vadd.f32 %v1285, %v1466
        %v1494 = vadd.f32 %v1286, %v1469
        %v1495 = vadd.f32 %v1287, %v1472
        %v1496 = vadd.f32 %v1288, %v1475
        %v1497 = vadd.f32 %v1289, %v1478
        %v1498 = vadd.f32 %v1290, %v1481
        %v1499 = vadd.f32 %v1291, %v1484
        %1500 = vst.sshfl [vmem:[#allocation1] sm:$0xff pattern:$0x73625140] %v261
        %1501 = vst.sshfl [vmem:[#allocation1 + $0x20] sm:$0xff pattern:$0x73625140] %v262
        %s1502 = scalar_lea.vmem [#allocation1], 1
        %v1503 = vld [vmem:[%s1502] ss:$4 sm:$0xff]
        %s1504 = scalar_lea.vmem [#allocation1], 2
        %v1505 = vld [vmem:[%s1504] ss:$4 sm:$0xff]
        %s1506 = scalar_lea.vmem [#allocation1], 3
        %v1507 = vld [vmem:[%s1506] ss:$4 sm:$0xff]
        %s1508 = scalar_lea.vmem [#allocation1], 32
        %v1509 = vld [vmem:[%s1508] ss:$4 sm:$0xff]
        %s1510 = scalar_lea.vmem [#allocation1], 33
        %v1511 = vld [vmem:[%s1510] ss:$4 sm:$0xff]
        %s1512 = scalar_lea.vmem [#allocation1], 34
        %v1513 = vld [vmem:[%s1512] ss:$4 sm:$0xff]
        %s1514 = scalar_lea.vmem [#allocation1], 35
        %v1515 = vld [vmem:[%s1514] ss:$4 sm:$0xff]
        %1516 = vst.sshfl [vmem:[#allocation1] sm:$0xff pattern:$0x73625140] %v263
        %v1517 = vld [vmem:[#allocation1] ss:$4 sm:$0xff]
        %v1518 = vld [vmem:[%s1502] ss:$4 sm:$0xff]
        %1519 = vst.sshfl [vmem:[#allocation1 + $0x20] sm:$0xff pattern:$0x73625140] %v264
        %v1520 = vld [vmem:[%s1510] ss:$4 sm:$0xff]
        %v1521 = vld [vmem:[%s1512] ss:$4 sm:$0xff]
        %v1522 = vld [vmem:[%s1514] ss:$4 sm:$0xff]
        %1523 = vst.sshfl [vmem:[#allocation1] sm:$0xff pattern:$0x73625140] %v265
        %1524 = vst.sshfl [vmem:[#allocation1 + $0x20] sm:$0xff pattern:$0x73625140] %v266
        %v1525 = vld [vmem:[#allocation1] ss:$4 sm:$0xff]
        %v1526 = vld [vmem:[%s1502] ss:$4 sm:$0xff]
        %v1527 = vld [vmem:[%s1504] ss:$4 sm:$0xff]
        %v1528 = vld [vmem:[%s1506] ss:$4 sm:$0xff]
        %v1529 = vld [vmem:[%s1508] ss:$4 sm:$0xff]
        %v1530 = vld [vmem:[%s1510] ss:$4 sm:$0xff]
        %1531 = vst.sshfl [vmem:[#allocation1] sm:$0xff pattern:$0x73625140] %v267
        %1532 = vst.sshfl [vmem:[#allocation1 + $0x20] sm:$0xff pattern:$0x73625140] %v268
        %v1533 = vld [vmem:[%s1502] ss:$4 sm:$0xff]
        %v1534 = vld [vmem:[%s1504] ss:$4 sm:$0xff]
        %v1535 = vld [vmem:[%s1506] ss:$4 sm:$0xff]
        %v1536 = vld [vmem:[%s1508] ss:$4 sm:$0xff]
        %v1537 = vld [vmem:[%s1510] ss:$4 sm:$0xff]
        %v1538 = vld [vmem:[%s1512] ss:$4 sm:$0xff]
        %v1539 = vld [vmem:[%s1514] ss:$4 sm:$0xff]
        %1540 = vst.sshfl [vmem:[#allocation1] sm:$0xff pattern:$0x73625140] %v269
        %v1541 = vld [vmem:[#allocation1] ss:$4 sm:$0xff]
        %v1542 = vld [vmem:[%s1502] ss:$4 sm:$0xff]
        %1543 = vst.sshfl [vmem:[#allocation1 + $0x20] sm:$0xff pattern:$0x73625140] %v270
        %v1544 = vld [vmem:[%s1510] ss:$4 sm:$0xff]
        %v1545 = vld [vmem:[%s1512] ss:$4 sm:$0xff]
        %v1546 = vld [vmem:[%s1514] ss:$4 sm:$0xff]
        %1547 = vst.sshfl [vmem:[#allocation1] sm:$0xff pattern:$0x73625140] %v271
        %1548 = vst.sshfl [vmem:[#allocation1 + $0x20] sm:$0xff pattern:$0x73625140] %v272
        %v1549 = vld [vmem:[#allocation1] ss:$4 sm:$0xff]
        %v1550 = vld [vmem:[%s1502] ss:$4 sm:$0xff]
        %v1551 = vld [vmem:[%s1504] ss:$4 sm:$0xff]
        %v1552 = vld [vmem:[%s1506] ss:$4 sm:$0xff]
        %v1553 = vld [vmem:[%s1508] ss:$4 sm:$0xff]
        %v1554 = vld [vmem:[%s1510] ss:$4 sm:$0xff]
        %1555 = vst.sshfl [vmem:[#allocation1] sm:$0xff pattern:$0x73625140] %v273
        %1556 = vst.sshfl [vmem:[#allocation1 + $0x20] sm:$0xff pattern:$0x73625140] %v274
        %v1557 = vld [vmem:[%s1502] ss:$4 sm:$0xff]
        %v1558 = vld [vmem:[%s1504] ss:$4 sm:$0xff]
        %v1559 = vld [vmem:[%s1506] ss:$4 sm:$0xff]
        %v1560 = vld [vmem:[%s1508] ss:$4 sm:$0xff]
        %v1561 = vld [vmem:[%s1510] ss:$4 sm:$0xff]
        %v1562 = vld [vmem:[%s1512] ss:$4 sm:$0xff]
        %v1563 = vld [vmem:[%s1514] ss:$4 sm:$0xff]
        %1564 = vst.sshfl [vmem:[#allocation1] sm:$0xff pattern:$0x73625140] %v275
        %v1565 = vld [vmem:[#allocation1] ss:$4 sm:$0xff]
        %v1566 = vld [vmem:[%s1502] ss:$4 sm:$0xff]
        %1567 = vst.sshfl [vmem:[#allocation1 + $0x20] sm:$0xff pattern:$0x73625140] %v276
        %v1568 = vld [vmem:[%s1510] ss:$4 sm:$0xff]
        %v1569 = vld [vmem:[%s1512] ss:$4 sm:$0xff]
        %v1570 = vld [vmem:[%s1514] ss:$4 sm:$0xff]
        %1571 = vst.sshfl [vmem:[#allocation1] sm:$0xff pattern:$0x73625140] %v277
        %1572 = vst.sshfl [vmem:[#allocation1 + $0x20] sm:$0xff pattern:$0x73625140] %v278
        %v1573 = vld [vmem:[#allocation1] ss:$4 sm:$0xff]
        %v1574 = vld [vmem:[%s1502] ss:$4 sm:$0xff]
        %v1575 = vld [vmem:[%s1504] ss:$4 sm:$0xff]
        %v1576 = vld [vmem:[%s1506] ss:$4 sm:$0xff]
        %v1577 = vld [vmem:[%s1508] ss:$4 sm:$0xff]
        %v1578 = vld [vmem:[%s1510] ss:$4 sm:$0xff]
        %s1579 = scalar_lea.vmem %s1, 640
        %v1580 = vld [vmem:[%s1579] sm:$0xff]
        %v1581 = vld [vmem:[%s1579 + $0x8] sm:$0xff]
        %v1582 = vld [vmem:[%s1579 + $0x10] sm:$0xff]
        %v1583 = vld [vmem:[%s1579 + $0x18] sm:$0xff]
        %v1584 = vld [vmem:[%s1579 + $0x20] sm:$0xff]
        %v1585 = vld [vmem:[%s1579 + $0x28] sm:$0xff]
        %v1586 = vld [vmem:[%s1579 + $0x30] sm:$0xff]
        %v1587 = vld [vmem:[%s1579 + $0x38] sm:$0xff]
        %v1588 = vld [vmem:[%s1579 + $0x40] sm:$0xff]
        %v1589 = vld [vmem:[%s1579 + $0x48] sm:$0xff]
        %v1590 = vld [vmem:[%s1579 + $0x50] sm:$0xff]
        %v1591 = vld [vmem:[%s1579 + $0x58] sm:$0xff]
        %v1592 = vld [vmem:[%s1579 + $0x60] sm:$0xff]
        %v1593 = vld [vmem:[%s1579 + $0x68] sm:$0xff]
        %v1594 = vld [vmem:[%s1579 + $0x70] sm:$0xff]
        %v1595 = vld [vmem:[%s1579 + $0x78] sm:$0xff]
        %1596 = vst [vmem:[#allocation1] ss:$4 sm:$0xff] %v1503
        %s1597 = scalar_lea.vmem [#allocation1], 1
        %1598 = vst [vmem:[%s1597] ss:$4 sm:$0xff] %v1505
        %s1599 = scalar_lea.vmem [#allocation1], 2
        %1600 = vst [vmem:[%s1599] ss:$4 sm:$0xff] %v1507
        %s1601 = scalar_lea.vmem [#allocation1], 3
        %1602 = vst [vmem:[%s1601] ss:$4 sm:$0xff] %v1509
        %s1603 = scalar_lea.vmem [#allocation1], 32
        %1604 = vst [vmem:[%s1603] ss:$4 sm:$0xff] %v1511
        %s1605 = scalar_lea.vmem [#allocation1], 33
        %1606 = vst [vmem:[%s1605] ss:$4 sm:$0xff] %v1513
        %s1607 = scalar_lea.vmem [#allocation1], 34
        %1608 = vst [vmem:[%s1607] ss:$4 sm:$0xff] %v1515
        %s1609 = scalar_lea.vmem [#allocation1], 35
        %1610 = vst [vmem:[%s1609] ss:$4 sm:$0xff] %v1517
        %v1611 = vld.sshfl [vmem:[#allocation1] sm:$0xff pattern:$0x73625140]
        %v1612 = vld.sshfl [vmem:[#allocation1 + $0x20] sm:$0xff pattern:$0x73625140]
        %1613 = vst [vmem:[#allocation1] ss:$4 sm:$0xff] %v1518
        %1614 = vst [vmem:[%s1597] ss:$4 sm:$0xff] %v1520
        %1615 = vst [vmem:[%s1599] ss:$4 sm:$0xff] %v1521
        %1616 = vst [vmem:[%s1601] ss:$4 sm:$0xff] %v1522
        %1617 = vst [vmem:[%s1603] ss:$4 sm:$0xff] %v1525
        %1618 = vst [vmem:[%s1605] ss:$4 sm:$0xff] %v1526
        %1619 = vst [vmem:[%s1607] ss:$4 sm:$0xff] %v1527
        %1620 = vst [vmem:[%s1609] ss:$4 sm:$0xff] %v1528
        %v1621 = vld.sshfl [vmem:[#allocation1] sm:$0xff pattern:$0x73625140]
        %v1622 = vld.sshfl [vmem:[#allocation1 + $0x20] sm:$0xff pattern:$0x73625140]
        %1623 = vst [vmem:[#allocation1] ss:$4 sm:$0xff] %v1529
        %1624 = vst [vmem:[%s1597] ss:$4 sm:$0xff] %v1530
        %1625 = vst [vmem:[%s1599] ss:$4 sm:$0xff] %v1533
        %1626 = vst [vmem:[%s1601] ss:$4 sm:$0xff] %v1534
        %1627 = vst [vmem:[%s1603] ss:$4 sm:$0xff] %v1535
        %1628 = vst [vmem:[%s1605] ss:$4 sm:$0xff] %v1536
        %1629 = vst [vmem:[%s1607] ss:$4 sm:$0xff] %v1537
        %1630 = vst [vmem:[%s1609] ss:$4 sm:$0xff] %v1538
        %v1631 = vld.sshfl [vmem:[#allocation1] sm:$0xff pattern:$0x73625140]
        %v1632 = vld.sshfl [vmem:[#allocation1 + $0x20] sm:$0xff pattern:$0x73625140]
        %1633 = vst [vmem:[#allocation1] ss:$4 sm:$0xff] %v1539
        %1634 = vst [vmem:[%s1597] ss:$4 sm:$0xff] %v1541
        %1635 = vst [vmem:[%s1599] ss:$4 sm:$0xff] %v1542
        %1636 = vst [vmem:[%s1601] ss:$4 sm:$0xff] %v1544
        %1637 = vst [vmem:[%s1603] ss:$4 sm:$0xff] %v1545
        %1638 = vst [vmem:[%s1605] ss:$4 sm:$0xff] %v1546
        %1639 = vst [vmem:[%s1607] ss:$4 sm:$0xff] %v1549
        %1640 = vst [vmem:[%s1609] ss:$4 sm:$0xff] %v1550
        %v1641 = vld.sshfl [vmem:[#allocation1] sm:$0xff pattern:$0x73625140]
        %v1642 = vld.sshfl [vmem:[#allocation1 + $0x20] sm:$0xff pattern:$0x73625140]
        %1643 = vst [vmem:[#allocation1] ss:$4 sm:$0xff] %v1551
        %1644 = vst [vmem:[%s1597] ss:$4 sm:$0xff] %v1552
        %1645 = vst [vmem:[%s1599] ss:$4 sm:$0xff] %v1553
        %1646 = vst [vmem:[%s1601] ss:$4 sm:$0xff] %v1554
        %1647 = vst [vmem:[%s1603] ss:$4 sm:$0xff] %v1557
        %1648 = vst [vmem:[%s1605] ss:$4 sm:$0xff] %v1558
        %1649 = vst [vmem:[%s1607] ss:$4 sm:$0xff] %v1559
        %1650 = vst [vmem:[%s1609] ss:$4 sm:$0xff] %v1560
        %v1651 = vld.sshfl [vmem:[#allocation1] sm:$0xff pattern:$0x73625140]
        %v1652 = vld.sshfl [vmem:[#allocation1 + $0x20] sm:$0xff pattern:$0x73625140]
        %1653 = vst [vmem:[#allocation1] ss:$4 sm:$0xff] %v1561
        %1654 = vst [vmem:[%s1597] ss:$4 sm:$0xff] %v1562
        %1655 = vst [vmem:[%s1599] ss:$4 sm:$0xff] %v1563
        %1656 = vst [vmem:[%s1601] ss:$4 sm:$0xff] %v1565
        %1657 = vst [vmem:[%s1603] ss:$4 sm:$0xff] %v1566
        %1658 = vst [vmem:[%s1605] ss:$4 sm:$0xff] %v1568
        %1659 = vst [vmem:[%s1607] ss:$4 sm:$0xff] %v1569
        %1660 = vst [vmem:[%s1609] ss:$4 sm:$0xff] %v1570
        %v1661 = vld.sshfl [vmem:[#allocation1] sm:$0xff pattern:$0x73625140]
        %v1662 = vld.sshfl [vmem:[#allocation1 + $0x20] sm:$0xff pattern:$0x73625140]
        %1663 = vst [vmem:[#allocation1] ss:$4 sm:$0xff] %v1573
        %1664 = vst [vmem:[%s1597] ss:$4 sm:$0xff] %v1574
        %1665 = vst [vmem:[%s1599] ss:$4 sm:$0xff] %v1575
        %1666 = vst [vmem:[%s1601] ss:$4 sm:$0xff] %v1576
        %1667 = vst [vmem:[%s1603] ss:$4 sm:$0xff] %v1577
        %1668 = vst [vmem:[%s1605] ss:$4 sm:$0xff] %v1578
        %v1669 = vld.sshfl [vmem:[#allocation1] sm:$0xff pattern:$0x73625140]
        %v1670 = vld.sshfl [vmem:[#allocation1 + $0x20] sm:$0xff pattern:$0x73625140]
        %1685 = vmatpush.msra.mxu0 %v1595
        %1686 = vmatpush.msra.mxu0 %v1594
        %1687 = vmatpush.msra.mxu0 %v1593
        %1688 = vmatpush.msra.mxu0 %v1592
        %1689 = vmatpush.msra.mxu0 %v1591
        %1690 = vmatpush.msra.mxu0 %v1590
        %1691 = vmatpush.msra.mxu0 %v1589
        %1692 = vmatpush.msra.mxu0 %v1588
        %1693 = vmatpush.msra.mxu0 %v1587
        %1694 = vmatpush.msra.mxu0 %v1586
        %1695 = vmatpush.msra.mxu0 %v1585
        %1696 = vmatpush.msra.mxu0 %v1584
        %1697 = vmatpush.msra.mxu0 %v1583
        %1698 = vmatpush.msra.mxu0 %v1582
        %1699 = vmatpush.msra.mxu0 %v1581
        %1700 = vmatpush.msra.mxu0 %v1580
        %1701 = vmatmul.f32.gmra.mxu0 %v1611
        %v1702 = vpop.f32.mrf.mxu0
        %v1703 = vadd.f32 0.0, %v1702
        %1704 = vmatmul.f32.gmra.mxu0 %v1612
        %v1705 = vpop.f32.mrf.mxu0
        %v1706 = vadd.f32 0.0, %v1705
        %1707 = vmatmul.f32.gmra.mxu0 %v1621
        %v1708 = vpop.f32.mrf.mxu0
        %v1709 = vadd.f32 0.0, %v1708
        %1710 = vmatmul.f32.gmra.mxu0 %v1622
        %v1711 = vpop.f32.mrf.mxu0
        %v1712 = vadd.f32 0.0, %v1711
        %1713 = vmatmul.f32.gmra.mxu0 %v1631
        %v1714 = vpop.f32.mrf.mxu0
        %v1715 = vadd.f32 0.0, %v1714
        %1716 = vmatmul.f32.gmra.mxu0 %v1632
        %v1717 = vpop.f32.mrf.mxu0
        %v1718 = vadd.f32 0.0, %v1717
        %1719 = vmatmul.f32.gmra.mxu0 %v1641
        %v1720 = vpop.f32.mrf.mxu0
        %v1721 = vadd.f32 0.0, %v1720
        %1722 = vmatmul.f32.gmra.mxu0 %v1642
        %v1723 = vpop.f32.mrf.mxu0
        %v1724 = vadd.f32 0.0, %v1723
        %1725 = vmatmul.f32.gmra.mxu0 %v1651
        %v1726 = vpop.f32.mrf.mxu0
        %v1727 = vadd.f32 0.0, %v1726
        %1728 = vmatmul.f32.gmra.mxu0 %v1652
        %v1729 = vpop.f32.mrf.mxu0
        %v1730 = vadd.f32 0.0, %v1729
        %1731 = vmatmul.f32.gmra.mxu0 %v1661
        %v1732 = vpop.f32.mrf.mxu0
        %v1733 = vadd.f32 0.0, %v1732
        %1734 = vmatmul.f32.gmra.mxu0 %v1662
        %v1735 = vpop.f32.mrf.mxu0
        %v1736 = vadd.f32 0.0, %v1735
        %1737 = vmatmul.f32.gmra.mxu0 %v1669
        %v1738 = vpop.f32.mrf.mxu0
        %v1739 = vadd.f32 0.0, %v1738
        %1740 = vmatmul.f32.gmra.mxu0 %v1670
        %v1741 = vpop.f32.mrf.mxu0
        %v1742 = vadd.f32 0.0, %v1741
        %1743 = vdwg.mxu0
        %v1744 = vadd.f32 %v1486, %v1703
        %v1745 = vadd.f32 %v1487, %v1706
        %v1746 = vadd.f32 %v1488, %v1709
        %v1747 = vadd.f32 %v1489, %v1712
        %v1748 = vadd.f32 %v1490, %v1715
        %v1749 = vadd.f32 %v1491, %v1718
        %v1750 = vadd.f32 %v1492, %v1721
        %v1751 = vadd.f32 %v1493, %v1724
        %v1752 = vadd.f32 %v1494, %v1727
        %v1753 = vadd.f32 %v1495, %v1730
        %v1754 = vadd.f32 %v1496, %v1733
        %v1755 = vadd.f32 %v1497, %v1736
        %v1756 = vadd.f32 %v1498, %v1739
        %v1757 = vadd.f32 %v1499, %v1742
        %v1761 = vrot.slane %v279, 2
        %v1762 = vrot.slane %v279, 4
        %v1763 = vrot.slane %v279, 6
        %v1764 = vrot.slane %v280, 2
        %v1765 = vrot.slane %v280, 4
        %v1766 = vrot.slane %v280, 6
        %s1767 = scalar_lea.vmem %s1, 768
        %v1768 = vld [vmem:[%s1767] sm:$0xff]
        %v1769 = vld [vmem:[%s1767 + $0x8] sm:$0xff]
        %v1770 = vld [vmem:[%s1767 + $0x10] sm:$0xff]
        %v1771 = vld [vmem:[%s1767 + $0x18] sm:$0xff]
        %v1772 = vld [vmem:[%s1767 + $0x20] sm:$0xff]
        %v1773 = vld [vmem:[%s1767 + $0x28] sm:$0xff]
        %v1774 = vld [vmem:[%s1767 + $0x30] sm:$0xff]
        %v1775 = vld [vmem:[%s1767 + $0x38] sm:$0xff]
        %v1776 = vld [vmem:[%s1767 + $0x40] sm:$0xff]
        %v1777 = vld [vmem:[%s1767 + $0x48] sm:$0xff]
        %v1778 = vld [vmem:[%s1767 + $0x50] sm:$0xff]
        %v1779 = vld [vmem:[%s1767 + $0x58] sm:$0xff]
        %v1780 = vld [vmem:[%s1767 + $0x60] sm:$0xff]
        %v1781 = vld [vmem:[%s1767 + $0x68] sm:$0xff]
        %v1782 = vld [vmem:[%s1767 + $0x70] sm:$0xff]
        %v1783 = vld [vmem:[%s1767 + $0x78] sm:$0xff]
        %1784 = vst [vmem:[#allocation1] ss:$4 sm:$0xff] %v264
        %s1785 = scalar_lea.vmem [#allocation1], 1
        %1786 = vst [vmem:[%s1785] ss:$4 sm:$0xff] %v312
        %s1787 = scalar_lea.vmem [#allocation1], 2
        %1788 = vst [vmem:[%s1787] ss:$4 sm:$0xff] %v313
        %s1789 = scalar_lea.vmem [#allocation1], 3
        %1790 = vst [vmem:[%s1789] ss:$4 sm:$0xff] %v314
        %s1791 = scalar_lea.vmem [#allocation1], 32
        %1792 = vst [vmem:[%s1791] ss:$4 sm:$0xff] %v265
        %s1793 = scalar_lea.vmem [#allocation1], 33
        %1794 = vst [vmem:[%s1793] ss:$4 sm:$0xff] %v315
        %s1795 = scalar_lea.vmem [#allocation1], 34
        %1796 = vst [vmem:[%s1795] ss:$4 sm:$0xff] %v316
        %s1797 = scalar_lea.vmem [#allocation1], 35
        %1798 = vst [vmem:[%s1797] ss:$4 sm:$0xff] %v317
        %v1799 = vld.sshfl [vmem:[#allocation1] sm:$0xff pattern:$0x73625140]
        %v1800 = vld.sshfl [vmem:[#allocation1 + $0x20] sm:$0xff pattern:$0x73625140]
        %1801 = vst [vmem:[#allocation1] ss:$4 sm:$0xff] %v266
        %1802 = vst [vmem:[%s1785] ss:$4 sm:$0xff] %v267
        %1803 = vst [vmem:[%s1787] ss:$4 sm:$0xff] %v318
        %1804 = vst [vmem:[%s1789] ss:$4 sm:$0xff] %v319
        %1805 = vst [vmem:[%s1791] ss:$4 sm:$0xff] %v320
        %1806 = vst [vmem:[%s1793] ss:$4 sm:$0xff] %v268
        %1807 = vst [vmem:[%s1795] ss:$4 sm:$0xff] %v321
        %1808 = vst [vmem:[%s1797] ss:$4 sm:$0xff] %v322
        %v1809 = vld.sshfl [vmem:[#allocation1] sm:$0xff pattern:$0x73625140]
        %v1810 = vld.sshfl [vmem:[#allocation1 + $0x20] sm:$0xff pattern:$0x73625140]
        %1811 = vst [vmem:[#allocation1] ss:$4 sm:$0xff] %v323
        %1812 = vst [vmem:[%s1785] ss:$4 sm:$0xff] %v269
        %1813 = vst [vmem:[%s1787] ss:$4 sm:$0xff] %v270
        %1814 = vst [vmem:[%s1789] ss:$4 sm:$0xff] %v324
        %1815 = vst [vmem:[%s1791] ss:$4 sm:$0xff] %v325
        %1816 = vst [vmem:[%s1793] ss:$4 sm:$0xff] %v326
        %1817 = vst [vmem:[%s1795] ss:$4 sm:$0xff] %v271
        %1818 = vst [vmem:[%s1797] ss:$4 sm:$0xff] %v327
        %v1819 = vld.sshfl [vmem:[#allocation1] sm:$0xff pattern:$0x73625140]
        %v1820 = vld.sshfl [vmem:[#allocation1 + $0x20] sm:$0xff pattern:$0x73625140]
        %1821 = vst [vmem:[#allocation1] ss:$4 sm:$0xff] %v328
        %1822 = vst [vmem:[%s1785] ss:$4 sm:$0xff] %v329
        %1823 = vst [vmem:[%s1787] ss:$4 sm:$0xff] %v272
        %1824 = vst [vmem:[%s1789] ss:$4 sm:$0xff] %v273
        %1825 = vst [vmem:[%s1791] ss:$4 sm:$0xff] %v330
        %1826 = vst [vmem:[%s1793] ss:$4 sm:$0xff] %v331
        %1827 = vst [vmem:[%s1795] ss:$4 sm:$0xff] %v332
        %1828 = vst [vmem:[%s1797] ss:$4 sm:$0xff] %v274
        %v1829 = vld.sshfl [vmem:[#allocation1] sm:$0xff pattern:$0x73625140]
        %v1830 = vld.sshfl [vmem:[#allocation1 + $0x20] sm:$0xff pattern:$0x73625140]
        %1831 = vst [vmem:[#allocation1] ss:$4 sm:$0xff] %v333
        %1832 = vst [vmem:[%s1785] ss:$4 sm:$0xff] %v334
        %1833 = vst [vmem:[%s1787] ss:$4 sm:$0xff] %v335
        %1834 = vst [vmem:[%s1789] ss:$4 sm:$0xff] %v275
        %1835 = vst [vmem:[%s1791] ss:$4 sm:$0xff] %v276
        %1836 = vst [vmem:[%s1793] ss:$4 sm:$0xff] %v1107
        %1837 = vst [vmem:[%s1795] ss:$4 sm:$0xff] %v1108
        %1838 = vst [vmem:[%s1797] ss:$4 sm:$0xff] %v1109
        %v1839 = vld.sshfl [vmem:[#allocation1] sm:$0xff pattern:$0x73625140]
        %v1840 = vld.sshfl [vmem:[#allocation1 + $0x20] sm:$0xff pattern:$0x73625140]
        %1841 = vst [vmem:[#allocation1] ss:$4 sm:$0xff] %v277
        %1842 = vst [vmem:[%s1785] ss:$4 sm:$0xff] %v1110
        %1843 = vst [vmem:[%s1787] ss:$4 sm:$0xff] %v1111
        %1844 = vst [vmem:[%s1789] ss:$4 sm:$0xff] %v1112
        %1845 = vst [vmem:[%s1791] ss:$4 sm:$0xff] %v278
        %1846 = vst [vmem:[%s1793] ss:$4 sm:$0xff] %v279
        %1847 = vst [vmem:[%s1795] ss:$4 sm:$0xff] %v1761
        %1848 = vst [vmem:[%s1797] ss:$4 sm:$0xff] %v1762
        %v1849 = vld.sshfl [vmem:[#allocation1] sm:$0xff pattern:$0x73625140]
        %v1850 = vld.sshfl [vmem:[#allocation1 + $0x20] sm:$0xff pattern:$0x73625140]
        %1851 = vst [vmem:[#allocation1] ss:$4 sm:$0xff] %v1763
        %1852 = vst [vmem:[%s1785] ss:$4 sm:$0xff] %v280
        %1853 = vst [vmem:[%s1787] ss:$4 sm:$0xff] %v1764
        %1854 = vst [vmem:[%s1789] ss:$4 sm:$0xff] %v1765
        %1855 = vst [vmem:[%s1791] ss:$4 sm:$0xff] %v1766
        %1856 = vst [vmem:[%s1793] ss:$4 sm:$0xff] %v281
        %v1857 = vld.sshfl [vmem:[#allocation1] sm:$0xff pattern:$0x73625140]
        %v1858 = vld.sshfl [vmem:[#allocation1 + $0x20] sm:$0xff pattern:$0x73625140]
        %1873 = vmatpush.msra.mxu0 %v1783
        %1874 = vmatpush.msra.mxu0 %v1782
        %1875 = vmatpush.msra.mxu0 %v1781
        %1876 = vmatpush.msra.mxu0 %v1780
        %1877 = vmatpush.msra.mxu0 %v1779
        %1878 = vmatpush.msra.mxu0 %v1778
        %1879 = vmatpush.msra.mxu0 %v1777
        %1880 = vmatpush.msra.mxu0 %v1776
        %1881 = vmatpush.msra.mxu0 %v1775
        %1882 = vmatpush.msra.mxu0 %v1774
        %1883 = vmatpush.msra.mxu0 %v1773
        %1884 = vmatpush.msra.mxu0 %v1772
        %1885 = vmatpush.msra.mxu0 %v1771
        %1886 = vmatpush.msra.mxu0 %v1770
        %1887 = vmatpush.msra.mxu0 %v1769
        %1888 = vmatpush.msra.mxu0 %v1768
        %1889 = vmatmul.f32.gmra.mxu0 %v1799
        %v1890 = vpop.f32.mrf.mxu0
        %v1891 = vadd.f32 0.0, %v1890
        %1892 = vmatmul.f32.gmra.mxu0 %v1800
        %v1893 = vpop.f32.mrf.mxu0
        %v1894 = vadd.f32 0.0, %v1893
        %1895 = vmatmul.f32.gmra.mxu0 %v1809
        %v1896 = vpop.f32.mrf.mxu0
        %v1897 = vadd.f32 0.0, %v1896
        %1898 = vmatmul.f32.gmra.mxu0 %v1810
        %v1899 = vpop.f32.mrf.mxu0
        %v1900 = vadd.f32 0.0, %v1899
        %1901 = vmatmul.f32.gmra.mxu0 %v1819
        %v1902 = vpop.f32.mrf.mxu0
        %v1903 = vadd.f32 0.0, %v1902
        %1904 = vmatmul.f32.gmra.mxu0 %v1820
        %v1905 = vpop.f32.mrf.mxu0
        %v1906 = vadd.f32 0.0, %v1905
        %1907 = vmatmul.f32.gmra.mxu0 %v1829
        %v1908 = vpop.f32.mrf.mxu0
        %v1909 = vadd.f32 0.0, %v1908
        %1910 = vmatmul.f32.gmra.mxu0 %v1830
        %v1911 = vpop.f32.mrf.mxu0
        %v1912 = vadd.f32 0.0, %v1911
        %1913 = vmatmul.f32.gmra.mxu0 %v1839
        %v1914 = vpop.f32.mrf.mxu0
        %v1915 = vadd.f32 0.0, %v1914
        %1916 = vmatmul.f32.gmra.mxu0 %v1840
        %v1917 = vpop.f32.mrf.mxu0
        %v1918 = vadd.f32 0.0, %v1917
        %1919 = vmatmul.f32.gmra.mxu0 %v1849
        %v1920 = vpop.f32.mrf.mxu0
        %v1921 = vadd.f32 0.0, %v1920
        %1922 = vmatmul.f32.gmra.mxu0 %v1850
        %v1923 = vpop.f32.mrf.mxu0
        %v1924 = vadd.f32 0.0, %v1923
        %1925 = vmatmul.f32.gmra.mxu0 %v1857
        %v1926 = vpop.f32.mrf.mxu0
        %v1927 = vadd.f32 0.0, %v1926
        %1928 = vmatmul.f32.gmra.mxu0 %v1858
        %v1929 = vpop.f32.mrf.mxu0
        %v1930 = vadd.f32 0.0, %v1929
        %1931 = vdwg.mxu0
        %v1932 = vadd.f32 %v1744, %v1891
        %v1933 = vadd.f32 %v1745, %v1894
        %v1934 = vadd.f32 %v1746, %v1897
        %v1935 = vadd.f32 %v1747, %v1900
        %v1936 = vadd.f32 %v1748, %v1903
        %v1937 = vadd.f32 %v1749, %v1906
        %v1938 = vadd.f32 %v1750, %v1909
        %v1939 = vadd.f32 %v1751, %v1912
        %v1940 = vadd.f32 %v1752, %v1915
        %v1941 = vadd.f32 %v1753, %v1918
        %v1942 = vadd.f32 %v1754, %v1921
        %v1943 = vadd.f32 %v1755, %v1924
        %v1944 = vadd.f32 %v1756, %v1927
        %v1945 = vadd.f32 %v1757, %v1930
        %v1946 = vrot.slane %v281, 2
        %v1947 = vrot.slane %v279, 7
        %v1948 = vrot.slane %v1947, 2
        %v1949 = vrot.slane %v1761, 7
        %v1950 = vsel %vm364, %v1948, %v1949
        %v1951 = vrot.slane %v1949, 2
        %v1952 = vrot.slane %v1762, 7
        %v1953 = vsel %vm364, %v1951, %v1952
        %v1954 = vrot.slane %v1952, 2
        %v1955 = vrot.slane %v1763, 7
        %v1956 = vsel %vm364, %v1954, %v1955
        %v1957 = vrot.slane %v1955, 2
        %v1958 = vrot.slane %v280, 7
        %v1959 = vsel %vm364, %v1957, %v1958
        %v1960 = vrot.slane %v1958, 2
        %v1961 = vrot.slane %v1764, 7
        %v1962 = vsel %vm364, %v1960, %v1961
        %v1963 = vrot.slane %v1961, 2
        %v1964 = vrot.slane %v1765, 7
        %v1965 = vsel %vm364, %v1963, %v1964
        %v1966 = vrot.slane %v1964, 2
        %v1967 = vrot.slane %v1766, 7
        %v1968 = vsel %vm364, %v1966, %v1967
        %v1969 = vrot.slane %v1967, 2
        %v1970 = vrot.slane %v281, 7
        %v1971 = vsel %vm364, %v1969, %v1970
        %v1972 = vrot.slane %v1970, 2
        %v1973 = vrot.slane %v1946, 7
        %v1974 = vsel %vm364, %v1972, %v1973
        %s1975 = scalar_lea.vmem %s1, 896
        %v1976 = vld [vmem:[%s1975] sm:$0xff]
        %v1977 = vld [vmem:[%s1975 + $0x8] sm:$0xff]
        %v1978 = vld [vmem:[%s1975 + $0x10] sm:$0xff]
        %v1979 = vld [vmem:[%s1975 + $0x18] sm:$0xff]
        %v1980 = vld [vmem:[%s1975 + $0x20] sm:$0xff]
        %v1981 = vld [vmem:[%s1975 + $0x28] sm:$0xff]
        %v1982 = vld [vmem:[%s1975 + $0x30] sm:$0xff]
        %v1983 = vld [vmem:[%s1975 + $0x38] sm:$0xff]
        %v1984 = vld [vmem:[%s1975 + $0x40] sm:$0xff]
        %v1985 = vld [vmem:[%s1975 + $0x48] sm:$0xff]
        %v1986 = vld [vmem:[%s1975 + $0x50] sm:$0xff]
        %v1987 = vld [vmem:[%s1975 + $0x58] sm:$0xff]
        %v1988 = vld [vmem:[%s1975 + $0x60] sm:$0xff]
        %v1989 = vld [vmem:[%s1975 + $0x68] sm:$0xff]
        %v1990 = vld [vmem:[%s1975 + $0x70] sm:$0xff]
        %v1991 = vld [vmem:[%s1975 + $0x78] sm:$0xff]
        %1992 = vst [vmem:[#allocation1] ss:$4 sm:$0xff] %v424
        %s1993 = scalar_lea.vmem [#allocation1], 1
        %1994 = vst [vmem:[%s1993] ss:$4 sm:$0xff] %v427
        %s1995 = scalar_lea.vmem [#allocation1], 2
        %1996 = vst [vmem:[%s1995] ss:$4 sm:$0xff] %v430
        %s1997 = scalar_lea.vmem [#allocation1], 3
        %1998 = vst [vmem:[%s1997] ss:$4 sm:$0xff] %v433
        %s1999 = scalar_lea.vmem [#allocation1], 32
        %2000 = vst [vmem:[%s1999] ss:$4 sm:$0xff] %v436
        %s2001 = scalar_lea.vmem [#allocation1], 33
        %2002 = vst [vmem:[%s2001] ss:$4 sm:$0xff] %v439
        %s2003 = scalar_lea.vmem [#allocation1], 34
        %2004 = vst [vmem:[%s2003] ss:$4 sm:$0xff] %v442
        %s2005 = scalar_lea.vmem [#allocation1], 35
        %2006 = vst [vmem:[%s2005] ss:$4 sm:$0xff] %v445
        %v2007 = vld.sshfl [vmem:[#allocation1] sm:$0xff pattern:$0x73625140]
        %v2008 = vld.sshfl [vmem:[#allocation1 + $0x20] sm:$0xff pattern:$0x73625140]
        %2009 = vst [vmem:[#allocation1] ss:$4 sm:$0xff] %v448
        %2010 = vst [vmem:[%s1993] ss:$4 sm:$0xff] %v452
        %2011 = vst [vmem:[%s1995] ss:$4 sm:$0xff] %v455
        %2012 = vst [vmem:[%s1997] ss:$4 sm:$0xff] %v458
        %2013 = vst [vmem:[%s1999] ss:$4 sm:$0xff] %v461
        %2014 = vst [vmem:[%s2001] ss:$4 sm:$0xff] %v464
        %2015 = vst [vmem:[%s2003] ss:$4 sm:$0xff] %v467
        %2016 = vst [vmem:[%s2005] ss:$4 sm:$0xff] %v470
        %v2017 = vld.sshfl [vmem:[#allocation1] sm:$0xff pattern:$0x73625140]
        %v2018 = vld.sshfl [vmem:[#allocation1 + $0x20] sm:$0xff pattern:$0x73625140]
        %2019 = vst [vmem:[#allocation1] ss:$4 sm:$0xff] %v473
        %2020 = vst [vmem:[%s1993] ss:$4 sm:$0xff] %v476
        %2021 = vst [vmem:[%s1995] ss:$4 sm:$0xff] %v480
        %2022 = vst [vmem:[%s1997] ss:$4 sm:$0xff] %v483
        %2023 = vst [vmem:[%s1999] ss:$4 sm:$0xff] %v486
        %2024 = vst [vmem:[%s2001] ss:$4 sm:$0xff] %v489
        %2025 = vst [vmem:[%s2003] ss:$4 sm:$0xff] %v492
        %2026 = vst [vmem:[%s2005] ss:$4 sm:$0xff] %v495
        %v2027 = vld.sshfl [vmem:[#allocation1] sm:$0xff pattern:$0x73625140]
        %v2028 = vld.sshfl [vmem:[#allocation1 + $0x20] sm:$0xff pattern:$0x73625140]
        %2029 = vst [vmem:[#allocation1] ss:$4 sm:$0xff] %v498
        %2030 = vst [vmem:[%s1993] ss:$4 sm:$0xff] %v501
        %2031 = vst [vmem:[%s1995] ss:$4 sm:$0xff] %v504
        %2032 = vst [vmem:[%s1997] ss:$4 sm:$0xff] %v508
        %2033 = vst [vmem:[%s1999] ss:$4 sm:$0xff] %v511
        %2034 = vst [vmem:[%s2001] ss:$4 sm:$0xff] %v514
        %2035 = vst [vmem:[%s2003] ss:$4 sm:$0xff] %v517
        %2036 = vst [vmem:[%s2005] ss:$4 sm:$0xff] %v520
        %v2037 = vld.sshfl [vmem:[#allocation1] sm:$0xff pattern:$0x73625140]
        %v2038 = vld.sshfl [vmem:[#allocation1 + $0x20] sm:$0xff pattern:$0x73625140]
        %2039 = vst [vmem:[#allocation1] ss:$4 sm:$0xff] %v523
        %2040 = vst [vmem:[%s1993] ss:$4 sm:$0xff] %v526
        %2041 = vst [vmem:[%s1995] ss:$4 sm:$0xff] %v529
        %2042 = vst [vmem:[%s1997] ss:$4 sm:$0xff] %v532
        %2043 = vst [vmem:[%s1999] ss:$4 sm:$0xff] %v1296
        %2044 = vst [vmem:[%s2001] ss:$4 sm:$0xff] %v1299
        %2045 = vst [vmem:[%s2003] ss:$4 sm:$0xff] %v1302
        %2046 = vst [vmem:[%s2005] ss:$4 sm:$0xff] %v1305
        %v2047 = vld.sshfl [vmem:[#allocation1] sm:$0xff pattern:$0x73625140]
        %v2048 = vld.sshfl [vmem:[#allocation1 + $0x20] sm:$0xff pattern:$0x73625140]
        %2049 = vst [vmem:[#allocation1] ss:$4 sm:$0xff] %v1308
        %2050 = vst [vmem:[%s1993] ss:$4 sm:$0xff] %v1311
        %2051 = vst [vmem:[%s1995] ss:$4 sm:$0xff] %v1314
        %2052 = vst [vmem:[%s1997] ss:$4 sm:$0xff] %v1317
        %2053 = vst [vmem:[%s1999] ss:$4 sm:$0xff] %v1320
        %2054 = vst [vmem:[%s2001] ss:$4 sm:$0xff] %v1950
        %2055 = vst [vmem:[%s2003] ss:$4 sm:$0xff] %v1953
        %2056 = vst [vmem:[%s2005] ss:$4 sm:$0xff] %v1956
        %v2057 = vld.sshfl [vmem:[#allocation1] sm:$0xff pattern:$0x73625140]
        %v2058 = vld.sshfl [vmem:[#allocation1 + $0x20] sm:$0xff pattern:$0x73625140]
        %2059 = vst [vmem:[#allocation1] ss:$4 sm:$0xff] %v1959
        %2060 = vst [vmem:[%s1993] ss:$4 sm:$0xff] %v1962
        %2061 = vst [vmem:[%s1995] ss:$4 sm:$0xff] %v1965
        %2062 = vst [vmem:[%s1997] ss:$4 sm:$0xff] %v1968
        %2063 = vst [vmem:[%s1999] ss:$4 sm:$0xff] %v1971
        %2064 = vst [vmem:[%s2001] ss:$4 sm:$0xff] %v1974
        %v2065 = vld.sshfl [vmem:[#allocation1] sm:$0xff pattern:$0x73625140]
        %v2066 = vld.sshfl [vmem:[#allocation1 + $0x20] sm:$0xff pattern:$0x73625140]
        %2081 = vmatpush.msra.mxu0 %v1991
        %2082 = vmatpush.msra.mxu0 %v1990
        %2083 = vmatpush.msra.mxu0 %v1989
        %2084 = vmatpush.msra.mxu0 %v1988
        %2085 = vmatpush.msra.mxu0 %v1987
        %2086 = vmatpush.msra.mxu0 %v1986
        %2087 = vmatpush.msra.mxu0 %v1985
        %2088 = vmatpush.msra.mxu0 %v1984
        %2089 = vmatpush.msra.mxu0 %v1983
        %2090 = vmatpush.msra.mxu0 %v1982
        %2091 = vmatpush.msra.mxu0 %v1981
        %2092 = vmatpush.msra.mxu0 %v1980
        %2093 = vmatpush.msra.mxu0 %v1979
        %2094 = vmatpush.msra.mxu0 %v1978
        %2095 = vmatpush.msra.mxu0 %v1977
        %2096 = vmatpush.msra.mxu0 %v1976
        %2097 = vmatmul.f32.gmra.mxu0 %v2007
        %v2098 = vpop.f32.mrf.mxu0
        %v2099 = vadd.f32 0.0, %v2098
        %2100 = vmatmul.f32.gmra.mxu0 %v2008
        %v2101 = vpop.f32.mrf.mxu0
        %v2102 = vadd.f32 0.0, %v2101
        %2103 = vmatmul.f32.gmra.mxu0 %v2017
        %v2104 = vpop.f32.mrf.mxu0
        %v2105 = vadd.f32 0.0, %v2104
        %2106 = vmatmul.f32.gmra.mxu0 %v2018
        %v2107 = vpop.f32.mrf.mxu0
        %v2108 = vadd.f32 0.0, %v2107
        %2109 = vmatmul.f32.gmra.mxu0 %v2027
        %v2110 = vpop.f32.mrf.mxu0
        %v2111 = vadd.f32 0.0, %v2110
        %2112 = vmatmul.f32.gmra.mxu0 %v2028
        %v2113 = vpop.f32.mrf.mxu0
        %v2114 = vadd.f32 0.0, %v2113
        %2115 = vmatmul.f32.gmra.mxu0 %v2037
        %v2116 = vpop.f32.mrf.mxu0
        %v2117 = vadd.f32 0.0, %v2116
        %2118 = vmatmul.f32.gmra.mxu0 %v2038
        %v2119 = vpop.f32.mrf.mxu0
        %v2120 = vadd.f32 0.0, %v2119
        %2121 = vmatmul.f32.gmra.mxu0 %v2047
        %v2122 = vpop.f32.mrf.mxu0
        %v2123 = vadd.f32 0.0, %v2122
        %2124 = vmatmul.f32.gmra.mxu0 %v2048
        %v2125 = vpop.f32.mrf.mxu0
        %v2126 = vadd.f32 0.0, %v2125
        %2127 = vmatmul.f32.gmra.mxu0 %v2057
        %v2128 = vpop.f32.mrf.mxu0
        %v2129 = vadd.f32 0.0, %v2128
        %2130 = vmatmul.f32.gmra.mxu0 %v2058
        %v2131 = vpop.f32.mrf.mxu0
        %v2132 = vadd.f32 0.0, %v2131
        %2133 = vmatmul.f32.gmra.mxu0 %v2065
        %v2134 = vpop.f32.mrf.mxu0
        %v2135 = vadd.f32 0.0, %v2134
        %2136 = vmatmul.f32.gmra.mxu0 %v2066
        %v2137 = vpop.f32.mrf.mxu0
        %v2138 = vadd.f32 0.0, %v2137
        %2139 = vdwg.mxu0
        %v2140 = vadd.f32 %v1932, %v2099
        %v2141 = vadd.f32 %v1933, %v2102
        %v2142 = vadd.f32 %v1934, %v2105
        %v2143 = vadd.f32 %v1935, %v2108
        %v2144 = vadd.f32 %v1936, %v2111
        %v2145 = vadd.f32 %v1937, %v2114
        %v2146 = vadd.f32 %v1938, %v2117
        %v2147 = vadd.f32 %v1939, %v2120
        %v2148 = vadd.f32 %v1940, %v2123
        %v2149 = vadd.f32 %v1941, %v2126
        %v2150 = vadd.f32 %v1942, %v2129
        %v2151 = vadd.f32 %v1943, %v2132
        %v2152 = vadd.f32 %v1944, %v2135
        %v2153 = vadd.f32 %v1945, %v2138
        %2154 = vst.sshfl [vmem:[#allocation1] sm:$0xff pattern:$0x73625140] %v264
        %2155 = vst.sshfl [vmem:[#allocation1 + $0x20] sm:$0xff pattern:$0x73625140] %v265
        %s2156 = scalar_lea.vmem [#allocation1], 1
        %v2157 = vld [vmem:[%s2156] ss:$4 sm:$0xff]
        %s2158 = scalar_lea.vmem [#allocation1], 2
        %v2159 = vld [vmem:[%s2158] ss:$4 sm:$0xff]
        %s2160 = scalar_lea.vmem [#allocation1], 3
        %v2161 = vld [vmem:[%s2160] ss:$4 sm:$0xff]
        %s2162 = scalar_lea.vmem [#allocation1], 32
        %v2163 = vld [vmem:[%s2162] ss:$4 sm:$0xff]
        %s2164 = scalar_lea.vmem [#allocation1], 33
        %v2165 = vld [vmem:[%s2164] ss:$4 sm:$0xff]
        %s2166 = scalar_lea.vmem [#allocation1], 34
        %v2167 = vld [vmem:[%s2166] ss:$4 sm:$0xff]
        %s2168 = scalar_lea.vmem [#allocation1], 35
        %v2169 = vld [vmem:[%s2168] ss:$4 sm:$0xff]
        %2170 = vst.sshfl [vmem:[#allocation1] sm:$0xff pattern:$0x73625140] %v266
        %v2171 = vld [vmem:[#allocation1] ss:$4 sm:$0xff]
        %v2172 = vld [vmem:[%s2156] ss:$4 sm:$0xff]
        %2173 = vst.sshfl [vmem:[#allocation1 + $0x20] sm:$0xff pattern:$0x73625140] %v267
        %v2174 = vld [vmem:[%s2164] ss:$4 sm:$0xff]
        %v2175 = vld [vmem:[%s2166] ss:$4 sm:$0xff]
        %v2176 = vld [vmem:[%s2168] ss:$4 sm:$0xff]
        %2177 = vst.sshfl [vmem:[#allocation1] sm:$0xff pattern:$0x73625140] %v268
        %2178 = vst.sshfl [vmem:[#allocation1 + $0x20] sm:$0xff pattern:$0x73625140] %v269
        %v2179 = vld [vmem:[#allocation1] ss:$4 sm:$0xff]
        %v2180 = vld [vmem:[%s2156] ss:$4 sm:$0xff]
        %v2181 = vld [vmem:[%s2158] ss:$4 sm:$0xff]
        %v2182 = vld [vmem:[%s2160] ss:$4 sm:$0xff]
        %v2183 = vld [vmem:[%s2162] ss:$4 sm:$0xff]
        %v2184 = vld [vmem:[%s2164] ss:$4 sm:$0xff]
        %2185 = vst.sshfl [vmem:[#allocation1] sm:$0xff pattern:$0x73625140] %v270
        %2186 = vst.sshfl [vmem:[#allocation1 + $0x20] sm:$0xff pattern:$0x73625140] %v271
        %v2187 = vld [vmem:[%s2156] ss:$4 sm:$0xff]
        %v2188 = vld [vmem:[%s2158] ss:$4 sm:$0xff]
        %v2189 = vld [vmem:[%s2160] ss:$4 sm:$0xff]
        %v2190 = vld [vmem:[%s2162] ss:$4 sm:$0xff]
        %v2191 = vld [vmem:[%s2164] ss:$4 sm:$0xff]
        %v2192 = vld [vmem:[%s2166] ss:$4 sm:$0xff]
        %v2193 = vld [vmem:[%s2168] ss:$4 sm:$0xff]
        %2194 = vst.sshfl [vmem:[#allocation1] sm:$0xff pattern:$0x73625140] %v272
        %v2195 = vld [vmem:[#allocation1] ss:$4 sm:$0xff]
        %v2196 = vld [vmem:[%s2156] ss:$4 sm:$0xff]
        %2197 = vst.sshfl [vmem:[#allocation1 + $0x20] sm:$0xff pattern:$0x73625140] %v273
        %v2198 = vld [vmem:[%s2164] ss:$4 sm:$0xff]
        %v2199 = vld [vmem:[%s2166] ss:$4 sm:$0xff]
        %v2200 = vld [vmem:[%s2168] ss:$4 sm:$0xff]
        %2201 = vst.sshfl [vmem:[#allocation1] sm:$0xff pattern:$0x73625140] %v274
        %2202 = vst.sshfl [vmem:[#allocation1 + $0x20] sm:$0xff pattern:$0x73625140] %v275
        %v2203 = vld [vmem:[#allocation1] ss:$4 sm:$0xff]
        %v2204 = vld [vmem:[%s2156] ss:$4 sm:$0xff]
        %v2205 = vld [vmem:[%s2158] ss:$4 sm:$0xff]
        %v2206 = vld [vmem:[%s2160] ss:$4 sm:$0xff]
        %v2207 = vld [vmem:[%s2162] ss:$4 sm:$0xff]
        %v2208 = vld [vmem:[%s2164] ss:$4 sm:$0xff]
        %2209 = vst.sshfl [vmem:[#allocation1] sm:$0xff pattern:$0x73625140] %v276
        %2210 = vst.sshfl [vmem:[#allocation1 + $0x20] sm:$0xff pattern:$0x73625140] %v277
        %v2211 = vld [vmem:[%s2156] ss:$4 sm:$0xff]
        %v2212 = vld [vmem:[%s2158] ss:$4 sm:$0xff]
        %v2213 = vld [vmem:[%s2160] ss:$4 sm:$0xff]
        %v2214 = vld [vmem:[%s2162] ss:$4 sm:$0xff]
        %v2215 = vld [vmem:[%s2164] ss:$4 sm:$0xff]
        %v2216 = vld [vmem:[%s2166] ss:$4 sm:$0xff]
        %v2217 = vld [vmem:[%s2168] ss:$4 sm:$0xff]
        %2218 = vst.sshfl [vmem:[#allocation1] sm:$0xff pattern:$0x73625140] %v278
        %v2219 = vld [vmem:[#allocation1] ss:$4 sm:$0xff]
        %v2220 = vld [vmem:[%s2156] ss:$4 sm:$0xff]
        %2221 = vst.sshfl [vmem:[#allocation1 + $0x20] sm:$0xff pattern:$0x73625140] %v279
        %v2222 = vld [vmem:[%s2164] ss:$4 sm:$0xff]
        %v2223 = vld [vmem:[%s2166] ss:$4 sm:$0xff]
        %v2224 = vld [vmem:[%s2168] ss:$4 sm:$0xff]
        %2225 = vst.sshfl [vmem:[#allocation1] sm:$0xff pattern:$0x73625140] %v280
        %2226 = vst.sshfl [vmem:[#allocation1 + $0x20] sm:$0xff pattern:$0x73625140] %v281
        %v2227 = vld [vmem:[#allocation1] ss:$4 sm:$0xff]
        %v2228 = vld [vmem:[%s2156] ss:$4 sm:$0xff]
        %v2229 = vld [vmem:[%s2158] ss:$4 sm:$0xff]
        %v2230 = vld [vmem:[%s2160] ss:$4 sm:$0xff]
        %v2231 = vld [vmem:[%s2162] ss:$4 sm:$0xff]
        %v2232 = vld [vmem:[%s2164] ss:$4 sm:$0xff]
        %s2233 = scalar_lea.vmem %s1, 1024
        %v2234 = vld [vmem:[%s2233] sm:$0xff]
        %v2235 = vld [vmem:[%s2233 + $0x8] sm:$0xff]
        %v2236 = vld [vmem:[%s2233 + $0x10] sm:$0xff]
        %v2237 = vld [vmem:[%s2233 + $0x18] sm:$0xff]
        %v2238 = vld [vmem:[%s2233 + $0x20] sm:$0xff]
        %v2239 = vld [vmem:[%s2233 + $0x28] sm:$0xff]
        %v2240 = vld [vmem:[%s2233 + $0x30] sm:$0xff]
        %v2241 = vld [vmem:[%s2233 + $0x38] sm:$0xff]
        %v2242 = vld [vmem:[%s2233 + $0x40] sm:$0xff]
        %v2243 = vld [vmem:[%s2233 + $0x48] sm:$0xff]
        %v2244 = vld [vmem:[%s2233 + $0x50] sm:$0xff]
        %v2245 = vld [vmem:[%s2233 + $0x58] sm:$0xff]
        %v2246 = vld [vmem:[%s2233 + $0x60] sm:$0xff]
        %v2247 = vld [vmem:[%s2233 + $0x68] sm:$0xff]
        %v2248 = vld [vmem:[%s2233 + $0x70] sm:$0xff]
        %v2249 = vld [vmem:[%s2233 + $0x78] sm:$0xff]
        %2250 = vst [vmem:[#allocation1] ss:$4 sm:$0xff] %v2157
        %s2251 = scalar_lea.vmem [#allocation1], 1
        %2252 = vst [vmem:[%s2251] ss:$4 sm:$0xff] %v2159
        %s2253 = scalar_lea.vmem [#allocation1], 2
        %2254 = vst [vmem:[%s2253] ss:$4 sm:$0xff] %v2161
        %s2255 = scalar_lea.vmem [#allocation1], 3
        %2256 = vst [vmem:[%s2255] ss:$4 sm:$0xff] %v2163
        %s2257 = scalar_lea.vmem [#allocation1], 32
        %2258 = vst [vmem:[%s2257] ss:$4 sm:$0xff] %v2165
        %s2259 = scalar_lea.vmem [#allocation1], 33
        %2260 = vst [vmem:[%s2259] ss:$4 sm:$0xff] %v2167
        %s2261 = scalar_lea.vmem [#allocation1], 34
        %2262 = vst [vmem:[%s2261] ss:$4 sm:$0xff] %v2169
        %s2263 = scalar_lea.vmem [#allocation1], 35
        %2264 = vst [vmem:[%s2263] ss:$4 sm:$0xff] %v2171
        %v2265 = vld.sshfl [vmem:[#allocation1] sm:$0xff pattern:$0x73625140]
        %v2266 = vld.sshfl [vmem:[#allocation1 + $0x20] sm:$0xff pattern:$0x73625140]
        %2267 = vst [vmem:[#allocation1] ss:$4 sm:$0xff] %v2172
        %2268 = vst [vmem:[%s2251] ss:$4 sm:$0xff] %v2174
        %2269 = vst [vmem:[%s2253] ss:$4 sm:$0xff] %v2175
        %2270 = vst [vmem:[%s2255] ss:$4 sm:$0xff] %v2176
        %2271 = vst [vmem:[%s2257] ss:$4 sm:$0xff] %v2179
        %2272 = vst [vmem:[%s2259] ss:$4 sm:$0xff] %v2180
        %2273 = vst [vmem:[%s2261] ss:$4 sm:$0xff] %v2181
        %2274 = vst [vmem:[%s2263] ss:$4 sm:$0xff] %v2182
        %v2275 = vld.sshfl [vmem:[#allocation1] sm:$0xff pattern:$0x73625140]
        %v2276 = vld.sshfl [vmem:[#allocation1 + $0x20] sm:$0xff pattern:$0x73625140]
        %2277 = vst [vmem:[#allocation1] ss:$4 sm:$0xff] %v2183
        %2278 = vst [vmem:[%s2251] ss:$4 sm:$0xff] %v2184
        %2279 = vst [vmem:[%s2253] ss:$4 sm:$0xff] %v2187
        %2280 = vst [vmem:[%s2255] ss:$4 sm:$0xff] %v2188
        %2281 = vst [vmem:[%s2257] ss:$4 sm:$0xff] %v2189
        %2282 = vst [vmem:[%s2259] ss:$4 sm:$0xff] %v2190
        %2283 = vst [vmem:[%s2261] ss:$4 sm:$0xff] %v2191
        %2284 = vst [vmem:[%s2263] ss:$4 sm:$0xff] %v2192
        %v2285 = vld.sshfl [vmem:[#allocation1] sm:$0xff pattern:$0x73625140]
        %v2286 = vld.sshfl [vmem:[#allocation1 + $0x20] sm:$0xff pattern:$0x73625140]
        %2287 = vst [vmem:[#allocation1] ss:$4 sm:$0xff] %v2193
        %2288 = vst [vmem:[%s2251] ss:$4 sm:$0xff] %v2195
        %2289 = vst [vmem:[%s2253] ss:$4 sm:$0xff] %v2196
        %2290 = vst [vmem:[%s2255] ss:$4 sm:$0xff] %v2198
        %2291 = vst [vmem:[%s2257] ss:$4 sm:$0xff] %v2199
        %2292 = vst [vmem:[%s2259] ss:$4 sm:$0xff] %v2200
        %2293 = vst [vmem:[%s2261] ss:$4 sm:$0xff] %v2203
        %2294 = vst [vmem:[%s2263] ss:$4 sm:$0xff] %v2204
        %v2295 = vld.sshfl [vmem:[#allocation1] sm:$0xff pattern:$0x73625140]
        %v2296 = vld.sshfl [vmem:[#allocation1 + $0x20] sm:$0xff pattern:$0x73625140]
        %2297 = vst [vmem:[#allocation1] ss:$4 sm:$0xff] %v2205
        %2298 = vst [vmem:[%s2251] ss:$4 sm:$0xff] %v2206
        %2299 = vst [vmem:[%s2253] ss:$4 sm:$0xff] %v2207
        %2300 = vst [vmem:[%s2255] ss:$4 sm:$0xff] %v2208
        %2301 = vst [vmem:[%s2257] ss:$4 sm:$0xff] %v2211
        %2302 = vst [vmem:[%s2259] ss:$4 sm:$0xff] %v2212
        %2303 = vst [vmem:[%s2261] ss:$4 sm:$0xff] %v2213
        %2304 = vst [vmem:[%s2263] ss:$4 sm:$0xff] %v2214
        %v2305 = vld.sshfl [vmem:[#allocation1] sm:$0xff pattern:$0x73625140]
        %v2306 = vld.sshfl [vmem:[#allocation1 + $0x20] sm:$0xff pattern:$0x73625140]
        %2307 = vst [vmem:[#allocation1] ss:$4 sm:$0xff] %v2215
        %2308 = vst [vmem:[%s2251] ss:$4 sm:$0xff] %v2216
        %2309 = vst [vmem:[%s2253] ss:$4 sm:$0xff] %v2217
        %2310 = vst [vmem:[%s2255] ss:$4 sm:$0xff] %v2219
        %2311 = vst [vmem:[%s2257] ss:$4 sm:$0xff] %v2220
        %2312 = vst [vmem:[%s2259] ss:$4 sm:$0xff] %v2222
        %2313 = vst [vmem:[%s2261] ss:$4 sm:$0xff] %v2223
        %2314 = vst [vmem:[%s2263] ss:$4 sm:$0xff] %v2224
        %v2315 = vld.sshfl [vmem:[#allocation1] sm:$0xff pattern:$0x73625140]
        %v2316 = vld.sshfl [vmem:[#allocation1 + $0x20] sm:$0xff pattern:$0x73625140]
        %2317 = vst [vmem:[#allocation1] ss:$4 sm:$0xff] %v2227
        %2318 = vst [vmem:[%s2251] ss:$4 sm:$0xff] %v2228
        %2319 = vst [vmem:[%s2253] ss:$4 sm:$0xff] %v2229
        %2320 = vst [vmem:[%s2255] ss:$4 sm:$0xff] %v2230
        %2321 = vst [vmem:[%s2257] ss:$4 sm:$0xff] %v2231
        %2322 = vst [vmem:[%s2259] ss:$4 sm:$0xff] %v2232
        %v2323 = vld.sshfl [vmem:[#allocation1] sm:$0xff pattern:$0x73625140]
        %v2324 = vld.sshfl [vmem:[#allocation1 + $0x20] sm:$0xff pattern:$0x73625140]
        %2339 = vmatpush.msra.mxu0 %v2249
        %2340 = vmatpush.msra.mxu0 %v2248
        %2341 = vmatpush.msra.mxu0 %v2247
        %2342 = vmatpush.msra.mxu0 %v2246
        %2343 = vmatpush.msra.mxu0 %v2245
        %2344 = vmatpush.msra.mxu0 %v2244
        %2345 = vmatpush.msra.mxu0 %v2243
        %2346 = vmatpush.msra.mxu0 %v2242
        %2347 = vmatpush.msra.mxu0 %v2241
        %2348 = vmatpush.msra.mxu0 %v2240
        %2349 = vmatpush.msra.mxu0 %v2239
        %2350 = vmatpush.msra.mxu0 %v2238
        %2351 = vmatpush.msra.mxu0 %v2237
        %2352 = vmatpush.msra.mxu0 %v2236
        %2353 = vmatpush.msra.mxu0 %v2235
        %2354 = vmatpush.msra.mxu0 %v2234
        %2355 = vmatmul.f32.gmra.mxu0 %v2265
        %v2356 = vpop.f32.mrf.mxu0
        %v2357 = vadd.f32 0.0, %v2356
        %2358 = vmatmul.f32.gmra.mxu0 %v2266
        %v2359 = vpop.f32.mrf.mxu0
        %v2360 = vadd.f32 0.0, %v2359
        %2361 = vmatmul.f32.gmra.mxu0 %v2275
        %v2362 = vpop.f32.mrf.mxu0
        %v2363 = vadd.f32 0.0, %v2362
        %2364 = vmatmul.f32.gmra.mxu0 %v2276
        %v2365 = vpop.f32.mrf.mxu0
        %v2366 = vadd.f32 0.0, %v2365
        %2367 = vmatmul.f32.gmra.mxu0 %v2285
        %v2368 = vpop.f32.mrf.mxu0
        %v2369 = vadd.f32 0.0, %v2368
        %2370 = vmatmul.f32.gmra.mxu0 %v2286
        %v2371 = vpop.f32.mrf.mxu0
        %v2372 = vadd.f32 0.0, %v2371
        %2373 = vmatmul.f32.gmra.mxu0 %v2295
        %v2374 = vpop.f32.mrf.mxu0
        %v2375 = vadd.f32 0.0, %v2374
        %2376 = vmatmul.f32.gmra.mxu0 %v2296
        %v2377 = vpop.f32.mrf.mxu0
        %v2378 = vadd.f32 0.0, %v2377
        %2379 = vmatmul.f32.gmra.mxu0 %v2305
        %v2380 = vpop.f32.mrf.mxu0
        %v2381 = vadd.f32 0.0, %v2380
        %2382 = vmatmul.f32.gmra.mxu0 %v2306
        %v2383 = vpop.f32.mrf.mxu0
        %v2384 = vadd.f32 0.0, %v2383
        %2385 = vmatmul.f32.gmra.mxu0 %v2315
        %v2386 = vpop.f32.mrf.mxu0
        %v2387 = vadd.f32 0.0, %v2386
        %2388 = vmatmul.f32.gmra.mxu0 %v2316
        %v2389 = vpop.f32.mrf.mxu0
        %v2390 = vadd.f32 0.0, %v2389
        %2391 = vmatmul.f32.gmra.mxu0 %v2323
        %v2392 = vpop.f32.mrf.mxu0
        %v2393 = vadd.f32 0.0, %v2392
        %2394 = vmatmul.f32.gmra.mxu0 %v2324
        %v2395 = vpop.f32.mrf.mxu0
        %v2396 = vadd.f32 0.0, %v2395
        %2397 = vdwg.mxu0
        %v2398 = vadd.f32 %v2140, %v2357
        %v2399 = vadd.f32 %v2141, %v2360
        %v2400 = vadd.f32 %v2142, %v2363
        %v2401 = vadd.f32 %v2143, %v2366
        %v2402 = vadd.f32 %v2144, %v2369
        %v2403 = vadd.f32 %v2145, %v2372
        %v2404 = vadd.f32 %v2146, %v2375
        %v2405 = vadd.f32 %v2147, %v2378
        %v2406 = vadd.f32 %v2148, %v2381
        %v2407 = vadd.f32 %v2149, %v2384
        %v2408 = vadd.f32 %v2150, %v2387
        %v2409 = vadd.f32 %v2151, %v2390
        %v2410 = vadd.f32 %v2152, %v2393
        %v2411 = vadd.f32 %v2153, %v2396
        %v2412 = vld [vmem:[%s2] sm:$0x1]
        %v2414 = vperm.slane %v2412, 0
        %v2416 = vadd.f32 %v2398, %v2414
        %v2417 = vadd.f32 %v2399, %v2414
        %v2418 = vadd.f32 %v2400, %v2414
        %v2419 = vadd.f32 %v2401, %v2414
        %v2420 = vadd.f32 %v2402, %v2414
        %v2421 = vadd.f32 %v2403, %v2414
        %v2422 = vadd.f32 %v2404, %v2414
        %v2423 = vadd.f32 %v2405, %v2414
        %v2424 = vadd.f32 %v2406, %v2414
        %v2425 = vadd.f32 %v2407, %v2414
        %v2426 = vadd.f32 %v2408, %v2414
        %v2427 = vadd.f32 %v2409, %v2414
        %v2428 = vadd.f32 %v2410, %v2414
        %v2429 = vadd.f32 %v2411, %v2414
        %v2430 = vmax.f32 %v2416, 0.0
        %v2431 = vmax.f32 %v2417, 0.0
        %v2432 = vmax.f32 %v2418, 0.0
        %v2433 = vmax.f32 %v2419, 0.0
        %v2434 = vmax.f32 %v2420, 0.0
        %v2435 = vmax.f32 %v2421, 0.0
        %v2436 = vmax.f32 %v2422, 0.0
        %v2437 = vmax.f32 %v2423, 0.0
        %v2438 = vmax.f32 %v2424, 0.0
        %v2439 = vmax.f32 %v2425, 0.0
        %v2440 = vmax.f32 %v2426, 0.0
        %v2441 = vmax.f32 %v2427, 0.0
        %v2442 = vmax.f32 %v2428, 0.0
        %v2443 = vmax.f32 %v2429, 0.0
        %v2458 = vrot.slane %v2430, 2
        %v2459 = vrot.slane %v2430, 4
        %v2460 = vrot.slane %v2430, 6
        %v2461 = vrot.slane %v2431, 2
        %v2462 = vrot.slane %v2431, 4
        %v2463 = vrot.slane %v2431, 6
        %v2464 = vrot.slane %v2432, 2
        %v2465 = vrot.slane %v2432, 4
        %v2466 = vrot.slane %v2432, 6
        %v2467 = vrot.slane %v2433, 2
        %v2468 = vrot.slane %v2433, 4
        %v2469 = vrot.slane %v2433, 6
        %v2470 = vrot.slane %v2434, 2
        %v2471 = vrot.slane %v2434, 4
        %v2472 = vrot.slane %v2434, 6
        %v2473 = vrot.slane %v2435, 2
        %v2474 = vrot.slane %v2435, 4
        %v2475 = vrot.slane %v2435, 6
        %v2476 = vrot.slane %v2436, 2
        %v2477 = vrot.slane %v2436, 4
        %v2478 = vrot.slane %v2436, 6
        %v2479 = vrot.slane %v2437, 2
        %v2480 = vrot.slane %v2437, 4
        %v2481 = vrot.slane %v2437, 6
        %v2482 = vrot.slane %v2438, 2
        %v2483 = vrot.slane %v2438, 4
        %v2484 = vrot.slane %v2438, 6
        %v2485 = vrot.slane %v2439, 2
        %v2486 = vrot.slane %v2439, 4
        %v2487 = vrot.slane %v2439, 6
        %v2488 = vrot.slane %v2440, 2
        %v2489 = vrot.slane %v2440, 4
        %v2490 = vrot.slane %v2440, 6
        %v2491 = vrot.slane %v2441, 2
        %v2492 = vrot.slane %v2441, 4
        %v2493 = vrot.slane %v2441, 6
        %v2494 = vrot.slane %v2442, 2
        %v2495 = vrot.slane %v2442, 4
        %v2496 = vrot.slane %v2442, 6
        %v2497 = vrot.slane %v2443, 2
        %v2498 = vlaneseq
        %v2499 = vshrl.u32 %v2498, 7
        %v2500 = vadd.s32 %v2499, 8
        %v2501 = vadd.s32 %v2499, 16
        %vm2502 = vcmp.ge.s32.totalorder %v2499, 1
        %vm2503 = vcmp.ge.s32.totalorder %v2500, 1
        %vm2504 = vcmp.ge.s32.totalorder %v2501, 1
        %vm2505 = vcmp.le.s32.totalorder %v2499, 16
        %vm2506 = vcmp.le.s32.totalorder %v2500, 16
        %vm2507 = vcmp.le.s32.totalorder %v2501, 16
        %vm2508 = vmand %vm2502, %vm2505
        %vm2509 = vmand %vm2503, %vm2506
        %vm2510 = vmand %vm2504, %vm2507
        %v2511 = vsel %vm2508, 1, 0
        %v2512 = vsel %vm2509, 1, 0
        %v2513 = vsel %vm2510, 1, 0
        %vm2514 = vcmp.eq.s32.totalorder %v2511, 1
        %vm2515 = vcmp.eq.s32.totalorder %v2512, 1
        %vm2516 = vcmp.eq.s32.totalorder %v2513, 1
        %2517 = vst [vmem:[#allocation1] ss:$4 sm:$0xff] %v2430
        %s2518 = scalar_lea.vmem [#allocation1], 1
        %2519 = vst [vmem:[%s2518] ss:$4 sm:$0xff] %v2458
        %s2520 = scalar_lea.vmem [#allocation1], 2
        %2521 = vst [vmem:[%s2520] ss:$4 sm:$0xff] %v2459
        %s2522 = scalar_lea.vmem [#allocation1], 3
        %2523 = vst [vmem:[%s2522] ss:$4 sm:$0xff] %v2460
        %s2524 = scalar_lea.vmem [#allocation1], 32
        %2525 = vst [vmem:[%s2524] ss:$4 sm:$0xff] %v2431
        %s2526 = scalar_lea.vmem [#allocation1], 33
        %2527 = vst [vmem:[%s2526] ss:$4 sm:$0xff] %v2461
        %s2528 = scalar_lea.vmem [#allocation1], 34
        %2529 = vst [vmem:[%s2528] ss:$4 sm:$0xff] %v2462
        %s2530 = scalar_lea.vmem [#allocation1], 35
        %2531 = vst [vmem:[%s2530] ss:$4 sm:$0xff] %v2463
        %v2532 = vld.sshfl [vmem:[#allocation1] sm:$0xff pattern:$0x73625140]
        %v2533 = vld.sshfl [vmem:[#allocation1 + $0x20] sm:$0xff pattern:$0x73625140]
        %2534 = vst [vmem:[#allocation1] ss:$4 sm:$0xff] %v2432
        %v2535 = vld.sshfl [vmem:[#allocation1] sm:$0xff pattern:$0x73625140]
        %2536 = vst [vmem:[%s2524] ss:$4 sm:$0xff] %v2464
        %2537 = vst [vmem:[%s2526] ss:$4 sm:$0xff] %v2465
        %2538 = vst [vmem:[%s2528] ss:$4 sm:$0xff] %v2466
        %2539 = vst [vmem:[%s2530] ss:$4 sm:$0xff] %v2433
        %v2540 = vld.sshfl [vmem:[#allocation1 + $0x20] sm:$0xff pattern:$0x73625140]
        %2541 = vst [vmem:[#allocation1] ss:$4 sm:$0xff] %v2467
        %2542 = vst [vmem:[%s2518] ss:$4 sm:$0xff] %v2468
        %2543 = vst [vmem:[%s2520] ss:$4 sm:$0xff] %v2469
        %2544 = vst [vmem:[%s2522] ss:$4 sm:$0xff] %v2434
        %2545 = vst [vmem:[%s2524] ss:$4 sm:$0xff] %v2470
        %v2546 = vld.sshfl [vmem:[#allocation1] sm:$0xff pattern:$0x73625140]
        %v2547 = vld.sshfl [vmem:[#allocation1 + $0x20] sm:$0xff pattern:$0x73625140]
        %2548 = vst [vmem:[#allocation1] ss:$4 sm:$0xff] %v2471
        %2549 = vst [vmem:[%s2518] ss:$4 sm:$0xff] %v2472
        %2550 = vst [vmem:[%s2520] ss:$4 sm:$0xff] %v2435
        %2551 = vst [vmem:[%s2522] ss:$4 sm:$0xff] %v2473
        %2552 = vst [vmem:[%s2524] ss:$4 sm:$0xff] %v2474
        %2553 = vst [vmem:[%s2526] ss:$4 sm:$0xff] %v2475
        %2554 = vst [vmem:[%s2528] ss:$4 sm:$0xff] %v2436
        %2555 = vst [vmem:[%s2530] ss:$4 sm:$0xff] %v2476
        %v2556 = vld.sshfl [vmem:[#allocation1] sm:$0xff pattern:$0x73625140]
        %v2557 = vld.sshfl [vmem:[#allocation1 + $0x20] sm:$0xff pattern:$0x73625140]
        %2558 = vst [vmem:[#allocation1] ss:$4 sm:$0xff] %v2477
        %v2559 = vld.sshfl [vmem:[#allocation1] sm:$0xff pattern:$0x73625140]
        %2560 = vst [vmem:[%s2524] ss:$4 sm:$0xff] %v2478
        %2561 = vst [vmem:[%s2526] ss:$4 sm:$0xff] %v2437
        %2562 = vst [vmem:[%s2528] ss:$4 sm:$0xff] %v2479
        %2563 = vst [vmem:[%s2530] ss:$4 sm:$0xff] %v2480
        %v2564 = vld.sshfl [vmem:[#allocation1 + $0x20] sm:$0xff pattern:$0x73625140]
        %2565 = vst [vmem:[#allocation1] ss:$4 sm:$0xff] %v2481
        %2566 = vst [vmem:[%s2518] ss:$4 sm:$0xff] %v2438
        %2567 = vst [vmem:[%s2520] ss:$4 sm:$0xff] %v2482
        %2568 = vst [vmem:[%s2522] ss:$4 sm:$0xff] %v2483
        %2569 = vst [vmem:[%s2524] ss:$4 sm:$0xff] %v2484
        %v2570 = vld.sshfl [vmem:[#allocation1] sm:$0xff pattern:$0x73625140]
        %v2571 = vld.sshfl [vmem:[#allocation1 + $0x20] sm:$0xff pattern:$0x73625140]
        %2572 = vst [vmem:[#allocation1] ss:$4 sm:$0xff] %v2439
        %2573 = vst [vmem:[%s2518] ss:$4 sm:$0xff] %v2485
        %2574 = vst [vmem:[%s2520] ss:$4 sm:$0xff] %v2486
        %2575 = vst [vmem:[%s2522] ss:$4 sm:$0xff] %v2487
        %2576 = vst [vmem:[%s2524] ss:$4 sm:$0xff] %v2440
        %2577 = vst [vmem:[%s2526] ss:$4 sm:$0xff] %v2488
        %2578 = vst [vmem:[%s2528] ss:$4 sm:$0xff] %v2489
        %2579 = vst [vmem:[%s2530] ss:$4 sm:$0xff] %v2490
        %v2580 = vld.sshfl [vmem:[#allocation1] sm:$0xff pattern:$0x73625140]
        %v2581 = vld.sshfl [vmem:[#allocation1 + $0x20] sm:$0xff pattern:$0x73625140]
        %2582 = vst [vmem:[#allocation1] ss:$4 sm:$0xff] %v2441
        %v2583 = vld.sshfl [vmem:[#allocation1] sm:$0xff pattern:$0x73625140]
        %2584 = vst [vmem:[%s2524] ss:$4 sm:$0xff] %v2491
        %2585 = vst [vmem:[%s2526] ss:$4 sm:$0xff] %v2492
        %2586 = vst [vmem:[%s2528] ss:$4 sm:$0xff] %v2493
        %2587 = vst [vmem:[%s2530] ss:$4 sm:$0xff] %v2442
        %v2588 = vld.sshfl [vmem:[#allocation1 + $0x20] sm:$0xff pattern:$0x73625140]
        %2589 = vst [vmem:[#allocation1] ss:$4 sm:$0xff] %v2494
        %2590 = vst [vmem:[%s2518] ss:$4 sm:$0xff] %v2495
        %2591 = vst [vmem:[%s2520] ss:$4 sm:$0xff] %v2496
        %2592 = vst [vmem:[%s2522] ss:$4 sm:$0xff] %v2443
        %2593 = vst [vmem:[%s2524] ss:$4 sm:$0xff] %v2497
        %v2594 = vld.sshfl [vmem:[#allocation1] sm:$0xff pattern:$0x73625140]
        %v2595 = vld.sshfl [vmem:[#allocation1 + $0x20] sm:$0xff pattern:$0x73625140]
        %v2614 = vsel %vm2514, %v2532, 0.0
        %v2615 = vsel %vm2515, %v2533, 0.0
        %v2616 = vsel %vm2516, %v2535, 0.0
        %v2617 = vsel %vm2514, %v2540, 0.0
        %v2618 = vsel %vm2515, %v2546, 0.0
        %v2619 = vsel %vm2516, %v2547, 0.0
        %v2620 = vsel %vm2514, %v2556, 0.0
        %v2621 = vsel %vm2515, %v2557, 0.0
        %v2622 = vsel %vm2516, %v2559, 0.0
        %v2623 = vsel %vm2514, %v2564, 0.0
        %v2624 = vsel %vm2515, %v2570, 0.0
        %v2625 = vsel %vm2516, %v2571, 0.0
        %v2626 = vsel %vm2514, %v2580, 0.0
        %v2627 = vsel %vm2515, %v2581, 0.0
        %v2628 = vsel %vm2516, %v2583, 0.0
        %v2629 = vsel %vm2514, %v2588, 0.0
        %v2630 = vsel %vm2515, %v2594, 0.0
        %v2631 = vsel %vm2516, %v2595, 0.0
        %2632 = vst [vmem:[#allocation2] sm:$0xff] %v2614
        %2633 = vst [vmem:[#allocation2 + $0x8] sm:$0xff] %v2615
        %2634 = vst [vmem:[#allocation2 + $0x10] sm:$0x3] %v2616
        %2635 = vst [vmem:[#allocation2 + $0x18] sm:$0xff] %v2617
        %2636 = vst [vmem:[#allocation2 + $0x20] sm:$0xff] %v2618
        %2637 = vst [vmem:[#allocation2 + $0x28] sm:$0x3] %v2619
        %2638 = vst [vmem:[#allocation2 + $0x30] sm:$0xff] %v2620
        %2639 = vst [vmem:[#allocation2 + $0x38] sm:$0xff] %v2621
        %2640 = vst [vmem:[#allocation2 + $0x40] sm:$0x3] %v2622
        %2641 = vst [vmem:[#allocation2 + $0x48] sm:$0xff] %v2623
        %2642 = vst [vmem:[#allocation2 + $0x50] sm:$0xff] %v2624
        %2643 = vst [vmem:[#allocation2 + $0x58] sm:$0x3] %v2625
        %2644 = vst [vmem:[#allocation2 + $0x60] sm:$0xff] %v2626
        %2645 = vst [vmem:[#allocation2 + $0x68] sm:$0xff] %v2627
        %2646 = vst [vmem:[#allocation2 + $0x70] sm:$0x3] %v2628
        %2647 = vst [vmem:[#allocation2 + $0x78] sm:$0xff] %v2629
        %2648 = vst [vmem:[#allocation2 + $0x80] sm:$0xff] %v2630
        %2649 = vst [vmem:[#allocation2 + $0x88] sm:$0x3] %v2631
        %p2650 = scmp.eq.s32.totalorder %s25, 0
        // Predicated region
        $region45: #{tpu_custom_call.1} parent=39 // pred_check
          %p2651 = pneg %p2650
        $region46: #{tpu_custom_call.1} parent=39 // pred_check_branch
          %2653 = sbr.rel (%p2651) target = $region48
        $region47: #{tpu_custom_call.1} parent=39 // pred_region
          %2654 = vst [vmem:[#allocation2] sm:$0xff] 0.0
          %2655 = vst [vmem:[#allocation2 + $0x8] sm:$0xff] 0.0
          %2656 = vst [vmem:[#allocation2 + $0x10] sm:$0x3] 0.0
        $region48: #{tpu_custom_call.1} parent=39 // pred_fallthru
          _
        %p2657 = scmp.eq.s32.totalorder %s25, 3
        // Predicated region
        $region49: #{tpu_custom_call.1} parent=39 // pred_check
          %p2658 = pneg %p2657
        $region50: #{tpu_custom_call.1} parent=39 // pred_check_branch
          %2660 = sbr.rel (%p2658) target = $region52
        $region51: #{tpu_custom_call.1} parent=39 // pred_region
          %s2661 = scalar_lea.vmem [#allocation2], 120
          %2662 = vst [vmem:[%s2661] sm:$0xff] 0.0
          %2663 = vst [vmem:[%s2661 + $0x8] sm:$0xff] 0.0
          %2664 = vst [vmem:[%s2661 + $0x10] sm:$0x3] 0.0
        $region52: #{tpu_custom_call.1} parent=39 // pred_fallthru
          _
        %v2665 = vld [vmem:[#allocation2] sm:$0xff]
        %v2666 = vld [vmem:[#allocation2 + $0x8] sm:$0xff]
        %v2667 = vld [vmem:[#allocation2 + $0x18] sm:$0xff]
        %v2668 = vld [vmem:[#allocation2 + $0x20] sm:$0xff]
        %v2669 = vld [vmem:[#allocation2 + $0x30] sm:$0xff]
        %v2670 = vld [vmem:[#allocation2 + $0x38] sm:$0xff]
        %v2671 = vld [vmem:[#allocation2 + $0x48] sm:$0xff]
        %v2672 = vld [vmem:[#allocation2 + $0x50] sm:$0xff]
        %v2673 = vld [vmem:[#allocation3] sm:$0xff]
        %v2674 = vld [vmem:[#allocation3 + $0x8] sm:$0xff]
        %v2675 = vld [vmem:[#allocation3 + $0x10] sm:$0xff]
        %v2676 = vld [vmem:[#allocation3 + $0x18] sm:$0xff]
        %v2677 = vld [vmem:[#allocation3 + $0x20] sm:$0xff]
        %v2678 = vld [vmem:[#allocation3 + $0x28] sm:$0xff]
        %v2679 = vld [vmem:[#allocation3 + $0x30] sm:$0xff]
        %v2680 = vld [vmem:[#allocation3 + $0x38] sm:$0xff]
        %v2681 = vld [vmem:[#allocation3 + $0x40] sm:$0xff]
        %v2682 = vld [vmem:[#allocation3 + $0x48] sm:$0xff]
        %v2683 = vld [vmem:[#allocation3 + $0x50] sm:$0xff]
        %v2684 = vld [vmem:[#allocation3 + $0x58] sm:$0xff]
        %v2685 = vld [vmem:[#allocation3 + $0x60] sm:$0xff]
        %v2686 = vld [vmem:[#allocation3 + $0x68] sm:$0xff]
        %v2687 = vld [vmem:[#allocation3 + $0x70] sm:$0xff]
        %v2688 = vld [vmem:[#allocation3 + $0x78] sm:$0xff]
        %v2689 = vld [vmem:[#allocation2 + $0x1] sm:$0xff]
        %v2690 = vld [vmem:[#allocation2 + $0x9] sm:$0xff]
        %v2691 = vld [vmem:[#allocation2 + $0x19] sm:$0xff]
        %v2692 = vld [vmem:[#allocation2 + $0x21] sm:$0xff]
        %v2693 = vld [vmem:[#allocation2 + $0x31] sm:$0xff]
        %v2694 = vld [vmem:[#allocation2 + $0x39] sm:$0xff]
        %v2695 = vld [vmem:[#allocation2 + $0x49] sm:$0xff]
        %v2696 = vld [vmem:[#allocation2 + $0x51] sm:$0xff]
        %s2697 = scalar_lea.vmem [#allocation3], 128
        %v2698 = vld [vmem:[%s2697] sm:$0xff]
        %v2699 = vld [vmem:[%s2697 + $0x8] sm:$0xff]
        %v2700 = vld [vmem:[%s2697 + $0x10] sm:$0xff]
        %v2701 = vld [vmem:[%s2697 + $0x18] sm:$0xff]
        %v2702 = vld [vmem:[%s2697 + $0x20] sm:$0xff]
        %v2703 = vld [vmem:[%s2697 + $0x28] sm:$0xff]
        %v2704 = vld [vmem:[%s2697 + $0x30] sm:$0xff]
        %v2705 = vld [vmem:[%s2697 + $0x38] sm:$0xff]
        %v2706 = vld [vmem:[%s2697 + $0x40] sm:$0xff]
        %v2707 = vld [vmem:[%s2697 + $0x48] sm:$0xff]
        %v2708 = vld [vmem:[%s2697 + $0x50] sm:$0xff]
        %v2709 = vld [vmem:[%s2697 + $0x58] sm:$0xff]
        %v2710 = vld [vmem:[%s2697 + $0x60] sm:$0xff]
        %v2711 = vld [vmem:[%s2697 + $0x68] sm:$0xff]
        %v2712 = vld [vmem:[%s2697 + $0x70] sm:$0xff]
        %v2713 = vld [vmem:[%s2697 + $0x78] sm:$0xff]
        %2714 = vmatpush.msra.mxu0 %v2713
        %2715 = vmatpush.msra.mxu0 %v2712
        %2716 = vmatpush.msra.mxu0 %v2711
        %2717 = vmatpush.msra.mxu0 %v2710
        %2718 = vmatpush.msra.mxu0 %v2709
        %2719 = vmatpush.msra.mxu0 %v2708
        %2720 = vmatpush.msra.mxu0 %v2707
        %2721 = vmatpush.msra.mxu0 %v2706
        %2722 = vmatpush.msra.mxu0 %v2705
        %2723 = vmatpush.msra.mxu0 %v2704
        %2724 = vmatpush.msra.mxu0 %v2703
        %2725 = vmatpush.msra.mxu0 %v2702
        %2726 = vmatpush.msra.mxu0 %v2701
        %2727 = vmatpush.msra.mxu0 %v2700
        %2728 = vmatpush.msra.mxu0 %v2699
        %2729 = vmatpush.msra.mxu0 %v2698
        %2730 = vmatmul.f32.gmra.mxu0 %v2689
        %v2731 = vpop.f32.mrf.mxu0
        %v2732 = vadd.f32 0.0, %v2731
        %2733 = vmatmul.f32.gmra.mxu0 %v2690
        %v2734 = vpop.f32.mrf.mxu0
        %v2735 = vadd.f32 0.0, %v2734
        %2736 = vmatmul.f32.gmra.mxu0 %v2691
        %v2737 = vpop.f32.mrf.mxu0
        %v2738 = vadd.f32 0.0, %v2737
        %2739 = vmatmul.f32.gmra.mxu0 %v2692
        %v2740 = vpop.f32.mrf.mxu0
        %v2741 = vadd.f32 0.0, %v2740
        %2742 = vmatmul.f32.gmra.mxu0 %v2693
        %v2743 = vpop.f32.mrf.mxu0
        %v2744 = vadd.f32 0.0, %v2743
        %2745 = vmatmul.f32.gmra.mxu0 %v2694
        %v2746 = vpop.f32.mrf.mxu0
        %v2747 = vadd.f32 0.0, %v2746
        %2748 = vmatmul.f32.gmra.mxu0 %v2695
        %v2749 = vpop.f32.mrf.mxu0
        %v2750 = vadd.f32 0.0, %v2749
        %2751 = vmatmul.f32.gmra.mxu0 %v2696
        %v2752 = vpop.f32.mrf.mxu0
        %v2753 = vadd.f32 0.0, %v2752
        %2754 = vdwg.mxu0
        %2755 = vmatpush.msra.mxu0 %v2688
        %2756 = vmatpush.msra.mxu0 %v2687
        %2757 = vmatpush.msra.mxu0 %v2686
        %2758 = vmatpush.msra.mxu0 %v2685
        %2759 = vmatpush.msra.mxu0 %v2684
        %2760 = vmatpush.msra.mxu0 %v2683
        %2761 = vmatpush.msra.mxu0 %v2682
        %2762 = vmatpush.msra.mxu0 %v2681
        %2763 = vmatpush.msra.mxu0 %v2680
        %2764 = vmatpush.msra.mxu0 %v2679
        %2765 = vmatpush.msra.mxu0 %v2678
        %2766 = vmatpush.msra.mxu0 %v2677
        %2767 = vmatpush.msra.mxu0 %v2676
        %2768 = vmatpush.msra.mxu0 %v2675
        %2769 = vmatpush.msra.mxu0 %v2674
        %2770 = vmatpush.msra.mxu0 %v2673
        %2771 = vmatmul.f32.gmra.mxu0 %v2665
        %v2772 = vpop.f32.mrf.mxu0
        %v2773 = vadd.f32 %v2732, %v2772
        %2774 = vmatmul.f32.gmra.mxu0 %v2666
        %v2775 = vpop.f32.mrf.mxu0
        %v2776 = vadd.f32 %v2735, %v2775
        %2777 = vmatmul.f32.gmra.mxu0 %v2667
        %v2778 = vpop.f32.mrf.mxu0
        %v2779 = vadd.f32 %v2738, %v2778
        %2780 = vmatmul.f32.gmra.mxu0 %v2668
        %v2781 = vpop.f32.mrf.mxu0
        %v2782 = vadd.f32 %v2741, %v2781
        %2783 = vmatmul.f32.gmra.mxu0 %v2669
        %v2784 = vpop.f32.mrf.mxu0
        %v2785 = vadd.f32 %v2744, %v2784
        %2786 = vmatmul.f32.gmra.mxu0 %v2670
        %v2787 = vpop.f32.mrf.mxu0
        %v2788 = vadd.f32 %v2747, %v2787
        %2789 = vmatmul.f32.gmra.mxu0 %v2671
        %v2790 = vpop.f32.mrf.mxu0
        %v2791 = vadd.f32 %v2750, %v2790
        %2792 = vmatmul.f32.gmra.mxu0 %v2672
        %v2793 = vpop.f32.mrf.mxu0
        %v2794 = vadd.f32 %v2753, %v2793
        %2795 = vdwg.mxu0
        %v2796 = vld [vmem:[#allocation2 + $0x2] sm:$0xff]
        %v2797 = vld [vmem:[#allocation2 + $0xa] sm:$0xff]
        %v2798 = vld [vmem:[#allocation2 + $0x1a] sm:$0xff]
        %v2799 = vld [vmem:[#allocation2 + $0x22] sm:$0xff]
        %v2800 = vld [vmem:[#allocation2 + $0x32] sm:$0xff]
        %v2801 = vld [vmem:[#allocation2 + $0x3a] sm:$0xff]
        %v2802 = vld [vmem:[#allocation2 + $0x4a] sm:$0xff]
        %v2803 = vld [vmem:[#allocation2 + $0x52] sm:$0xff]
        %s2804 = scalar_lea.vmem [#allocation3], 256
        %v2805 = vld [vmem:[%s2804] sm:$0xff]
        %v2806 = vld [vmem:[%s2804 + $0x8] sm:$0xff]
        %v2807 = vld [vmem:[%s2804 + $0x10] sm:$0xff]
        %v2808 = vld [vmem:[%s2804 + $0x18] sm:$0xff]
        %v2809 = vld [vmem:[%s2804 + $0x20] sm:$0xff]
        %v2810 = vld [vmem:[%s2804 + $0x28] sm:$0xff]
        %v2811 = vld [vmem:[%s2804 + $0x30] sm:$0xff]
        %v2812 = vld [vmem:[%s2804 + $0x38] sm:$0xff]
        %v2813 = vld [vmem:[%s2804 + $0x40] sm:$0xff]
        %v2814 = vld [vmem:[%s2804 + $0x48] sm:$0xff]
        %v2815 = vld [vmem:[%s2804 + $0x50] sm:$0xff]
        %v2816 = vld [vmem:[%s2804 + $0x58] sm:$0xff]
        %v2817 = vld [vmem:[%s2804 + $0x60] sm:$0xff]
        %v2818 = vld [vmem:[%s2804 + $0x68] sm:$0xff]
        %v2819 = vld [vmem:[%s2804 + $0x70] sm:$0xff]
        %v2820 = vld [vmem:[%s2804 + $0x78] sm:$0xff]
        %2821 = vmatpush.msra.mxu0 %v2820
        %2822 = vmatpush.msra.mxu0 %v2819
        %2823 = vmatpush.msra.mxu0 %v2818
        %2824 = vmatpush.msra.mxu0 %v2817
        %2825 = vmatpush.msra.mxu0 %v2816
        %2826 = vmatpush.msra.mxu0 %v2815
        %2827 = vmatpush.msra.mxu0 %v2814
        %2828 = vmatpush.msra.mxu0 %v2813
        %2829 = vmatpush.msra.mxu0 %v2812
        %2830 = vmatpush.msra.mxu0 %v2811
        %2831 = vmatpush.msra.mxu0 %v2810
        %2832 = vmatpush.msra.mxu0 %v2809
        %2833 = vmatpush.msra.mxu0 %v2808
        %2834 = vmatpush.msra.mxu0 %v2807
        %2835 = vmatpush.msra.mxu0 %v2806
        %2836 = vmatpush.msra.mxu0 %v2805
        %2837 = vmatmul.f32.gmra.mxu0 %v2796
        %v2838 = vpop.f32.mrf.mxu0
        %v2839 = vadd.f32 0.0, %v2838
        %2840 = vmatmul.f32.gmra.mxu0 %v2797
        %v2841 = vpop.f32.mrf.mxu0
        %v2842 = vadd.f32 0.0, %v2841
        %2843 = vmatmul.f32.gmra.mxu0 %v2798
        %v2844 = vpop.f32.mrf.mxu0
        %v2845 = vadd.f32 0.0, %v2844
        %2846 = vmatmul.f32.gmra.mxu0 %v2799
        %v2847 = vpop.f32.mrf.mxu0
        %v2848 = vadd.f32 0.0, %v2847
        %2849 = vmatmul.f32.gmra.mxu0 %v2800
        %v2850 = vpop.f32.mrf.mxu0
        %v2851 = vadd.f32 0.0, %v2850
        %2852 = vmatmul.f32.gmra.mxu0 %v2801
        %v2853 = vpop.f32.mrf.mxu0
        %v2854 = vadd.f32 0.0, %v2853
        %2855 = vmatmul.f32.gmra.mxu0 %v2802
        %v2856 = vpop.f32.mrf.mxu0
        %v2857 = vadd.f32 0.0, %v2856
        %2858 = vmatmul.f32.gmra.mxu0 %v2803
        %v2859 = vpop.f32.mrf.mxu0
        %v2860 = vadd.f32 0.0, %v2859
        %2861 = vdwg.mxu0
        %v2862 = vadd.f32 %v2773, %v2839
        %v2863 = vadd.f32 %v2776, %v2842
        %v2864 = vadd.f32 %v2779, %v2845
        %v2865 = vadd.f32 %v2782, %v2848
        %v2866 = vadd.f32 %v2785, %v2851
        %v2867 = vadd.f32 %v2788, %v2854
        %v2868 = vadd.f32 %v2791, %v2857
        %v2869 = vadd.f32 %v2794, %v2860
        %s2870 = scalar_lea.vmem [#allocation2], 24
        %v2871 = vld [vmem:[%s2870] sm:$0xff]
        %v2872 = vld [vmem:[%s2870 + $0x8] sm:$0xff]
        %v2873 = vld [vmem:[%s2870 + $0x18] sm:$0xff]
        %v2874 = vld [vmem:[%s2870 + $0x20] sm:$0xff]
        %v2875 = vld [vmem:[%s2870 + $0x30] sm:$0xff]
        %v2876 = vld [vmem:[%s2870 + $0x38] sm:$0xff]
        %v2877 = vld [vmem:[%s2870 + $0x48] sm:$0xff]
        %v2878 = vld [vmem:[%s2870 + $0x50] sm:$0xff]
        %s2879 = scalar_lea.vmem [#allocation3], 384
        %v2880 = vld [vmem:[%s2879] sm:$0xff]
        %v2881 = vld [vmem:[%s2879 + $0x8] sm:$0xff]
        %v2882 = vld [vmem:[%s2879 + $0x10] sm:$0xff]
        %v2883 = vld [vmem:[%s2879 + $0x18] sm:$0xff]
        %v2884 = vld [vmem:[%s2879 + $0x20] sm:$0xff]
        %v2885 = vld [vmem:[%s2879 + $0x28] sm:$0xff]
        %v2886 = vld [vmem:[%s2879 + $0x30] sm:$0xff]
        %v2887 = vld [vmem:[%s2879 + $0x38] sm:$0xff]
        %v2888 = vld [vmem:[%s2879 + $0x40] sm:$0xff]
        %v2889 = vld [vmem:[%s2879 + $0x48] sm:$0xff]
        %v2890 = vld [vmem:[%s2879 + $0x50] sm:$0xff]
        %v2891 = vld [vmem:[%s2879 + $0x58] sm:$0xff]
        %v2892 = vld [vmem:[%s2879 + $0x60] sm:$0xff]
        %v2893 = vld [vmem:[%s2879 + $0x68] sm:$0xff]
        %v2894 = vld [vmem:[%s2879 + $0x70] sm:$0xff]
        %v2895 = vld [vmem:[%s2879 + $0x78] sm:$0xff]
        %2896 = vmatpush.msra.mxu0 %v2895
        %2897 = vmatpush.msra.mxu0 %v2894
        %2898 = vmatpush.msra.mxu0 %v2893
        %2899 = vmatpush.msra.mxu0 %v2892
        %2900 = vmatpush.msra.mxu0 %v2891
        %2901 = vmatpush.msra.mxu0 %v2890
        %2902 = vmatpush.msra.mxu0 %v2889
        %2903 = vmatpush.msra.mxu0 %v2888
        %2904 = vmatpush.msra.mxu0 %v2887
        %2905 = vmatpush.msra.mxu0 %v2886
        %2906 = vmatpush.msra.mxu0 %v2885
        %2907 = vmatpush.msra.mxu0 %v2884
        %2908 = vmatpush.msra.mxu0 %v2883
        %2909 = vmatpush.msra.mxu0 %v2882
        %2910 = vmatpush.msra.mxu0 %v2881
        %2911 = vmatpush.msra.mxu0 %v2880
        %2912 = vmatmul.f32.gmra.mxu0 %v2871
        %v2913 = vpop.f32.mrf.mxu0
        %v2914 = vadd.f32 0.0, %v2913
        %2915 = vmatmul.f32.gmra.mxu0 %v2872
        %v2916 = vpop.f32.mrf.mxu0
        %v2917 = vadd.f32 0.0, %v2916
        %2918 = vmatmul.f32.gmra.mxu0 %v2873
        %v2919 = vpop.f32.mrf.mxu0
        %v2920 = vadd.f32 0.0, %v2919
        %2921 = vmatmul.f32.gmra.mxu0 %v2874
        %v2922 = vpop.f32.mrf.mxu0
        %v2923 = vadd.f32 0.0, %v2922
        %2924 = vmatmul.f32.gmra.mxu0 %v2875
        %v2925 = vpop.f32.mrf.mxu0
        %v2926 = vadd.f32 0.0, %v2925
        %2927 = vmatmul.f32.gmra.mxu0 %v2876
        %v2928 = vpop.f32.mrf.mxu0
        %v2929 = vadd.f32 0.0, %v2928
        %2930 = vmatmul.f32.gmra.mxu0 %v2877
        %v2931 = vpop.f32.mrf.mxu0
        %v2932 = vadd.f32 0.0, %v2931
        %2933 = vmatmul.f32.gmra.mxu0 %v2878
        %v2934 = vpop.f32.mrf.mxu0
        %v2935 = vadd.f32 0.0, %v2934
        %2936 = vdwg.mxu0
        %v2937 = vadd.f32 %v2862, %v2914
        %v2938 = vadd.f32 %v2863, %v2917
        %v2939 = vadd.f32 %v2864, %v2920
        %v2940 = vadd.f32 %v2865, %v2923
        %v2941 = vadd.f32 %v2866, %v2926
        %v2942 = vadd.f32 %v2867, %v2929
        %v2943 = vadd.f32 %v2868, %v2932
        %v2944 = vadd.f32 %v2869, %v2935
        %v2945 = vld [vmem:[%s2870 + $0x1] sm:$0xff]
        %v2946 = vld [vmem:[%s2870 + $0x9] sm:$0xff]
        %v2947 = vld [vmem:[%s2870 + $0x19] sm:$0xff]
        %v2948 = vld [vmem:[%s2870 + $0x21] sm:$0xff]
        %v2949 = vld [vmem:[%s2870 + $0x31] sm:$0xff]
        %v2950 = vld [vmem:[%s2870 + $0x39] sm:$0xff]
        %v2951 = vld [vmem:[%s2870 + $0x49] sm:$0xff]
        %v2952 = vld [vmem:[%s2870 + $0x51] sm:$0xff]
        %s2953 = scalar_lea.vmem [#allocation3], 512
        %v2954 = vld [vmem:[%s2953] sm:$0xff]
        %v2955 = vld [vmem:[%s2953 + $0x8] sm:$0xff]
        %v2956 = vld [vmem:[%s2953 + $0x10] sm:$0xff]
        %v2957 = vld [vmem:[%s2953 + $0x18] sm:$0xff]
        %v2958 = vld [vmem:[%s2953 + $0x20] sm:$0xff]
        %v2959 = vld [vmem:[%s2953 + $0x28] sm:$0xff]
        %v2960 = vld [vmem:[%s2953 + $0x30] sm:$0xff]
        %v2961 = vld [vmem:[%s2953 + $0x38] sm:$0xff]
        %v2962 = vld [vmem:[%s2953 + $0x40] sm:$0xff]
        %v2963 = vld [vmem:[%s2953 + $0x48] sm:$0xff]
        %v2964 = vld [vmem:[%s2953 + $0x50] sm:$0xff]
        %v2965 = vld [vmem:[%s2953 + $0x58] sm:$0xff]
        %v2966 = vld [vmem:[%s2953 + $0x60] sm:$0xff]
        %v2967 = vld [vmem:[%s2953 + $0x68] sm:$0xff]
        %v2968 = vld [vmem:[%s2953 + $0x70] sm:$0xff]
        %v2969 = vld [vmem:[%s2953 + $0x78] sm:$0xff]
        %2970 = vmatpush.msra.mxu0 %v2969
        %2971 = vmatpush.msra.mxu0 %v2968
        %2972 = vmatpush.msra.mxu0 %v2967
        %2973 = vmatpush.msra.mxu0 %v2966
        %2974 = vmatpush.msra.mxu0 %v2965
        %2975 = vmatpush.msra.mxu0 %v2964
        %2976 = vmatpush.msra.mxu0 %v2963
        %2977 = vmatpush.msra.mxu0 %v2962
        %2978 = vmatpush.msra.mxu0 %v2961
        %2979 = vmatpush.msra.mxu0 %v2960
        %2980 = vmatpush.msra.mxu0 %v2959
        %2981 = vmatpush.msra.mxu0 %v2958
        %2982 = vmatpush.msra.mxu0 %v2957
        %2983 = vmatpush.msra.mxu0 %v2956
        %2984 = vmatpush.msra.mxu0 %v2955
        %2985 = vmatpush.msra.mxu0 %v2954
        %2986 = vmatmul.f32.gmra.mxu0 %v2945
        %v2987 = vpop.f32.mrf.mxu0
        %v2988 = vadd.f32 0.0, %v2987
        %2989 = vmatmul.f32.gmra.mxu0 %v2946
        %v2990 = vpop.f32.mrf.mxu0
        %v2991 = vadd.f32 0.0, %v2990
        %2992 = vmatmul.f32.gmra.mxu0 %v2947
        %v2993 = vpop.f32.mrf.mxu0
        %v2994 = vadd.f32 0.0, %v2993
        %2995 = vmatmul.f32.gmra.mxu0 %v2948
        %v2996 = vpop.f32.mrf.mxu0
        %v2997 = vadd.f32 0.0, %v2996
        %2998 = vmatmul.f32.gmra.mxu0 %v2949
        %v2999 = vpop.f32.mrf.mxu0
        %v3000 = vadd.f32 0.0, %v2999
        %3001 = vmatmul.f32.gmra.mxu0 %v2950
        %v3002 = vpop.f32.mrf.mxu0
        %v3003 = vadd.f32 0.0, %v3002
        %3004 = vmatmul.f32.gmra.mxu0 %v2951
        %v3005 = vpop.f32.mrf.mxu0
        %v3006 = vadd.f32 0.0, %v3005
        %3007 = vmatmul.f32.gmra.mxu0 %v2952
        %v3008 = vpop.f32.mrf.mxu0
        %v3009 = vadd.f32 0.0, %v3008
        %3010 = vdwg.mxu0
        %v3011 = vadd.f32 %v2937, %v2988
        %v3012 = vadd.f32 %v2938, %v2991
        %v3013 = vadd.f32 %v2939, %v2994
        %v3014 = vadd.f32 %v2940, %v2997
        %v3015 = vadd.f32 %v2941, %v3000
        %v3016 = vadd.f32 %v2942, %v3003
        %v3017 = vadd.f32 %v2943, %v3006
        %v3018 = vadd.f32 %v2944, %v3009
        %v3019 = vld [vmem:[%s2870 + $0x2] sm:$0xff]
        %v3020 = vld [vmem:[%s2870 + $0xa] sm:$0xff]
        %v3021 = vld [vmem:[%s2870 + $0x1a] sm:$0xff]
        %v3022 = vld [vmem:[%s2870 + $0x22] sm:$0xff]
        %v3023 = vld [vmem:[%s2870 + $0x32] sm:$0xff]
        %v3024 = vld [vmem:[%s2870 + $0x3a] sm:$0xff]
        %v3025 = vld [vmem:[%s2870 + $0x4a] sm:$0xff]
        %v3026 = vld [vmem:[%s2870 + $0x52] sm:$0xff]
        %s3027 = scalar_lea.vmem [#allocation3], 640
        %v3028 = vld [vmem:[%s3027] sm:$0xff]
        %v3029 = vld [vmem:[%s3027 + $0x8] sm:$0xff]
        %v3030 = vld [vmem:[%s3027 + $0x10] sm:$0xff]
        %v3031 = vld [vmem:[%s3027 + $0x18] sm:$0xff]
        %v3032 = vld [vmem:[%s3027 + $0x20] sm:$0xff]
        %v3033 = vld [vmem:[%s3027 + $0x28] sm:$0xff]
        %v3034 = vld [vmem:[%s3027 + $0x30] sm:$0xff]
        %v3035 = vld [vmem:[%s3027 + $0x38] sm:$0xff]
        %v3036 = vld [vmem:[%s3027 + $0x40] sm:$0xff]
        %v3037 = vld [vmem:[%s3027 + $0x48] sm:$0xff]
        %v3038 = vld [vmem:[%s3027 + $0x50] sm:$0xff]
        %v3039 = vld [vmem:[%s3027 + $0x58] sm:$0xff]
        %v3040 = vld [vmem:[%s3027 + $0x60] sm:$0xff]
        %v3041 = vld [vmem:[%s3027 + $0x68] sm:$0xff]
        %v3042 = vld [vmem:[%s3027 + $0x70] sm:$0xff]
        %v3043 = vld [vmem:[%s3027 + $0x78] sm:$0xff]
        %3044 = vmatpush.msra.mxu0 %v3043
        %3045 = vmatpush.msra.mxu0 %v3042
        %3046 = vmatpush.msra.mxu0 %v3041
        %3047 = vmatpush.msra.mxu0 %v3040
        %3048 = vmatpush.msra.mxu0 %v3039
        %3049 = vmatpush.msra.mxu0 %v3038
        %3050 = vmatpush.msra.mxu0 %v3037
        %3051 = vmatpush.msra.mxu0 %v3036
        %3052 = vmatpush.msra.mxu0 %v3035
        %3053 = vmatpush.msra.mxu0 %v3034
        %3054 = vmatpush.msra.mxu0 %v3033
        %3055 = vmatpush.msra.mxu0 %v3032
        %3056 = vmatpush.msra.mxu0 %v3031
        %3057 = vmatpush.msra.mxu0 %v3030
        %3058 = vmatpush.msra.mxu0 %v3029
        %3059 = vmatpush.msra.mxu0 %v3028
        %3060 = vmatmul.f32.gmra.mxu0 %v3019
        %v3061 = vpop.f32.mrf.mxu0
        %v3062 = vadd.f32 0.0, %v3061
        %3063 = vmatmul.f32.gmra.mxu0 %v3020
        %v3064 = vpop.f32.mrf.mxu0
        %v3065 = vadd.f32 0.0, %v3064
        %3066 = vmatmul.f32.gmra.mxu0 %v3021
        %v3067 = vpop.f32.mrf.mxu0
        %v3068 = vadd.f32 0.0, %v3067
        %3069 = vmatmul.f32.gmra.mxu0 %v3022
        %v3070 = vpop.f32.mrf.mxu0
        %v3071 = vadd.f32 0.0, %v3070
        %3072 = vmatmul.f32.gmra.mxu0 %v3023
        %v3073 = vpop.f32.mrf.mxu0
        %v3074 = vadd.f32 0.0, %v3073
        %3075 = vmatmul.f32.gmra.mxu0 %v3024
        %v3076 = vpop.f32.mrf.mxu0
        %v3077 = vadd.f32 0.0, %v3076
        %3078 = vmatmul.f32.gmra.mxu0 %v3025
        %v3079 = vpop.f32.mrf.mxu0
        %v3080 = vadd.f32 0.0, %v3079
        %3081 = vmatmul.f32.gmra.mxu0 %v3026
        %v3082 = vpop.f32.mrf.mxu0
        %v3083 = vadd.f32 0.0, %v3082
        %3084 = vdwg.mxu0
        %v3085 = vadd.f32 %v3011, %v3062
        %v3086 = vadd.f32 %v3012, %v3065
        %v3087 = vadd.f32 %v3013, %v3068
        %v3088 = vadd.f32 %v3014, %v3071
        %v3089 = vadd.f32 %v3015, %v3074
        %v3090 = vadd.f32 %v3016, %v3077
        %v3091 = vadd.f32 %v3017, %v3080
        %v3092 = vadd.f32 %v3018, %v3083
        %s3093 = scalar_lea.vmem [#allocation2], 48
        %v3094 = vld [vmem:[%s3093] sm:$0xff]
        %v3095 = vld [vmem:[%s3093 + $0x8] sm:$0xff]
        %v3096 = vld [vmem:[%s3093 + $0x18] sm:$0xff]
        %v3097 = vld [vmem:[%s3093 + $0x20] sm:$0xff]
        %v3098 = vld [vmem:[%s3093 + $0x30] sm:$0xff]
        %v3099 = vld [vmem:[%s3093 + $0x38] sm:$0xff]
        %v3100 = vld [vmem:[%s3093 + $0x48] sm:$0xff]
        %v3101 = vld [vmem:[%s3093 + $0x50] sm:$0xff]
        %s3102 = scalar_lea.vmem [#allocation3], 768
        %v3103 = vld [vmem:[%s3102] sm:$0xff]
        %v3104 = vld [vmem:[%s3102 + $0x8] sm:$0xff]
        %v3105 = vld [vmem:[%s3102 + $0x10] sm:$0xff]
        %v3106 = vld [vmem:[%s3102 + $0x18] sm:$0xff]
        %v3107 = vld [vmem:[%s3102 + $0x20] sm:$0xff]
        %v3108 = vld [vmem:[%s3102 + $0x28] sm:$0xff]
        %v3109 = vld [vmem:[%s3102 + $0x30] sm:$0xff]
        %v3110 = vld [vmem:[%s3102 + $0x38] sm:$0xff]
        %v3111 = vld [vmem:[%s3102 + $0x40] sm:$0xff]
        %v3112 = vld [vmem:[%s3102 + $0x48] sm:$0xff]
        %v3113 = vld [vmem:[%s3102 + $0x50] sm:$0xff]
        %v3114 = vld [vmem:[%s3102 + $0x58] sm:$0xff]
        %v3115 = vld [vmem:[%s3102 + $0x60] sm:$0xff]
        %v3116 = vld [vmem:[%s3102 + $0x68] sm:$0xff]
        %v3117 = vld [vmem:[%s3102 + $0x70] sm:$0xff]
        %v3118 = vld [vmem:[%s3102 + $0x78] sm:$0xff]
        %3119 = vmatpush.msra.mxu0 %v3118
        %3120 = vmatpush.msra.mxu0 %v3117
        %3121 = vmatpush.msra.mxu0 %v3116
        %3122 = vmatpush.msra.mxu0 %v3115
        %3123 = vmatpush.msra.mxu0 %v3114
        %3124 = vmatpush.msra.mxu0 %v3113
        %3125 = vmatpush.msra.mxu0 %v3112
        %3126 = vmatpush.msra.mxu0 %v3111
        %3127 = vmatpush.msra.mxu0 %v3110
        %3128 = vmatpush.msra.mxu0 %v3109
        %3129 = vmatpush.msra.mxu0 %v3108
        %3130 = vmatpush.msra.mxu0 %v3107
        %3131 = vmatpush.msra.mxu0 %v3106
        %3132 = vmatpush.msra.mxu0 %v3105
        %3133 = vmatpush.msra.mxu0 %v3104
        %3134 = vmatpush.msra.mxu0 %v3103
        %3135 = vmatmul.f32.gmra.mxu0 %v3094
        %v3136 = vpop.f32.mrf.mxu0
        %v3137 = vadd.f32 0.0, %v3136
        %3138 = vmatmul.f32.gmra.mxu0 %v3095
        %v3139 = vpop.f32.mrf.mxu0
        %v3140 = vadd.f32 0.0, %v3139
        %3141 = vmatmul.f32.gmra.mxu0 %v3096
        %v3142 = vpop.f32.mrf.mxu0
        %v3143 = vadd.f32 0.0, %v3142
        %3144 = vmatmul.f32.gmra.mxu0 %v3097
        %v3145 = vpop.f32.mrf.mxu0
        %v3146 = vadd.f32 0.0, %v3145
        %3147 = vmatmul.f32.gmra.mxu0 %v3098
        %v3148 = vpop.f32.mrf.mxu0
        %v3149 = vadd.f32 0.0, %v3148
        %3150 = vmatmul.f32.gmra.mxu0 %v3099
        %v3151 = vpop.f32.mrf.mxu0
        %v3152 = vadd.f32 0.0, %v3151
        %3153 = vmatmul.f32.gmra.mxu0 %v3100
        %v3154 = vpop.f32.mrf.mxu0
        %v3155 = vadd.f32 0.0, %v3154
        %3156 = vmatmul.f32.gmra.mxu0 %v3101
        %v3157 = vpop.f32.mrf.mxu0
        %v3158 = vadd.f32 0.0, %v3157
        %3159 = vdwg.mxu0
        %v3160 = vadd.f32 %v3085, %v3137
        %v3161 = vadd.f32 %v3086, %v3140
        %v3162 = vadd.f32 %v3087, %v3143
        %v3163 = vadd.f32 %v3088, %v3146
        %v3164 = vadd.f32 %v3089, %v3149
        %v3165 = vadd.f32 %v3090, %v3152
        %v3166 = vadd.f32 %v3091, %v3155
        %v3167 = vadd.f32 %v3092, %v3158
        %v3168 = vld [vmem:[%s3093 + $0x1] sm:$0xff]
        %v3169 = vld [vmem:[%s3093 + $0x9] sm:$0xff]
        %v3170 = vld [vmem:[%s3093 + $0x19] sm:$0xff]
        %v3171 = vld [vmem:[%s3093 + $0x21] sm:$0xff]
        %v3172 = vld [vmem:[%s3093 + $0x31] sm:$0xff]
        %v3173 = vld [vmem:[%s3093 + $0x39] sm:$0xff]
        %v3174 = vld [vmem:[%s3093 + $0x49] sm:$0xff]
        %v3175 = vld [vmem:[%s3093 + $0x51] sm:$0xff]
        %s3176 = scalar_lea.vmem [#allocation3], 896
        %v3177 = vld [vmem:[%s3176] sm:$0xff]
        %v3178 = vld [vmem:[%s3176 + $0x8] sm:$0xff]
        %v3179 = vld [vmem:[%s3176 + $0x10] sm:$0xff]
        %v3180 = vld [vmem:[%s3176 + $0x18] sm:$0xff]
        %v3181 = vld [vmem:[%s3176 + $0x20] sm:$0xff]
        %v3182 = vld [vmem:[%s3176 + $0x28] sm:$0xff]
        %v3183 = vld [vmem:[%s3176 + $0x30] sm:$0xff]
        %v3184 = vld [vmem:[%s3176 + $0x38] sm:$0xff]
        %v3185 = vld [vmem:[%s3176 + $0x40] sm:$0xff]
        %v3186 = vld [vmem:[%s3176 + $0x48] sm:$0xff]
        %v3187 = vld [vmem:[%s3176 + $0x50] sm:$0xff]
        %v3188 = vld [vmem:[%s3176 + $0x58] sm:$0xff]
        %v3189 = vld [vmem:[%s3176 + $0x60] sm:$0xff]
        %v3190 = vld [vmem:[%s3176 + $0x68] sm:$0xff]
        %v3191 = vld [vmem:[%s3176 + $0x70] sm:$0xff]
        %v3192 = vld [vmem:[%s3176 + $0x78] sm:$0xff]
        %3193 = vmatpush.msra.mxu0 %v3192
        %3194 = vmatpush.msra.mxu0 %v3191
        %3195 = vmatpush.msra.mxu0 %v3190
        %3196 = vmatpush.msra.mxu0 %v3189
        %3197 = vmatpush.msra.mxu0 %v3188
        %3198 = vmatpush.msra.mxu0 %v3187
        %3199 = vmatpush.msra.mxu0 %v3186
        %3200 = vmatpush.msra.mxu0 %v3185
        %3201 = vmatpush.msra.mxu0 %v3184
        %3202 = vmatpush.msra.mxu0 %v3183
        %3203 = vmatpush.msra.mxu0 %v3182
        %3204 = vmatpush.msra.mxu0 %v3181
        %3205 = vmatpush.msra.mxu0 %v3180
        %3206 = vmatpush.msra.mxu0 %v3179
        %3207 = vmatpush.msra.mxu0 %v3178
        %3208 = vmatpush.msra.mxu0 %v3177
        %3209 = vmatmul.f32.gmra.mxu0 %v3168
        %v3210 = vpop.f32.mrf.mxu0
        %v3211 = vadd.f32 0.0, %v3210
        %3212 = vmatmul.f32.gmra.mxu0 %v3169
        %v3213 = vpop.f32.mrf.mxu0
        %v3214 = vadd.f32 0.0, %v3213
        %3215 = vmatmul.f32.gmra.mxu0 %v3170
        %v3216 = vpop.f32.mrf.mxu0
        %v3217 = vadd.f32 0.0, %v3216
        %3218 = vmatmul.f32.gmra.mxu0 %v3171
        %v3219 = vpop.f32.mrf.mxu0
        %v3220 = vadd.f32 0.0, %v3219
        %3221 = vmatmul.f32.gmra.mxu0 %v3172
        %v3222 = vpop.f32.mrf.mxu0
        %v3223 = vadd.f32 0.0, %v3222
        %3224 = vmatmul.f32.gmra.mxu0 %v3173
        %v3225 = vpop.f32.mrf.mxu0
        %v3226 = vadd.f32 0.0, %v3225
        %3227 = vmatmul.f32.gmra.mxu0 %v3174
        %v3228 = vpop.f32.mrf.mxu0
        %v3229 = vadd.f32 0.0, %v3228
        %3230 = vmatmul.f32.gmra.mxu0 %v3175
        %v3231 = vpop.f32.mrf.mxu0
        %v3232 = vadd.f32 0.0, %v3231
        %3233 = vdwg.mxu0
        %v3234 = vadd.f32 %v3160, %v3211
        %v3235 = vadd.f32 %v3161, %v3214
        %v3236 = vadd.f32 %v3162, %v3217
        %v3237 = vadd.f32 %v3163, %v3220
        %v3238 = vadd.f32 %v3164, %v3223
        %v3239 = vadd.f32 %v3165, %v3226
        %v3240 = vadd.f32 %v3166, %v3229
        %v3241 = vadd.f32 %v3167, %v3232
        %v3242 = vld [vmem:[%s3093 + $0x2] sm:$0xff]
        %v3243 = vld [vmem:[%s3093 + $0xa] sm:$0xff]
        %v3244 = vld [vmem:[%s3093 + $0x1a] sm:$0xff]
        %v3245 = vld [vmem:[%s3093 + $0x22] sm:$0xff]
        %v3246 = vld [vmem:[%s3093 + $0x32] sm:$0xff]
        %v3247 = vld [vmem:[%s3093 + $0x3a] sm:$0xff]
        %v3248 = vld [vmem:[%s3093 + $0x4a] sm:$0xff]
        %v3249 = vld [vmem:[%s3093 + $0x52] sm:$0xff]
        %s3250 = scalar_lea.vmem [#allocation3], 1024
        %v3251 = vld [vmem:[%s3250] sm:$0xff]
        %v3252 = vld [vmem:[%s3250 + $0x8] sm:$0xff]
        %v3253 = vld [vmem:[%s3250 + $0x10] sm:$0xff]
        %v3254 = vld [vmem:[%s3250 + $0x18] sm:$0xff]
        %v3255 = vld [vmem:[%s3250 + $0x20] sm:$0xff]
        %v3256 = vld [vmem:[%s3250 + $0x28] sm:$0xff]
        %v3257 = vld [vmem:[%s3250 + $0x30] sm:$0xff]
        %v3258 = vld [vmem:[%s3250 + $0x38] sm:$0xff]
        %v3259 = vld [vmem:[%s3250 + $0x40] sm:$0xff]
        %v3260 = vld [vmem:[%s3250 + $0x48] sm:$0xff]
        %v3261 = vld [vmem:[%s3250 + $0x50] sm:$0xff]
        %v3262 = vld [vmem:[%s3250 + $0x58] sm:$0xff]
        %v3263 = vld [vmem:[%s3250 + $0x60] sm:$0xff]
        %v3264 = vld [vmem:[%s3250 + $0x68] sm:$0xff]
        %v3265 = vld [vmem:[%s3250 + $0x70] sm:$0xff]
        %v3266 = vld [vmem:[%s3250 + $0x78] sm:$0xff]
        %3267 = vmatpush.msra.mxu0 %v3266
        %3268 = vmatpush.msra.mxu0 %v3265
        %3269 = vmatpush.msra.mxu0 %v3264
        %3270 = vmatpush.msra.mxu0 %v3263
        %3271 = vmatpush.msra.mxu0 %v3262
        %3272 = vmatpush.msra.mxu0 %v3261
        %3273 = vmatpush.msra.mxu0 %v3260
        %3274 = vmatpush.msra.mxu0 %v3259
        %3275 = vmatpush.msra.mxu0 %v3258
        %3276 = vmatpush.msra.mxu0 %v3257
        %3277 = vmatpush.msra.mxu0 %v3256
        %3278 = vmatpush.msra.mxu0 %v3255
        %3279 = vmatpush.msra.mxu0 %v3254
        %3280 = vmatpush.msra.mxu0 %v3253
        %3281 = vmatpush.msra.mxu0 %v3252
        %3282 = vmatpush.msra.mxu0 %v3251
        %3283 = vmatmul.f32.gmra.mxu0 %v3242
        %v3284 = vpop.f32.mrf.mxu0
        %v3285 = vadd.f32 0.0, %v3284
        %3286 = vmatmul.f32.gmra.mxu0 %v3243
        %v3287 = vpop.f32.mrf.mxu0
        %v3288 = vadd.f32 0.0, %v3287
        %3289 = vmatmul.f32.gmra.mxu0 %v3244
        %v3290 = vpop.f32.mrf.mxu0
        %v3291 = vadd.f32 0.0, %v3290
        %3292 = vmatmul.f32.gmra.mxu0 %v3245
        %v3293 = vpop.f32.mrf.mxu0
        %v3294 = vadd.f32 0.0, %v3293
        %3295 = vmatmul.f32.gmra.mxu0 %v3246
        %v3296 = vpop.f32.mrf.mxu0
        %v3297 = vadd.f32 0.0, %v3296
        %3298 = vmatmul.f32.gmra.mxu0 %v3247
        %v3299 = vpop.f32.mrf.mxu0
        %v3300 = vadd.f32 0.0, %v3299
        %3301 = vmatmul.f32.gmra.mxu0 %v3248
        %v3302 = vpop.f32.mrf.mxu0
        %v3303 = vadd.f32 0.0, %v3302
        %3304 = vmatmul.f32.gmra.mxu0 %v3249
        %v3305 = vpop.f32.mrf.mxu0
        %v3306 = vadd.f32 0.0, %v3305
        %3307 = vdwg.mxu0
        %v3308 = vadd.f32 %v3234, %v3285
        %v3309 = vadd.f32 %v3235, %v3288
        %v3310 = vadd.f32 %v3236, %v3291
        %v3311 = vadd.f32 %v3237, %v3294
        %v3312 = vadd.f32 %v3238, %v3297
        %v3313 = vadd.f32 %v3239, %v3300
        %v3314 = vadd.f32 %v3240, %v3303
        %v3315 = vadd.f32 %v3241, %v3306
        %v3316 = vld [vmem:[%s4] sm:$0x1]
        %v3318 = vperm.slane %v3316, 0
        %v3320 = vadd.f32 %v3308, %v3318
        %v3321 = vadd.f32 %v3309, %v3318
        %v3322 = vadd.f32 %v3310, %v3318
        %v3323 = vadd.f32 %v3311, %v3318
        %v3324 = vadd.f32 %v3312, %v3318
        %v3325 = vadd.f32 %v3313, %v3318
        %v3326 = vadd.f32 %v3314, %v3318
        %v3327 = vadd.f32 %v3315, %v3318
        %vm3328 = vcmask 1045504
        %v3329 = vsel %vm3328, %v312, %v315
        %v3330 = vsel %vm3328, %v315, %v354
        %v3331 = vsel %vm3328, %v318, %v321
        %v3332 = vsel %vm3328, %v321, %v355
        %v3333 = vsel %vm3328, %v324, %v327
        %v3334 = vsel %vm3328, %v327, %v356
        %v3335 = vsel %vm3328, %v330, %v333
        %v3336 = vsel %vm3328, %v333, %v357
        %v3345 = vadd.f32 %v3320, %v3329
        %v3346 = vadd.f32 %v3321, %v3330
        %v3347 = vadd.f32 %v3322, %v3331
        %v3348 = vadd.f32 %v3323, %v3332
        %v3349 = vadd.f32 %v3324, %v3333
        %v3350 = vadd.f32 %v3325, %v3334
        %v3351 = vadd.f32 %v3326, %v3335
        %v3352 = vadd.f32 %v3327, %v3336
        %v3353 = vmax.f32 %v3345, 0.0
        %v3354 = vmax.f32 %v3346, 0.0
        %v3355 = vmax.f32 %v3347, 0.0
        %v3356 = vmax.f32 %v3348, 0.0
        %v3357 = vmax.f32 %v3349, 0.0
        %v3358 = vmax.f32 %v3350, 0.0
        %v3359 = vmax.f32 %v3351, 0.0
        %v3360 = vmax.f32 %v3352, 0.0
        %3361 = vst [vmem:[%s248] sm:$0xff] %v3353
        %3362 = vst [vmem:[%s248 + $0x8] sm:$0xff] %v3354
        %3363 = vst [vmem:[%s248 + $0x10] sm:$0xff] %v3355
        %3364 = vst [vmem:[%s248 + $0x18] sm:$0xff] %v3356
        %3365 = vst [vmem:[%s248 + $0x20] sm:$0xff] %v3357
        %3366 = vst [vmem:[%s248 + $0x28] sm:$0xff] %v3358
        %3367 = vst [vmem:[%s248 + $0x30] sm:$0xff] %v3359
        %3368 = vst [vmem:[%s248 + $0x38] sm:$0xff] %v3360
        %s3369 = sand.u32 %s152, 1
        %s3370 = scalar_lea.sflag [#allocation5], %s3369
        %s3371 = sand.u32 %s152, 1
        %s3372 = smul.addr %s3371, 64
        %s3373 = scalar_lea.vmem [#allocation6], %s3372
        // Predicated region
        $region53: #{tpu_custom_call.1} parent=39 // pred_check
          %p3374 = pneg %p162
        $region54: #{tpu_custom_call.1} parent=39 // pred_check_branch
          %3376 = sbr.rel (%p3374) target = $region56
        $region55: #{tpu_custom_call.1} parent=39 // pred_region
          %s3377 = smul.u32 4, %s25
          %3379 = vsyncadd %s3370, 0
          %s3380 = smul.addr %s3377, 2
          %s3381 = smul.addr %s24, 32
          %s3382 = sadd.s32 %s3380, %s3381
          %s3383 = smul.addr %s3382, 8
          %s3384 = scalar_lea.hbm %s5, %s3383
          %s3385 = sshll.u32 %s3373, 4
          %s3386 = int_to_ptr.vmem [resolvable:$true] %s3385
          %s3387 = sshll.u32 %s3384, 4
          %s3388 = int_to_ptr.hbm [resolvable:$true] %s3387
          %3393 = dma.vmem_to_hbm [thread:$0]  %s3386, 1024, %s3388, %s3370, 128, 128, 8
        $region56: #{tpu_custom_call.1} parent=39 // pred_fallthru
          _
      $region40: #{tpu_custom_call.1} parent=5 // pred_fallthru
        _
      %p3394 = scmp.le.s32.totalorder 2, %s15
      // Predicated region
      $region57: #{tpu_custom_call.1} parent=5 // pred_check
        %p3395 = pneg %p3394
      $region58: #{tpu_custom_call.1} parent=5 // pred_check_branch
        %3397 = sbr.rel (%p3395) target = $region60
      $region59: #{tpu_custom_call.1} parent=5 // pred_region
        %s3398 = ssub.s32 %s15, 2
        // Predicated region
        $region61: #{tpu_custom_call.1} parent=59 // pred_check
          %p3399 = pneg %p168
        $region62: #{tpu_custom_call.1} parent=59 // pred_check_branch
          %3401 = sbr.rel (%p3399) target = $region64
        $region63: #{tpu_custom_call.1} parent=59 // pred_region
          %s3402 = sand.u32 %s153, 1
          %s3403 = scalar_lea.sflag [#allocation5], %s3402
          %s3404 = sand.u32 %s153, 1
          %s3405 = smul.addr %s3404, 64
          %s3406 = scalar_lea.vmem [#allocation6], %s3405
          %3408 = dma.done %s3403, 1024
        $region64: #{tpu_custom_call.1} parent=59 // pred_fallthru
          _
      $region60: #{tpu_custom_call.1} parent=5 // pred_fallthru
        _
    $region6: #{tpu_custom_call.1} parent=1 // loop_footer
      %s19 = sadd.s32 1, %s15
    $region7: #{tpu_custom_call.1} parent=1 // loop_footer_branch
      %14 = sbr.rel target = $region3
    $region8: #{tpu_custom_call.1} parent=1 // loop_exit
      _
    %3409 = vsyncpa [#allocation4], 1
    %s3410 = scalar_lea.sflag [#allocation4], 1
    %3411 = vsyncpa %s3410, 1
    %3412 = vsyncpa [#allocation5], 1
    %s3413 = scalar_lea.sflag [#allocation5], 1
    %3414 = vsyncpa %s3413, 1

// kernel: tpu_custom_call.1
$region0: #{tpu_custom_call.1}
  #allocation0 [shape = 'u32[]', space=smem, size = 0x4, offset = 0x4, fixed_abs, tag = 'smem constant byte address 0x4 - core index']
  #allocation1 [shape = 'u32[72,128]{1,0:T(1,128)}', space=vmem, size = 0x9000, scoped, tag = 'internal scratch']
  #allocation2 [shape = 'f32[6,18,128]{2,1,0:T(8,128)}', space=vmem, size = 0x12000, scoped, tag = 'scratch operand']
  %s0 = inlined_call_operand.vmem [shape: f32[2,20,20,128], index: 0, kind: input, shape index: {}]
  %s1 = inlined_call_operand.vmem [shape: f32[9,128,128], index: 1, kind: input, shape index: {}]
  %s2 = inlined_call_operand.vmem [shape: f32[1,128], index: 2, kind: input, shape index: {}]
  %s3 = inlined_call_operand.hbm [shape: f32[9,128,128], index: 3, kind: input, shape index: {}]
  %s4 = inlined_call_operand.vmem [shape: f32[1,128], index: 4, kind: input, shape index: {}]
  %s5 = inlined_call_operand.hbm [shape: f32[2,16,16,128], index: 5, kind: output, shape index: {}]
  %s6 = sld [smem:[#allocation0]]
  $region65: #{tpu_custom_call.1} parent=0
    _
  %s8 = ssub.s32 1, %s6
  %s9 = scalar_select 0, %s8, %s6
  $region1: #{tpu_custom_call.1} parent=0
    #allocation3 [shape = 'u8[589824]{0}', space=vmem, size = 0x90000, scoped, tag = 'input window, operand 3, single buffered']
    #allocation4 [shape = 's32[2]{0}', space=sflag, size = 0x8, scoped, tag = 'scoped memory for tpu_custom_call.1']
    #allocation5 [shape = 's32[2]{0}', space=sflag, size = 0x8, scoped, tag = 'scoped memory for tpu_custom_call.1']
    #allocation6 [shape = 'u8[65536]{0}', space=vmem, size = 0x10000, scoped, tag = 'output window, operand 0']
    %10 = vsyncpa [#allocation4], 0
    %11 = vsyncpa [#allocation5], 0
    %s12 = scalar_lea.sflag [#allocation5], 1
    %13 = vsyncpa %s12, 0
    loop: start=0, step=1, limit=10
    $region2: #{tpu_custom_call.1} parent=1 // loop_pre_header
      _
    $region3: #{tpu_custom_call.1} parent=1 // loop_header
      %s15 = sphi 0, %s19
      %p16 = scmp.ge.s32.totalorder %s15, 10
      %s22 = sphi 0, %s34
      %s23 = sphi 0, %s30
      %s24 = sphi 0, %s22
      %s25 = sphi 0, %s23
      %s26 = sphi 0, %s24
      %s27 = sphi 0, %s25
      %s37 = sphi 0, %s39
      %s40 = sphi 0, %s37
      %s41 = sphi 0, %s40
      %s57 = sphi 0, %s41
      %s61 = sphi 0, %s61
      %s63 = sphi 0, %s61
      %s64 = sphi 0, %s63
      %s78 = sphi 0, %s64
      %s82 = sphi 0, %s82
      %s84 = sphi 0, %s82
      %s85 = sphi 0, %s84
      %s99 = sphi 0, %s85
      %s103 = sphi 0, %s103
      %s105 = sphi 0, %s103
      %s106 = sphi 0, %s105
      %s120 = sphi 0, %s106
      %s124 = sphi 0, %s124
      %s126 = sphi 0, %s124
      %s127 = sphi 0, %s126
      %s141 = sphi 0, %s127
      %s149 = sphi 0, %s151
      %s152 = sphi 0, %s149
      %s153 = sphi 0, %s152
      %s169 = sphi 0, %s153
    $region4: #{tpu_custom_call.1} parent=1 // loop_header_branch
      %18 = sbr.rel (%p16) target = $region8
    $region5: #{tpu_custom_call.1} parent=1 // loop_body
      %s20 = ssub.s32 %s15, 1
      %s21 = ssub.s32 %s15, 2
      %s28 = sadd.s32 1, %s23
      %p29 = scmp.ge.s32.totalorder %s28, 4
      %s30 = scalar_select %p29, 0, %s28
      %s31 = sadd.s32 1, %s22
      %s32 = scalar_select %p29, %s31, %s22
      %p33 = scmp.ge.s32.totalorder %s32, 2
      %s34 = scalar_select %p33, 0, %s32
      %s35 = ssub.s32 %s22, %s34
      %p36 = scmp.eq.s32.totalorder %s35, 0
      %s38 = sadd.s32 %s37, 1
      %s39 = scalar_select %p36, %s37, %s38
      %p42 = pneg %p36
      %p43 = scmp.eq.s32.totalorder %s15, 7
      %p44 = por %p42, %p43
      %p45 = scmp.ne.s32.totalorder %s37, %s40
      %p46 = scmp.eq.s32.totalorder %s15, 0
      %p47 = por %p45, %p46
      %p48 = scmp.ne.s32.totalorder %s37, %s40
      %p49 = scmp.eq.s32.totalorder %s20, 7
      %p50 = por %p48, %p49
      %p51 = scmp.ne.s32.totalorder %s40, %s41
      %p52 = scmp.eq.s32.totalorder %s20, 0
      %p53 = por %p51, %p52
      %p54 = scmp.ne.s32.totalorder %s40, %s41
      %p55 = scmp.eq.s32.totalorder %s21, 7
      %p56 = por %p54, %p55
      %p58 = scmp.ne.s32.totalorder %s41, %s57
      %p59 = scmp.eq.s32.totalorder %s21, 0
      %p60 = por %p58, %p59
      %s62 = sadd.s32 %s61, 1
      %p65 = scmp.eq.s32.totalorder %s15, 7
      %p66 = scmp.ne.s32.totalorder %s61, %s63
      %p67 = scmp.eq.s32.totalorder %s15, 0
      %p68 = por %p66, %p67
      %p69 = scmp.ne.s32.totalorder %s61, %s63
      %p70 = scmp.eq.s32.totalorder %s20, 7
      %p71 = por %p69, %p70
      %p72 = scmp.ne.s32.totalorder %s63, %s64
      %p73 = scmp.eq.s32.totalorder %s20, 0
      %p74 = por %p72, %p73
      %p75 = scmp.ne.s32.totalorder %s63, %s64
      %p76 = scmp.eq.s32.totalorder %s21, 7
      %p77 = por %p75, %p76
      %p79 = scmp.ne.s32.totalorder %s64, %s78
      %p80 = scmp.eq.s32.totalorder %s21, 0
      %p81 = por %p79, %p80
      %s83 = sadd.s32 %s82, 1
      %p86 = scmp.eq.s32.totalorder %s15, 7
      %p87 = scmp.ne.s32.totalorder %s82, %s84
      %p88 = scmp.eq.s32.totalorder %s15, 0
      %p89 = por %p87, %p88
      %p90 = scmp.ne.s32.totalorder %s82, %s84
      %p91 = scmp.eq.s32.totalorder %s20, 7
      %p92 = por %p90, %p91
      %p93 = scmp.ne.s32.totalorder %s84, %s85
      %p94 = scmp.eq.s32.totalorder %s20, 0
      %p95 = por %p93, %p94
      %p96 = scmp.ne.s32.totalorder %s84, %s85
      %p97 = scmp.eq.s32.totalorder %s21, 7
      %p98 = por %p96, %p97
      %p100 = scmp.ne.s32.totalorder %s85, %s99
      %p101 = scmp.eq.s32.totalorder %s21, 0
      %p102 = por %p100, %p101
      %s104 = sadd.s32 %s103, 1
      %p107 = scmp.eq.s32.totalorder %s15, 7
      %p108 = scmp.ne.s32.totalorder %s103, %s105
      %p109 = scmp.eq.s32.totalorder %s15, 0
      %p110 = por %p108, %p109
      %p111 = scmp.ne.s32.totalorder %s103, %s105
      %p112 = scmp.eq.s32.totalorder %s20, 7
      %p113 = por %p111, %p112
      %p114 = scmp.ne.s32.totalorder %s105, %s106
      %p115 = scmp.eq.s32.totalorder %s20, 0
      %p116 = por %p114, %p115
      %p117 = scmp.ne.s32.totalorder %s105, %s106
      %p118 = scmp.eq.s32.totalorder %s21, 7
      %p119 = por %p117, %p118
      %p121 = scmp.ne.s32.totalorder %s106, %s120
      %p122 = scmp.eq.s32.totalorder %s21, 0
      %p123 = por %p121, %p122
      %s125 = sadd.s32 %s124, 1
      %p128 = scmp.eq.s32.totalorder %s15, 7
      %p129 = scmp.ne.s32.totalorder %s124, %s126
      %p130 = scmp.eq.s32.totalorder %s15, 0
      %p131 = por %p129, %p130
      %p132 = scmp.ne.s32.totalorder %s124, %s126
      %p133 = scmp.eq.s32.totalorder %s20, 7
      %p134 = por %p132, %p133
      %p135 = scmp.ne.s32.totalorder %s126, %s127
      %p136 = scmp.eq.s32.totalorder %s20, 0
      %p137 = por %p135, %p136
      %p138 = scmp.ne.s32.totalorder %s126, %s127
      %p139 = scmp.eq.s32.totalorder %s21, 7
      %p140 = por %p138, %p139
      %p142 = scmp.ne.s32.totalorder %s127, %s141
      %p143 = scmp.eq.s32.totalorder %s21, 0
      %p144 = por %p142, %p143
      %s145 = ssub.s32 %s22, %s34
      %s146 = ssub.s32 %s23, %s30
      %s147 = sor.u32 %s145, %s146
      %p148 = scmp.eq.s32.totalorder %s147, 0
      %s150 = sadd.s32 %s149, 1
      %s151 = scalar_select %p148, %s149, %s150
      %p154 = pneg %p148
      %p155 = scmp.eq.s32.totalorder %s15, 7
      %p156 = por %p154, %p155
      %p157 = scmp.ne.s32.totalorder %s149, %s152
      %p158 = scmp.eq.s32.totalorder %s15, 0
      %p159 = por %p157, %p158
      %p160 = scmp.ne.s32.totalorder %s149, %s152
      %p161 = scmp.eq.s32.totalorder %s20, 7
      %p162 = por %p160, %p161
      %p163 = scmp.ne.s32.totalorder %s152, %s153
      %p164 = scmp.eq.s32.totalorder %s20, 0
      %p165 = por %p163, %p164
      %p166 = scmp.ne.s32.totalorder %s152, %s153
      %p167 = scmp.eq.s32.totalorder %s21, 7
      %p168 = por %p166, %p167
      %p170 = scmp.ne.s32.totalorder %s153, %s169
      %p171 = scmp.eq.s32.totalorder %s21, 0
      %p172 = por %p170, %p171
      %p173 = scmp.le.s32.totalorder 1, %s15
      %p174 = scmp.lt.s32.totalorder %s15, 9
      %p175 = pnand %p173, %p174
      %p176 = pneg %p175
      // Predicated region
      $region9: #{tpu_custom_call.1} parent=5 // pred_check
        _
      $region10: #{tpu_custom_call.1} parent=5 // pred_check_branch
        %178 = sbr.rel (%p175) target = $region12
      $region11: #{tpu_custom_call.1} parent=5 // pred_region
        %s179 = ssub.s32 %s15, 1
        // Predicated region
        $region13: #{tpu_custom_call.1} parent=11 // pred_check
          %p180 = pneg %p74
        $region14: #{tpu_custom_call.1} parent=11 // pred_check_branch
          %182 = sbr.rel (%p180) target = $region16
        $region15: #{tpu_custom_call.1} parent=11 // pred_region
          _
        $region16: #{tpu_custom_call.1} parent=11 // pred_fallthru
          _
        // Predicated region
        $region17: #{tpu_custom_call.1} parent=11 // pred_check
          %p183 = pneg %p95
        $region18: #{tpu_custom_call.1} parent=11 // pred_check_branch
          %185 = sbr.rel (%p183) target = $region20
        $region19: #{tpu_custom_call.1} parent=11 // pred_region
          _
        $region20: #{tpu_custom_call.1} parent=11 // pred_fallthru
          _
        // Predicated region
        $region21: #{tpu_custom_call.1} parent=11 // pred_check
          %p186 = pneg %p116
        $region22: #{tpu_custom_call.1} parent=11 // pred_check_branch
          %188 = sbr.rel (%p186) target = $region24
        $region23: #{tpu_custom_call.1} parent=11 // pred_region
          %190 = vsyncadd [#allocation4], 0
          %s191 = sshll.u32 %s3, 4
          %s192 = int_to_ptr.hbm [resolvable:$true] %s191
          %s193 = sshll.u32 [#allocation3], 4
          %s194 = int_to_ptr.vmem [resolvable:$true] %s193
          %199 = dma.hbm_to_vmem [thread:$0]  %s192, 18432, %s194, [#allocation4], 128, 128, 8
        $region24: #{tpu_custom_call.1} parent=11 // pred_fallthru
          _
        // Predicated region
        $region25: #{tpu_custom_call.1} parent=11 // pred_check
          %p200 = pneg %p137
        $region26: #{tpu_custom_call.1} parent=11 // pred_check_branch
          %202 = sbr.rel (%p200) target = $region28
        $region27: #{tpu_custom_call.1} parent=11 // pred_region
          _
        $region28: #{tpu_custom_call.1} parent=11 // pred_fallthru
          _
      $region12: #{tpu_custom_call.1} parent=5 // pred_fallthru
        _
      %p203 = scmp.lt.s32.totalorder %s15, 8
      // Predicated region
      $region29: #{tpu_custom_call.1} parent=5 // pred_check
        %p204 = pneg %p203
      $region30: #{tpu_custom_call.1} parent=5 // pred_check_branch
        %206 = sbr.rel (%p204) target = $region32
      $region31: #{tpu_custom_call.1} parent=5 // pred_region
        // Predicated region
        $region33: #{tpu_custom_call.1} parent=31 // pred_check
          %p207 = pneg %p47
        $region34: #{tpu_custom_call.1} parent=31 // pred_check_branch
          %209 = sbr.rel (%p207) target = $region36
        $region35: #{tpu_custom_call.1} parent=31 // pred_region
          %p210 = scmp.lt.s32.totalorder %s22, 1
          %s211 = scalar_select %p210, %s22, 1
          %s212 = smul.addr %s211, 60
          %s213 = smul.addr %s212, 8
          %s214 = scalar_lea.vmem %s0, %s213
        $region36: #{tpu_custom_call.1} parent=31 // pred_fallthru
          _
      $region32: #{tpu_custom_call.1} parent=5 // pred_fallthru
        _
      %p215 = scmp.le.s32.totalorder 1, %s15
      %p216 = scmp.lt.s32.totalorder %s15, 9
      %p217 = pnand %p215, %p216
      %p218 = pneg %p217
      // Predicated region
      $region37: #{tpu_custom_call.1} parent=5 // pred_check
        _
      $region38: #{tpu_custom_call.1} parent=5 // pred_check_branch
        %220 = sbr.rel (%p217) target = $region40
      $region39: #{tpu_custom_call.1} parent=5 // pred_region
        %s221 = ssub.s32 %s15, 1
        // Predicated region
        $region41: #{tpu_custom_call.1} parent=39 // pred_check
          %p222 = pneg %p116
        $region42: #{tpu_custom_call.1} parent=39 // pred_check_branch
          %224 = sbr.rel (%p222) target = $region44
        $region43: #{tpu_custom_call.1} parent=39 // pred_region
          %226 = dma.done [#allocation4], 18432
        $region44: #{tpu_custom_call.1} parent=39 // pred_fallthru
          _
        %p227 = scmp.lt.s32.totalorder %s24, 1
        %s228 = scalar_select %p227, %s24, 1
        %s229 = smul.addr %s228, 60
        %s230 = smul.addr %s229, 8
        %s231 = scalar_lea.vmem %s0, %s230
        %p232 = pneg %p53
        %p233 = pneg %p50
        %p234 = pneg %p74
        %p235 = pneg %p71
        %p236 = pneg %p95
        %p237 = pneg %p92
        %p238 = pneg %p116
        %p239 = pneg %p113
        %p240 = pneg %p137
        %p241 = pneg %p134
        %p242 = pneg %p165
        %p243 = pneg %p162
        %s244 = sand.u32 %s152, 1
        %s245 = scalar_lea.sflag [#allocation5], %s244
        %s246 = sand.u32 %s152, 1
        %s247 = smul.addr %s246, 64
        %s248 = scalar_lea.vmem [#allocation6], %s247
        %p249 = scmp.lt.s32.totalorder %s24, 1
        %s250 = scalar_select %p249, %s24, 1
        %s251 = smul.addr %s250, 60
        %s252 = smul.addr %s251, 8
        %s253 = scalar_lea.vmem %s0, %s252
        %s254 = smul.u32 4, %s25
        %s255 = smul.u32 %s25, 4
        %s256 = smul.u32 %s255, 24
        %s257 = scalar_lea.vmem %s253, %s256
        %v258 = vld [vmem:[%s257] sm:$0xff]
        %v259 = vld [vmem:[%s257 + $0x8] sm:$0xff]
        %v260 = vld [vmem:[%s257 + $0x10] sm:$0xf]
        %v261 = vld [vmem:[%s257 + $0x18] sm:$0xff]
        %v262 = vld [vmem:[%s257 + $0x20] sm:$0xff]
        %v263 = vld [vmem:[%s257 + $0x28] sm:$0xf]
        %v264 = vld [vmem:[%s257 + $0x30] sm:$0xff]
        %v265 = vld [vmem:[%s257 + $0x38] sm:$0xff]
        %v266 = vld [vmem:[%s257 + $0x40] sm:$0xf]
        %v267 = vld [vmem:[%s257 + $0x48] sm:$0xff]
        %v268 = vld [vmem:[%s257 + $0x50] sm:$0xff]
        %v269 = vld [vmem:[%s257 + $0x58] sm:$0xf]
        %v270 = vld [vmem:[%s257 + $0x60] sm:$0xff]
        %v271 = vld [vmem:[%s257 + $0x68] sm:$0xff]
        %v272 = vld [vmem:[%s257 + $0x70] sm:$0xf]
        %v273 = vld [vmem:[%s257 + $0x78] sm:$0xff]
        %v274 = vld [vmem:[%s257 + $0x80] sm:$0xff]
        %v275 = vld [vmem:[%s257 + $0x88] sm:$0xf]
        %v276 = vld [vmem:[%s257 + $0x90] sm:$0xff]
        %v277 = vld [vmem:[%s257 + $0x98] sm:$0xff]
        %v278 = vld [vmem:[%s257 + $0xa0] sm:$0xf]
        %v279 = vld [vmem:[%s257 + $0xa8] sm:$0xff]
        %v280 = vld [vmem:[%s257 + $0xb0] sm:$0xff]
        %v281 = vld [vmem:[%s257 + $0xb8] sm:$0xf]
        %v300 = vrot.slane %v258, 2
        %v301 = vrot.slane %v258, 4
        %v302 = vrot.slane %v258, 6
        %v303 = vrot.slane %v259, 2
        %v304 = vrot.slane %v259, 4
        %v305 = vrot.slane %v259, 6
        %v306 = vrot.slane %v261, 2
        %v307 = vrot.slane %v261, 4
        %v308 = vrot.slane %v261, 6
        %v309 = vrot.slane %v262, 2
        %v310 = vrot.slane %v262, 4
        %v311 = vrot.slane %v262, 6
        %v312 = vrot.slane %v264, 2
        %v313 = vrot.slane %v264, 4
        %v314 = vrot.slane %v264, 6
        %v315 = vrot.slane %v265, 2
        %v316 = vrot.slane %v265, 4
        %v317 = vrot.slane %v265, 6
        %v318 = vrot.slane %v267, 2
        %v319 = vrot.slane %v267, 4
        %v320 = vrot.slane %v267, 6
        %v321 = vrot.slane %v268, 2
        %v322 = vrot.slane %v268, 4
        %v323 = vrot.slane %v268, 6
        %v324 = vrot.slane %v270, 2
        %v325 = vrot.slane %v270, 4
        %v326 = vrot.slane %v270, 6
        %v327 = vrot.slane %v271, 2
        %v328 = vrot.slane %v271, 4
        %v329 = vrot.slane %v271, 6
        %v330 = vrot.slane %v273, 2
        %v331 = vrot.slane %v273, 4
        %v332 = vrot.slane %v273, 6
        %v333 = vrot.slane %v274, 2
        %v334 = vrot.slane %v274, 4
        %v335 = vrot.slane %v274, 6
        %v336 = vld [vmem:[%s1] sm:$0xff]
        %v337 = vld [vmem:[%s1 + $0x8] sm:$0xff]
        %v338 = vld [vmem:[%s1 + $0x10] sm:$0xff]
        %v339 = vld [vmem:[%s1 + $0x18] sm:$0xff]
        %v340 = vld [vmem:[%s1 + $0x20] sm:$0xff]
        %v341 = vld [vmem:[%s1 + $0x28] sm:$0xff]
        %v342 = vld [vmem:[%s1 + $0x30] sm:$0xff]
        %v343 = vld [vmem:[%s1 + $0x38] sm:$0xff]
        %v344 = vld [vmem:[%s1 + $0x40] sm:$0xff]
        %v345 = vld [vmem:[%s1 + $0x48] sm:$0xff]
        %v346 = vld [vmem:[%s1 + $0x50] sm:$0xff]
        %v347 = vld [vmem:[%s1 + $0x58] sm:$0xff]
        %v348 = vld [vmem:[%s1 + $0x60] sm:$0xff]
        %v349 = vld [vmem:[%s1 + $0x68] sm:$0xff]
        %v350 = vld [vmem:[%s1 + $0x70] sm:$0xff]
        %v351 = vld [vmem:[%s1 + $0x78] sm:$0xff]
        %v352 = vrot.slane %v260, 2
        %v353 = vrot.slane %v263, 2
        %v354 = vrot.slane %v266, 2
        %v355 = vrot.slane %v269, 2
        %v356 = vrot.slane %v272, 2
        %v357 = vrot.slane %v275, 2
        %vm358 = vcmask 1040384
        %vm359 = vcmask 1042434
        %vm360 = vmor %vm358, %vm359
        %vm361 = vcmask 1044484
        %vm362 = vmor %vm360, %vm361
        %vm363 = vcmask 1046534
        %vm364 = vmor %vm362, %vm363
        %v365 = vrot.slane %v258, 7
        %v366 = vrot.slane %v365, 2
        %v367 = vrot.slane %v300, 7
        %v368 = vsel %vm364, %v366, %v367
        %v369 = vrot.slane %v367, 2
        %v370 = vrot.slane %v301, 7
        %v371 = vsel %vm364, %v369, %v370
        %v372 = vrot.slane %v370, 2
        %v373 = vrot.slane %v302, 7
        %v374 = vsel %vm364, %v372, %v373
        %v375 = vrot.slane %v373, 2
        %v376 = vrot.slane %v259, 7
        %v377 = vsel %vm364, %v375, %v376
        %v378 = vrot.slane %v376, 2
        %v379 = vrot.slane %v303, 7
        %v380 = vsel %vm364, %v378, %v379
        %v381 = vrot.slane %v379, 2
        %v382 = vrot.slane %v304, 7
        %v383 = vsel %vm364, %v381, %v382
        %v384 = vrot.slane %v382, 2
        %v385 = vrot.slane %v305, 7
        %v386 = vsel %vm364, %v384, %v385
        %v387 = vrot.slane %v385, 2
        %v388 = vrot.slane %v260, 7
        %v389 = vsel %vm364, %v387, %v388
        %v390 = vrot.slane %v388, 2
        %v391 = vrot.slane %v352, 7
        %v392 = vsel %vm364, %v390, %v391
        %v393 = vrot.slane %v261, 7
        %v394 = vrot.slane %v393, 2
        %v395 = vrot.slane %v306, 7
        %v396 = vsel %vm364, %v394, %v395
        %v397 = vrot.slane %v395, 2
        %v398 = vrot.slane %v307, 7
        %v399 = vsel %vm364, %v397, %v398
        %v400 = vrot.slane %v398, 2
        %v401 = vrot.slane %v308, 7
        %v402 = vsel %vm364, %v400, %v401
        %v403 = vrot.slane %v401, 2
        %v404 = vrot.slane %v262, 7
        %v405 = vsel %vm364, %v403, %v404
        %v406 = vrot.slane %v404, 2
        %v407 = vrot.slane %v309, 7
        %v408 = vsel %vm364, %v406, %v407
        %v409 = vrot.slane %v407, 2
        %v410 = vrot.slane %v310, 7
        %v411 = vsel %vm364, %v409, %v410
        %v412 = vrot.slane %v410, 2
        %v413 = vrot.slane %v311, 7
        %v414 = vsel %vm364, %v412, %v413
        %v415 = vrot.slane %v413, 2
        %v416 = vrot.slane %v263, 7
        %v417 = vsel %vm364, %v415, %v416
        %v418 = vrot.slane %v416, 2
        %v419 = vrot.slane %v353, 7
        %v420 = vsel %vm364, %v418, %v419
        %v421 = vrot.slane %v264, 7
        %v422 = vrot.slane %v421, 2
        %v423 = vrot.slane %v312, 7
        %v424 = vsel %vm364, %v422, %v423
        %v425 = vrot.slane %v423, 2
        %v426 = vrot.slane %v313, 7
        %v427 = vsel %vm364, %v425, %v426
        %v428 = vrot.slane %v426, 2
        %v429 = vrot.slane %v314, 7
        %v430 = vsel %vm364, %v428, %v429
        %v431 = vrot.slane %v429, 2
        %v432 = vrot.slane %v265, 7
        %v433 = vsel %vm364, %v431, %v432
        %v434 = vrot.slane %v432, 2
        %v435 = vrot.slane %v315, 7
        %v436 = vsel %vm364, %v434, %v435
        %v437 = vrot.slane %v435, 2
        %v438 = vrot.slane %v316, 7
        %v439 = vsel %vm364, %v437, %v438
        %v440 = vrot.slane %v438, 2
        %v441 = vrot.slane %v317, 7
        %v442 = vsel %vm364, %v440, %v441
        %v443 = vrot.slane %v441, 2
        %v444 = vrot.slane %v266, 7
        %v445 = vsel %vm364, %v443, %v444
        %v446 = vrot.slane %v444, 2
        %v447 = vrot.slane %v354, 7
        %v448 = vsel %vm364, %v446, %v447
        %v449 = vrot.slane %v267, 7
        %v450 = vrot.slane %v449, 2
        %v451 = vrot.slane %v318, 7
        %v452 = vsel %vm364, %v450, %v451
        %v453 = vrot.slane %v451, 2
        %v454 = vrot.slane %v319, 7
        %v455 = vsel %vm364, %v453, %v454
        %v456 = vrot.slane %v454, 2
        %v457 = vrot.slane %v320, 7
        %v458 = vsel %vm364, %v456, %v457
        %v459 = vrot.slane %v457, 2
        %v460 = vrot.slane %v268, 7
        %v461 = vsel %vm364, %v459, %v460
        %v462 = vrot.slane %v460, 2
        %v463 = vrot.slane %v321, 7
        %v464 = vsel %vm364, %v462, %v463
        %v465 = vrot.slane %v463, 2
        %v466 = vrot.slane %v322, 7
        %v467 = vsel %vm364, %v465, %v466
        %v468 = vrot.slane %v466, 2
        %v469 = vrot.slane %v323, 7
        %v470 = vsel %vm364, %v468, %v469
        %v471 = vrot.slane %v469, 2
        %v472 = vrot.slane %v269, 7
        %v473 = vsel %vm364, %v471, %v472
        %v474 = vrot.slane %v472, 2
        %v475 = vrot.slane %v355, 7
        %v476 = vsel %vm364, %v474, %v475
        %v477 = vrot.slane %v270, 7
        %v478 = vrot.slane %v477, 2
        %v479 = vrot.slane %v324, 7
        %v480 = vsel %vm364, %v478, %v479
        %v481 = vrot.slane %v479, 2
        %v482 = vrot.slane %v325, 7
        %v483 = vsel %vm364, %v481, %v482
        %v484 = vrot.slane %v482, 2
        %v485 = vrot.slane %v326, 7
        %v486 = vsel %vm364, %v484, %v485
        %v487 = vrot.slane %v485, 2
        %v488 = vrot.slane %v271, 7
        %v489 = vsel %vm364, %v487, %v488
        %v490 = vrot.slane %v488, 2
        %v491 = vrot.slane %v327, 7
        %v492 = vsel %vm364, %v490, %v491
        %v493 = vrot.slane %v491, 2
        %v494 = vrot.slane %v328, 7
        %v495 = vsel %vm364, %v493, %v494
        %v496 = vrot.slane %v494, 2
        %v497 = vrot.slane %v329, 7
        %v498 = vsel %vm364, %v496, %v497
        %v499 = vrot.slane %v497, 2
        %v500 = vrot.slane %v272, 7
        %v501 = vsel %vm364, %v499, %v500
        %v502 = vrot.slane %v500, 2
        %v503 = vrot.slane %v356, 7
        %v504 = vsel %vm364, %v502, %v503
        %v505 = vrot.slane %v273, 7
        %v506 = vrot.slane %v505, 2
        %v507 = vrot.slane %v330, 7
        %v508 = vsel %vm364, %v506, %v507
        %v509 = vrot.slane %v507, 2
        %v510 = vrot.slane %v331, 7
        %v511 = vsel %vm364, %v509, %v510
        %v512 = vrot.slane %v510, 2
        %v513 = vrot.slane %v332, 7
        %v514 = vsel %vm364, %v512, %v513
        %v515 = vrot.slane %v513, 2
        %v516 = vrot.slane %v274, 7
        %v517 = vsel %vm364, %v515, %v516
        %v518 = vrot.slane %v516, 2
        %v519 = vrot.slane %v333, 7
        %v520 = vsel %vm364, %v518, %v519
        %v521 = vrot.slane %v519, 2
        %v522 = vrot.slane %v334, 7
        %v523 = vsel %vm364, %v521, %v522
        %v524 = vrot.slane %v522, 2
        %v525 = vrot.slane %v335, 7
        %v526 = vsel %vm364, %v524, %v525
        %v527 = vrot.slane %v525, 2
        %v528 = vrot.slane %v275, 7
        %v529 = vsel %vm364, %v527, %v528
        %v530 = vrot.slane %v528, 2
        %v531 = vrot.slane %v357, 7
        %v532 = vsel %vm364, %v530, %v531
        %s533 = scalar_lea.vmem %s1, 128
        %v534 = vld [vmem:[%s533] sm:$0xff]
        %v535 = vld [vmem:[%s533 + $0x8] sm:$0xff]
        %v536 = vld [vmem:[%s533 + $0x10] sm:$0xff]
        %v537 = vld [vmem:[%s533 + $0x18] sm:$0xff]
        %v538 = vld [vmem:[%s533 + $0x20] sm:$0xff]
        %v539 = vld [vmem:[%s533 + $0x28] sm:$0xff]
        %v540 = vld [vmem:[%s533 + $0x30] sm:$0xff]
        %v541 = vld [vmem:[%s533 + $0x38] sm:$0xff]
        %v542 = vld [vmem:[%s533 + $0x40] sm:$0xff]
        %v543 = vld [vmem:[%s533 + $0x48] sm:$0xff]
        %v544 = vld [vmem:[%s533 + $0x50] sm:$0xff]
        %v545 = vld [vmem:[%s533 + $0x58] sm:$0xff]
        %v546 = vld [vmem:[%s533 + $0x60] sm:$0xff]
        %v547 = vld [vmem:[%s533 + $0x68] sm:$0xff]
        %v548 = vld [vmem:[%s533 + $0x70] sm:$0xff]
        %v549 = vld [vmem:[%s533 + $0x78] sm:$0xff]
        %550 = vst [vmem:[#allocation1] ss:$4 sm:$0xff] %v368
        %s551 = scalar_lea.vmem [#allocation1], 1
        %552 = vst [vmem:[%s551] ss:$4 sm:$0xff] %v371
        %s553 = scalar_lea.vmem [#allocation1], 2
        %554 = vst [vmem:[%s553] ss:$4 sm:$0xff] %v374
        %s555 = scalar_lea.vmem [#allocation1], 3
        %556 = vst [vmem:[%s555] ss:$4 sm:$0xff] %v377
        %s557 = scalar_lea.vmem [#allocation1], 32
        %558 = vst [vmem:[%s557] ss:$4 sm:$0xff] %v380
        %s559 = scalar_lea.vmem [#allocation1], 33
        %560 = vst [vmem:[%s559] ss:$4 sm:$0xff] %v383
        %s561 = scalar_lea.vmem [#allocation1], 34
        %562 = vst [vmem:[%s561] ss:$4 sm:$0xff] %v386
        %s563 = scalar_lea.vmem [#allocation1], 35
        %564 = vst [vmem:[%s563] ss:$4 sm:$0xff] %v389
        %v565 = vld.sshfl [vmem:[#allocation1] sm:$0xff pattern:$0x73625140]
        %v566 = vld.sshfl [vmem:[#allocation1 + $0x20] sm:$0xff pattern:$0x73625140]
        %567 = vst [vmem:[#allocation1] ss:$4 sm:$0xff] %v392
        %568 = vst [vmem:[%s551] ss:$4 sm:$0xff] %v396
        %569 = vst [vmem:[%s553] ss:$4 sm:$0xff] %v399
        %570 = vst [vmem:[%s555] ss:$4 sm:$0xff] %v402
        %571 = vst [vmem:[%s557] ss:$4 sm:$0xff] %v405
        %572 = vst [vmem:[%s559] ss:$4 sm:$0xff] %v408
        %573 = vst [vmem:[%s561] ss:$4 sm:$0xff] %v411
        %574 = vst [vmem:[%s563] ss:$4 sm:$0xff] %v414
        %v575 = vld.sshfl [vmem:[#allocation1] sm:$0xff pattern:$0x73625140]
        %v576 = vld.sshfl [vmem:[#allocation1 + $0x20] sm:$0xff pattern:$0x73625140]
        %577 = vst [vmem:[#allocation1] ss:$4 sm:$0xff] %v417
        %578 = vst [vmem:[%s551] ss:$4 sm:$0xff] %v420
        %579 = vst [vmem:[%s553] ss:$4 sm:$0xff] %v424
        %580 = vst [vmem:[%s555] ss:$4 sm:$0xff] %v427
        %581 = vst [vmem:[%s557] ss:$4 sm:$0xff] %v430
        %582 = vst [vmem:[%s559] ss:$4 sm:$0xff] %v433
        %583 = vst [vmem:[%s561] ss:$4 sm:$0xff] %v436
        %584 = vst [vmem:[%s563] ss:$4 sm:$0xff] %v439
        %v585 = vld.sshfl [vmem:[#allocation1] sm:$0xff pattern:$0x73625140]
        %v586 = vld.sshfl [vmem:[#allocation1 + $0x20] sm:$0xff pattern:$0x73625140]
        %587 = vst [vmem:[#allocation1] ss:$4 sm:$0xff] %v442
        %588 = vst [vmem:[%s551] ss:$4 sm:$0xff] %v445
        %589 = vst [vmem:[%s553] ss:$4 sm:$0xff] %v448
        %590 = vst [vmem:[%s555] ss:$4 sm:$0xff] %v452
        %591 = vst [vmem:[%s557] ss:$4 sm:$0xff] %v455
        %592 = vst [vmem:[%s559] ss:$4 sm:$0xff] %v458
        %593 = vst [vmem:[%s561] ss:$4 sm:$0xff] %v461
        %594 = vst [vmem:[%s563] ss:$4 sm:$0xff] %v464
        %v595 = vld.sshfl [vmem:[#allocation1] sm:$0xff pattern:$0x73625140]
        %v596 = vld.sshfl [vmem:[#allocation1 + $0x20] sm:$0xff pattern:$0x73625140]
        %597 = vst [vmem:[#allocation1] ss:$4 sm:$0xff] %v467
        %598 = vst [vmem:[%s551] ss:$4 sm:$0xff] %v470
        %599 = vst [vmem:[%s553] ss:$4 sm:$0xff] %v473
        %600 = vst [vmem:[%s555] ss:$4 sm:$0xff] %v476
        %601 = vst [vmem:[%s557] ss:$4 sm:$0xff] %v480
        %602 = vst [vmem:[%s559] ss:$4 sm:$0xff] %v483
        %603 = vst [vmem:[%s561] ss:$4 sm:$0xff] %v486
        %604 = vst [vmem:[%s563] ss:$4 sm:$0xff] %v489
        %v605 = vld.sshfl [vmem:[#allocation1] sm:$0xff pattern:$0x73625140]
        %v606 = vld.sshfl [vmem:[#allocation1 + $0x20] sm:$0xff pattern:$0x73625140]
        %607 = vst [vmem:[#allocation1] ss:$4 sm:$0xff] %v492
        %608 = vst [vmem:[%s551] ss:$4 sm:$0xff] %v495
        %609 = vst [vmem:[%s553] ss:$4 sm:$0xff] %v498
        %610 = vst [vmem:[%s555] ss:$4 sm:$0xff] %v501
        %611 = vst [vmem:[%s557] ss:$4 sm:$0xff] %v504
        %612 = vst [vmem:[%s559] ss:$4 sm:$0xff] %v508
        %613 = vst [vmem:[%s561] ss:$4 sm:$0xff] %v511
        %614 = vst [vmem:[%s563] ss:$4 sm:$0xff] %v514
        %v615 = vld.sshfl [vmem:[#allocation1] sm:$0xff pattern:$0x73625140]
        %v616 = vld.sshfl [vmem:[#allocation1 + $0x20] sm:$0xff pattern:$0x73625140]
        %617 = vst [vmem:[#allocation1] ss:$4 sm:$0xff] %v517
        %618 = vst [vmem:[%s551] ss:$4 sm:$0xff] %v520
        %619 = vst [vmem:[%s553] ss:$4 sm:$0xff] %v523
        %620 = vst [vmem:[%s555] ss:$4 sm:$0xff] %v526
        %621 = vst [vmem:[%s557] ss:$4 sm:$0xff] %v529
        %622 = vst [vmem:[%s559] ss:$4 sm:$0xff] %v532
        %v623 = vld.sshfl [vmem:[#allocation1] sm:$0xff pattern:$0x73625140]
        %v624 = vld.sshfl [vmem:[#allocation1 + $0x20] sm:$0xff pattern:$0x73625140]
        %639 = vmatpush.msra.mxu0 %v549
        %640 = vmatpush.msra.mxu0 %v548
        %641 = vmatpush.msra.mxu0 %v547
        %642 = vmatpush.msra.mxu0 %v546
        %643 = vmatpush.msra.mxu0 %v545
        %644 = vmatpush.msra.mxu0 %v544
        %645 = vmatpush.msra.mxu0 %v543
        %646 = vmatpush.msra.mxu0 %v542
        %647 = vmatpush.msra.mxu0 %v541
        %648 = vmatpush.msra.mxu0 %v540
        %649 = vmatpush.msra.mxu0 %v539
        %650 = vmatpush.msra.mxu0 %v538
        %651 = vmatpush.msra.mxu0 %v537
        %652 = vmatpush.msra.mxu0 %v536
        %653 = vmatpush.msra.mxu0 %v535
        %654 = vmatpush.msra.mxu0 %v534
        %655 = vmatmul.f32.gmra.mxu0 %v565
        %v656 = vpop.f32.mrf.mxu0
        %v657 = vadd.f32 0.0, %v656
        %658 = vmatmul.f32.gmra.mxu0 %v566
        %v659 = vpop.f32.mrf.mxu0
        %v660 = vadd.f32 0.0, %v659
        %661 = vmatmul.f32.gmra.mxu0 %v575
        %v662 = vpop.f32.mrf.mxu0
        %v663 = vadd.f32 0.0, %v662
        %664 = vmatmul.f32.gmra.mxu0 %v576
        %v665 = vpop.f32.mrf.mxu0
        %v666 = vadd.f32 0.0, %v665
        %667 = vmatmul.f32.gmra.mxu0 %v585
        %v668 = vpop.f32.mrf.mxu0
        %v669 = vadd.f32 0.0, %v668
        %670 = vmatmul.f32.gmra.mxu0 %v586
        %v671 = vpop.f32.mrf.mxu0
        %v672 = vadd.f32 0.0, %v671
        %673 = vmatmul.f32.gmra.mxu0 %v595
        %v674 = vpop.f32.mrf.mxu0
        %v675 = vadd.f32 0.0, %v674
        %676 = vmatmul.f32.gmra.mxu0 %v596
        %v677 = vpop.f32.mrf.mxu0
        %v678 = vadd.f32 0.0, %v677
        %679 = vmatmul.f32.gmra.mxu0 %v605
        %v680 = vpop.f32.mrf.mxu0
        %v681 = vadd.f32 0.0, %v680
        %682 = vmatmul.f32.gmra.mxu0 %v606
        %v683 = vpop.f32.mrf.mxu0
        %v684 = vadd.f32 0.0, %v683
        %685 = vmatmul.f32.gmra.mxu0 %v615
        %v686 = vpop.f32.mrf.mxu0
        %v687 = vadd.f32 0.0, %v686
        %688 = vmatmul.f32.gmra.mxu0 %v616
        %v689 = vpop.f32.mrf.mxu0
        %v690 = vadd.f32 0.0, %v689
        %691 = vmatmul.f32.gmra.mxu0 %v623
        %v692 = vpop.f32.mrf.mxu0
        %v693 = vadd.f32 0.0, %v692
        %694 = vmatmul.f32.gmra.mxu0 %v624
        %v695 = vpop.f32.mrf.mxu0
        %v696 = vadd.f32 0.0, %v695
        %697 = vdwg.mxu0
        %698 = vst [vmem:[#allocation1] ss:$4 sm:$0xff] %v258
        %s699 = scalar_lea.vmem [#allocation1], 1
        %700 = vst [vmem:[%s699] ss:$4 sm:$0xff] %v300
        %s701 = scalar_lea.vmem [#allocation1], 2
        %702 = vst [vmem:[%s701] ss:$4 sm:$0xff] %v301
        %s703 = scalar_lea.vmem [#allocation1], 3
        %704 = vst [vmem:[%s703] ss:$4 sm:$0xff] %v302
        %s705 = scalar_lea.vmem [#allocation1], 32
        %706 = vst [vmem:[%s705] ss:$4 sm:$0xff] %v259
        %s707 = scalar_lea.vmem [#allocation1], 33
        %708 = vst [vmem:[%s707] ss:$4 sm:$0xff] %v303
        %s709 = scalar_lea.vmem [#allocation1], 34
        %710 = vst [vmem:[%s709] ss:$4 sm:$0xff] %v304
        %s711 = scalar_lea.vmem [#allocation1], 35
        %712 = vst [vmem:[%s711] ss:$4 sm:$0xff] %v305
        %v713 = vld.sshfl [vmem:[#allocation1] sm:$0xff pattern:$0x73625140]
        %v714 = vld.sshfl [vmem:[#allocation1 + $0x20] sm:$0xff pattern:$0x73625140]
        %715 = vst [vmem:[#allocation1] ss:$4 sm:$0xff] %v260
        %716 = vst [vmem:[%s699] ss:$4 sm:$0xff] %v261
        %717 = vst [vmem:[%s701] ss:$4 sm:$0xff] %v306
        %718 = vst [vmem:[%s703] ss:$4 sm:$0xff] %v307
        %719 = vst [vmem:[%s705] ss:$4 sm:$0xff] %v308
        %720 = vst [vmem:[%s707] ss:$4 sm:$0xff] %v262
        %721 = vst [vmem:[%s709] ss:$4 sm:$0xff] %v309
        %722 = vst [vmem:[%s711] ss:$4 sm:$0xff] %v310
        %v723 = vld.sshfl [vmem:[#allocation1] sm:$0xff pattern:$0x73625140]
        %v724 = vld.sshfl [vmem:[#allocation1 + $0x20] sm:$0xff pattern:$0x73625140]
        %725 = vst [vmem:[#allocation1] ss:$4 sm:$0xff] %v311
        %726 = vst [vmem:[%s699] ss:$4 sm:$0xff] %v263
        %727 = vst [vmem:[%s701] ss:$4 sm:$0xff] %v264
        %728 = vst [vmem:[%s703] ss:$4 sm:$0xff] %v312
        %729 = vst [vmem:[%s705] ss:$4 sm:$0xff] %v313
        %730 = vst [vmem:[%s707] ss:$4 sm:$0xff] %v314
        %731 = vst [vmem:[%s709] ss:$4 sm:$0xff] %v265
        %732 = vst [vmem:[%s711] ss:$4 sm:$0xff] %v315
        %v733 = vld.sshfl [vmem:[#allocation1] sm:$0xff pattern:$0x73625140]
        %v734 = vld.sshfl [vmem:[#allocation1 + $0x20] sm:$0xff pattern:$0x73625140]
        %735 = vst [vmem:[#allocation1] ss:$4 sm:$0xff] %v316
        %736 = vst [vmem:[%s699] ss:$4 sm:$0xff] %v317
        %737 = vst [vmem:[%s701] ss:$4 sm:$0xff] %v266
        %738 = vst [vmem:[%s703] ss:$4 sm:$0xff] %v267
        %739 = vst [vmem:[%s705] ss:$4 sm:$0xff] %v318
        %740 = vst [vmem:[%s707] ss:$4 sm:$0xff] %v319
        %741 = vst [vmem:[%s709] ss:$4 sm:$0xff] %v320
        %742 = vst [vmem:[%s711] ss:$4 sm:$0xff] %v268
        %v743 = vld.sshfl [vmem:[#allocation1] sm:$0xff pattern:$0x73625140]
        %v744 = vld.sshfl [vmem:[#allocation1 + $0x20] sm:$0xff pattern:$0x73625140]
        %745 = vst [vmem:[#allocation1] ss:$4 sm:$0xff] %v321
        %746 = vst [vmem:[%s699] ss:$4 sm:$0xff] %v322
        %747 = vst [vmem:[%s701] ss:$4 sm:$0xff] %v323
        %748 = vst [vmem:[%s703] ss:$4 sm:$0xff] %v269
        %749 = vst [vmem:[%s705] ss:$4 sm:$0xff] %v270
        %750 = vst [vmem:[%s707] ss:$4 sm:$0xff] %v324
        %751 = vst [vmem:[%s709] ss:$4 sm:$0xff] %v325
        %752 = vst [vmem:[%s711] ss:$4 sm:$0xff] %v326
        %v753 = vld.sshfl [vmem:[#allocation1] sm:$0xff pattern:$0x73625140]
        %v754 = vld.sshfl [vmem:[#allocation1 + $0x20] sm:$0xff pattern:$0x73625140]
        %755 = vst [vmem:[#allocation1] ss:$4 sm:$0xff] %v271
        %756 = vst [vmem:[%s699] ss:$4 sm:$0xff] %v327
        %757 = vst [vmem:[%s701] ss:$4 sm:$0xff] %v328
        %758 = vst [vmem:[%s703] ss:$4 sm:$0xff] %v329
        %759 = vst [vmem:[%s705] ss:$4 sm:$0xff] %v272
        %760 = vst [vmem:[%s707] ss:$4 sm:$0xff] %v273
        %761 = vst [vmem:[%s709] ss:$4 sm:$0xff] %v330
        %762 = vst [vmem:[%s711] ss:$4 sm:$0xff] %v331
        %v763 = vld.sshfl [vmem:[#allocation1] sm:$0xff pattern:$0x73625140]
        %v764 = vld.sshfl [vmem:[#allocation1 + $0x20] sm:$0xff pattern:$0x73625140]
        %765 = vst [vmem:[#allocation1] ss:$4 sm:$0xff] %v332
        %766 = vst [vmem:[%s699] ss:$4 sm:$0xff] %v274
        %767 = vst [vmem:[%s701] ss:$4 sm:$0xff] %v333
        %768 = vst [vmem:[%s703] ss:$4 sm:$0xff] %v334
        %769 = vst [vmem:[%s705] ss:$4 sm:$0xff] %v335
        %770 = vst [vmem:[%s707] ss:$4 sm:$0xff] %v275
        %v771 = vld.sshfl [vmem:[#allocation1] sm:$0xff pattern:$0x73625140]
        %v772 = vld.sshfl [vmem:[#allocation1 + $0x20] sm:$0xff pattern:$0x73625140]
        %787 = vmatpush.msra.mxu0 %v351
        %788 = vmatpush.msra.mxu0 %v350
        %789 = vmatpush.msra.mxu0 %v349
        %790 = vmatpush.msra.mxu0 %v348
        %791 = vmatpush.msra.mxu0 %v347
        %792 = vmatpush.msra.mxu0 %v346
        %793 = vmatpush.msra.mxu0 %v345
        %794 = vmatpush.msra.mxu0 %v344
        %795 = vmatpush.msra.mxu0 %v343
        %796 = vmatpush.msra.mxu0 %v342
        %797 = vmatpush.msra.mxu0 %v341
        %798 = vmatpush.msra.mxu0 %v340
        %799 = vmatpush.msra.mxu0 %v339
        %800 = vmatpush.msra.mxu0 %v338
        %801 = vmatpush.msra.mxu0 %v337
        %802 = vmatpush.msra.mxu0 %v336
        %803 = vmatmul.f32.gmra.mxu0 %v713
        %v804 = vpop.f32.mrf.mxu0
        %v805 = vadd.f32 %v657, %v804
        %806 = vmatmul.f32.gmra.mxu0 %v714
        %v807 = vpop.f32.mrf.mxu0
        %v808 = vadd.f32 %v660, %v807
        %809 = vmatmul.f32.gmra.mxu0 %v723
        %v810 = vpop.f32.mrf.mxu0
        %v811 = vadd.f32 %v663, %v810
        %812 = vmatmul.f32.gmra.mxu0 %v724
        %v813 = vpop.f32.mrf.mxu0
        %v814 = vadd.f32 %v666, %v813
        %815 = vmatmul.f32.gmra.mxu0 %v733
        %v816 = vpop.f32.mrf.mxu0
        %v817 = vadd.f32 %v669, %v816
        %818 = vmatmul.f32.gmra.mxu0 %v734
        %v819 = vpop.f32.mrf.mxu0
        %v820 = vadd.f32 %v672, %v819
        %821 = vmatmul.f32.gmra.mxu0 %v743
        %v822 = vpop.f32.mrf.mxu0
        %v823 = vadd.f32 %v675, %v822
        %824 = vmatmul.f32.gmra.mxu0 %v744
        %v825 = vpop.f32.mrf.mxu0
        %v826 = vadd.f32 %v678, %v825
        %827 = vmatmul.f32.gmra.mxu0 %v753
        %v828 = vpop.f32.mrf.mxu0
        %v829 = vadd.f32 %v681, %v828
        %830 = vmatmul.f32.gmra.mxu0 %v754
        %v831 = vpop.f32.mrf.mxu0
        %v832 = vadd.f32 %v684, %v831
        %833 = vmatmul.f32.gmra.mxu0 %v763
        %v834 = vpop.f32.mrf.mxu0
        %v835 = vadd.f32 %v687, %v834
        %836 = vmatmul.f32.gmra.mxu0 %v764
        %v837 = vpop.f32.mrf.mxu0
        %v838 = vadd.f32 %v690, %v837
        %839 = vmatmul.f32.gmra.mxu0 %v771
        %v840 = vpop.f32.mrf.mxu0
        %v841 = vadd.f32 %v693, %v840
        %842 = vmatmul.f32.gmra.mxu0 %v772
        %v843 = vpop.f32.mrf.mxu0
        %v844 = vadd.f32 %v696, %v843
        %845 = vdwg.mxu0
        %846 = vst.sshfl [vmem:[#allocation1] sm:$0xff pattern:$0x73625140] %v258
        %847 = vst.sshfl [vmem:[#allocation1 + $0x20] sm:$0xff pattern:$0x73625140] %v259
        %s848 = scalar_lea.vmem [#allocation1], 1
        %v849 = vld [vmem:[%s848] ss:$4 sm:$0xff]
        %s850 = scalar_lea.vmem [#allocation1], 2
        %v851 = vld [vmem:[%s850] ss:$4 sm:$0xff]
        %s852 = scalar_lea.vmem [#allocation1], 3
        %v853 = vld [vmem:[%s852] ss:$4 sm:$0xff]
        %s854 = scalar_lea.vmem [#allocation1], 32
        %v855 = vld [vmem:[%s854] ss:$4 sm:$0xff]
        %s856 = scalar_lea.vmem [#allocation1], 33
        %v857 = vld [vmem:[%s856] ss:$4 sm:$0xff]
        %s858 = scalar_lea.vmem [#allocation1], 34
        %v859 = vld [vmem:[%s858] ss:$4 sm:$0xff]
        %s860 = scalar_lea.vmem [#allocation1], 35
        %v861 = vld [vmem:[%s860] ss:$4 sm:$0xff]
        %862 = vst.sshfl [vmem:[#allocation1] sm:$0xff pattern:$0x73625140] %v260
        %v863 = vld [vmem:[#allocation1] ss:$4 sm:$0xff]
        %v864 = vld [vmem:[%s848] ss:$4 sm:$0xff]
        %865 = vst.sshfl [vmem:[#allocation1 + $0x20] sm:$0xff pattern:$0x73625140] %v261
        %v866 = vld [vmem:[%s856] ss:$4 sm:$0xff]
        %v867 = vld [vmem:[%s858] ss:$4 sm:$0xff]
        %v868 = vld [vmem:[%s860] ss:$4 sm:$0xff]
        %869 = vst.sshfl [vmem:[#allocation1] sm:$0xff pattern:$0x73625140] %v262
        %870 = vst.sshfl [vmem:[#allocation1 + $0x20] sm:$0xff pattern:$0x73625140] %v263
        %v871 = vld [vmem:[#allocation1] ss:$4 sm:$0xff]
        %v872 = vld [vmem:[%s848] ss:$4 sm:$0xff]
        %v873 = vld [vmem:[%s850] ss:$4 sm:$0xff]
        %v874 = vld [vmem:[%s852] ss:$4 sm:$0xff]
        %v875 = vld [vmem:[%s854] ss:$4 sm:$0xff]
        %v876 = vld [vmem:[%s856] ss:$4 sm:$0xff]
        %877 = vst.sshfl [vmem:[#allocation1] sm:$0xff pattern:$0x73625140] %v264
        %878 = vst.sshfl [vmem:[#allocation1 + $0x20] sm:$0xff pattern:$0x73625140] %v265
        %v879 = vld [vmem:[%s848] ss:$4 sm:$0xff]
        %v880 = vld [vmem:[%s850] ss:$4 sm:$0xff]
        %v881 = vld [vmem:[%s852] ss:$4 sm:$0xff]
        %v882 = vld [vmem:[%s854] ss:$4 sm:$0xff]
        %v883 = vld [vmem:[%s856] ss:$4 sm:$0xff]
        %v884 = vld [vmem:[%s858] ss:$4 sm:$0xff]
        %v885 = vld [vmem:[%s860] ss:$4 sm:$0xff]
        %886 = vst.sshfl [vmem:[#allocation1] sm:$0xff pattern:$0x73625140] %v266
        %v887 = vld [vmem:[#allocation1] ss:$4 sm:$0xff]
        %v888 = vld [vmem:[%s848] ss:$4 sm:$0xff]
        %889 = vst.sshfl [vmem:[#allocation1 + $0x20] sm:$0xff pattern:$0x73625140] %v267
        %v890 = vld [vmem:[%s856] ss:$4 sm:$0xff]
        %v891 = vld [vmem:[%s858] ss:$4 sm:$0xff]
        %v892 = vld [vmem:[%s860] ss:$4 sm:$0xff]
        %893 = vst.sshfl [vmem:[#allocation1] sm:$0xff pattern:$0x73625140] %v268
        %894 = vst.sshfl [vmem:[#allocation1 + $0x20] sm:$0xff pattern:$0x73625140] %v269
        %v895 = vld [vmem:[#allocation1] ss:$4 sm:$0xff]
        %v896 = vld [vmem:[%s848] ss:$4 sm:$0xff]
        %v897 = vld [vmem:[%s850] ss:$4 sm:$0xff]
        %v898 = vld [vmem:[%s852] ss:$4 sm:$0xff]
        %v899 = vld [vmem:[%s854] ss:$4 sm:$0xff]
        %v900 = vld [vmem:[%s856] ss:$4 sm:$0xff]
        %901 = vst.sshfl [vmem:[#allocation1] sm:$0xff pattern:$0x73625140] %v270
        %902 = vst.sshfl [vmem:[#allocation1 + $0x20] sm:$0xff pattern:$0x73625140] %v271
        %v903 = vld [vmem:[%s848] ss:$4 sm:$0xff]
        %v904 = vld [vmem:[%s850] ss:$4 sm:$0xff]
        %v905 = vld [vmem:[%s852] ss:$4 sm:$0xff]
        %v906 = vld [vmem:[%s854] ss:$4 sm:$0xff]
        %v907 = vld [vmem:[%s856] ss:$4 sm:$0xff]
        %v908 = vld [vmem:[%s858] ss:$4 sm:$0xff]
        %v909 = vld [vmem:[%s860] ss:$4 sm:$0xff]
        %910 = vst.sshfl [vmem:[#allocation1] sm:$0xff pattern:$0x73625140] %v272
        %v911 = vld [vmem:[#allocation1] ss:$4 sm:$0xff]
        %v912 = vld [vmem:[%s848] ss:$4 sm:$0xff]
        %913 = vst.sshfl [vmem:[#allocation1 + $0x20] sm:$0xff pattern:$0x73625140] %v273
        %v914 = vld [vmem:[%s856] ss:$4 sm:$0xff]
        %v915 = vld [vmem:[%s858] ss:$4 sm:$0xff]
        %v916 = vld [vmem:[%s860] ss:$4 sm:$0xff]
        %917 = vst.sshfl [vmem:[#allocation1] sm:$0xff pattern:$0x73625140] %v274
        %918 = vst.sshfl [vmem:[#allocation1 + $0x20] sm:$0xff pattern:$0x73625140] %v275
        %v919 = vld [vmem:[#allocation1] ss:$4 sm:$0xff]
        %v920 = vld [vmem:[%s848] ss:$4 sm:$0xff]
        %v921 = vld [vmem:[%s850] ss:$4 sm:$0xff]
        %v922 = vld [vmem:[%s852] ss:$4 sm:$0xff]
        %v923 = vld [vmem:[%s854] ss:$4 sm:$0xff]
        %v924 = vld [vmem:[%s856] ss:$4 sm:$0xff]
        %s925 = scalar_lea.vmem %s1, 256
        %v926 = vld [vmem:[%s925] sm:$0xff]
        %v927 = vld [vmem:[%s925 + $0x8] sm:$0xff]
        %v928 = vld [vmem:[%s925 + $0x10] sm:$0xff]
        %v929 = vld [vmem:[%s925 + $0x18] sm:$0xff]
        %v930 = vld [vmem:[%s925 + $0x20] sm:$0xff]
        %v931 = vld [vmem:[%s925 + $0x28] sm:$0xff]
        %v932 = vld [vmem:[%s925 + $0x30] sm:$0xff]
        %v933 = vld [vmem:[%s925 + $0x38] sm:$0xff]
        %v934 = vld [vmem:[%s925 + $0x40] sm:$0xff]
        %v935 = vld [vmem:[%s925 + $0x48] sm:$0xff]
        %v936 = vld [vmem:[%s925 + $0x50] sm:$0xff]
        %v937 = vld [vmem:[%s925 + $0x58] sm:$0xff]
        %v938 = vld [vmem:[%s925 + $0x60] sm:$0xff]
        %v939 = vld [vmem:[%s925 + $0x68] sm:$0xff]
        %v940 = vld [vmem:[%s925 + $0x70] sm:$0xff]
        %v941 = vld [vmem:[%s925 + $0x78] sm:$0xff]
        %942 = vst [vmem:[#allocation1] ss:$4 sm:$0xff] %v849
        %s943 = scalar_lea.vmem [#allocation1], 1
        %944 = vst [vmem:[%s943] ss:$4 sm:$0xff] %v851
        %s945 = scalar_lea.vmem [#allocation1], 2
        %946 = vst [vmem:[%s945] ss:$4 sm:$0xff] %v853
        %s947 = scalar_lea.vmem [#allocation1], 3
        %948 = vst [vmem:[%s947] ss:$4 sm:$0xff] %v855
        %s949 = scalar_lea.vmem [#allocation1], 32
        %950 = vst [vmem:[%s949] ss:$4 sm:$0xff] %v857
        %s951 = scalar_lea.vmem [#allocation1], 33
        %952 = vst [vmem:[%s951] ss:$4 sm:$0xff] %v859
        %s953 = scalar_lea.vmem [#allocation1], 34
        %954 = vst [vmem:[%s953] ss:$4 sm:$0xff] %v861
        %s955 = scalar_lea.vmem [#allocation1], 35
        %956 = vst [vmem:[%s955] ss:$4 sm:$0xff] %v863
        %v957 = vld.sshfl [vmem:[#allocation1] sm:$0xff pattern:$0x73625140]
        %v958 = vld.sshfl [vmem:[#allocation1 + $0x20] sm:$0xff pattern:$0x73625140]
        %959 = vst [vmem:[#allocation1] ss:$4 sm:$0xff] %v864
        %960 = vst [vmem:[%s943] ss:$4 sm:$0xff] %v866
        %961 = vst [vmem:[%s945] ss:$4 sm:$0xff] %v867
        %962 = vst [vmem:[%s947] ss:$4 sm:$0xff] %v868
        %963 = vst [vmem:[%s949] ss:$4 sm:$0xff] %v871
        %964 = vst [vmem:[%s951] ss:$4 sm:$0xff] %v872
        %965 = vst [vmem:[%s953] ss:$4 sm:$0xff] %v873
        %966 = vst [vmem:[%s955] ss:$4 sm:$0xff] %v874
        %v967 = vld.sshfl [vmem:[#allocation1] sm:$0xff pattern:$0x73625140]
        %v968 = vld.sshfl [vmem:[#allocation1 + $0x20] sm:$0xff pattern:$0x73625140]
        %969 = vst [vmem:[#allocation1] ss:$4 sm:$0xff] %v875
        %970 = vst [vmem:[%s943] ss:$4 sm:$0xff] %v876
        %971 = vst [vmem:[%s945] ss:$4 sm:$0xff] %v879
        %972 = vst [vmem:[%s947] ss:$4 sm:$0xff] %v880
        %973 = vst [vmem:[%s949] ss:$4 sm:$0xff] %v881
        %974 = vst [vmem:[%s951] ss:$4 sm:$0xff] %v882
        %975 = vst [vmem:[%s953] ss:$4 sm:$0xff] %v883
        %976 = vst [vmem:[%s955] ss:$4 sm:$0xff] %v884
        %v977 = vld.sshfl [vmem:[#allocation1] sm:$0xff pattern:$0x73625140]
        %v978 = vld.sshfl [vmem:[#allocation1 + $0x20] sm:$0xff pattern:$0x73625140]
        %979 = vst [vmem:[#allocation1] ss:$4 sm:$0xff] %v885
        %980 = vst [vmem:[%s943] ss:$4 sm:$0xff] %v887
        %981 = vst [vmem:[%s945] ss:$4 sm:$0xff] %v888
        %982 = vst [vmem:[%s947] ss:$4 sm:$0xff] %v890
        %983 = vst [vmem:[%s949] ss:$4 sm:$0xff] %v891
        %984 = vst [vmem:[%s951] ss:$4 sm:$0xff] %v892
        %985 = vst [vmem:[%s953] ss:$4 sm:$0xff] %v895
        %986 = vst [vmem:[%s955] ss:$4 sm:$0xff] %v896
        %v987 = vld.sshfl [vmem:[#allocation1] sm:$0xff pattern:$0x73625140]
        %v988 = vld.sshfl [vmem:[#allocation1 + $0x20] sm:$0xff pattern:$0x73625140]
        %989 = vst [vmem:[#allocation1] ss:$4 sm:$0xff] %v897
        %990 = vst [vmem:[%s943] ss:$4 sm:$0xff] %v898
        %991 = vst [vmem:[%s945] ss:$4 sm:$0xff] %v899
        %992 = vst [vmem:[%s947] ss:$4 sm:$0xff] %v900
        %993 = vst [vmem:[%s949] ss:$4 sm:$0xff] %v903
        %994 = vst [vmem:[%s951] ss:$4 sm:$0xff] %v904
        %995 = vst [vmem:[%s953] ss:$4 sm:$0xff] %v905
        %996 = vst [vmem:[%s955] ss:$4 sm:$0xff] %v906
        %v997 = vld.sshfl [vmem:[#allocation1] sm:$0xff pattern:$0x73625140]
        %v998 = vld.sshfl [vmem:[#allocation1 + $0x20] sm:$0xff pattern:$0x73625140]
        %999 = vst [vmem:[#allocation1] ss:$4 sm:$0xff] %v907
        %1000 = vst [vmem:[%s943] ss:$4 sm:$0xff] %v908
        %1001 = vst [vmem:[%s945] ss:$4 sm:$0xff] %v909
        %1002 = vst [vmem:[%s947] ss:$4 sm:$0xff] %v911
        %1003 = vst [vmem:[%s949] ss:$4 sm:$0xff] %v912
        %1004 = vst [vmem:[%s951] ss:$4 sm:$0xff] %v914
        %1005 = vst [vmem:[%s953] ss:$4 sm:$0xff] %v915
        %1006 = vst [vmem:[%s955] ss:$4 sm:$0xff] %v916
        %v1007 = vld.sshfl [vmem:[#allocation1] sm:$0xff pattern:$0x73625140]
        %v1008 = vld.sshfl [vmem:[#allocation1 + $0x20] sm:$0xff pattern:$0x73625140]
        %1009 = vst [vmem:[#allocation1] ss:$4 sm:$0xff] %v919
        %1010 = vst [vmem:[%s943] ss:$4 sm:$0xff] %v920
        %1011 = vst [vmem:[%s945] ss:$4 sm:$0xff] %v921
        %1012 = vst [vmem:[%s947] ss:$4 sm:$0xff] %v922
        %1013 = vst [vmem:[%s949] ss:$4 sm:$0xff] %v923
        %1014 = vst [vmem:[%s951] ss:$4 sm:$0xff] %v924
        %v1015 = vld.sshfl [vmem:[#allocation1] sm:$0xff pattern:$0x73625140]
        %v1016 = vld.sshfl [vmem:[#allocation1 + $0x20] sm:$0xff pattern:$0x73625140]
        %1031 = vmatpush.msra.mxu0 %v941
        %1032 = vmatpush.msra.mxu0 %v940
        %1033 = vmatpush.msra.mxu0 %v939
        %1034 = vmatpush.msra.mxu0 %v938
        %1035 = vmatpush.msra.mxu0 %v937
        %1036 = vmatpush.msra.mxu0 %v936
        %1037 = vmatpush.msra.mxu0 %v935
        %1038 = vmatpush.msra.mxu0 %v934
        %1039 = vmatpush.msra.mxu0 %v933
        %1040 = vmatpush.msra.mxu0 %v932
        %1041 = vmatpush.msra.mxu0 %v931
        %1042 = vmatpush.msra.mxu0 %v930
        %1043 = vmatpush.msra.mxu0 %v929
        %1044 = vmatpush.msra.mxu0 %v928
        %1045 = vmatpush.msra.mxu0 %v927
        %1046 = vmatpush.msra.mxu0 %v926
        %1047 = vmatmul.f32.gmra.mxu0 %v957
        %v1048 = vpop.f32.mrf.mxu0
        %v1049 = vadd.f32 0.0, %v1048
        %1050 = vmatmul.f32.gmra.mxu0 %v958
        %v1051 = vpop.f32.mrf.mxu0
        %v1052 = vadd.f32 0.0, %v1051
        %1053 = vmatmul.f32.gmra.mxu0 %v967
        %v1054 = vpop.f32.mrf.mxu0
        %v1055 = vadd.f32 0.0, %v1054
        %1056 = vmatmul.f32.gmra.mxu0 %v968
        %v1057 = vpop.f32.mrf.mxu0
        %v1058 = vadd.f32 0.0, %v1057
        %1059 = vmatmul.f32.gmra.mxu0 %v977
        %v1060 = vpop.f32.mrf.mxu0
        %v1061 = vadd.f32 0.0, %v1060
        %1062 = vmatmul.f32.gmra.mxu0 %v978
        %v1063 = vpop.f32.mrf.mxu0
        %v1064 = vadd.f32 0.0, %v1063
        %1065 = vmatmul.f32.gmra.mxu0 %v987
        %v1066 = vpop.f32.mrf.mxu0
        %v1067 = vadd.f32 0.0, %v1066
        %1068 = vmatmul.f32.gmra.mxu0 %v988
        %v1069 = vpop.f32.mrf.mxu0
        %v1070 = vadd.f32 0.0, %v1069
        %1071 = vmatmul.f32.gmra.mxu0 %v997
        %v1072 = vpop.f32.mrf.mxu0
        %v1073 = vadd.f32 0.0, %v1072
        %1074 = vmatmul.f32.gmra.mxu0 %v998
        %v1075 = vpop.f32.mrf.mxu0
        %v1076 = vadd.f32 0.0, %v1075
        %1077 = vmatmul.f32.gmra.mxu0 %v1007
        %v1078 = vpop.f32.mrf.mxu0
        %v1079 = vadd.f32 0.0, %v1078
        %1080 = vmatmul.f32.gmra.mxu0 %v1008
        %v1081 = vpop.f32.mrf.mxu0
        %v1082 = vadd.f32 0.0, %v1081
        %1083 = vmatmul.f32.gmra.mxu0 %v1015
        %v1084 = vpop.f32.mrf.mxu0
        %v1085 = vadd.f32 0.0, %v1084
        %1086 = vmatmul.f32.gmra.mxu0 %v1016
        %v1087 = vpop.f32.mrf.mxu0
        %v1088 = vadd.f32 0.0, %v1087
        %1089 = vdwg.mxu0
        %v1090 = vadd.f32 %v805, %v1049
        %v1091 = vadd.f32 %v808, %v1052
        %v1092 = vadd.f32 %v811, %v1055
        %v1093 = vadd.f32 %v814, %v1058
        %v1094 = vadd.f32 %v817, %v1061
        %v1095 = vadd.f32 %v820, %v1064
        %v1096 = vadd.f32 %v823, %v1067
        %v1097 = vadd.f32 %v826, %v1070
        %v1098 = vadd.f32 %v829, %v1073
        %v1099 = vadd.f32 %v832, %v1076
        %v1100 = vadd.f32 %v835, %v1079
        %v1101 = vadd.f32 %v838, %v1082
        %v1102 = vadd.f32 %v841, %v1085
        %v1103 = vadd.f32 %v844, %v1088
        %v1107 = vrot.slane %v276, 2
        %v1108 = vrot.slane %v276, 4
        %v1109 = vrot.slane %v276, 6
        %v1110 = vrot.slane %v277, 2
        %v1111 = vrot.slane %v277, 4
        %v1112 = vrot.slane %v277, 6
        %s1113 = scalar_lea.vmem %s1, 384
        %v1114 = vld [vmem:[%s1113] sm:$0xff]
        %v1115 = vld [vmem:[%s1113 + $0x8] sm:$0xff]
        %v1116 = vld [vmem:[%s1113 + $0x10] sm:$0xff]
        %v1117 = vld [vmem:[%s1113 + $0x18] sm:$0xff]
        %v1118 = vld [vmem:[%s1113 + $0x20] sm:$0xff]
        %v1119 = vld [vmem:[%s1113 + $0x28] sm:$0xff]
        %v1120 = vld [vmem:[%s1113 + $0x30] sm:$0xff]
        %v1121 = vld [vmem:[%s1113 + $0x38] sm:$0xff]
        %v1122 = vld [vmem:[%s1113 + $0x40] sm:$0xff]
        %v1123 = vld [vmem:[%s1113 + $0x48] sm:$0xff]
        %v1124 = vld [vmem:[%s1113 + $0x50] sm:$0xff]
        %v1125 = vld [vmem:[%s1113 + $0x58] sm:$0xff]
        %v1126 = vld [vmem:[%s1113 + $0x60] sm:$0xff]
        %v1127 = vld [vmem:[%s1113 + $0x68] sm:$0xff]
        %v1128 = vld [vmem:[%s1113 + $0x70] sm:$0xff]
        %v1129 = vld [vmem:[%s1113 + $0x78] sm:$0xff]
        %1130 = vst [vmem:[#allocation1] ss:$4 sm:$0xff] %v261
        %s1131 = scalar_lea.vmem [#allocation1], 1
        %1132 = vst [vmem:[%s1131] ss:$4 sm:$0xff] %v306
        %s1133 = scalar_lea.vmem [#allocation1], 2
        %1134 = vst [vmem:[%s1133] ss:$4 sm:$0xff] %v307
        %s1135 = scalar_lea.vmem [#allocation1], 3
        %1136 = vst [vmem:[%s1135] ss:$4 sm:$0xff] %v308
        %s1137 = scalar_lea.vmem [#allocation1], 32
        %1138 = vst [vmem:[%s1137] ss:$4 sm:$0xff] %v262
        %s1139 = scalar_lea.vmem [#allocation1], 33
        %1140 = vst [vmem:[%s1139] ss:$4 sm:$0xff] %v309
        %s1141 = scalar_lea.vmem [#allocation1], 34
        %1142 = vst [vmem:[%s1141] ss:$4 sm:$0xff] %v310
        %s1143 = scalar_lea.vmem [#allocation1], 35
        %1144 = vst [vmem:[%s1143] ss:$4 sm:$0xff] %v311
        %v1145 = vld.sshfl [vmem:[#allocation1] sm:$0xff pattern:$0x73625140]
        %v1146 = vld.sshfl [vmem:[#allocation1 + $0x20] sm:$0xff pattern:$0x73625140]
        %1147 = vst [vmem:[#allocation1] ss:$4 sm:$0xff] %v263
        %1148 = vst [vmem:[%s1131] ss:$4 sm:$0xff] %v264
        %1149 = vst [vmem:[%s1133] ss:$4 sm:$0xff] %v312
        %1150 = vst [vmem:[%s1135] ss:$4 sm:$0xff] %v313
        %1151 = vst [vmem:[%s1137] ss:$4 sm:$0xff] %v314
        %1152 = vst [vmem:[%s1139] ss:$4 sm:$0xff] %v265
        %1153 = vst [vmem:[%s1141] ss:$4 sm:$0xff] %v315
        %1154 = vst [vmem:[%s1143] ss:$4 sm:$0xff] %v316
        %v1155 = vld.sshfl [vmem:[#allocation1] sm:$0xff pattern:$0x73625140]
        %v1156 = vld.sshfl [vmem:[#allocation1 + $0x20] sm:$0xff pattern:$0x73625140]
        %1157 = vst [vmem:[#allocation1] ss:$4 sm:$0xff] %v317
        %1158 = vst [vmem:[%s1131] ss:$4 sm:$0xff] %v266
        %1159 = vst [vmem:[%s1133] ss:$4 sm:$0xff] %v267
        %1160 = vst [vmem:[%s1135] ss:$4 sm:$0xff] %v318
        %1161 = vst [vmem:[%s1137] ss:$4 sm:$0xff] %v319
        %1162 = vst [vmem:[%s1139] ss:$4 sm:$0xff] %v320
        %1163 = vst [vmem:[%s1141] ss:$4 sm:$0xff] %v268
        %1164 = vst [vmem:[%s1143] ss:$4 sm:$0xff] %v321
        %v1165 = vld.sshfl [vmem:[#allocation1] sm:$0xff pattern:$0x73625140]
        %v1166 = vld.sshfl [vmem:[#allocation1 + $0x20] sm:$0xff pattern:$0x73625140]
        %1167 = vst [vmem:[#allocation1] ss:$4 sm:$0xff] %v322
        %1168 = vst [vmem:[%s1131] ss:$4 sm:$0xff] %v323
        %1169 = vst [vmem:[%s1133] ss:$4 sm:$0xff] %v269
        %1170 = vst [vmem:[%s1135] ss:$4 sm:$0xff] %v270
        %1171 = vst [vmem:[%s1137] ss:$4 sm:$0xff] %v324
        %1172 = vst [vmem:[%s1139] ss:$4 sm:$0xff] %v325
        %1173 = vst [vmem:[%s1141] ss:$4 sm:$0xff] %v326
        %1174 = vst [vmem:[%s1143] ss:$4 sm:$0xff] %v271
        %v1175 = vld.sshfl [vmem:[#allocation1] sm:$0xff pattern:$0x73625140]
        %v1176 = vld.sshfl [vmem:[#allocation1 + $0x20] sm:$0xff pattern:$0x73625140]
        %1177 = vst [vmem:[#allocation1] ss:$4 sm:$0xff] %v327
        %1178 = vst [vmem:[%s1131] ss:$4 sm:$0xff] %v328
        %1179 = vst [vmem:[%s1133] ss:$4 sm:$0xff] %v329
        %1180 = vst [vmem:[%s1135] ss:$4 sm:$0xff] %v272
        %1181 = vst [vmem:[%s1137] ss:$4 sm:$0xff] %v273
        %1182 = vst [vmem:[%s1139] ss:$4 sm:$0xff] %v330
        %1183 = vst [vmem:[%s1141] ss:$4 sm:$0xff] %v331
        %1184 = vst [vmem:[%s1143] ss:$4 sm:$0xff] %v332
        %v1185 = vld.sshfl [vmem:[#allocation1] sm:$0xff pattern:$0x73625140]
        %v1186 = vld.sshfl [vmem:[#allocation1 + $0x20] sm:$0xff pattern:$0x73625140]
        %1187 = vst [vmem:[#allocation1] ss:$4 sm:$0xff] %v274
        %1188 = vst [vmem:[%s1131] ss:$4 sm:$0xff] %v333
        %1189 = vst [vmem:[%s1133] ss:$4 sm:$0xff] %v334
        %1190 = vst [vmem:[%s1135] ss:$4 sm:$0xff] %v335
        %1191 = vst [vmem:[%s1137] ss:$4 sm:$0xff] %v275
        %1192 = vst [vmem:[%s1139] ss:$4 sm:$0xff] %v276
        %1193 = vst [vmem:[%s1141] ss:$4 sm:$0xff] %v1107
        %1194 = vst [vmem:[%s1143] ss:$4 sm:$0xff] %v1108
        %v1195 = vld.sshfl [vmem:[#allocation1] sm:$0xff pattern:$0x73625140]
        %v1196 = vld.sshfl [vmem:[#allocation1 + $0x20] sm:$0xff pattern:$0x73625140]
        %1197 = vst [vmem:[#allocation1] ss:$4 sm:$0xff] %v1109
        %1198 = vst [vmem:[%s1131] ss:$4 sm:$0xff] %v277
        %1199 = vst [vmem:[%s1133] ss:$4 sm:$0xff] %v1110
        %1200 = vst [vmem:[%s1135] ss:$4 sm:$0xff] %v1111
        %1201 = vst [vmem:[%s1137] ss:$4 sm:$0xff] %v1112
        %1202 = vst [vmem:[%s1139] ss:$4 sm:$0xff] %v278
        %v1203 = vld.sshfl [vmem:[#allocation1] sm:$0xff pattern:$0x73625140]
        %v1204 = vld.sshfl [vmem:[#allocation1 + $0x20] sm:$0xff pattern:$0x73625140]
        %1219 = vmatpush.msra.mxu0 %v1129
        %1220 = vmatpush.msra.mxu0 %v1128
        %1221 = vmatpush.msra.mxu0 %v1127
        %1222 = vmatpush.msra.mxu0 %v1126
        %1223 = vmatpush.msra.mxu0 %v1125
        %1224 = vmatpush.msra.mxu0 %v1124
        %1225 = vmatpush.msra.mxu0 %v1123
        %1226 = vmatpush.msra.mxu0 %v1122
        %1227 = vmatpush.msra.mxu0 %v1121
        %1228 = vmatpush.msra.mxu0 %v1120
        %1229 = vmatpush.msra.mxu0 %v1119
        %1230 = vmatpush.msra.mxu0 %v1118
        %1231 = vmatpush.msra.mxu0 %v1117
        %1232 = vmatpush.msra.mxu0 %v1116
        %1233 = vmatpush.msra.mxu0 %v1115
        %1234 = vmatpush.msra.mxu0 %v1114
        %1235 = vmatmul.f32.gmra.mxu0 %v1145
        %v1236 = vpop.f32.mrf.mxu0
        %v1237 = vadd.f32 0.0, %v1236
        %1238 = vmatmul.f32.gmra.mxu0 %v1146
        %v1239 = vpop.f32.mrf.mxu0
        %v1240 = vadd.f32 0.0, %v1239
        %1241 = vmatmul.f32.gmra.mxu0 %v1155
        %v1242 = vpop.f32.mrf.mxu0
        %v1243 = vadd.f32 0.0, %v1242
        %1244 = vmatmul.f32.gmra.mxu0 %v1156
        %v1245 = vpop.f32.mrf.mxu0
        %v1246 = vadd.f32 0.0, %v1245
        %1247 = vmatmul.f32.gmra.mxu0 %v1165
        %v1248 = vpop.f32.mrf.mxu0
        %v1249 = vadd.f32 0.0, %v1248
        %1250 = vmatmul.f32.gmra.mxu0 %v1166
        %v1251 = vpop.f32.mrf.mxu0
        %v1252 = vadd.f32 0.0, %v1251
        %1253 = vmatmul.f32.gmra.mxu0 %v1175
        %v1254 = vpop.f32.mrf.mxu0
        %v1255 = vadd.f32 0.0, %v1254
        %1256 = vmatmul.f32.gmra.mxu0 %v1176
        %v1257 = vpop.f32.mrf.mxu0
        %v1258 = vadd.f32 0.0, %v1257
        %1259 = vmatmul.f32.gmra.mxu0 %v1185
        %v1260 = vpop.f32.mrf.mxu0
        %v1261 = vadd.f32 0.0, %v1260
        %1262 = vmatmul.f32.gmra.mxu0 %v1186
        %v1263 = vpop.f32.mrf.mxu0
        %v1264 = vadd.f32 0.0, %v1263
        %1265 = vmatmul.f32.gmra.mxu0 %v1195
        %v1266 = vpop.f32.mrf.mxu0
        %v1267 = vadd.f32 0.0, %v1266
        %1268 = vmatmul.f32.gmra.mxu0 %v1196
        %v1269 = vpop.f32.mrf.mxu0
        %v1270 = vadd.f32 0.0, %v1269
        %1271 = vmatmul.f32.gmra.mxu0 %v1203
        %v1272 = vpop.f32.mrf.mxu0
        %v1273 = vadd.f32 0.0, %v1272
        %1274 = vmatmul.f32.gmra.mxu0 %v1204
        %v1275 = vpop.f32.mrf.mxu0
        %v1276 = vadd.f32 0.0, %v1275
        %1277 = vdwg.mxu0
        %v1278 = vadd.f32 %v1090, %v1237
        %v1279 = vadd.f32 %v1091, %v1240
        %v1280 = vadd.f32 %v1092, %v1243
        %v1281 = vadd.f32 %v1093, %v1246
        %v1282 = vadd.f32 %v1094, %v1249
        %v1283 = vadd.f32 %v1095, %v1252
        %v1284 = vadd.f32 %v1096, %v1255
        %v1285 = vadd.f32 %v1097, %v1258
        %v1286 = vadd.f32 %v1098, %v1261
        %v1287 = vadd.f32 %v1099, %v1264
        %v1288 = vadd.f32 %v1100, %v1267
        %v1289 = vadd.f32 %v1101, %v1270
        %v1290 = vadd.f32 %v1102, %v1273
        %v1291 = vadd.f32 %v1103, %v1276
        %v1292 = vrot.slane %v278, 2
        %v1293 = vrot.slane %v276, 7
        %v1294 = vrot.slane %v1293, 2
        %v1295 = vrot.slane %v1107, 7
        %v1296 = vsel %vm364, %v1294, %v1295
        %v1297 = vrot.slane %v1295, 2
        %v1298 = vrot.slane %v1108, 7
        %v1299 = vsel %vm364, %v1297, %v1298
        %v1300 = vrot.slane %v1298, 2
        %v1301 = vrot.slane %v1109, 7
        %v1302 = vsel %vm364, %v1300, %v1301
        %v1303 = vrot.slane %v1301, 2
        %v1304 = vrot.slane %v277, 7
        %v1305 = vsel %vm364, %v1303, %v1304
        %v1306 = vrot.slane %v1304, 2
        %v1307 = vrot.slane %v1110, 7
        %v1308 = vsel %vm364, %v1306, %v1307
        %v1309 = vrot.slane %v1307, 2
        %v1310 = vrot.slane %v1111, 7
        %v1311 = vsel %vm364, %v1309, %v1310
        %v1312 = vrot.slane %v1310, 2
        %v1313 = vrot.slane %v1112, 7
        %v1314 = vsel %vm364, %v1312, %v1313
        %v1315 = vrot.slane %v1313, 2
        %v1316 = vrot.slane %v278, 7
        %v1317 = vsel %vm364, %v1315, %v1316
        %v1318 = vrot.slane %v1316, 2
        %v1319 = vrot.slane %v1292, 7
        %v1320 = vsel %vm364, %v1318, %v1319
        %s1321 = scalar_lea.vmem %s1, 512
        %v1322 = vld [vmem:[%s1321] sm:$0xff]
        %v1323 = vld [vmem:[%s1321 + $0x8] sm:$0xff]
        %v1324 = vld [vmem:[%s1321 + $0x10] sm:$0xff]
        %v1325 = vld [vmem:[%s1321 + $0x18] sm:$0xff]
        %v1326 = vld [vmem:[%s1321 + $0x20] sm:$0xff]
        %v1327 = vld [vmem:[%s1321 + $0x28] sm:$0xff]
        %v1328 = vld [vmem:[%s1321 + $0x30] sm:$0xff]
        %v1329 = vld [vmem:[%s1321 + $0x38] sm:$0xff]
        %v1330 = vld [vmem:[%s1321 + $0x40] sm:$0xff]
        %v1331 = vld [vmem:[%s1321 + $0x48] sm:$0xff]
        %v1332 = vld [vmem:[%s1321 + $0x50] sm:$0xff]
        %v1333 = vld [vmem:[%s1321 + $0x58] sm:$0xff]
        %v1334 = vld [vmem:[%s1321 + $0x60] sm:$0xff]
        %v1335 = vld [vmem:[%s1321 + $0x68] sm:$0xff]
        %v1336 = vld [vmem:[%s1321 + $0x70] sm:$0xff]
        %v1337 = vld [vmem:[%s1321 + $0x78] sm:$0xff]
        %1338 = vst [vmem:[#allocation1] ss:$4 sm:$0xff] %v396
        %s1339 = scalar_lea.vmem [#allocation1], 1
        %1340 = vst [vmem:[%s1339] ss:$4 sm:$0xff] %v399
        %s1341 = scalar_lea.vmem [#allocation1], 2
        %1342 = vst [vmem:[%s1341] ss:$4 sm:$0xff] %v402
        %s1343 = scalar_lea.vmem [#allocation1], 3
        %1344 = vst [vmem:[%s1343] ss:$4 sm:$0xff] %v405
        %s1345 = scalar_lea.vmem [#allocation1], 32
        %1346 = vst [vmem:[%s1345] ss:$4 sm:$0xff] %v408
        %s1347 = scalar_lea.vmem [#allocation1], 33
        %1348 = vst [vmem:[%s1347] ss:$4 sm:$0xff] %v411
        %s1349 = scalar_lea.vmem [#allocation1], 34
        %1350 = vst [vmem:[%s1349] ss:$4 sm:$0xff] %v414
        %s1351 = scalar_lea.vmem [#allocation1], 35
        %1352 = vst [vmem:[%s1351] ss:$4 sm:$0xff] %v417
        %v1353 = vld.sshfl [vmem:[#allocation1] sm:$0xff pattern:$0x73625140]
        %v1354 = vld.sshfl [vmem:[#allocation1 + $0x20] sm:$0xff pattern:$0x73625140]
        %1355 = vst [vmem:[#allocation1] ss:$4 sm:$0xff] %v420
        %1356 = vst [vmem:[%s1339] ss:$4 sm:$0xff] %v424
        %1357 = vst [vmem:[%s1341] ss:$4 sm:$0xff] %v427
        %1358 = vst [vmem:[%s1343] ss:$4 sm:$0xff] %v430
        %1359 = vst [vmem:[%s1345] ss:$4 sm:$0xff] %v433
        %1360 = vst [vmem:[%s1347] ss:$4 sm:$0xff] %v436
        %1361 = vst [vmem:[%s1349] ss:$4 sm:$0xff] %v439
        %1362 = vst [vmem:[%s1351] ss:$4 sm:$0xff] %v442
        %v1363 = vld.sshfl [vmem:[#allocation1] sm:$0xff pattern:$0x73625140]
        %v1364 = vld.sshfl [vmem:[#allocation1 + $0x20] sm:$0xff pattern:$0x73625140]
        %1365 = vst [vmem:[#allocation1] ss:$4 sm:$0xff] %v445
        %1366 = vst [vmem:[%s1339] ss:$4 sm:$0xff] %v448
        %1367 = vst [vmem:[%s1341] ss:$4 sm:$0xff] %v452
        %1368 = vst [vmem:[%s1343] ss:$4 sm:$0xff] %v455
        %1369 = vst [vmem:[%s1345] ss:$4 sm:$0xff] %v458
        %1370 = vst [vmem:[%s1347] ss:$4 sm:$0xff] %v461
        %1371 = vst [vmem:[%s1349] ss:$4 sm:$0xff] %v464
        %1372 = vst [vmem:[%s1351] ss:$4 sm:$0xff] %v467
        %v1373 = vld.sshfl [vmem:[#allocation1] sm:$0xff pattern:$0x73625140]
        %v1374 = vld.sshfl [vmem:[#allocation1 + $0x20] sm:$0xff pattern:$0x73625140]
        %1375 = vst [vmem:[#allocation1] ss:$4 sm:$0xff] %v470
        %1376 = vst [vmem:[%s1339] ss:$4 sm:$0xff] %v473
        %1377 = vst [vmem:[%s1341] ss:$4 sm:$0xff] %v476
        %1378 = vst [vmem:[%s1343] ss:$4 sm:$0xff] %v480
        %1379 = vst [vmem:[%s1345] ss:$4 sm:$0xff] %v483
        %1380 = vst [vmem:[%s1347] ss:$4 sm:$0xff] %v486
        %1381 = vst [vmem:[%s1349] ss:$4 sm:$0xff] %v489
        %1382 = vst [vmem:[%s1351] ss:$4 sm:$0xff] %v492
        %v1383 = vld.sshfl [vmem:[#allocation1] sm:$0xff pattern:$0x73625140]
        %v1384 = vld.sshfl [vmem:[#allocation1 + $0x20] sm:$0xff pattern:$0x73625140]
        %1385 = vst [vmem:[#allocation1] ss:$4 sm:$0xff] %v495
        %1386 = vst [vmem:[%s1339] ss:$4 sm:$0xff] %v498
        %1387 = vst [vmem:[%s1341] ss:$4 sm:$0xff] %v501
        %1388 = vst [vmem:[%s1343] ss:$4 sm:$0xff] %v504
        %1389 = vst [vmem:[%s1345] ss:$4 sm:$0xff] %v508
        %1390 = vst [vmem:[%s1347] ss:$4 sm:$0xff] %v511
        %1391 = vst [vmem:[%s1349] ss:$4 sm:$0xff] %v514
        %1392 = vst [vmem:[%s1351] ss:$4 sm:$0xff] %v517
        %v1393 = vld.sshfl [vmem:[#allocation1] sm:$0xff pattern:$0x73625140]
        %v1394 = vld.sshfl [vmem:[#allocation1 + $0x20] sm:$0xff pattern:$0x73625140]
        %1395 = vst [vmem:[#allocation1] ss:$4 sm:$0xff] %v520
        %1396 = vst [vmem:[%s1339] ss:$4 sm:$0xff] %v523
        %1397 = vst [vmem:[%s1341] ss:$4 sm:$0xff] %v526
        %1398 = vst [vmem:[%s1343] ss:$4 sm:$0xff] %v529
        %1399 = vst [vmem:[%s1345] ss:$4 sm:$0xff] %v532
        %1400 = vst [vmem:[%s1347] ss:$4 sm:$0xff] %v1296
        %1401 = vst [vmem:[%s1349] ss:$4 sm:$0xff] %v1299
        %1402 = vst [vmem:[%s1351] ss:$4 sm:$0xff] %v1302
        %v1403 = vld.sshfl [vmem:[#allocation1] sm:$0xff pattern:$0x73625140]
        %v1404 = vld.sshfl [vmem:[#allocation1 + $0x20] sm:$0xff pattern:$0x73625140]
        %1405 = vst [vmem:[#allocation1] ss:$4 sm:$0xff] %v1305
        %1406 = vst [vmem:[%s1339] ss:$4 sm:$0xff] %v1308
        %1407 = vst [vmem:[%s1341] ss:$4 sm:$0xff] %v1311
        %1408 = vst [vmem:[%s1343] ss:$4 sm:$0xff] %v1314
        %1409 = vst [vmem:[%s1345] ss:$4 sm:$0xff] %v1317
        %1410 = vst [vmem:[%s1347] ss:$4 sm:$0xff] %v1320
        %v1411 = vld.sshfl [vmem:[#allocation1] sm:$0xff pattern:$0x73625140]
        %v1412 = vld.sshfl [vmem:[#allocation1 + $0x20] sm:$0xff pattern:$0x73625140]
        %1427 = vmatpush.msra.mxu0 %v1337
        %1428 = vmatpush.msra.mxu0 %v1336
        %1429 = vmatpush.msra.mxu0 %v1335
        %1430 = vmatpush.msra.mxu0 %v1334
        %1431 = vmatpush.msra.mxu0 %v1333
        %1432 = vmatpush.msra.mxu0 %v1332
        %1433 = vmatpush.msra.mxu0 %v1331
        %1434 = vmatpush.msra.mxu0 %v1330
        %1435 = vmatpush.msra.mxu0 %v1329
        %1436 = vmatpush.msra.mxu0 %v1328
        %1437 = vmatpush.msra.mxu0 %v1327
        %1438 = vmatpush.msra.mxu0 %v1326
        %1439 = vmatpush.msra.mxu0 %v1325
        %1440 = vmatpush.msra.mxu0 %v1324
        %1441 = vmatpush.msra.mxu0 %v1323
        %1442 = vmatpush.msra.mxu0 %v1322
        %1443 = vmatmul.f32.gmra.mxu0 %v1353
        %v1444 = vpop.f32.mrf.mxu0
        %v1445 = vadd.f32 0.0, %v1444
        %1446 = vmatmul.f32.gmra.mxu0 %v1354
        %v1447 = vpop.f32.mrf.mxu0
        %v1448 = vadd.f32 0.0, %v1447
        %1449 = vmatmul.f32.gmra.mxu0 %v1363
        %v1450 = vpop.f32.mrf.mxu0
        %v1451 = vadd.f32 0.0, %v1450
        %1452 = vmatmul.f32.gmra.mxu0 %v1364
        %v1453 = vpop.f32.mrf.mxu0
        %v1454 = vadd.f32 0.0, %v1453
        %1455 = vmatmul.f32.gmra.mxu0 %v1373
        %v1456 = vpop.f32.mrf.mxu0
        %v1457 = vadd.f32 0.0, %v1456
        %1458 = vmatmul.f32.gmra.mxu0 %v1374
        %v1459 = vpop.f32.mrf.mxu0
        %v1460 = vadd.f32 0.0, %v1459
        %1461 = vmatmul.f32.gmra.mxu0 %v1383
        %v1462 = vpop.f32.mrf.mxu0
        %v1463 = vadd.f32 0.0, %v1462
        %1464 = vmatmul.f32.gmra.mxu0 %v1384
        %v1465 = vpop.f32.mrf.mxu0
        %v1466 = vadd.f32 0.0, %v1465
        %1467 = vmatmul.f32.gmra.mxu0 %v1393
        %v1468 = vpop.f32.mrf.mxu0
        %v1469 = vadd.f32 0.0, %v1468
        %1470 = vmatmul.f32.gmra.mxu0 %v1394
        %v1471 = vpop.f32.mrf.mxu0
        %v1472 = vadd.f32 0.0, %v1471
        %1473 = vmatmul.f32.gmra.mxu0 %v1403
        %v1474 = vpop.f32.mrf.mxu0
        %v1475 = vadd.f32 0.0, %v1474
        %1476 = vmatmul.f32.gmra.mxu0 %v1404
        %v1477 = vpop.f32.mrf.mxu0
        %v1478 = vadd.f32 0.0, %v1477
        %1479 = vmatmul.f32.gmra.mxu0 %v1411
        %v1480 = vpop.f32.mrf.mxu0
        %v1481 = vadd.f32 0.0, %v1480
        %1482 = vmatmul.f32.gmra.mxu0 %v1412
        %v1483 = vpop.f32.mrf.mxu0
        %v1484 = vadd.f32 0.0, %v1483
        %1485 = vdwg.mxu0
        %v1486 = vadd.f32 %v1278, %v1445
        %v1487 = vadd.f32 %v1279, %v1448
        %v1488 = vadd.f32 %v1280, %v1451
        %v1489 = vadd.f32 %v1281, %v1454
        %v1490 = vadd.f32 %v1282, %v1457
        %v1491 = vadd.f32 %v1283, %v1460
        %v1492 = vadd.f32 %v1284, %v1463
        %v1493 = vadd.f32 %v1285, %v1466
        %v1494 = vadd.f32 %v1286, %v1469
        %v1495 = vadd.f32 %v1287, %v1472
        %v1496 = vadd.f32 %v1288, %v1475
        %v1497 = vadd.f32 %v1289, %v1478
        %v1498 = vadd.f32 %v1290, %v1481
        %v1499 = vadd.f32 %v1291, %v1484
        %1500 = vst.sshfl [vmem:[#allocation1] sm:$0xff pattern:$0x73625140] %v261
        %1501 = vst.sshfl [vmem:[#allocation1 + $0x20] sm:$0xff pattern:$0x73625140] %v262
        %s1502 = scalar_lea.vmem [#allocation1], 1
        %v1503 = vld [vmem:[%s1502] ss:$4 sm:$0xff]
        %s1504 = scalar_lea.vmem [#allocation1], 2
        %v1505 = vld [vmem:[%s1504] ss:$4 sm:$0xff]
        %s1506 = scalar_lea.vmem [#allocation1], 3
        %v1507 = vld [vmem:[%s1506] ss:$4 sm:$0xff]
        %s1508 = scalar_lea.vmem [#allocation1], 32
        %v1509 = vld [vmem:[%s1508] ss:$4 sm:$0xff]
        %s1510 = scalar_lea.vmem [#allocation1], 33
        %v1511 = vld [vmem:[%s1510] ss:$4 sm:$0xff]
        %s1512 = scalar_lea.vmem [#allocation1], 34
        %v1513 = vld [vmem:[%s1512] ss:$4 sm:$0xff]
        %s1514 = scalar_lea.vmem [#allocation1], 35
        %v1515 = vld [vmem:[%s1514] ss:$4 sm:$0xff]
        %1516 = vst.sshfl [vmem:[#allocation1] sm:$0xff pattern:$0x73625140] %v263
        %v1517 = vld [vmem:[#allocation1] ss:$4 sm:$0xff]
        %v1518 = vld [vmem:[%s1502] ss:$4 sm:$0xff]
        %1519 = vst.sshfl [vmem:[#allocation1 + $0x20] sm:$0xff pattern:$0x73625140] %v264
        %v1520 = vld [vmem:[%s1510] ss:$4 sm:$0xff]
        %v1521 = vld [vmem:[%s1512] ss:$4 sm:$0xff]
        %v1522 = vld [vmem:[%s1514] ss:$4 sm:$0xff]
        %1523 = vst.sshfl [vmem:[#allocation1] sm:$0xff pattern:$0x73625140] %v265
        %1524 = vst.sshfl [vmem:[#allocation1 + $0x20] sm:$0xff pattern:$0x73625140] %v266
        %v1525 = vld [vmem:[#allocation1] ss:$4 sm:$0xff]
        %v1526 = vld [vmem:[%s1502] ss:$4 sm:$0xff]
        %v1527 = vld [vmem:[%s1504] ss:$4 sm:$0xff]
        %v1528 = vld [vmem:[%s1506] ss:$4 sm:$0xff]
        %v1529 = vld [vmem:[%s1508] ss:$4 sm:$0xff]
        %v1530 = vld [vmem:[%s1510] ss:$4 sm:$0xff]
        %1531 = vst.sshfl [vmem:[#allocation1] sm:$0xff pattern:$0x73625140] %v267
        %1532 = vst.sshfl [vmem:[#allocation1 + $0x20] sm:$0xff pattern:$0x73625140] %v268
        %v1533 = vld [vmem:[%s1502] ss:$4 sm:$0xff]
        %v1534 = vld [vmem:[%s1504] ss:$4 sm:$0xff]
        %v1535 = vld [vmem:[%s1506] ss:$4 sm:$0xff]
        %v1536 = vld [vmem:[%s1508] ss:$4 sm:$0xff]
        %v1537 = vld [vmem:[%s1510] ss:$4 sm:$0xff]
        %v1538 = vld [vmem:[%s1512] ss:$4 sm:$0xff]
        %v1539 = vld [vmem:[%s1514] ss:$4 sm:$0xff]
        %1540 = vst.sshfl [vmem:[#allocation1] sm:$0xff pattern:$0x73625140] %v269
        %v1541 = vld [vmem:[#allocation1] ss:$4 sm:$0xff]
        %v1542 = vld [vmem:[%s1502] ss:$4 sm:$0xff]
        %1543 = vst.sshfl [vmem:[#allocation1 + $0x20] sm:$0xff pattern:$0x73625140] %v270
        %v1544 = vld [vmem:[%s1510] ss:$4 sm:$0xff]
        %v1545 = vld [vmem:[%s1512] ss:$4 sm:$0xff]
        %v1546 = vld [vmem:[%s1514] ss:$4 sm:$0xff]
        %1547 = vst.sshfl [vmem:[#allocation1] sm:$0xff pattern:$0x73625140] %v271
        %1548 = vst.sshfl [vmem:[#allocation1 + $0x20] sm:$0xff pattern:$0x73625140] %v272
        %v1549 = vld [vmem:[#allocation1] ss:$4 sm:$0xff]
        %v1550 = vld [vmem:[%s1502] ss:$4 sm:$0xff]
        %v1551 = vld [vmem:[%s1504] ss:$4 sm:$0xff]
        %v1552 = vld [vmem:[%s1506] ss:$4 sm:$0xff]
        %v1553 = vld [vmem:[%s1508] ss:$4 sm:$0xff]
        %v1554 = vld [vmem:[%s1510] ss:$4 sm:$0xff]
        %1555 = vst.sshfl [vmem:[#allocation1] sm:$0xff pattern:$0x73625140] %v273
        %1556 = vst.sshfl [vmem:[#allocation1 + $0x20] sm:$0xff pattern:$0x73625140] %v274
        %v1557 = vld [vmem:[%s1502] ss:$4 sm:$0xff]
        %v1558 = vld [vmem:[%s1504] ss:$4 sm:$0xff]
        %v1559 = vld [vmem:[%s1506] ss:$4 sm:$0xff]
        %v1560 = vld [vmem:[%s1508] ss:$4 sm:$0xff]
        %v1561 = vld [vmem:[%s1510] ss:$4 sm:$0xff]
        %v1562 = vld [vmem:[%s1512] ss:$4 sm:$0xff]
        %v1563 = vld [vmem:[%s1514] ss:$4 sm:$0xff]
        %1564 = vst.sshfl [vmem:[#allocation1] sm:$0xff pattern:$0x73625140] %v275
        %v1565 = vld [vmem:[#allocation1] ss:$4 sm:$0xff]
        %v1566 = vld [vmem:[%s1502] ss:$4 sm:$0xff]
        %1567 = vst.sshfl [vmem:[#allocation1 + $0x20] sm:$0xff pattern:$0x73625140] %v276
        %v1568 = vld [vmem:[%s1510] ss:$4 sm:$0xff]
        %v1569 = vld [vmem:[%s1512] ss:$4 sm:$0xff]
        %v1570 = vld [vmem:[%s1514] ss:$4 sm:$0xff]
        %1571 = vst.sshfl [vmem:[#allocation1] sm:$0xff pattern:$0x73625140] %v277
        %1572 = vst.sshfl [vmem:[#allocation1 + $0x20] sm:$0xff pattern:$0x73625140] %v278
        %v1573 = vld [vmem:[#allocation1] ss:$4 sm:$0xff]
        %v1574 = vld [vmem:[%s1502] ss:$4 sm:$0xff]
        %v1575 = vld [vmem:[%s1504] ss:$4 sm:$0xff]
        %v1576 = vld [vmem:[%s1506] ss:$4 sm:$0xff]
        %v1577 = vld [vmem:[%s1508] ss:$4 sm:$0xff]
        %v1578 = vld [vmem:[%s1510] ss:$4 sm:$0xff]
        %s1579 = scalar_lea.vmem %s1, 640
        %v1580 = vld [vmem:[%s1579] sm:$0xff]
        %v1581 = vld [vmem:[%s1579 + $0x8] sm:$0xff]
        %v1582 = vld [vmem:[%s1579 + $0x10] sm:$0xff]
        %v1583 = vld [vmem:[%s1579 + $0x18] sm:$0xff]
        %v1584 = vld [vmem:[%s1579 + $0x20] sm:$0xff]
        %v1585 = vld [vmem:[%s1579 + $0x28] sm:$0xff]
        %v1586 = vld [vmem:[%s1579 + $0x30] sm:$0xff]
        %v1587 = vld [vmem:[%s1579 + $0x38] sm:$0xff]
        %v1588 = vld [vmem:[%s1579 + $0x40] sm:$0xff]
        %v1589 = vld [vmem:[%s1579 + $0x48] sm:$0xff]
        %v1590 = vld [vmem:[%s1579 + $0x50] sm:$0xff]
        %v1591 = vld [vmem:[%s1579 + $0x58] sm:$0xff]
        %v1592 = vld [vmem:[%s1579 + $0x60] sm:$0xff]
        %v1593 = vld [vmem:[%s1579 + $0x68] sm:$0xff]
        %v1594 = vld [vmem:[%s1579 + $0x70] sm:$0xff]
        %v1595 = vld [vmem:[%s1579 + $0x78] sm:$0xff]
        %1596 = vst [vmem:[#allocation1] ss:$4 sm:$0xff] %v1503
        %s1597 = scalar_lea.vmem [#allocation1], 1
        %1598 = vst [vmem:[%s1597] ss:$4 sm:$0xff] %v1505
        %s1599 = scalar_lea.vmem [#allocation1], 2
        %1600 = vst [vmem:[%s1599] ss:$4 sm:$0xff] %v1507
        %s1601 = scalar_lea.vmem [#allocation1], 3
        %1602 = vst [vmem:[%s1601] ss:$4 sm:$0xff] %v1509
        %s1603 = scalar_lea.vmem [#allocation1], 32
        %1604 = vst [vmem:[%s1603] ss:$4 sm:$0xff] %v1511
        %s1605 = scalar_lea.vmem [#allocation1], 33
        %1606 = vst [vmem:[%s1605] ss:$4 sm:$0xff] %v1513
        %s1607 = scalar_lea.vmem [#allocation1], 34
        %1608 = vst [vmem:[%s1607] ss:$4 sm:$0xff] %v1515
        %s1609 = scalar_lea.vmem [#allocation1], 35
        %1610 = vst [vmem:[%s1609] ss:$4 sm:$0xff] %v1517
        %v1611 = vld.sshfl [vmem:[#allocation1] sm:$0xff pattern:$0x73625140]
        %v1612 = vld.sshfl [vmem:[#allocation1 + $0x20] sm:$0xff pattern:$0x73625140]
        %1613 = vst [vmem:[#allocation1] ss:$4 sm:$0xff] %v1518
        %1614 = vst [vmem:[%s1597] ss:$4 sm:$0xff] %v1520
        %1615 = vst [vmem:[%s1599] ss:$4 sm:$0xff] %v1521
        %1616 = vst [vmem:[%s1601] ss:$4 sm:$0xff] %v1522
        %1617 = vst [vmem:[%s1603] ss:$4 sm:$0xff] %v1525
        %1618 = vst [vmem:[%s1605] ss:$4 sm:$0xff] %v1526
        %1619 = vst [vmem:[%s1607] ss:$4 sm:$0xff] %v1527
        %1620 = vst [vmem:[%s1609] ss:$4 sm:$0xff] %v1528
        %v1621 = vld.sshfl [vmem:[#allocation1] sm:$0xff pattern:$0x73625140]
        %v1622 = vld.sshfl [vmem:[#allocation1 + $0x20] sm:$0xff pattern:$0x73625140]
        %1623 = vst [vmem:[#allocation1] ss:$4 sm:$0xff] %v1529
        %1624 = vst [vmem:[%s1597] ss:$4 sm:$0xff] %v1530
        %1625 = vst [vmem:[%s1599] ss:$4 sm:$0xff] %v1533
        %1626 = vst [vmem:[%s1601] ss:$4 sm:$0xff] %v1534
        %1627 = vst [vmem:[%s1603] ss:$4 sm:$0xff] %v1535
        %1628 = vst [vmem:[%s1605] ss:$4 sm:$0xff] %v1536
        %1629 = vst [vmem:[%s1607] ss:$4 sm:$0xff] %v1537
        %1630 = vst [vmem:[%s1609] ss:$4 sm:$0xff] %v1538
        %v1631 = vld.sshfl [vmem:[#allocation1] sm:$0xff pattern:$0x73625140]
        %v1632 = vld.sshfl [vmem:[#allocation1 + $0x20] sm:$0xff pattern:$0x73625140]
        %1633 = vst [vmem:[#allocation1] ss:$4 sm:$0xff] %v1539
        %1634 = vst [vmem:[%s1597] ss:$4 sm:$0xff] %v1541
        %1635 = vst [vmem:[%s1599] ss:$4 sm:$0xff] %v1542
        %1636 = vst [vmem:[%s1601] ss:$4 sm:$0xff] %v1544
        %1637 = vst [vmem:[%s1603] ss:$4 sm:$0xff] %v1545
        %1638 = vst [vmem:[%s1605] ss:$4 sm:$0xff] %v1546
        %1639 = vst [vmem:[%s1607] ss:$4 sm:$0xff] %v1549
        %1640 = vst [vmem:[%s1609] ss:$4 sm:$0xff] %v1550
        %v1641 = vld.sshfl [vmem:[#allocation1] sm:$0xff pattern:$0x73625140]
        %v1642 = vld.sshfl [vmem:[#allocation1 + $0x20] sm:$0xff pattern:$0x73625140]
        %1643 = vst [vmem:[#allocation1] ss:$4 sm:$0xff] %v1551
        %1644 = vst [vmem:[%s1597] ss:$4 sm:$0xff] %v1552
        %1645 = vst [vmem:[%s1599] ss:$4 sm:$0xff] %v1553
        %1646 = vst [vmem:[%s1601] ss:$4 sm:$0xff] %v1554
        %1647 = vst [vmem:[%s1603] ss:$4 sm:$0xff] %v1557
        %1648 = vst [vmem:[%s1605] ss:$4 sm:$0xff] %v1558
        %1649 = vst [vmem:[%s1607] ss:$4 sm:$0xff] %v1559
        %1650 = vst [vmem:[%s1609] ss:$4 sm:$0xff] %v1560
        %v1651 = vld.sshfl [vmem:[#allocation1] sm:$0xff pattern:$0x73625140]
        %v1652 = vld.sshfl [vmem:[#allocation1 + $0x20] sm:$0xff pattern:$0x73625140]
        %1653 = vst [vmem:[#allocation1] ss:$4 sm:$0xff] %v1561
        %1654 = vst [vmem:[%s1597] ss:$4 sm:$0xff] %v1562
        %1655 = vst [vmem:[%s1599] ss:$4 sm:$0xff] %v1563
        %1656 = vst [vmem:[%s1601] ss:$4 sm:$0xff] %v1565
        %1657 = vst [vmem:[%s1603] ss:$4 sm:$0xff] %v1566
        %1658 = vst [vmem:[%s1605] ss:$4 sm:$0xff] %v1568
        %1659 = vst [vmem:[%s1607] ss:$4 sm:$0xff] %v1569
        %1660 = vst [vmem:[%s1609] ss:$4 sm:$0xff] %v1570
        %v1661 = vld.sshfl [vmem:[#allocation1] sm:$0xff pattern:$0x73625140]
        %v1662 = vld.sshfl [vmem:[#allocation1 + $0x20] sm:$0xff pattern:$0x73625140]
        %1663 = vst [vmem:[#allocation1] ss:$4 sm:$0xff] %v1573
        %1664 = vst [vmem:[%s1597] ss:$4 sm:$0xff] %v1574
        %1665 = vst [vmem:[%s1599] ss:$4 sm:$0xff] %v1575
        %1666 = vst [vmem:[%s1601] ss:$4 sm:$0xff] %v1576
        %1667 = vst [vmem:[%s1603] ss:$4 sm:$0xff] %v1577
        %1668 = vst [vmem:[%s1605] ss:$4 sm:$0xff] %v1578
        %v1669 = vld.sshfl [vmem:[#allocation1] sm:$0xff pattern:$0x73625140]
        %v1670 = vld.sshfl [vmem:[#allocation1 + $0x20] sm:$0xff pattern:$0x73625140]
        %1685 = vmatpush.msra.mxu0 %v1595
        %1686 = vmatpush.msra.mxu0 %v1594
        %1687 = vmatpush.msra.mxu0 %v1593
        %1688 = vmatpush.msra.mxu0 %v1592
        %1689 = vmatpush.msra.mxu0 %v1591
        %1690 = vmatpush.msra.mxu0 %v1590
        %1691 = vmatpush.msra.mxu0 %v1589
        %1692 = vmatpush.msra.mxu0 %v1588
        %1693 = vmatpush.msra.mxu0 %v1587
        %1694 = vmatpush.msra.mxu0 %v1586
        %1695 = vmatpush.msra.mxu0 %v1585
        %1696 = vmatpush.msra.mxu0 %v1584
        %1697 = vmatpush.msra.mxu0 %v1583
        %1698 = vmatpush.msra.mxu0 %v1582
        %1699 = vmatpush.msra.mxu0 %v1581
        %1700 = vmatpush.msra.mxu0 %v1580
        %1701 = vmatmul.f32.gmra.mxu0 %v1611
        %v1702 = vpop.f32.mrf.mxu0
        %v1703 = vadd.f32 0.0, %v1702
        %1704 = vmatmul.f32.gmra.mxu0 %v1612
        %v1705 = vpop.f32.mrf.mxu0
        %v1706 = vadd.f32 0.0, %v1705
        %1707 = vmatmul.f32.gmra.mxu0 %v1621
        %v1708 = vpop.f32.mrf.mxu0
        %v1709 = vadd.f32 0.0, %v1708
        %1710 = vmatmul.f32.gmra.mxu0 %v1622
        %v1711 = vpop.f32.mrf.mxu0
        %v1712 = vadd.f32 0.0, %v1711
        %1713 = vmatmul.f32.gmra.mxu0 %v1631
        %v1714 = vpop.f32.mrf.mxu0
        %v1715 = vadd.f32 0.0, %v1714
        %1716 = vmatmul.f32.gmra.mxu0 %v1632
        %v1717 = vpop.f32.mrf.mxu0
        %v1718 = vadd.f32 0.0, %v1717
        %1719 = vmatmul.f32.gmra.mxu0 %v1641
        %v1720 = vpop.f32.mrf.mxu0
        %v1721 = vadd.f32 0.0, %v1720
        %1722 = vmatmul.f32.gmra.mxu0 %v1642
        %v1723 = vpop.f32.mrf.mxu0
        %v1724 = vadd.f32 0.0, %v1723
        %1725 = vmatmul.f32.gmra.mxu0 %v1651
        %v1726 = vpop.f32.mrf.mxu0
        %v1727 = vadd.f32 0.0, %v1726
        %1728 = vmatmul.f32.gmra.mxu0 %v1652
        %v1729 = vpop.f32.mrf.mxu0
        %v1730 = vadd.f32 0.0, %v1729
        %1731 = vmatmul.f32.gmra.mxu0 %v1661
        %v1732 = vpop.f32.mrf.mxu0
        %v1733 = vadd.f32 0.0, %v1732
        %1734 = vmatmul.f32.gmra.mxu0 %v1662
        %v1735 = vpop.f32.mrf.mxu0
        %v1736 = vadd.f32 0.0, %v1735
        %1737 = vmatmul.f32.gmra.mxu0 %v1669
        %v1738 = vpop.f32.mrf.mxu0
        %v1739 = vadd.f32 0.0, %v1738
        %1740 = vmatmul.f32.gmra.mxu0 %v1670
        %v1741 = vpop.f32.mrf.mxu0
        %v1742 = vadd.f32 0.0, %v1741
        %1743 = vdwg.mxu0
        %v1744 = vadd.f32 %v1486, %v1703
        %v1745 = vadd.f32 %v1487, %v1706
        %v1746 = vadd.f32 %v1488, %v1709
        %v1747 = vadd.f32 %v1489, %v1712
        %v1748 = vadd.f32 %v1490, %v1715
        %v1749 = vadd.f32 %v1491, %v1718
        %v1750 = vadd.f32 %v1492, %v1721
        %v1751 = vadd.f32 %v1493, %v1724
        %v1752 = vadd.f32 %v1494, %v1727
        %v1753 = vadd.f32 %v1495, %v1730
        %v1754 = vadd.f32 %v1496, %v1733
        %v1755 = vadd.f32 %v1497, %v1736
        %v1756 = vadd.f32 %v1498, %v1739
        %v1757 = vadd.f32 %v1499, %v1742
        %v1761 = vrot.slane %v279, 2
        %v1762 = vrot.slane %v279, 4
        %v1763 = vrot.slane %v279, 6
        %v1764 = vrot.slane %v280, 2
        %v1765 = vrot.slane %v280, 4
        %v1766 = vrot.slane %v280, 6
        %s1767 = scalar_lea.vmem %s1, 768
        %v1768 = vld [vmem:[%s1767] sm:$0xff]
        %v1769 = vld [vmem:[%s1767 + $0x8] sm:$0xff]
        %v1770 = vld [vmem:[%s1767 + $0x10] sm:$0xff]
        %v1771 = vld [vmem:[%s1767 + $0x18] sm:$0xff]
        %v1772 = vld [vmem:[%s1767 + $0x20] sm:$0xff]
        %v1773 = vld [vmem:[%s1767 + $0x28] sm:$0xff]
        %v1774 = vld [vmem:[%s1767 + $0x30] sm:$0xff]
        %v1775 = vld [vmem:[%s1767 + $0x38] sm:$0xff]
        %v1776 = vld [vmem:[%s1767 + $0x40] sm:$0xff]
        %v1777 = vld [vmem:[%s1767 + $0x48] sm:$0xff]
        %v1778 = vld [vmem:[%s1767 + $0x50] sm:$0xff]
        %v1779 = vld [vmem:[%s1767 + $0x58] sm:$0xff]
        %v1780 = vld [vmem:[%s1767 + $0x60] sm:$0xff]
        %v1781 = vld [vmem:[%s1767 + $0x68] sm:$0xff]
        %v1782 = vld [vmem:[%s1767 + $0x70] sm:$0xff]
        %v1783 = vld [vmem:[%s1767 + $0x78] sm:$0xff]
        %1784 = vst [vmem:[#allocation1] ss:$4 sm:$0xff] %v264
        %s1785 = scalar_lea.vmem [#allocation1], 1
        %1786 = vst [vmem:[%s1785] ss:$4 sm:$0xff] %v312
        %s1787 = scalar_lea.vmem [#allocation1], 2
        %1788 = vst [vmem:[%s1787] ss:$4 sm:$0xff] %v313
        %s1789 = scalar_lea.vmem [#allocation1], 3
        %1790 = vst [vmem:[%s1789] ss:$4 sm:$0xff] %v314
        %s1791 = scalar_lea.vmem [#allocation1], 32
        %1792 = vst [vmem:[%s1791] ss:$4 sm:$0xff] %v265
        %s1793 = scalar_lea.vmem [#allocation1], 33
        %1794 = vst [vmem:[%s1793] ss:$4 sm:$0xff] %v315
        %s1795 = scalar_lea.vmem [#allocation1], 34
        %1796 = vst [vmem:[%s1795] ss:$4 sm:$0xff] %v316
        %s1797 = scalar_lea.vmem [#allocation1], 35
        %1798 = vst [vmem:[%s1797] ss:$4 sm:$0xff] %v317
        %v1799 = vld.sshfl [vmem:[#allocation1] sm:$0xff pattern:$0x73625140]
        %v1800 = vld.sshfl [vmem:[#allocation1 + $0x20] sm:$0xff pattern:$0x73625140]
        %1801 = vst [vmem:[#allocation1] ss:$4 sm:$0xff] %v266
        %1802 = vst [vmem:[%s1785] ss:$4 sm:$0xff] %v267
        %1803 = vst [vmem:[%s1787] ss:$4 sm:$0xff] %v318
        %1804 = vst [vmem:[%s1789] ss:$4 sm:$0xff] %v319
        %1805 = vst [vmem:[%s1791] ss:$4 sm:$0xff] %v320
        %1806 = vst [vmem:[%s1793] ss:$4 sm:$0xff] %v268
        %1807 = vst [vmem:[%s1795] ss:$4 sm:$0xff] %v321
        %1808 = vst [vmem:[%s1797] ss:$4 sm:$0xff] %v322
        %v1809 = vld.sshfl [vmem:[#allocation1] sm:$0xff pattern:$0x73625140]
        %v1810 = vld.sshfl [vmem:[#allocation1 + $0x20] sm:$0xff pattern:$0x73625140]
        %1811 = vst [vmem:[#allocation1] ss:$4 sm:$0xff] %v323
        %1812 = vst [vmem:[%s1785] ss:$4 sm:$0xff] %v269
        %1813 = vst [vmem:[%s1787] ss:$4 sm:$0xff] %v270
        %1814 = vst [vmem:[%s1789] ss:$4 sm:$0xff] %v324
        %1815 = vst [vmem:[%s1791] ss:$4 sm:$0xff] %v325
        %1816 = vst [vmem:[%s1793] ss:$4 sm:$0xff] %v326
        %1817 = vst [vmem:[%s1795] ss:$4 sm:$0xff] %v271
        %1818 = vst [vmem:[%s1797] ss:$4 sm:$0xff] %v327
        %v1819 = vld.sshfl [vmem:[#allocation1] sm:$0xff pattern:$0x73625140]
        %v1820 = vld.sshfl [vmem:[#allocation1 + $0x20] sm:$0xff pattern:$0x73625140]
        %1821 = vst [vmem:[#allocation1] ss:$4 sm:$0xff] %v328
        %1822 = vst [vmem:[%s1785] ss:$4 sm:$0xff] %v329
        %1823 = vst [vmem:[%s1787] ss:$4 sm:$0xff] %v272
        %1824 = vst [vmem:[%s1789] ss:$4 sm:$0xff] %v273
        %1825 = vst [vmem:[%s1791] ss:$4 sm:$0xff] %v330
        %1826 = vst [vmem:[%s1793] ss:$4 sm:$0xff] %v331
        %1827 = vst [vmem:[%s1795] ss:$4 sm:$0xff] %v332
        %1828 = vst [vmem:[%s1797] ss:$4 sm:$0xff] %v274
        %v1829 = vld.sshfl [vmem:[#allocation1] sm:$0xff pattern:$0x73625140]
        %v1830 = vld.sshfl [vmem:[#allocation1 + $0x20] sm:$0xff pattern:$0x73625140]
        %1831 = vst [vmem:[#allocation1] ss:$4 sm:$0xff] %v333
        %1832 = vst [vmem:[%s1785] ss:$4 sm:$0xff] %v334
        %1833 = vst [vmem:[%s1787] ss:$4 sm:$0xff] %v335
        %1834 = vst [vmem:[%s1789] ss:$4 sm:$0xff] %v275
        %1835 = vst [vmem:[%s1791] ss:$4 sm:$0xff] %v276
        %1836 = vst [vmem:[%s1793] ss:$4 sm:$0xff] %v1107
        %1837 = vst [vmem:[%s1795] ss:$4 sm:$0xff] %v1108
        %1838 = vst [vmem:[%s1797] ss:$4 sm:$0xff] %v1109
        %v1839 = vld.sshfl [vmem:[#allocation1] sm:$0xff pattern:$0x73625140]
        %v1840 = vld.sshfl [vmem:[#allocation1 + $0x20] sm:$0xff pattern:$0x73625140]
        %1841 = vst [vmem:[#allocation1] ss:$4 sm:$0xff] %v277
        %1842 = vst [vmem:[%s1785] ss:$4 sm:$0xff] %v1110
        %1843 = vst [vmem:[%s1787] ss:$4 sm:$0xff] %v1111
        %1844 = vst [vmem:[%s1789] ss:$4 sm:$0xff] %v1112
        %1845 = vst [vmem:[%s1791] ss:$4 sm:$0xff] %v278
        %1846 = vst [vmem:[%s1793] ss:$4 sm:$0xff] %v279
        %1847 = vst [vmem:[%s1795] ss:$4 sm:$0xff] %v1761
        %1848 = vst [vmem:[%s1797] ss:$4 sm:$0xff] %v1762
        %v1849 = vld.sshfl [vmem:[#allocation1] sm:$0xff pattern:$0x73625140]
        %v1850 = vld.sshfl [vmem:[#allocation1 + $0x20] sm:$0xff pattern:$0x73625140]
        %1851 = vst [vmem:[#allocation1] ss:$4 sm:$0xff] %v1763
        %1852 = vst [vmem:[%s1785] ss:$4 sm:$0xff] %v280
        %1853 = vst [vmem:[%s1787] ss:$4 sm:$0xff] %v1764
        %1854 = vst [vmem:[%s1789] ss:$4 sm:$0xff] %v1765
        %1855 = vst [vmem:[%s1791] ss:$4 sm:$0xff] %v1766
        %1856 = vst [vmem:[%s1793] ss:$4 sm:$0xff] %v281
        %v1857 = vld.sshfl [vmem:[#allocation1] sm:$0xff pattern:$0x73625140]
        %v1858 = vld.sshfl [vmem:[#allocation1 + $0x20] sm:$0xff pattern:$0x73625140]
        %1873 = vmatpush.msra.mxu0 %v1783
        %1874 = vmatpush.msra.mxu0 %v1782
        %1875 = vmatpush.msra.mxu0 %v1781
        %1876 = vmatpush.msra.mxu0 %v1780
        %1877 = vmatpush.msra.mxu0 %v1779
        %1878 = vmatpush.msra.mxu0 %v1778
        %1879 = vmatpush.msra.mxu0 %v1777
        %1880 = vmatpush.msra.mxu0 %v1776
        %1881 = vmatpush.msra.mxu0 %v1775
        %1882 = vmatpush.msra.mxu0 %v1774
        %1883 = vmatpush.msra.mxu0 %v1773
        %1884 = vmatpush.msra.mxu0 %v1772
        %1885 = vmatpush.msra.mxu0 %v1771
        %1886 = vmatpush.msra.mxu0 %v1770
        %1887 = vmatpush.msra.mxu0 %v1769
        %1888 = vmatpush.msra.mxu0 %v1768
        %1889 = vmatmul.f32.gmra.mxu0 %v1799
        %v1890 = vpop.f32.mrf.mxu0
        %v1891 = vadd.f32 0.0, %v1890
        %1892 = vmatmul.f32.gmra.mxu0 %v1800
        %v1893 = vpop.f32.mrf.mxu0
        %v1894 = vadd.f32 0.0, %v1893
        %1895 = vmatmul.f32.gmra.mxu0 %v1809
        %v1896 = vpop.f32.mrf.mxu0
        %v1897 = vadd.f32 0.0, %v1896
        %1898 = vmatmul.f32.gmra.mxu0 %v1810
        %v1899 = vpop.f32.mrf.mxu0
        %v1900 = vadd.f32 0.0, %v1899
        %1901 = vmatmul.f32.gmra.mxu0 %v1819
        %v1902 = vpop.f32.mrf.mxu0
        %v1903 = vadd.f32 0.0, %v1902
        %1904 = vmatmul.f32.gmra.mxu0 %v1820
        %v1905 = vpop.f32.mrf.mxu0
        %v1906 = vadd.f32 0.0, %v1905
        %1907 = vmatmul.f32.gmra.mxu0 %v1829
        %v1908 = vpop.f32.mrf.mxu0
        %v1909 = vadd.f32 0.0, %v1908
        %1910 = vmatmul.f32.gmra.mxu0 %v1830
        %v1911 = vpop.f32.mrf.mxu0
        %v1912 = vadd.f32 0.0, %v1911
        %1913 = vmatmul.f32.gmra.mxu0 %v1839
        %v1914 = vpop.f32.mrf.mxu0
        %v1915 = vadd.f32 0.0, %v1914
        %1916 = vmatmul.f32.gmra.mxu0 %v1840
        %v1917 = vpop.f32.mrf.mxu0
        %v1918 = vadd.f32 0.0, %v1917
        %1919 = vmatmul.f32.gmra.mxu0 %v1849
        %v1920 = vpop.f32.mrf.mxu0
        %v1921 = vadd.f32 0.0, %v1920
        %1922 = vmatmul.f32.gmra.mxu0 %v1850
        %v1923 = vpop.f32.mrf.mxu0
        %v1924 = vadd.f32 0.0, %v1923
        %1925 = vmatmul.f32.gmra.mxu0 %v1857
        %v1926 = vpop.f32.mrf.mxu0
        %v1927 = vadd.f32 0.0, %v1926
        %1928 = vmatmul.f32.gmra.mxu0 %v1858
        %v1929 = vpop.f32.mrf.mxu0
        %v1930 = vadd.f32 0.0, %v1929
        %1931 = vdwg.mxu0
        %v1932 = vadd.f32 %v1744, %v1891
        %v1933 = vadd.f32 %v1745, %v1894
        %v1934 = vadd.f32 %v1746, %v1897
        %v1935 = vadd.f32 %v1747, %v1900
        %v1936 = vadd.f32 %v1748, %v1903
        %v1937 = vadd.f32 %v1749, %v1906
        %v1938 = vadd.f32 %v1750, %v1909
        %v1939 = vadd.f32 %v1751, %v1912
        %v1940 = vadd.f32 %v1752, %v1915
        %v1941 = vadd.f32 %v1753, %v1918
        %v1942 = vadd.f32 %v1754, %v1921
        %v1943 = vadd.f32 %v1755, %v1924
        %v1944 = vadd.f32 %v1756, %v1927
        %v1945 = vadd.f32 %v1757, %v1930
        %v1946 = vrot.slane %v281, 2
        %v1947 = vrot.slane %v279, 7
        %v1948 = vrot.slane %v1947, 2
        %v1949 = vrot.slane %v1761, 7
        %v1950 = vsel %vm364, %v1948, %v1949
        %v1951 = vrot.slane %v1949, 2
        %v1952 = vrot.slane %v1762, 7
        %v1953 = vsel %vm364, %v1951, %v1952
        %v1954 = vrot.slane %v1952, 2
        %v1955 = vrot.slane %v1763, 7
        %v1956 = vsel %vm364, %v1954, %v1955
        %v1957 = vrot.slane %v1955, 2
        %v1958 = vrot.slane %v280, 7
        %v1959 = vsel %vm364, %v1957, %v1958
        %v1960 = vrot.slane %v1958, 2
        %v1961 = vrot.slane %v1764, 7
        %v1962 = vsel %vm364, %v1960, %v1961
        %v1963 = vrot.slane %v1961, 2
        %v1964 = vrot.slane %v1765, 7
        %v1965 = vsel %vm364, %v1963, %v1964
        %v1966 = vrot.slane %v1964, 2
        %v1967 = vrot.slane %v1766, 7
        %v1968 = vsel %vm364, %v1966, %v1967
        %v1969 = vrot.slane %v1967, 2
        %v1970 = vrot.slane %v281, 7
        %v1971 = vsel %vm364, %v1969, %v1970
        %v1972 = vrot.slane %v1970, 2
        %v1973 = vrot.slane %v1946, 7
        %v1974 = vsel %vm364, %v1972, %v1973
        %s1975 = scalar_lea.vmem %s1, 896
        %v1976 = vld [vmem:[%s1975] sm:$0xff]
        %v1977 = vld [vmem:[%s1975 + $0x8] sm:$0xff]
        %v1978 = vld [vmem:[%s1975 + $0x10] sm:$0xff]
        %v1979 = vld [vmem:[%s1975 + $0x18] sm:$0xff]
        %v1980 = vld [vmem:[%s1975 + $0x20] sm:$0xff]
        %v1981 = vld [vmem:[%s1975 + $0x28] sm:$0xff]
        %v1982 = vld [vmem:[%s1975 + $0x30] sm:$0xff]
        %v1983 = vld [vmem:[%s1975 + $0x38] sm:$0xff]
        %v1984 = vld [vmem:[%s1975 + $0x40] sm:$0xff]
        %v1985 = vld [vmem:[%s1975 + $0x48] sm:$0xff]
        %v1986 = vld [vmem:[%s1975 + $0x50] sm:$0xff]
        %v1987 = vld [vmem:[%s1975 + $0x58] sm:$0xff]
        %v1988 = vld [vmem:[%s1975 + $0x60] sm:$0xff]
        %v1989 = vld [vmem:[%s1975 + $0x68] sm:$0xff]
        %v1990 = vld [vmem:[%s1975 + $0x70] sm:$0xff]
        %v1991 = vld [vmem:[%s1975 + $0x78] sm:$0xff]
        %1992 = vst [vmem:[#allocation1] ss:$4 sm:$0xff] %v424
        %s1993 = scalar_lea.vmem [#allocation1], 1
        %1994 = vst [vmem:[%s1993] ss:$4 sm:$0xff] %v427
        %s1995 = scalar_lea.vmem [#allocation1], 2
        %1996 = vst [vmem:[%s1995] ss:$4 sm:$0xff] %v430
        %s1997 = scalar_lea.vmem [#allocation1], 3
        %1998 = vst [vmem:[%s1997] ss:$4 sm:$0xff] %v433
        %s1999 = scalar_lea.vmem [#allocation1], 32
        %2000 = vst [vmem:[%s1999] ss:$4 sm:$0xff] %v436
        %s2001 = scalar_lea.vmem [#allocation1], 33
        %2002 = vst [vmem:[%s2001] ss:$4 sm:$0xff] %v439
        %s2003 = scalar_lea.vmem [#allocation1], 34
        %2004 = vst [vmem:[%s2003] ss:$4 sm:$0xff] %v442
        %s2005 = scalar_lea.vmem [#allocation1], 35
        %2006 = vst [vmem:[%s2005] ss:$4 sm:$0xff] %v445
        %v2007 = vld.sshfl [vmem:[#allocation1] sm:$0xff pattern:$0x73625140]
        %v2008 = vld.sshfl [vmem:[#allocation1 + $0x20] sm:$0xff pattern:$0x73625140]
        %2009 = vst [vmem:[#allocation1] ss:$4 sm:$0xff] %v448
        %2010 = vst [vmem:[%s1993] ss:$4 sm:$0xff] %v452
        %2011 = vst [vmem:[%s1995] ss:$4 sm:$0xff] %v455
        %2012 = vst [vmem:[%s1997] ss:$4 sm:$0xff] %v458
        %2013 = vst [vmem:[%s1999] ss:$4 sm:$0xff] %v461
        %2014 = vst [vmem:[%s2001] ss:$4 sm:$0xff] %v464
        %2015 = vst [vmem:[%s2003] ss:$4 sm:$0xff] %v467
        %2016 = vst [vmem:[%s2005] ss:$4 sm:$0xff] %v470
        %v2017 = vld.sshfl [vmem:[#allocation1] sm:$0xff pattern:$0x73625140]
        %v2018 = vld.sshfl [vmem:[#allocation1 + $0x20] sm:$0xff pattern:$0x73625140]
        %2019 = vst [vmem:[#allocation1] ss:$4 sm:$0xff] %v473
        %2020 = vst [vmem:[%s1993] ss:$4 sm:$0xff] %v476
        %2021 = vst [vmem:[%s1995] ss:$4 sm:$0xff] %v480
        %2022 = vst [vmem:[%s1997] ss:$4 sm:$0xff] %v483
        %2023 = vst [vmem:[%s1999] ss:$4 sm:$0xff] %v486
        %2024 = vst [vmem:[%s2001] ss:$4 sm:$0xff] %v489
        %2025 = vst [vmem:[%s2003] ss:$4 sm:$0xff] %v492
        %2026 = vst [vmem:[%s2005] ss:$4 sm:$0xff] %v495
        %v2027 = vld.sshfl [vmem:[#allocation1] sm:$0xff pattern:$0x73625140]
        %v2028 = vld.sshfl [vmem:[#allocation1 + $0x20] sm:$0xff pattern:$0x73625140]
        %2029 = vst [vmem:[#allocation1] ss:$4 sm:$0xff] %v498
        %2030 = vst [vmem:[%s1993] ss:$4 sm:$0xff] %v501
        %2031 = vst [vmem:[%s1995] ss:$4 sm:$0xff] %v504
        %2032 = vst [vmem:[%s1997] ss:$4 sm:$0xff] %v508
        %2033 = vst [vmem:[%s1999] ss:$4 sm:$0xff] %v511
        %2034 = vst [vmem:[%s2001] ss:$4 sm:$0xff] %v514
        %2035 = vst [vmem:[%s2003] ss:$4 sm:$0xff] %v517
        %2036 = vst [vmem:[%s2005] ss:$4 sm:$0xff] %v520
        %v2037 = vld.sshfl [vmem:[#allocation1] sm:$0xff pattern:$0x73625140]
        %v2038 = vld.sshfl [vmem:[#allocation1 + $0x20] sm:$0xff pattern:$0x73625140]
        %2039 = vst [vmem:[#allocation1] ss:$4 sm:$0xff] %v523
        %2040 = vst [vmem:[%s1993] ss:$4 sm:$0xff] %v526
        %2041 = vst [vmem:[%s1995] ss:$4 sm:$0xff] %v529
        %2042 = vst [vmem:[%s1997] ss:$4 sm:$0xff] %v532
        %2043 = vst [vmem:[%s1999] ss:$4 sm:$0xff] %v1296
        %2044 = vst [vmem:[%s2001] ss:$4 sm:$0xff] %v1299
        %2045 = vst [vmem:[%s2003] ss:$4 sm:$0xff] %v1302
        %2046 = vst [vmem:[%s2005] ss:$4 sm:$0xff] %v1305
        %v2047 = vld.sshfl [vmem:[#allocation1] sm:$0xff pattern:$0x73625140]
        %v2048 = vld.sshfl [vmem:[#allocation1 + $0x20] sm:$0xff pattern:$0x73625140]
        %2049 = vst [vmem:[#allocation1] ss:$4 sm:$0xff] %v1308
        %2050 = vst [vmem:[%s1993] ss:$4 sm:$0xff] %v1311
        %2051 = vst [vmem:[%s1995] ss:$4 sm:$0xff] %v1314
        %2052 = vst [vmem:[%s1997] ss:$4 sm:$0xff] %v1317
        %2053 = vst [vmem:[%s1999] ss:$4 sm:$0xff] %v1320
        %2054 = vst [vmem:[%s2001] ss:$4 sm:$0xff] %v1950
        %2055 = vst [vmem:[%s2003] ss:$4 sm:$0xff] %v1953
        %2056 = vst [vmem:[%s2005] ss:$4 sm:$0xff] %v1956
        %v2057 = vld.sshfl [vmem:[#allocation1] sm:$0xff pattern:$0x73625140]
        %v2058 = vld.sshfl [vmem:[#allocation1 + $0x20] sm:$0xff pattern:$0x73625140]
        %2059 = vst [vmem:[#allocation1] ss:$4 sm:$0xff] %v1959
        %2060 = vst [vmem:[%s1993] ss:$4 sm:$0xff] %v1962
        %2061 = vst [vmem:[%s1995] ss:$4 sm:$0xff] %v1965
        %2062 = vst [vmem:[%s1997] ss:$4 sm:$0xff] %v1968
        %2063 = vst [vmem:[%s1999] ss:$4 sm:$0xff] %v1971
        %2064 = vst [vmem:[%s2001] ss:$4 sm:$0xff] %v1974
        %v2065 = vld.sshfl [vmem:[#allocation1] sm:$0xff pattern:$0x73625140]
        %v2066 = vld.sshfl [vmem:[#allocation1 + $0x20] sm:$0xff pattern:$0x73625140]
        %2081 = vmatpush.msra.mxu0 %v1991
        %2082 = vmatpush.msra.mxu0 %v1990
        %2083 = vmatpush.msra.mxu0 %v1989
        %2084 = vmatpush.msra.mxu0 %v1988
        %2085 = vmatpush.msra.mxu0 %v1987
        %2086 = vmatpush.msra.mxu0 %v1986
        %2087 = vmatpush.msra.mxu0 %v1985
        %2088 = vmatpush.msra.mxu0 %v1984
        %2089 = vmatpush.msra.mxu0 %v1983
        %2090 = vmatpush.msra.mxu0 %v1982
        %2091 = vmatpush.msra.mxu0 %v1981
        %2092 = vmatpush.msra.mxu0 %v1980
        %2093 = vmatpush.msra.mxu0 %v1979
        %2094 = vmatpush.msra.mxu0 %v1978
        %2095 = vmatpush.msra.mxu0 %v1977
        %2096 = vmatpush.msra.mxu0 %v1976
        %2097 = vmatmul.f32.gmra.mxu0 %v2007
        %v2098 = vpop.f32.mrf.mxu0
        %v2099 = vadd.f32 0.0, %v2098
        %2100 = vmatmul.f32.gmra.mxu0 %v2008
        %v2101 = vpop.f32.mrf.mxu0
        %v2102 = vadd.f32 0.0, %v2101
        %2103 = vmatmul.f32.gmra.mxu0 %v2017
        %v2104 = vpop.f32.mrf.mxu0
        %v2105 = vadd.f32 0.0, %v2104
        %2106 = vmatmul.f32.gmra.mxu0 %v2018
        %v2107 = vpop.f32.mrf.mxu0
        %v2108 = vadd.f32 0.0, %v2107
        %2109 = vmatmul.f32.gmra.mxu0 %v2027
        %v2110 = vpop.f32.mrf.mxu0
        %v2111 = vadd.f32 0.0, %v2110
        %2112 = vmatmul.f32.gmra.mxu0 %v2028
        %v2113 = vpop.f32.mrf.mxu0
        %v2114 = vadd.f32 0.0, %v2113
        %2115 = vmatmul.f32.gmra.mxu0 %v2037
        %v2116 = vpop.f32.mrf.mxu0
        %v2117 = vadd.f32 0.0, %v2116
        %2118 = vmatmul.f32.gmra.mxu0 %v2038
        %v2119 = vpop.f32.mrf.mxu0
        %v2120 = vadd.f32 0.0, %v2119
        %2121 = vmatmul.f32.gmra.mxu0 %v2047
        %v2122 = vpop.f32.mrf.mxu0
        %v2123 = vadd.f32 0.0, %v2122
        %2124 = vmatmul.f32.gmra.mxu0 %v2048
        %v2125 = vpop.f32.mrf.mxu0
        %v2126 = vadd.f32 0.0, %v2125
        %2127 = vmatmul.f32.gmra.mxu0 %v2057
        %v2128 = vpop.f32.mrf.mxu0
        %v2129 = vadd.f32 0.0, %v2128
        %2130 = vmatmul.f32.gmra.mxu0 %v2058
        %v2131 = vpop.f32.mrf.mxu0
        %v2132 = vadd.f32 0.0, %v2131
        %2133 = vmatmul.f32.gmra.mxu0 %v2065
        %v2134 = vpop.f32.mrf.mxu0
        %v2135 = vadd.f32 0.0, %v2134
        %2136 = vmatmul.f32.gmra.mxu0 %v2066
        %v2137 = vpop.f32.mrf.mxu0
        %v2138 = vadd.f32 0.0, %v2137
        %2139 = vdwg.mxu0
        %v2140 = vadd.f32 %v1932, %v2099
        %v2141 = vadd.f32 %v1933, %v2102
        %v2142 = vadd.f32 %v1934, %v2105
        %v2143 = vadd.f32 %v1935, %v2108
        %v2144 = vadd.f32 %v1936, %v2111
        %v2145 = vadd.f32 %v1937, %v2114
        %v2146 = vadd.f32 %v1938, %v2117
        %v2147 = vadd.f32 %v1939, %v2120
        %v2148 = vadd.f32 %v1940, %v2123
        %v2149 = vadd.f32 %v1941, %v2126
        %v2150 = vadd.f32 %v1942, %v2129
        %v2151 = vadd.f32 %v1943, %v2132
        %v2152 = vadd.f32 %v1944, %v2135
        %v2153 = vadd.f32 %v1945, %v2138
        %2154 = vst.sshfl [vmem:[#allocation1] sm:$0xff pattern:$0x73625140] %v264
        %2155 = vst.sshfl [vmem:[#allocation1 + $0x20] sm:$0xff pattern:$0x73625140] %v265
        %s2156 = scalar_lea.vmem [#allocation1], 1
        %v2157 = vld [vmem:[%s2156] ss:$4 sm:$0xff]
        %s2158 = scalar_lea.vmem [#allocation1], 2
        %v2159 = vld [vmem:[%s2158] ss:$4 sm:$0xff]
        %s2160 = scalar_lea.vmem [#allocation1], 3
        %v2161 = vld [vmem:[%s2160] ss:$4 sm:$0xff]
        %s2162 = scalar_lea.vmem [#allocation1], 32
        %v2163 = vld [vmem:[%s2162] ss:$4 sm:$0xff]
        %s2164 = scalar_lea.vmem [#allocation1], 33
        %v2165 = vld [vmem:[%s2164] ss:$4 sm:$0xff]
        %s2166 = scalar_lea.vmem [#allocation1], 34
        %v2167 = vld [vmem:[%s2166] ss:$4 sm:$0xff]
        %s2168 = scalar_lea.vmem [#allocation1], 35
        %v2169 = vld [vmem:[%s2168] ss:$4 sm:$0xff]
        %2170 = vst.sshfl [vmem:[#allocation1] sm:$0xff pattern:$0x73625140] %v266
        %v2171 = vld [vmem:[#allocation1] ss:$4 sm:$0xff]
        %v2172 = vld [vmem:[%s2156] ss:$4 sm:$0xff]
        %2173 = vst.sshfl [vmem:[#allocation1 + $0x20] sm:$0xff pattern:$0x73625140] %v267
        %v2174 = vld [vmem:[%s2164] ss:$4 sm:$0xff]
        %v2175 = vld [vmem:[%s2166] ss:$4 sm:$0xff]
        %v2176 = vld [vmem:[%s2168] ss:$4 sm:$0xff]
        %2177 = vst.sshfl [vmem:[#allocation1] sm:$0xff pattern:$0x73625140] %v268
        %2178 = vst.sshfl [vmem:[#allocation1 + $0x20] sm:$0xff pattern:$0x73625140] %v269
        %v2179 = vld [vmem:[#allocation1] ss:$4 sm:$0xff]
        %v2180 = vld [vmem:[%s2156] ss:$4 sm:$0xff]
        %v2181 = vld [vmem:[%s2158] ss:$4 sm:$0xff]
        %v2182 = vld [vmem:[%s2160] ss:$4 sm:$0xff]
        %v2183 = vld [vmem:[%s2162] ss:$4 sm:$0xff]
        %v2184 = vld [vmem:[%s2164] ss:$4 sm:$0xff]
        %2185 = vst.sshfl [vmem:[#allocation1] sm:$0xff pattern:$0x73625140] %v270
        %2186 = vst.sshfl [vmem:[#allocation1 + $0x20] sm:$0xff pattern:$0x73625140] %v271
        %v2187 = vld [vmem:[%s2156] ss:$4 sm:$0xff]
        %v2188 = vld [vmem:[%s2158] ss:$4 sm:$0xff]
        %v2189 = vld [vmem:[%s2160] ss:$4 sm:$0xff]
        %v2190 = vld [vmem:[%s2162] ss:$4 sm:$0xff]
        %v2191 = vld [vmem:[%s2164] ss:$4 sm:$0xff]
        %v2192 = vld [vmem:[%s2166] ss:$4 sm:$0xff]
        %v2193 = vld [vmem:[%s2168] ss:$4 sm:$0xff]
        %2194 = vst.sshfl [vmem:[#allocation1] sm:$0xff pattern:$0x73625140] %v272
        %v2195 = vld [vmem:[#allocation1] ss:$4 sm:$0xff]
        %v2196 = vld [vmem:[%s2156] ss:$4 sm:$0xff]
        %2197 = vst.sshfl [vmem:[#allocation1 + $0x20] sm:$0xff pattern:$0x73625140] %v273
        %v2198 = vld [vmem:[%s2164] ss:$4 sm:$0xff]
        %v2199 = vld [vmem:[%s2166] ss:$4 sm:$0xff]
        %v2200 = vld [vmem:[%s2168] ss:$4 sm:$0xff]
        %2201 = vst.sshfl [vmem:[#allocation1] sm:$0xff pattern:$0x73625140] %v274
        %2202 = vst.sshfl [vmem:[#allocation1 + $0x20] sm:$0xff pattern:$0x73625140] %v275
        %v2203 = vld [vmem:[#allocation1] ss:$4 sm:$0xff]
        %v2204 = vld [vmem:[%s2156] ss:$4 sm:$0xff]
        %v2205 = vld [vmem:[%s2158] ss:$4 sm:$0xff]
        %v2206 = vld [vmem:[%s2160] ss:$4 sm:$0xff]
        %v2207 = vld [vmem:[%s2162] ss:$4 sm:$0xff]
        %v2208 = vld [vmem:[%s2164] ss:$4 sm:$0xff]
        %2209 = vst.sshfl [vmem:[#allocation1] sm:$0xff pattern:$0x73625140] %v276
        %2210 = vst.sshfl [vmem:[#allocation1 + $0x20] sm:$0xff pattern:$0x73625140] %v277
        %v2211 = vld [vmem:[%s2156] ss:$4 sm:$0xff]
        %v2212 = vld [vmem:[%s2158] ss:$4 sm:$0xff]
        %v2213 = vld [vmem:[%s2160] ss:$4 sm:$0xff]
        %v2214 = vld [vmem:[%s2162] ss:$4 sm:$0xff]
        %v2215 = vld [vmem:[%s2164] ss:$4 sm:$0xff]
        %v2216 = vld [vmem:[%s2166] ss:$4 sm:$0xff]
        %v2217 = vld [vmem:[%s2168] ss:$4 sm:$0xff]
        %2218 = vst.sshfl [vmem:[#allocation1] sm:$0xff pattern:$0x73625140] %v278
        %v2219 = vld [vmem:[#allocation1] ss:$4 sm:$0xff]
        %v2220 = vld [vmem:[%s2156] ss:$4 sm:$0xff]
        %2221 = vst.sshfl [vmem:[#allocation1 + $0x20] sm:$0xff pattern:$0x73625140] %v279
        %v2222 = vld [vmem:[%s2164] ss:$4 sm:$0xff]
        %v2223 = vld [vmem:[%s2166] ss:$4 sm:$0xff]
        %v2224 = vld [vmem:[%s2168] ss:$4 sm:$0xff]
        %2225 = vst.sshfl [vmem:[#allocation1] sm:$0xff pattern:$0x73625140] %v280
        %2226 = vst.sshfl [vmem:[#allocation1 + $0x20] sm:$0xff pattern:$0x73625140] %v281
        %v2227 = vld [vmem:[#allocation1] ss:$4 sm:$0xff]
        %v2228 = vld [vmem:[%s2156] ss:$4 sm:$0xff]
        %v2229 = vld [vmem:[%s2158] ss:$4 sm:$0xff]
        %v2230 = vld [vmem:[%s2160] ss:$4 sm:$0xff]
        %v2231 = vld [vmem:[%s2162] ss:$4 sm:$0xff]
        %v2232 = vld [vmem:[%s2164] ss:$4 sm:$0xff]
        %s2233 = scalar_lea.vmem %s1, 1024
        %v2234 = vld [vmem:[%s2233] sm:$0xff]
        %v2235 = vld [vmem:[%s2233 + $0x8] sm:$0xff]
        %v2236 = vld [vmem:[%s2233 + $0x10] sm:$0xff]
        %v2237 = vld [vmem:[%s2233 + $0x18] sm:$0xff]
        %v2238 = vld [vmem:[%s2233 + $0x20] sm:$0xff]
        %v2239 = vld [vmem:[%s2233 + $0x28] sm:$0xff]
        %v2240 = vld [vmem:[%s2233 + $0x30] sm:$0xff]
        %v2241 = vld [vmem:[%s2233 + $0x38] sm:$0xff]
        %v2242 = vld [vmem:[%s2233 + $0x40] sm:$0xff]
        %v2243 = vld [vmem:[%s2233 + $0x48] sm:$0xff]
        %v2244 = vld [vmem:[%s2233 + $0x50] sm:$0xff]
        %v2245 = vld [vmem:[%s2233 + $0x58] sm:$0xff]
        %v2246 = vld [vmem:[%s2233 + $0x60] sm:$0xff]
        %v2247 = vld [vmem:[%s2233 + $0x68] sm:$0xff]
        %v2248 = vld [vmem:[%s2233 + $0x70] sm:$0xff]
        %v2249 = vld [vmem:[%s2233 + $0x78] sm:$0xff]
        %2250 = vst [vmem:[#allocation1] ss:$4 sm:$0xff] %v2157
        %s2251 = scalar_lea.vmem [#allocation1], 1
        %2252 = vst [vmem:[%s2251] ss:$4 sm:$0xff] %v2159
        %s2253 = scalar_lea.vmem [#allocation1], 2
        %2254 = vst [vmem:[%s2253] ss:$4 sm:$0xff] %v2161
        %s2255 = scalar_lea.vmem [#allocation1], 3
        %2256 = vst [vmem:[%s2255] ss:$4 sm:$0xff] %v2163
        %s2257 = scalar_lea.vmem [#allocation1], 32
        %2258 = vst [vmem:[%s2257] ss:$4 sm:$0xff] %v2165
        %s2259 = scalar_lea.vmem [#allocation1], 33
        %2260 = vst [vmem:[%s2259] ss:$4 sm:$0xff] %v2167
        %s2261 = scalar_lea.vmem [#allocation1], 34
        %2262 = vst [vmem:[%s2261] ss:$4 sm:$0xff] %v2169
        %s2263 = scalar_lea.vmem [#allocation1], 35
        %2264 = vst [vmem:[%s2263] ss:$4 sm:$0xff] %v2171
        %v2265 = vld.sshfl [vmem:[#allocation1] sm:$0xff pattern:$0x73625140]
        %v2266 = vld.sshfl [vmem:[#allocation1 + $0x20] sm:$0xff pattern:$0x73625140]
        %2267 = vst [vmem:[#allocation1] ss:$4 sm:$0xff] %v2172
        %2268 = vst [vmem:[%s2251] ss:$4 sm:$0xff] %v2174
        %2269 = vst [vmem:[%s2253] ss:$4 sm:$0xff] %v2175
        %2270 = vst [vmem:[%s2255] ss:$4 sm:$0xff] %v2176
        %2271 = vst [vmem:[%s2257] ss:$4 sm:$0xff] %v2179
        %2272 = vst [vmem:[%s2259] ss:$4 sm:$0xff] %v2180
        %2273 = vst [vmem:[%s2261] ss:$4 sm:$0xff] %v2181
        %2274 = vst [vmem:[%s2263] ss:$4 sm:$0xff] %v2182
        %v2275 = vld.sshfl [vmem:[#allocation1] sm:$0xff pattern:$0x73625140]
        %v2276 = vld.sshfl [vmem:[#allocation1 + $0x20] sm:$0xff pattern:$0x73625140]
        %2277 = vst [vmem:[#allocation1] ss:$4 sm:$0xff] %v2183
        %2278 = vst [vmem:[%s2251] ss:$4 sm:$0xff] %v2184
        %2279 = vst [vmem:[%s2253] ss:$4 sm:$0xff] %v2187
        %2280 = vst [vmem:[%s2255] ss:$4 sm:$0xff] %v2188
        %2281 = vst [vmem:[%s2257] ss:$4 sm:$0xff] %v2189
        %2282 = vst [vmem:[%s2259] ss:$4 sm:$0xff] %v2190
        %2283 = vst [vmem:[%s2261] ss:$4 sm:$0xff] %v2191
        %2284 = vst [vmem:[%s2263] ss:$4 sm:$0xff] %v2192
        %v2285 = vld.sshfl [vmem:[#allocation1] sm:$0xff pattern:$0x73625140]
        %v2286 = vld.sshfl [vmem:[#allocation1 + $0x20] sm:$0xff pattern:$0x73625140]
        %2287 = vst [vmem:[#allocation1] ss:$4 sm:$0xff] %v2193
        %2288 = vst [vmem:[%s2251] ss:$4 sm:$0xff] %v2195
        %2289 = vst [vmem:[%s2253] ss:$4 sm:$0xff] %v2196
        %2290 = vst [vmem:[%s2255] ss:$4 sm:$0xff] %v2198
        %2291 = vst [vmem:[%s2257] ss:$4 sm:$0xff] %v2199
        %2292 = vst [vmem:[%s2259] ss:$4 sm:$0xff] %v2200
        %2293 = vst [vmem:[%s2261] ss:$4 sm:$0xff] %v2203
        %2294 = vst [vmem:[%s2263] ss:$4 sm:$0xff] %v2204
        %v2295 = vld.sshfl [vmem:[#allocation1] sm:$0xff pattern:$0x73625140]
        %v2296 = vld.sshfl [vmem:[#allocation1 + $0x20] sm:$0xff pattern:$0x73625140]
        %2297 = vst [vmem:[#allocation1] ss:$4 sm:$0xff] %v2205
        %2298 = vst [vmem:[%s2251] ss:$4 sm:$0xff] %v2206
        %2299 = vst [vmem:[%s2253] ss:$4 sm:$0xff] %v2207
        %2300 = vst [vmem:[%s2255] ss:$4 sm:$0xff] %v2208
        %2301 = vst [vmem:[%s2257] ss:$4 sm:$0xff] %v2211
        %2302 = vst [vmem:[%s2259] ss:$4 sm:$0xff] %v2212
        %2303 = vst [vmem:[%s2261] ss:$4 sm:$0xff] %v2213
        %2304 = vst [vmem:[%s2263] ss:$4 sm:$0xff] %v2214
        %v2305 = vld.sshfl [vmem:[#allocation1] sm:$0xff pattern:$0x73625140]
        %v2306 = vld.sshfl [vmem:[#allocation1 + $0x20] sm:$0xff pattern:$0x73625140]
        %2307 = vst [vmem:[#allocation1] ss:$4 sm:$0xff] %v2215
        %2308 = vst [vmem:[%s2251] ss:$4 sm:$0xff] %v2216
        %2309 = vst [vmem:[%s2253] ss:$4 sm:$0xff] %v2217
        %2310 = vst [vmem:[%s2255] ss:$4 sm:$0xff] %v2219
        %2311 = vst [vmem:[%s2257] ss:$4 sm:$0xff] %v2220
        %2312 = vst [vmem:[%s2259] ss:$4 sm:$0xff] %v2222
        %2313 = vst [vmem:[%s2261] ss:$4 sm:$0xff] %v2223
        %2314 = vst [vmem:[%s2263] ss:$4 sm:$0xff] %v2224
        %v2315 = vld.sshfl [vmem:[#allocation1] sm:$0xff pattern:$0x73625140]
        %v2316 = vld.sshfl [vmem:[#allocation1 + $0x20] sm:$0xff pattern:$0x73625140]
        %2317 = vst [vmem:[#allocation1] ss:$4 sm:$0xff] %v2227
        %2318 = vst [vmem:[%s2251] ss:$4 sm:$0xff] %v2228
        %2319 = vst [vmem:[%s2253] ss:$4 sm:$0xff] %v2229
        %2320 = vst [vmem:[%s2255] ss:$4 sm:$0xff] %v2230
        %2321 = vst [vmem:[%s2257] ss:$4 sm:$0xff] %v2231
        %2322 = vst [vmem:[%s2259] ss:$4 sm:$0xff] %v2232
        %v2323 = vld.sshfl [vmem:[#allocation1] sm:$0xff pattern:$0x73625140]
        %v2324 = vld.sshfl [vmem:[#allocation1 + $0x20] sm:$0xff pattern:$0x73625140]
        %2339 = vmatpush.msra.mxu0 %v2249
        %2340 = vmatpush.msra.mxu0 %v2248
        %2341 = vmatpush.msra.mxu0 %v2247
        %2342 = vmatpush.msra.mxu0 %v2246
        %2343 = vmatpush.msra.mxu0 %v2245
        %2344 = vmatpush.msra.mxu0 %v2244
        %2345 = vmatpush.msra.mxu0 %v2243
        %2346 = vmatpush.msra.mxu0 %v2242
        %2347 = vmatpush.msra.mxu0 %v2241
        %2348 = vmatpush.msra.mxu0 %v2240
        %2349 = vmatpush.msra.mxu0 %v2239
        %2350 = vmatpush.msra.mxu0 %v2238
        %2351 = vmatpush.msra.mxu0 %v2237
        %2352 = vmatpush.msra.mxu0 %v2236
        %2353 = vmatpush.msra.mxu0 %v2235
        %2354 = vmatpush.msra.mxu0 %v2234
        %2355 = vmatmul.f32.gmra.mxu0 %v2265
        %v2356 = vpop.f32.mrf.mxu0
        %v2357 = vadd.f32 0.0, %v2356
        %2358 = vmatmul.f32.gmra.mxu0 %v2266
        %v2359 = vpop.f32.mrf.mxu0
        %v2360 = vadd.f32 0.0, %v2359
        %2361 = vmatmul.f32.gmra.mxu0 %v2275
        %v2362 = vpop.f32.mrf.mxu0
        %v2363 = vadd.f32 0.0, %v2362
        %2364 = vmatmul.f32.gmra.mxu0 %v2276
        %v2365 = vpop.f32.mrf.mxu0
        %v2366 = vadd.f32 0.0, %v2365
        %2367 = vmatmul.f32.gmra.mxu0 %v2285
        %v2368 = vpop.f32.mrf.mxu0
        %v2369 = vadd.f32 0.0, %v2368
        %2370 = vmatmul.f32.gmra.mxu0 %v2286
        %v2371 = vpop.f32.mrf.mxu0
        %v2372 = vadd.f32 0.0, %v2371
        %2373 = vmatmul.f32.gmra.mxu0 %v2295
        %v2374 = vpop.f32.mrf.mxu0
        %v2375 = vadd.f32 0.0, %v2374
        %2376 = vmatmul.f32.gmra.mxu0 %v2296
        %v2377 = vpop.f32.mrf.mxu0
        %v2378 = vadd.f32 0.0, %v2377
        %2379 = vmatmul.f32.gmra.mxu0 %v2305
        %v2380 = vpop.f32.mrf.mxu0
        %v2381 = vadd.f32 0.0, %v2380
        %2382 = vmatmul.f32.gmra.mxu0 %v2306
        %v2383 = vpop.f32.mrf.mxu0
        %v2384 = vadd.f32 0.0, %v2383
        %2385 = vmatmul.f32.gmra.mxu0 %v2315
        %v2386 = vpop.f32.mrf.mxu0
        %v2387 = vadd.f32 0.0, %v2386
        %2388 = vmatmul.f32.gmra.mxu0 %v2316
        %v2389 = vpop.f32.mrf.mxu0
        %v2390 = vadd.f32 0.0, %v2389
        %2391 = vmatmul.f32.gmra.mxu0 %v2323
        %v2392 = vpop.f32.mrf.mxu0
        %v2393 = vadd.f32 0.0, %v2392
        %2394 = vmatmul.f32.gmra.mxu0 %v2324
        %v2395 = vpop.f32.mrf.mxu0
        %v2396 = vadd.f32 0.0, %v2395
        %2397 = vdwg.mxu0
        %v2398 = vadd.f32 %v2140, %v2357
        %v2399 = vadd.f32 %v2141, %v2360
        %v2400 = vadd.f32 %v2142, %v2363
        %v2401 = vadd.f32 %v2143, %v2366
        %v2402 = vadd.f32 %v2144, %v2369
        %v2403 = vadd.f32 %v2145, %v2372
        %v2404 = vadd.f32 %v2146, %v2375
        %v2405 = vadd.f32 %v2147, %v2378
        %v2406 = vadd.f32 %v2148, %v2381
        %v2407 = vadd.f32 %v2149, %v2384
        %v2408 = vadd.f32 %v2150, %v2387
        %v2409 = vadd.f32 %v2151, %v2390
        %v2410 = vadd.f32 %v2152, %v2393
        %v2411 = vadd.f32 %v2153, %v2396
        %v2412 = vld [vmem:[%s2] sm:$0x1]
        %v2414 = vperm.slane %v2412, 0
        %v2416 = vadd.f32 %v2398, %v2414
        %v2417 = vadd.f32 %v2399, %v2414
        %v2418 = vadd.f32 %v2400, %v2414
        %v2419 = vadd.f32 %v2401, %v2414
        %v2420 = vadd.f32 %v2402, %v2414
        %v2421 = vadd.f32 %v2403, %v2414
        %v2422 = vadd.f32 %v2404, %v2414
        %v2423 = vadd.f32 %v2405, %v2414
        %v2424 = vadd.f32 %v2406, %v2414
        %v2425 = vadd.f32 %v2407, %v2414
        %v2426 = vadd.f32 %v2408, %v2414
        %v2427 = vadd.f32 %v2409, %v2414
        %v2428 = vadd.f32 %v2410, %v2414
        %v2429 = vadd.f32 %v2411, %v2414
        %v2430 = vmax.f32 %v2416, 0.0
        %v2431 = vmax.f32 %v2417, 0.0
        %v2432 = vmax.f32 %v2418, 0.0
        %v2433 = vmax.f32 %v2419, 0.0
        %v2434 = vmax.f32 %v2420, 0.0
        %v2435 = vmax.f32 %v2421, 0.0
        %v2436 = vmax.f32 %v2422, 0.0
        %v2437 = vmax.f32 %v2423, 0.0
        %v2438 = vmax.f32 %v2424, 0.0
        %v2439 = vmax.f32 %v2425, 0.0
        %v2440 = vmax.f32 %v2426, 0.0
        %v2441 = vmax.f32 %v2427, 0.0
        %v2442 = vmax.f32 %v2428, 0.0
        %v2443 = vmax.f32 %v2429, 0.0
        %v2458 = vrot.slane %v2430, 2
        %v2459 = vrot.slane %v2430, 4
        %v2460 = vrot.slane %v2430, 6
        %v2461 = vrot.slane %v2431, 2
        %v2462 = vrot.slane %v2431, 4
        %v2463 = vrot.slane %v2431, 6
        %v2464 = vrot.slane %v2432, 2
        %v2465 = vrot.slane %v2432, 4
        %v2466 = vrot.slane %v2432, 6
        %v2467 = vrot.slane %v2433, 2
        %v2468 = vrot.slane %v2433, 4
        %v2469 = vrot.slane %v2433, 6
        %v2470 = vrot.slane %v2434, 2
        %v2471 = vrot.slane %v2434, 4
        %v2472 = vrot.slane %v2434, 6
        %v2473 = vrot.slane %v2435, 2
        %v2474 = vrot.slane %v2435, 4
        %v2475 = vrot.slane %v2435, 6
        %v2476 = vrot.slane %v2436, 2
        %v2477 = vrot.slane %v2436, 4
        %v2478 = vrot.slane %v2436, 6
        %v2479 = vrot.slane %v2437, 2
        %v2480 = vrot.slane %v2437, 4
        %v2481 = vrot.slane %v2437, 6
        %v2482 = vrot.slane %v2438, 2
        %v2483 = vrot.slane %v2438, 4
        %v2484 = vrot.slane %v2438, 6
        %v2485 = vrot.slane %v2439, 2
        %v2486 = vrot.slane %v2439, 4
        %v2487 = vrot.slane %v2439, 6
        %v2488 = vrot.slane %v2440, 2
        %v2489 = vrot.slane %v2440, 4
        %v2490 = vrot.slane %v2440, 6
        %v2491 = vrot.slane %v2441, 2
        %v2492 = vrot.slane %v2441, 4
        %v2493 = vrot.slane %v2441, 6
        %v2494 = vrot.slane %v2442, 2
        %v2495 = vrot.slane %v2442, 4
        %v2496 = vrot.slane %v2442, 6
        %v2497 = vrot.slane %v2443, 2
        %v2498 = vlaneseq
        %v2499 = vshrl.u32 %v2498, 7
        %v2500 = vadd.s32 %v2499, 8
        %v2501 = vadd.s32 %v2499, 16
        %vm2502 = vcmp.ge.s32.totalorder %v2499, 1
        %vm2503 = vcmp.ge.s32.totalorder %v2500, 1
        %vm2504 = vcmp.ge.s32.totalorder %v2501, 1
        %vm2505 = vcmp.le.s32.totalorder %v2499, 16
        %vm2506 = vcmp.le.s32.totalorder %v2500, 16
        %vm2507 = vcmp.le.s32.totalorder %v2501, 16
        %vm2508 = vmand %vm2502, %vm2505
        %vm2509 = vmand %vm2503, %vm2506
        %vm2510 = vmand %vm2504, %vm2507
        %v2511 = vsel %vm2508, 1, 0
        %v2512 = vsel %vm2509, 1, 0
        %v2513 = vsel %vm2510, 1, 0
        %vm2514 = vcmp.eq.s32.totalorder %v2511, 1
        %vm2515 = vcmp.eq.s32.totalorder %v2512, 1
        %vm2516 = vcmp.eq.s32.totalorder %v2513, 1
        %2517 = vst [vmem:[#allocation1] ss:$4 sm:$0xff] %v2430
        %s2518 = scalar_lea.vmem [#allocation1], 1
        %2519 = vst [vmem:[%s2518] ss:$4 sm:$0xff] %v2458
        %s2520 = scalar_lea.vmem [#allocation1], 2
        %2521 = vst [vmem:[%s2520] ss:$4 sm:$0xff] %v2459
        %s2522 = scalar_lea.vmem [#allocation1], 3
        %2523 = vst [vmem:[%s2522] ss:$4 sm:$0xff] %v2460
        %s2524 = scalar_lea.vmem [#allocation1], 32
        %2525 = vst [vmem:[%s2524] ss:$4 sm:$0xff] %v2431
        %s2526 = scalar_lea.vmem [#allocation1], 33
        %2527 = vst [vmem:[%s2526] ss:$4 sm:$0xff] %v2461
        %s2528 = scalar_lea.vmem [#allocation1], 34
        %2529 = vst [vmem:[%s2528] ss:$4 sm:$0xff] %v2462
        %s2530 = scalar_lea.vmem [#allocation1], 35
        %2531 = vst [vmem:[%s2530] ss:$4 sm:$0xff] %v2463
        %v2532 = vld.sshfl [vmem:[#allocation1] sm:$0xff pattern:$0x73625140]
        %v2533 = vld.sshfl [vmem:[#allocation1 + $0x20] sm:$0xff pattern:$0x73625140]
        %2534 = vst [vmem:[#allocation1] ss:$4 sm:$0xff] %v2432
        %v2535 = vld.sshfl [vmem:[#allocation1] sm:$0xff pattern:$0x73625140]
        %2536 = vst [vmem:[%s2524] ss:$4 sm:$0xff] %v2464
        %2537 = vst [vmem:[%s2526] ss:$4 sm:$0xff] %v2465
        %2538 = vst [vmem:[%s2528] ss:$4 sm:$0xff] %v2466
        %2539 = vst [vmem:[%s2530] ss:$4 sm:$0xff] %v2433
        %v2540 = vld.sshfl [vmem:[#allocation1 + $0x20] sm:$0xff pattern:$0x73625140]
        %2541 = vst [vmem:[#allocation1] ss:$4 sm:$0xff] %v2467
        %2542 = vst [vmem:[%s2518] ss:$4 sm:$0xff] %v2468
        %2543 = vst [vmem:[%s2520] ss:$4 sm:$0xff] %v2469
        %2544 = vst [vmem:[%s2522] ss:$4 sm:$0xff] %v2434
        %2545 = vst [vmem:[%s2524] ss:$4 sm:$0xff] %v2470
        %v2546 = vld.sshfl [vmem:[#allocation1] sm:$0xff pattern:$0x73625140]
        %v2547 = vld.sshfl [vmem:[#allocation1 + $0x20] sm:$0xff pattern:$0x73625140]
        %2548 = vst [vmem:[#allocation1] ss:$4 sm:$0xff] %v2471
        %2549 = vst [vmem:[%s2518] ss:$4 sm:$0xff] %v2472
        %2550 = vst [vmem:[%s2520] ss:$4 sm:$0xff] %v2435
        %2551 = vst [vmem:[%s2522] ss:$4 sm:$0xff] %v2473
        %2552 = vst [vmem:[%s2524] ss:$4 sm:$0xff] %v2474
        %2553 = vst [vmem:[%s2526] ss:$4 sm:$0xff] %v2475
        %2554 = vst [vmem:[%s2528] ss:$4 sm:$0xff] %v2436
        %2555 = vst [vmem:[%s2530] ss:$4 sm:$0xff] %v2476
        %v2556 = vld.sshfl [vmem:[#allocation1] sm:$0xff pattern:$0x73625140]
        %v2557 = vld.sshfl [vmem:[#allocation1 + $0x20] sm:$0xff pattern:$0x73625140]
        %2558 = vst [vmem:[#allocation1] ss:$4 sm:$0xff] %v2477
        %v2559 = vld.sshfl [vmem:[#allocation1] sm:$0xff pattern:$0x73625140]
        %2560 = vst [vmem:[%s2524] ss:$4 sm:$0xff] %v2478
        %2561 = vst [vmem:[%s2526] ss:$4 sm:$0xff] %v2437
        %2562 = vst [vmem:[%s2528] ss:$4 sm:$0xff] %v2479
        %2563 = vst [vmem:[%s2530] ss:$4 sm:$0xff] %v2480
        %v2564 = vld.sshfl [vmem:[#allocation1 + $0x20] sm:$0xff pattern:$0x73625140]
        %2565 = vst [vmem:[#allocation1] ss:$4 sm:$0xff] %v2481
        %2566 = vst [vmem:[%s2518] ss:$4 sm:$0xff] %v2438
        %2567 = vst [vmem:[%s2520] ss:$4 sm:$0xff] %v2482
        %2568 = vst [vmem:[%s2522] ss:$4 sm:$0xff] %v2483
        %2569 = vst [vmem:[%s2524] ss:$4 sm:$0xff] %v2484
        %v2570 = vld.sshfl [vmem:[#allocation1] sm:$0xff pattern:$0x73625140]
        %v2571 = vld.sshfl [vmem:[#allocation1 + $0x20] sm:$0xff pattern:$0x73625140]
        %2572 = vst [vmem:[#allocation1] ss:$4 sm:$0xff] %v2439
        %2573 = vst [vmem:[%s2518] ss:$4 sm:$0xff] %v2485
        %2574 = vst [vmem:[%s2520] ss:$4 sm:$0xff] %v2486
        %2575 = vst [vmem:[%s2522] ss:$4 sm:$0xff] %v2487
        %2576 = vst [vmem:[%s2524] ss:$4 sm:$0xff] %v2440
        %2577 = vst [vmem:[%s2526] ss:$4 sm:$0xff] %v2488
        %2578 = vst [vmem:[%s2528] ss:$4 sm:$0xff] %v2489
        %2579 = vst [vmem:[%s2530] ss:$4 sm:$0xff] %v2490
        %v2580 = vld.sshfl [vmem:[#allocation1] sm:$0xff pattern:$0x73625140]
        %v2581 = vld.sshfl [vmem:[#allocation1 + $0x20] sm:$0xff pattern:$0x73625140]
        %2582 = vst [vmem:[#allocation1] ss:$4 sm:$0xff] %v2441
        %v2583 = vld.sshfl [vmem:[#allocation1] sm:$0xff pattern:$0x73625140]
        %2584 = vst [vmem:[%s2524] ss:$4 sm:$0xff] %v2491
        %2585 = vst [vmem:[%s2526] ss:$4 sm:$0xff] %v2492
        %2586 = vst [vmem:[%s2528] ss:$4 sm:$0xff] %v2493
        %2587 = vst [vmem:[%s2530] ss:$4 sm:$0xff] %v2442
        %v2588 = vld.sshfl [vmem:[#allocation1 + $0x20] sm:$0xff pattern:$0x73625140]
        %2589 = vst [vmem:[#allocation1] ss:$4 sm:$0xff] %v2494
        %2590 = vst [vmem:[%s2518] ss:$4 sm:$0xff] %v2495
        %2591 = vst [vmem:[%s2520] ss:$4 sm:$0xff] %v2496
        %2592 = vst [vmem:[%s2522] ss:$4 sm:$0xff] %v2443
        %2593 = vst [vmem:[%s2524] ss:$4 sm:$0xff] %v2497
        %v2594 = vld.sshfl [vmem:[#allocation1] sm:$0xff pattern:$0x73625140]
        %v2595 = vld.sshfl [vmem:[#allocation1 + $0x20] sm:$0xff pattern:$0x73625140]
        %v2614 = vsel %vm2514, %v2532, 0.0
        %v2615 = vsel %vm2515, %v2533, 0.0
        %v2616 = vsel %vm2516, %v2535, 0.0
        %v2617 = vsel %vm2514, %v2540, 0.0
        %v2618 = vsel %vm2515, %v2546, 0.0
        %v2619 = vsel %vm2516, %v2547, 0.0
        %v2620 = vsel %vm2514, %v2556, 0.0
        %v2621 = vsel %vm2515, %v2557, 0.0
        %v2622 = vsel %vm2516, %v2559, 0.0
        %v2623 = vsel %vm2514, %v2564, 0.0
        %v2624 = vsel %vm2515, %v2570, 0.0
        %v2625 = vsel %vm2516, %v2571, 0.0
        %v2626 = vsel %vm2514, %v2580, 0.0
        %v2627 = vsel %vm2515, %v2581, 0.0
        %v2628 = vsel %vm2516, %v2583, 0.0
        %v2629 = vsel %vm2514, %v2588, 0.0
        %v2630 = vsel %vm2515, %v2594, 0.0
        %v2631 = vsel %vm2516, %v2595, 0.0
        %2632 = vst [vmem:[#allocation2] sm:$0xff] %v2614
        %2633 = vst [vmem:[#allocation2 + $0x8] sm:$0xff] %v2615
        %2634 = vst [vmem:[#allocation2 + $0x10] sm:$0x3] %v2616
        %2635 = vst [vmem:[#allocation2 + $0x18] sm:$0xff] %v2617
        %2636 = vst [vmem:[#allocation2 + $0x20] sm:$0xff] %v2618
        %2637 = vst [vmem:[#allocation2 + $0x28] sm:$0x3] %v2619
        %2638 = vst [vmem:[#allocation2 + $0x30] sm:$0xff] %v2620
        %2639 = vst [vmem:[#allocation2 + $0x38] sm:$0xff] %v2621
        %2640 = vst [vmem:[#allocation2 + $0x40] sm:$0x3] %v2622
        %2641 = vst [vmem:[#allocation2 + $0x48] sm:$0xff] %v2623
        %2642 = vst [vmem:[#allocation2 + $0x50] sm:$0xff] %v2624
        %2643 = vst [vmem:[#allocation2 + $0x58] sm:$0x3] %v2625
        %2644 = vst [vmem:[#allocation2 + $0x60] sm:$0xff] %v2626
        %2645 = vst [vmem:[#allocation2 + $0x68] sm:$0xff] %v2627
        %2646 = vst [vmem:[#allocation2 + $0x70] sm:$0x3] %v2628
        %2647 = vst [vmem:[#allocation2 + $0x78] sm:$0xff] %v2629
        %2648 = vst [vmem:[#allocation2 + $0x80] sm:$0xff] %v2630
        %2649 = vst [vmem:[#allocation2 + $0x88] sm:$0x3] %v2631
        %p2650 = scmp.eq.s32.totalorder %s25, 0
        // Predicated region
        $region45: #{tpu_custom_call.1} parent=39 // pred_check
          %p2651 = pneg %p2650
        $region46: #{tpu_custom_call.1} parent=39 // pred_check_branch
          %2653 = sbr.rel (%p2651) target = $region48
        $region47: #{tpu_custom_call.1} parent=39 // pred_region
          %2654 = vst [vmem:[#allocation2] sm:$0xff] 0.0
          %2655 = vst [vmem:[#allocation2 + $0x8] sm:$0xff] 0.0
          %2656 = vst [vmem:[#allocation2 + $0x10] sm:$0x3] 0.0
        $region48: #{tpu_custom_call.1} parent=39 // pred_fallthru
          _
        %p2657 = scmp.eq.s32.totalorder %s25, 3
        // Predicated region
        $region49: #{tpu_custom_call.1} parent=39 // pred_check
          %p2658 = pneg %p2657
        $region50: #{tpu_custom_call.1} parent=39 // pred_check_branch
          %2660 = sbr.rel (%p2658) target = $region52
        $region51: #{tpu_custom_call.1} parent=39 // pred_region
          %s2661 = scalar_lea.vmem [#allocation2], 120
          %2662 = vst [vmem:[%s2661] sm:$0xff] 0.0
          %2663 = vst [vmem:[%s2661 + $0x8] sm:$0xff] 0.0
          %2664 = vst [vmem:[%s2661 + $0x10] sm:$0x3] 0.0
        $region52: #{tpu_custom_call.1} parent=39 // pred_fallthru
          _
        %v2665 = vld [vmem:[#allocation2] sm:$0xff]
        %v2666 = vld [vmem:[#allocation2 + $0x8] sm:$0xff]
        %v2667 = vld [vmem:[#allocation2 + $0x18] sm:$0xff]
        %v2668 = vld [vmem:[#allocation2 + $0x20] sm:$0xff]
        %v2669 = vld [vmem:[#allocation2 + $0x30] sm:$0xff]
        %v2670 = vld [vmem:[#allocation2 + $0x38] sm:$0xff]
        %v2671 = vld [vmem:[#allocation2 + $0x48] sm:$0xff]
        %v2672 = vld [vmem:[#allocation2 + $0x50] sm:$0xff]
        %v2673 = vld [vmem:[#allocation3] sm:$0xff]
        %v2674 = vld [vmem:[#allocation3 + $0x8] sm:$0xff]
        %v2675 = vld [vmem:[#allocation3 + $0x10] sm:$0xff]
        %v2676 = vld [vmem:[#allocation3 + $0x18] sm:$0xff]
        %v2677 = vld [vmem:[#allocation3 + $0x20] sm:$0xff]
        %v2678 = vld [vmem:[#allocation3 + $0x28] sm:$0xff]
        %v2679 = vld [vmem:[#allocation3 + $0x30] sm:$0xff]
        %v2680 = vld [vmem:[#allocation3 + $0x38] sm:$0xff]
        %v2681 = vld [vmem:[#allocation3 + $0x40] sm:$0xff]
        %v2682 = vld [vmem:[#allocation3 + $0x48] sm:$0xff]
        %v2683 = vld [vmem:[#allocation3 + $0x50] sm:$0xff]
        %v2684 = vld [vmem:[#allocation3 + $0x58] sm:$0xff]
        %v2685 = vld [vmem:[#allocation3 + $0x60] sm:$0xff]
        %v2686 = vld [vmem:[#allocation3 + $0x68] sm:$0xff]
        %v2687 = vld [vmem:[#allocation3 + $0x70] sm:$0xff]
        %v2688 = vld [vmem:[#allocation3 + $0x78] sm:$0xff]
        %v2689 = vld [vmem:[#allocation2 + $0x1] sm:$0xff]
        %v2690 = vld [vmem:[#allocation2 + $0x9] sm:$0xff]
        %v2691 = vld [vmem:[#allocation2 + $0x19] sm:$0xff]
        %v2692 = vld [vmem:[#allocation2 + $0x21] sm:$0xff]
        %v2693 = vld [vmem:[#allocation2 + $0x31] sm:$0xff]
        %v2694 = vld [vmem:[#allocation2 + $0x39] sm:$0xff]
        %v2695 = vld [vmem:[#allocation2 + $0x49] sm:$0xff]
        %v2696 = vld [vmem:[#allocation2 + $0x51] sm:$0xff]
        %s2697 = scalar_lea.vmem [#allocation3], 128
        %v2698 = vld [vmem:[%s2697] sm:$0xff]
        %v2699 = vld [vmem:[%s2697 + $0x8] sm:$0xff]
        %v2700 = vld [vmem:[%s2697 + $0x10] sm:$0xff]
        %v2701 = vld [vmem:[%s2697 + $0x18] sm:$0xff]
        %v2702 = vld [vmem:[%s2697 + $0x20] sm:$0xff]
        %v2703 = vld [vmem:[%s2697 + $0x28] sm:$0xff]
        %v2704 = vld [vmem:[%s2697 + $0x30] sm:$0xff]
        %v2705 = vld [vmem:[%s2697 + $0x38] sm:$0xff]
        %v2706 = vld [vmem:[%s2697 + $0x40] sm:$0xff]
        %v2707 = vld [vmem:[%s2697 + $0x48] sm:$0xff]
        %v2708 = vld [vmem:[%s2697 + $0x50] sm:$0xff]
        %v2709 = vld [vmem:[%s2697 + $0x58] sm:$0xff]
        %v2710 = vld [vmem:[%s2697 + $0x60] sm:$0xff]
        %v2711 = vld [vmem:[%s2697 + $0x68] sm:$0xff]
        %v2712 = vld [vmem:[%s2697 + $0x70] sm:$0xff]
        %v2713 = vld [vmem:[%s2697 + $0x78] sm:$0xff]
        %2714 = vmatpush.msra.mxu0 %v2713
        %2715 = vmatpush.msra.mxu0 %v2712
        %2716 = vmatpush.msra.mxu0 %v2711
        %2717 = vmatpush.msra.mxu0 %v2710
        %2718 = vmatpush.msra.mxu0 %v2709
        %2719 = vmatpush.msra.mxu0 %v2708
        %2720 = vmatpush.msra.mxu0 %v2707
        %2721 = vmatpush.msra.mxu0 %v2706
        %2722 = vmatpush.msra.mxu0 %v2705
        %2723 = vmatpush.msra.mxu0 %v2704
        %2724 = vmatpush.msra.mxu0 %v2703
        %2725 = vmatpush.msra.mxu0 %v2702
        %2726 = vmatpush.msra.mxu0 %v2701
        %2727 = vmatpush.msra.mxu0 %v2700
        %2728 = vmatpush.msra.mxu0 %v2699
        %2729 = vmatpush.msra.mxu0 %v2698
        %2730 = vmatmul.f32.gmra.mxu0 %v2689
        %v2731 = vpop.f32.mrf.mxu0
        %v2732 = vadd.f32 0.0, %v2731
        %2733 = vmatmul.f32.gmra.mxu0 %v2690
        %v2734 = vpop.f32.mrf.mxu0
        %v2735 = vadd.f32 0.0, %v2734
        %2736 = vmatmul.f32.gmra.mxu0 %v2691
        %v2737 = vpop.f32.mrf.mxu0
        %v2738 = vadd.f32 0.0, %v2737
        %2739 = vmatmul.f32.gmra.mxu0 %v2692
        %v2740 = vpop.f32.mrf.mxu0
        %v2741 = vadd.f32 0.0, %v2740
        %2742 = vmatmul.f32.gmra.mxu0 %v2693
        %v2743 = vpop.f32.mrf.mxu0
        %v2744 = vadd.f32 0.0, %v2743
        %2745 = vmatmul.f32.gmra.mxu0 %v2694
        %v2746 = vpop.f32.mrf.mxu0
        %v2747 = vadd.f32 0.0, %v2746
        %2748 = vmatmul.f32.gmra.mxu0 %v2695
        %v2749 = vpop.f32.mrf.mxu0
        %v2750 = vadd.f32 0.0, %v2749
        %2751 = vmatmul.f32.gmra.mxu0 %v2696
        %v2752 = vpop.f32.mrf.mxu0
        %v2753 = vadd.f32 0.0, %v2752
        %2754 = vdwg.mxu0
        %2755 = vmatpush.msra.mxu0 %v2688
        %2756 = vmatpush.msra.mxu0 %v2687
        %2757 = vmatpush.msra.mxu0 %v2686
        %2758 = vmatpush.msra.mxu0 %v2685
        %2759 = vmatpush.msra.mxu0 %v2684
        %2760 = vmatpush.msra.mxu0 %v2683
        %2761 = vmatpush.msra.mxu0 %v2682
        %2762 = vmatpush.msra.mxu0 %v2681
        %2763 = vmatpush.msra.mxu0 %v2680
        %2764 = vmatpush.msra.mxu0 %v2679
        %2765 = vmatpush.msra.mxu0 %v2678
        %2766 = vmatpush.msra.mxu0 %v2677
        %2767 = vmatpush.msra.mxu0 %v2676
        %2768 = vmatpush.msra.mxu0 %v2675
        %2769 = vmatpush.msra.mxu0 %v2674
        %2770 = vmatpush.msra.mxu0 %v2673
        %2771 = vmatmul.f32.gmra.mxu0 %v2665
        %v2772 = vpop.f32.mrf.mxu0
        %v2773 = vadd.f32 %v2732, %v2772
        %2774 = vmatmul.f32.gmra.mxu0 %v2666
        %v2775 = vpop.f32.mrf.mxu0
        %v2776 = vadd.f32 %v2735, %v2775
        %2777 = vmatmul.f32.gmra.mxu0 %v2667
        %v2778 = vpop.f32.mrf.mxu0
        %v2779 = vadd.f32 %v2738, %v2778
        %2780 = vmatmul.f32.gmra.mxu0 %v2668
        %v2781 = vpop.f32.mrf.mxu0
        %v2782 = vadd.f32 %v2741, %v2781
        %2783 = vmatmul.f32.gmra.mxu0 %v2669
        %v2784 = vpop.f32.mrf.mxu0
        %v2785 = vadd.f32 %v2744, %v2784
        %2786 = vmatmul.f32.gmra.mxu0 %v2670
        %v2787 = vpop.f32.mrf.mxu0
        %v2788 = vadd.f32 %v2747, %v2787
        %2789 = vmatmul.f32.gmra.mxu0 %v2671
        %v2790 = vpop.f32.mrf.mxu0
        %v2791 = vadd.f32 %v2750, %v2790
        %2792 = vmatmul.f32.gmra.mxu0 %v2672
        %v2793 = vpop.f32.mrf.mxu0
        %v2794 = vadd.f32 %v2753, %v2793
        %2795 = vdwg.mxu0
        %v2796 = vld [vmem:[#allocation2 + $0x2] sm:$0xff]
        %v2797 = vld [vmem:[#allocation2 + $0xa] sm:$0xff]
        %v2798 = vld [vmem:[#allocation2 + $0x1a] sm:$0xff]
        %v2799 = vld [vmem:[#allocation2 + $0x22] sm:$0xff]
        %v2800 = vld [vmem:[#allocation2 + $0x32] sm:$0xff]
        %v2801 = vld [vmem:[#allocation2 + $0x3a] sm:$0xff]
        %v2802 = vld [vmem:[#allocation2 + $0x4a] sm:$0xff]
        %v2803 = vld [vmem:[#allocation2 + $0x52] sm:$0xff]
        %s2804 = scalar_lea.vmem [#allocation3], 256
        %v2805 = vld [vmem:[%s2804] sm:$0xff]
        %v2806 = vld [vmem:[%s2804 + $0x8] sm:$0xff]
        %v2807 = vld [vmem:[%s2804 + $0x10] sm:$0xff]
        %v2808 = vld [vmem:[%s2804 + $0x18] sm:$0xff]
        %v2809 = vld [vmem:[%s2804 + $0x20] sm:$0xff]
        %v2810 = vld [vmem:[%s2804 + $0x28] sm:$0xff]
        %v2811 = vld [vmem:[%s2804 + $0x30] sm:$0xff]
        %v2812 = vld [vmem:[%s2804 + $0x38] sm:$0xff]
        %v2813 = vld [vmem:[%s2804 + $0x40] sm:$0xff]
        %v2814 = vld [vmem:[%s2804 + $0x48] sm:$0xff]
        %v2815 = vld [vmem:[%s2804 + $0x50] sm:$0xff]
        %v2816 = vld [vmem:[%s2804 + $0x58] sm:$0xff]
        %v2817 = vld [vmem:[%s2804 + $0x60] sm:$0xff]
        %v2818 = vld [vmem:[%s2804 + $0x68] sm:$0xff]
        %v2819 = vld [vmem:[%s2804 + $0x70] sm:$0xff]
        %v2820 = vld [vmem:[%s2804 + $0x78] sm:$0xff]
        %2821 = vmatpush.msra.mxu0 %v2820
        %2822 = vmatpush.msra.mxu0 %v2819
        %2823 = vmatpush.msra.mxu0 %v2818
        %2824 = vmatpush.msra.mxu0 %v2817
        %2825 = vmatpush.msra.mxu0 %v2816
        %2826 = vmatpush.msra.mxu0 %v2815
        %2827 = vmatpush.msra.mxu0 %v2814
        %2828 = vmatpush.msra.mxu0 %v2813
        %2829 = vmatpush.msra.mxu0 %v2812
        %2830 = vmatpush.msra.mxu0 %v2811
        %2831 = vmatpush.msra.mxu0 %v2810
        %2832 = vmatpush.msra.mxu0 %v2809
        %2833 = vmatpush.msra.mxu0 %v2808
        %2834 = vmatpush.msra.mxu0 %v2807
        %2835 = vmatpush.msra.mxu0 %v2806
        %2836 = vmatpush.msra.mxu0 %v2805
        %2837 = vmatmul.f32.gmra.mxu0 %v2796
        %v2838 = vpop.f32.mrf.mxu0
        %v2839 = vadd.f32 0.0, %v2838
        %2840 = vmatmul.f32.gmra.mxu0 %v2797
        %v2841 = vpop.f32.mrf.mxu0
        %v2842 = vadd.f32 0.0, %v2841
        %2843 = vmatmul.f32.gmra.mxu0 %v2798
        %v2844 = vpop.f32.mrf.mxu0
        %v2845 = vadd.f32 0.0, %v2844
        %2846 = vmatmul.f32.gmra.mxu0 %v2799
        %v2847 = vpop.f32.mrf.mxu0
        %v2848 = vadd.f32 0.0, %v2847
        %2849 = vmatmul.f32.gmra.mxu0 %v2800
        %v2850 = vpop.f32.mrf.mxu0
        %v2851 = vadd.f32 0.0, %v2850
        %2852 = vmatmul.f32.gmra.mxu0 %v2801
        %v2853 = vpop.f32.mrf.mxu0
        %v2854 = vadd.f32 0.0, %v2853
        %2855 = vmatmul.f32.gmra.mxu0 %v2802
        %v2856 = vpop.f32.mrf.mxu0
        %v2857 = vadd.f32 0.0, %v2856
        %2858 = vmatmul.f32.gmra.mxu0 %v2803
        %v2859 = vpop.f32.mrf.mxu0
        %v2860 = vadd.f32 0.0, %v2859
        %2861 = vdwg.mxu0
        %v2862 = vadd.f32 %v2773, %v2839
        %v2863 = vadd.f32 %v2776, %v2842
        %v2864 = vadd.f32 %v2779, %v2845
        %v2865 = vadd.f32 %v2782, %v2848
        %v2866 = vadd.f32 %v2785, %v2851
        %v2867 = vadd.f32 %v2788, %v2854
        %v2868 = vadd.f32 %v2791, %v2857
        %v2869 = vadd.f32 %v2794, %v2860
        %s2870 = scalar_lea.vmem [#allocation2], 24
        %v2871 = vld [vmem:[%s2870] sm:$0xff]
        %v2872 = vld [vmem:[%s2870 + $0x8] sm:$0xff]
        %v2873 = vld [vmem:[%s2870 + $0x18] sm:$0xff]
        %v2874 = vld [vmem:[%s2870 + $0x20] sm:$0xff]
        %v2875 = vld [vmem:[%s2870 + $0x30] sm:$0xff]
        %v2876 = vld [vmem:[%s2870 + $0x38] sm:$0xff]
        %v2877 = vld [vmem:[%s2870 + $0x48] sm:$0xff]
        %v2878 = vld [vmem:[%s2870 + $0x50] sm:$0xff]
        %s2879 = scalar_lea.vmem [#allocation3], 384
        %v2880 = vld [vmem:[%s2879] sm:$0xff]
        %v2881 = vld [vmem:[%s2879 + $0x8] sm:$0xff]
        %v2882 = vld [vmem:[%s2879 + $0x10] sm:$0xff]
        %v2883 = vld [vmem:[%s2879 + $0x18] sm:$0xff]
        %v2884 = vld [vmem:[%s2879 + $0x20] sm:$0xff]
        %v2885 = vld [vmem:[%s2879 + $0x28] sm:$0xff]
        %v2886 = vld [vmem:[%s2879 + $0x30] sm:$0xff]
        %v2887 = vld [vmem:[%s2879 + $0x38] sm:$0xff]
        %v2888 = vld [vmem:[%s2879 + $0x40] sm:$0xff]
        %v2889 = vld [vmem:[%s2879 + $0x48] sm:$0xff]
        %v2890 = vld [vmem:[%s2879 + $0x50] sm:$0xff]
        %v2891 = vld [vmem:[%s2879 + $0x58] sm:$0xff]
        %v2892 = vld [vmem:[%s2879 + $0x60] sm:$0xff]
        %v2893 = vld [vmem:[%s2879 + $0x68] sm:$0xff]
        %v2894 = vld [vmem:[%s2879 + $0x70] sm:$0xff]
        %v2895 = vld [vmem:[%s2879 + $0x78] sm:$0xff]
        %2896 = vmatpush.msra.mxu0 %v2895
        %2897 = vmatpush.msra.mxu0 %v2894
        %2898 = vmatpush.msra.mxu0 %v2893
        %2899 = vmatpush.msra.mxu0 %v2892
        %2900 = vmatpush.msra.mxu0 %v2891
        %2901 = vmatpush.msra.mxu0 %v2890
        %2902 = vmatpush.msra.mxu0 %v2889
        %2903 = vmatpush.msra.mxu0 %v2888
        %2904 = vmatpush.msra.mxu0 %v2887
        %2905 = vmatpush.msra.mxu0 %v2886
        %2906 = vmatpush.msra.mxu0 %v2885
        %2907 = vmatpush.msra.mxu0 %v2884
        %2908 = vmatpush.msra.mxu0 %v2883
        %2909 = vmatpush.msra.mxu0 %v2882
        %2910 = vmatpush.msra.mxu0 %v2881
        %2911 = vmatpush.msra.mxu0 %v2880
        %2912 = vmatmul.f32.gmra.mxu0 %v2871
        %v2913 = vpop.f32.mrf.mxu0
        %v2914 = vadd.f32 0.0, %v2913
        %2915 = vmatmul.f32.gmra.mxu0 %v2872
        %v2916 = vpop.f32.mrf.mxu0
        %v2917 = vadd.f32 0.0, %v2916
        %2918 = vmatmul.f32.gmra.mxu0 %v2873
        %v2919 = vpop.f32.mrf.mxu0
        %v2920 = vadd.f32 0.0, %v2919
        %2921 = vmatmul.f32.gmra.mxu0 %v2874
        %v2922 = vpop.f32.mrf.mxu0
        %v2923 = vadd.f32 0.0, %v2922
        %2924 = vmatmul.f32.gmra.mxu0 %v2875
        %v2925 = vpop.f32.mrf.mxu0
        %v2926 = vadd.f32 0.0, %v2925
        %2927 = vmatmul.f32.gmra.mxu0 %v2876
        %v2928 = vpop.f32.mrf.mxu0
        %v2929 = vadd.f32 0.0, %v2928
        %2930 = vmatmul.f32.gmra.mxu0 %v2877
        %v2931 = vpop.f32.mrf.mxu0
        %v2932 = vadd.f32 0.0, %v2931
        %2933 = vmatmul.f32.gmra.mxu0 %v2878
        %v2934 = vpop.f32.mrf.mxu0
        %v2935 = vadd.f32 0.0, %v2934
        %2936 = vdwg.mxu0
        %v2937 = vadd.f32 %v2862, %v2914
        %v2938 = vadd.f32 %v2863, %v2917
        %v2939 = vadd.f32 %v2864, %v2920
        %v2940 = vadd.f32 %v2865, %v2923
        %v2941 = vadd.f32 %v2866, %v2926
        %v2942 = vadd.f32 %v2867, %v2929
        %v2943 = vadd.f32 %v2868, %v2932
        %v2944 = vadd.f32 %v2869, %v2935
        %v2945 = vld [vmem:[%s2870 + $0x1] sm:$0xff]
        %v2946 = vld [vmem:[%s2870 + $0x9] sm:$0xff]
        %v2947 = vld [vmem:[%s2870 + $0x19] sm:$0xff]
        %v2948 = vld [vmem:[%s2870 + $0x21] sm:$0xff]
        %v2949 = vld [vmem:[%s2870 + $0x31] sm:$0xff]
        %v2950 = vld [vmem:[%s2870 + $0x39] sm:$0xff]
        %v2951 = vld [vmem:[%s2870 + $0x49] sm:$0xff]
        %v2952 = vld [vmem:[%s2870 + $0x51] sm:$0xff]
        %s2953 = scalar_lea.vmem [#allocation3], 512
        %v2954 = vld [vmem:[%s2953] sm:$0xff]
        %v2955 = vld [vmem:[%s2953 + $0x8] sm:$0xff]
        %v2956 = vld [vmem:[%s2953 + $0x10] sm:$0xff]
        %v2957 = vld [vmem:[%s2953 + $0x18] sm:$0xff]
        %v2958 = vld [vmem:[%s2953 + $0x20] sm:$0xff]
        %v2959 = vld [vmem:[%s2953 + $0x28] sm:$0xff]
        %v2960 = vld [vmem:[%s2953 + $0x30] sm:$0xff]
        %v2961 = vld [vmem:[%s2953 + $0x38] sm:$0xff]
        %v2962 = vld [vmem:[%s2953 + $0x40] sm:$0xff]
        %v2963 = vld [vmem:[%s2953 + $0x48] sm:$0xff]
        %v2964 = vld [vmem:[%s2953 + $0x50] sm:$0xff]
        %v2965 = vld [vmem:[%s2953 + $0x58] sm:$0xff]
        %v2966 = vld [vmem:[%s2953 + $0x60] sm:$0xff]
        %v2967 = vld [vmem:[%s2953 + $0x68] sm:$0xff]
        %v2968 = vld [vmem:[%s2953 + $0x70] sm:$0xff]
        %v2969 = vld [vmem:[%s2953 + $0x78] sm:$0xff]
        %2970 = vmatpush.msra.mxu0 %v2969
        %2971 = vmatpush.msra.mxu0 %v2968
        %2972 = vmatpush.msra.mxu0 %v2967
        %2973 = vmatpush.msra.mxu0 %v2966
        %2974 = vmatpush.msra.mxu0 %v2965
        %2975 = vmatpush.msra.mxu0 %v2964
        %2976 = vmatpush.msra.mxu0 %v2963
        %2977 = vmatpush.msra.mxu0 %v2962
        %2978 = vmatpush.msra.mxu0 %v2961
        %2979 = vmatpush.msra.mxu0 %v2960
        %2980 = vmatpush.msra.mxu0 %v2959
        %2981 = vmatpush.msra.mxu0 %v2958
        %2982 = vmatpush.msra.mxu0 %v2957
        %2983 = vmatpush.msra.mxu0 %v2956
        %2984 = vmatpush.msra.mxu0 %v2955
        %2985 = vmatpush.msra.mxu0 %v2954
        %2986 = vmatmul.f32.gmra.mxu0 %v2945
        %v2987 = vpop.f32.mrf.mxu0
        %v2988 = vadd.f32 0.0, %v2987
        %2989 = vmatmul.f32.gmra.mxu0 %v2946
        %v2990 = vpop.f32.mrf.mxu0
        %v2991 = vadd.f32 0.0, %v2990
        %2992 = vmatmul.f32.gmra.mxu0 %v2947
        %v2993 = vpop.f32.mrf.mxu0
        %v2994 = vadd.f32 0.0, %v2993
        %2995 = vmatmul.f32.gmra.mxu0 %v2948
        %v2996 = vpop.f32.mrf.mxu0
        %v2997 = vadd.f32 0.0, %v2996
        %2998 = vmatmul.f32.gmra.mxu0 %v2949
        %v2999 = vpop.f32.mrf.mxu0
        %v3000 = vadd.f32 0.0, %v2999
        %3001 = vmatmul.f32.gmra.mxu0 %v2950
        %v3002 = vpop.f32.mrf.mxu0
        %v3003 = vadd.f32 0.0, %v3002
        %3004 = vmatmul.f32.gmra.mxu0 %v2951
        %v3005 = vpop.f32.mrf.mxu0
        %v3006 = vadd.f32 0.0, %v3005
        %3007 = vmatmul.f32.gmra.mxu0 %v2952
        %v3008 = vpop.f32.mrf.mxu0
        %v3009 = vadd.f32 0.0, %v3008
        %3010 = vdwg.mxu0
        %v3011 = vadd.f32 %v2937, %v2988
        %v3012 = vadd.f32 %v2938, %v2991
        %v3013 = vadd.f32 %v2939, %v2994
        %v3014 = vadd.f32 %v2940, %v2997
        %v3015 = vadd.f32 %v2941, %v3000
        %v3016 = vadd.f32 %v2942, %v3003
        %v3017 = vadd.f32 %v2943, %v3006
        %v3018 = vadd.f32 %v2944, %v3009
        %v3019 = vld [vmem:[%s2870 + $0x2] sm:$0xff]
        %v3020 = vld [vmem:[%s2870 + $0xa] sm:$0xff]
        %v3021 = vld [vmem:[%s2870 + $0x1a] sm:$0xff]
        %v3022 = vld [vmem:[%s2870 + $0x22] sm:$0xff]
        %v3023 = vld [vmem:[%s2870 + $0x32] sm:$0xff]
        %v3024 = vld [vmem:[%s2870 + $0x3a] sm:$0xff]
        %v3025 = vld [vmem:[%s2870 + $0x4a] sm:$0xff]
        %v3026 = vld [vmem:[%s2870 + $0x52] sm:$0xff]
        %s3027 = scalar_lea.vmem [#allocation3], 640
        %v3028 = vld [vmem:[%s3027] sm:$0xff]
        %v3029 = vld [vmem:[%s3027 + $0x8] sm:$0xff]
        %v3030 = vld [vmem:[%s3027 + $0x10] sm:$0xff]
        %v3031 = vld [vmem:[%s3027 + $0x18] sm:$0xff]
        %v3032 = vld [vmem:[%s3027 + $0x20] sm:$0xff]
        %v3033 = vld [vmem:[%s3027 + $0x28] sm:$0xff]
        %v3034 = vld [vmem:[%s3027 + $0x30] sm:$0xff]
        %v3035 = vld [vmem:[%s3027 + $0x38] sm:$0xff]
        %v3036 = vld [vmem:[%s3027 + $0x40] sm:$0xff]
        %v3037 = vld [vmem:[%s3027 + $0x48] sm:$0xff]
        %v3038 = vld [vmem:[%s3027 + $0x50] sm:$0xff]
        %v3039 = vld [vmem:[%s3027 + $0x58] sm:$0xff]
        %v3040 = vld [vmem:[%s3027 + $0x60] sm:$0xff]
        %v3041 = vld [vmem:[%s3027 + $0x68] sm:$0xff]
        %v3042 = vld [vmem:[%s3027 + $0x70] sm:$0xff]
        %v3043 = vld [vmem:[%s3027 + $0x78] sm:$0xff]
        %3044 = vmatpush.msra.mxu0 %v3043
        %3045 = vmatpush.msra.mxu0 %v3042
        %3046 = vmatpush.msra.mxu0 %v3041
        %3047 = vmatpush.msra.mxu0 %v3040
        %3048 = vmatpush.msra.mxu0 %v3039
        %3049 = vmatpush.msra.mxu0 %v3038
        %3050 = vmatpush.msra.mxu0 %v3037
        %3051 = vmatpush.msra.mxu0 %v3036
        %3052 = vmatpush.msra.mxu0 %v3035
        %3053 = vmatpush.msra.mxu0 %v3034
        %3054 = vmatpush.msra.mxu0 %v3033
        %3055 = vmatpush.msra.mxu0 %v3032
        %3056 = vmatpush.msra.mxu0 %v3031
        %3057 = vmatpush.msra.mxu0 %v3030
        %3058 = vmatpush.msra.mxu0 %v3029
        %3059 = vmatpush.msra.mxu0 %v3028
        %3060 = vmatmul.f32.gmra.mxu0 %v3019
        %v3061 = vpop.f32.mrf.mxu0
        %v3062 = vadd.f32 0.0, %v3061
        %3063 = vmatmul.f32.gmra.mxu0 %v3020
        %v3064 = vpop.f32.mrf.mxu0
        %v3065 = vadd.f32 0.0, %v3064
        %3066 = vmatmul.f32.gmra.mxu0 %v3021
        %v3067 = vpop.f32.mrf.mxu0
        %v3068 = vadd.f32 0.0, %v3067
        %3069 = vmatmul.f32.gmra.mxu0 %v3022
        %v3070 = vpop.f32.mrf.mxu0
        %v3071 = vadd.f32 0.0, %v3070
        %3072 = vmatmul.f32.gmra.mxu0 %v3023
        %v3073 = vpop.f32.mrf.mxu0
        %v3074 = vadd.f32 0.0, %v3073
        %3075 = vmatmul.f32.gmra.mxu0 %v3024
        %v3076 = vpop.f32.mrf.mxu0
        %v3077 = vadd.f32 0.0, %v3076
        %3078 = vmatmul.f32.gmra.mxu0 %v3025
        %v3079 = vpop.f32.mrf.mxu0
        %v3080 = vadd.f32 0.0, %v3079
        %3081 = vmatmul.f32.gmra.mxu0 %v3026
        %v3082 = vpop.f32.mrf.mxu0
        %v3083 = vadd.f32 0.0, %v3082
        %3084 = vdwg.mxu0
        %v3085 = vadd.f32 %v3011, %v3062
        %v3086 = vadd.f32 %v3012, %v3065
        %v3087 = vadd.f32 %v3013, %v3068
        %v3088 = vadd.f32 %v3014, %v3071
        %v3089 = vadd.f32 %v3015, %v3074
        %v3090 = vadd.f32 %v3016, %v3077
        %v3091 = vadd.f32 %v3017, %v3080
        %v3092 = vadd.f32 %v3018, %v3083
        %s3093 = scalar_lea.vmem [#allocation2], 48
        %v3094 = vld [vmem:[%s3093] sm:$0xff]
        %v3095 = vld [vmem:[%s3093 + $0x8] sm:$0xff]
        %v3096 = vld [vmem:[%s3093 + $0x18] sm:$0xff]
        %v3097 = vld [vmem:[%s3093 + $0x20] sm:$0xff]
        %v3098 = vld [vmem:[%s3093 + $0x30] sm:$0xff]
        %v3099 = vld [vmem:[%s3093 + $0x38] sm:$0xff]
        %v3100 = vld [vmem:[%s3093 + $0x48] sm:$0xff]
        %v3101 = vld [vmem:[%s3093 + $0x50] sm:$0xff]
        %s3102 = scalar_lea.vmem [#allocation3], 768
        %v3103 = vld [vmem:[%s3102] sm:$0xff]
        %v3104 = vld [vmem:[%s3102 + $0x8] sm:$0xff]
        %v3105 = vld [vmem:[%s3102 + $0x10] sm:$0xff]
        %v3106 = vld [vmem:[%s3102 + $0x18] sm:$0xff]
        %v3107 = vld [vmem:[%s3102 + $0x20] sm:$0xff]
        %v3108 = vld [vmem:[%s3102 + $0x28] sm:$0xff]
        %v3109 = vld [vmem:[%s3102 + $0x30] sm:$0xff]
        %v3110 = vld [vmem:[%s3102 + $0x38] sm:$0xff]
        %v3111 = vld [vmem:[%s3102 + $0x40] sm:$0xff]
        %v3112 = vld [vmem:[%s3102 + $0x48] sm:$0xff]
        %v3113 = vld [vmem:[%s3102 + $0x50] sm:$0xff]
        %v3114 = vld [vmem:[%s3102 + $0x58] sm:$0xff]
        %v3115 = vld [vmem:[%s3102 + $0x60] sm:$0xff]
        %v3116 = vld [vmem:[%s3102 + $0x68] sm:$0xff]
        %v3117 = vld [vmem:[%s3102 + $0x70] sm:$0xff]
        %v3118 = vld [vmem:[%s3102 + $0x78] sm:$0xff]
        %3119 = vmatpush.msra.mxu0 %v3118
        %3120 = vmatpush.msra.mxu0 %v3117
        %3121 = vmatpush.msra.mxu0 %v3116
        %3122 = vmatpush.msra.mxu0 %v3115
        %3123 = vmatpush.msra.mxu0 %v3114
        %3124 = vmatpush.msra.mxu0 %v3113
        %3125 = vmatpush.msra.mxu0 %v3112
        %3126 = vmatpush.msra.mxu0 %v3111
        %3127 = vmatpush.msra.mxu0 %v3110
        %3128 = vmatpush.msra.mxu0 %v3109
        %3129 = vmatpush.msra.mxu0 %v3108
        %3130 = vmatpush.msra.mxu0 %v3107
        %3131 = vmatpush.msra.mxu0 %v3106
        %3132 = vmatpush.msra.mxu0 %v3105
        %3133 = vmatpush.msra.mxu0 %v3104
        %3134 = vmatpush.msra.mxu0 %v3103
        %3135 = vmatmul.f32.gmra.mxu0 %v3094
        %v3136 = vpop.f32.mrf.mxu0
        %v3137 = vadd.f32 0.0, %v3136
        %3138 = vmatmul.f32.gmra.mxu0 %v3095
        %v3139 = vpop.f32.mrf.mxu0
        %v3140 = vadd.f32 0.0, %v3139
        %3141 = vmatmul.f32.gmra.mxu0 %v3096
        %v3142 = vpop.f32.mrf.mxu0
        %v3143 = vadd.f32 0.0, %v3142
        %3144 = vmatmul.f32.gmra.mxu0 %v3097
        %v3145 = vpop.f32.mrf.mxu0
        %v3146 = vadd.f32 0.0, %v3145
        %3147 = vmatmul.f32.gmra.mxu0 %v3098
        %v3148 = vpop.f32.mrf.mxu0
        %v3149 = vadd.f32 0.0, %v3148
        %3150 = vmatmul.f32.gmra.mxu0 %v3099
        %v3151 = vpop.f32.mrf.mxu0
        %v3152 = vadd.f32 0.0, %v3151
        %3153 = vmatmul.f32.gmra.mxu0 %v3100
        %v3154 = vpop.f32.mrf.mxu0
        %v3155 = vadd.f32 0.0, %v3154
        %3156 = vmatmul.f32.gmra.mxu0 %v3101
        %v3157 = vpop.f32.mrf.mxu0
        %v3158 = vadd.f32 0.0, %v3157
        %3159 = vdwg.mxu0
        %v3160 = vadd.f32 %v3085, %v3137
        %v3161 = vadd.f32 %v3086, %v3140
        %v3162 = vadd.f32 %v3087, %v3143
        %v3163 = vadd.f32 %v3088, %v3146
        %v3164 = vadd.f32 %v3089, %v3149
        %v3165 = vadd.f32 %v3090, %v3152
        %v3166 = vadd.f32 %v3091, %v3155
        %v3167 = vadd.f32 %v3092, %v3158
        %v3168 = vld [vmem:[%s3093 + $0x1] sm:$0xff]
        %v3169 = vld [vmem:[%s3093 + $0x9] sm:$0xff]
        %v3170 = vld [vmem:[%s3093 + $0x19] sm:$0xff]
        %v3171 = vld [vmem:[%s3093 + $0x21] sm:$0xff]
        %v3172 = vld [vmem:[%s3093 + $0x31] sm:$0xff]
        %v3173 = vld [vmem:[%s3093 + $0x39] sm:$0xff]
        %v3174 = vld [vmem:[%s3093 + $0x49] sm:$0xff]
        %v3175 = vld [vmem:[%s3093 + $0x51] sm:$0xff]
        %s3176 = scalar_lea.vmem [#allocation3], 896
        %v3177 = vld [vmem:[%s3176] sm:$0xff]
        %v3178 = vld [vmem:[%s3176 + $0x8] sm:$0xff]
        %v3179 = vld [vmem:[%s3176 + $0x10] sm:$0xff]
        %v3180 = vld [vmem:[%s3176 + $0x18] sm:$0xff]
        %v3181 = vld [vmem:[%s3176 + $0x20] sm:$0xff]
        %v3182 = vld [vmem:[%s3176 + $0x28] sm:$0xff]
        %v3183 = vld [vmem:[%s3176 + $0x30] sm:$0xff]
        %v3184 = vld [vmem:[%s3176 + $0x38] sm:$0xff]
        %v3185 = vld [vmem:[%s3176 + $0x40] sm:$0xff]
        %v3186 = vld [vmem:[%s3176 + $0x48] sm:$0xff]
        %v3187 = vld [vmem:[%s3176 + $0x50] sm:$0xff]
        %v3188 = vld [vmem:[%s3176 + $0x58] sm:$0xff]
        %v3189 = vld [vmem:[%s3176 + $0x60] sm:$0xff]
        %v3190 = vld [vmem:[%s3176 + $0x68] sm:$0xff]
        %v3191 = vld [vmem:[%s3176 + $0x70] sm:$0xff]
        %v3192 = vld [vmem:[%s3176 + $0x78] sm:$0xff]
        %3193 = vmatpush.msra.mxu0 %v3192
        %3194 = vmatpush.msra.mxu0 %v3191
        %3195 = vmatpush.msra.mxu0 %v3190
        %3196 = vmatpush.msra.mxu0 %v3189
        %3197 = vmatpush.msra.mxu0 %v3188
        %3198 = vmatpush.msra.mxu0 %v3187
        %3199 = vmatpush.msra.mxu0 %v3186
        %3200 = vmatpush.msra.mxu0 %v3185
        %3201 = vmatpush.msra.mxu0 %v3184
        %3202 = vmatpush.msra.mxu0 %v3183
        %3203 = vmatpush.msra.mxu0 %v3182
        %3204 = vmatpush.msra.mxu0 %v3181
        %3205 = vmatpush.msra.mxu0 %v3180
        %3206 = vmatpush.msra.mxu0 %v3179
        %3207 = vmatpush.msra.mxu0 %v3178
        %3208 = vmatpush.msra.mxu0 %v3177
        %3209 = vmatmul.f32.gmra.mxu0 %v3168
        %v3210 = vpop.f32.mrf.mxu0
        %v3211 = vadd.f32 0.0, %v3210
        %3212 = vmatmul.f32.gmra.mxu0 %v3169
        %v3213 = vpop.f32.mrf.mxu0
        %v3214 = vadd.f32 0.0, %v3213
        %3215 = vmatmul.f32.gmra.mxu0 %v3170
        %v3216 = vpop.f32.mrf.mxu0
        %v3217 = vadd.f32 0.0, %v3216
        %3218 = vmatmul.f32.gmra.mxu0 %v3171
        %v3219 = vpop.f32.mrf.mxu0
        %v3220 = vadd.f32 0.0, %v3219
        %3221 = vmatmul.f32.gmra.mxu0 %v3172
        %v3222 = vpop.f32.mrf.mxu0
        %v3223 = vadd.f32 0.0, %v3222
        %3224 = vmatmul.f32.gmra.mxu0 %v3173
        %v3225 = vpop.f32.mrf.mxu0
        %v3226 = vadd.f32 0.0, %v3225
        %3227 = vmatmul.f32.gmra.mxu0 %v3174
        %v3228 = vpop.f32.mrf.mxu0
        %v3229 = vadd.f32 0.0, %v3228
        %3230 = vmatmul.f32.gmra.mxu0 %v3175
        %v3231 = vpop.f32.mrf.mxu0
        %v3232 = vadd.f32 0.0, %v3231
        %3233 = vdwg.mxu0
        %v3234 = vadd.f32 %v3160, %v3211
        %v3235 = vadd.f32 %v3161, %v3214
        %v3236 = vadd.f32 %v3162, %v3217
        %v3237 = vadd.f32 %v3163, %v3220
        %v3238 = vadd.f32 %v3164, %v3223
        %v3239 = vadd.f32 %v3165, %v3226
        %v3240 = vadd.f32 %v3166, %v3229
        %v3241 = vadd.f32 %v3167, %v3232
        %v3242 = vld [vmem:[%s3093 + $0x2] sm:$0xff]
        %v3243 = vld [vmem:[%s3093 + $0xa] sm:$0xff]
        %v3244 = vld [vmem:[%s3093 + $0x1a] sm:$0xff]
        %v3245 = vld [vmem:[%s3093 + $0x22] sm:$0xff]
        %v3246 = vld [vmem:[%s3093 + $0x32] sm:$0xff]
        %v3247 = vld [vmem:[%s3093 + $0x3a] sm:$0xff]
        %v3248 = vld [vmem:[%s3093 + $0x4a] sm:$0xff]
        %v3249 = vld [vmem:[%s3093 + $0x52] sm:$0xff]
        %s3250 = scalar_lea.vmem [#allocation3], 1024
        %v3251 = vld [vmem:[%s3250] sm:$0xff]
        %v3252 = vld [vmem:[%s3250 + $0x8] sm:$0xff]
        %v3253 = vld [vmem:[%s3250 + $0x10] sm:$0xff]
        %v3254 = vld [vmem:[%s3250 + $0x18] sm:$0xff]
        %v3255 = vld [vmem:[%s3250 + $0x20] sm:$0xff]
        %v3256 = vld [vmem:[%s3250 + $0x28] sm:$0xff]
        %v3257 = vld [vmem:[%s3250 + $0x30] sm:$0xff]
        %v3258 = vld [vmem:[%s3250 + $0x38] sm:$0xff]
        %v3259 = vld [vmem:[%s3250 + $0x40] sm:$0xff]
        %v3260 = vld [vmem:[%s3250 + $0x48] sm:$0xff]
        %v3261 = vld [vmem:[%s3250 + $0x50] sm:$0xff]
        %v3262 = vld [vmem:[%s3250 + $0x58] sm:$0xff]
        %v3263 = vld [vmem:[%s3250 + $0x60] sm:$0xff]
        %v3264 = vld [vmem:[%s3250 + $0x68] sm:$0xff]
        %v3265 = vld [vmem:[%s3250 + $0x70] sm:$0xff]
        %v3266 = vld [vmem:[%s3250 + $0x78] sm:$0xff]
        %3267 = vmatpush.msra.mxu0 %v3266
        %3268 = vmatpush.msra.mxu0 %v3265
        %3269 = vmatpush.msra.mxu0 %v3264
        %3270 = vmatpush.msra.mxu0 %v3263
        %3271 = vmatpush.msra.mxu0 %v3262
        %3272 = vmatpush.msra.mxu0 %v3261
        %3273 = vmatpush.msra.mxu0 %v3260
        %3274 = vmatpush.msra.mxu0 %v3259
        %3275 = vmatpush.msra.mxu0 %v3258
        %3276 = vmatpush.msra.mxu0 %v3257
        %3277 = vmatpush.msra.mxu0 %v3256
        %3278 = vmatpush.msra.mxu0 %v3255
        %3279 = vmatpush.msra.mxu0 %v3254
        %3280 = vmatpush.msra.mxu0 %v3253
        %3281 = vmatpush.msra.mxu0 %v3252
        %3282 = vmatpush.msra.mxu0 %v3251
        %3283 = vmatmul.f32.gmra.mxu0 %v3242
        %v3284 = vpop.f32.mrf.mxu0
        %v3285 = vadd.f32 0.0, %v3284
        %3286 = vmatmul.f32.gmra.mxu0 %v3243
        %v3287 = vpop.f32.mrf.mxu0
        %v3288 = vadd.f32 0.0, %v3287
        %3289 = vmatmul.f32.gmra.mxu0 %v3244
        %v3290 = vpop.f32.mrf.mxu0
        %v3291 = vadd.f32 0.0, %v3290
        %3292 = vmatmul.f32.gmra.mxu0 %v3245
        %v3293 = vpop.f32.mrf.mxu0
        %v3294 = vadd.f32 0.0, %v3293
        %3295 = vmatmul.f32.gmra.mxu0 %v3246
        %v3296 = vpop.f32.mrf.mxu0
        %v3297 = vadd.f32 0.0, %v3296
        %3298 = vmatmul.f32.gmra.mxu0 %v3247
        %v3299 = vpop.f32.mrf.mxu0
        %v3300 = vadd.f32 0.0, %v3299
        %3301 = vmatmul.f32.gmra.mxu0 %v3248
        %v3302 = vpop.f32.mrf.mxu0
        %v3303 = vadd.f32 0.0, %v3302
        %3304 = vmatmul.f32.gmra.mxu0 %v3249
        %v3305 = vpop.f32.mrf.mxu0
        %v3306 = vadd.f32 0.0, %v3305
        %3307 = vdwg.mxu0
        %v3308 = vadd.f32 %v3234, %v3285
        %v3309 = vadd.f32 %v3235, %v3288
        %v3310 = vadd.f32 %v3236, %v3291
        %v3311 = vadd.f32 %v3237, %v3294
        %v3312 = vadd.f32 %v3238, %v3297
        %v3313 = vadd.f32 %v3239, %v3300
        %v3314 = vadd.f32 %v3240, %v3303
        %v3315 = vadd.f32 %v3241, %v3306
        %v3316 = vld [vmem:[%s4] sm:$0x1]
        %v3318 = vperm.slane %v3316, 0
        %v3320 = vadd.f32 %v3308, %v3318
        %v3321 = vadd.f32 %v3309, %v3318
        %v3322 = vadd.f32 %v3310, %v3318
        %v3323 = vadd.f32 %v3311, %v3318
        %v3324 = vadd.f32 %v3312, %v3318
        %v3325 = vadd.f32 %v3313, %v3318
        %v3326 = vadd.f32 %v3314, %v3318
        %v3327 = vadd.f32 %v3315, %v3318
        %vm3328 = vcmask 1045504
        %v3329 = vsel %vm3328, %v312, %v315
        %v3330 = vsel %vm3328, %v315, %v354
        %v3331 = vsel %vm3328, %v318, %v321
        %v3332 = vsel %vm3328, %v321, %v355
        %v3333 = vsel %vm3328, %v324, %v327
        %v3334 = vsel %vm3328, %v327, %v356
        %v3335 = vsel %vm3328, %v330, %v333
        %v3336 = vsel %vm3328, %v333, %v357
        %v3345 = vadd.f32 %v3320, %v3329
        %v3346 = vadd.f32 %v3321, %v3330
        %v3347 = vadd.f32 %v3322, %v3331
        %v3348 = vadd.f32 %v3323, %v3332
        %v3349 = vadd.f32 %v3324, %v3333
        %v3350 = vadd.f32 %v3325, %v3334
        %v3351 = vadd.f32 %v3326, %v3335
        %v3352 = vadd.f32 %v3327, %v3336
        %v3353 = vmax.f32 %v3345, 0.0
        %v3354 = vmax.f32 %v3346, 0.0
        %v3355 = vmax.f32 %v3347, 0.0
        %v3356 = vmax.f32 %v3348, 0.0
        %v3357 = vmax.f32 %v3349, 0.0
        %v3358 = vmax.f32 %v3350, 0.0
        %v3359 = vmax.f32 %v3351, 0.0
        %v3360 = vmax.f32 %v3352, 0.0
        %3361 = vst [vmem:[%s248] sm:$0xff] %v3353
        %3362 = vst [vmem:[%s248 + $0x8] sm:$0xff] %v3354
        %3363 = vst [vmem:[%s248 + $0x10] sm:$0xff] %v3355
        %3364 = vst [vmem:[%s248 + $0x18] sm:$0xff] %v3356
        %3365 = vst [vmem:[%s248 + $0x20] sm:$0xff] %v3357
        %3366 = vst [vmem:[%s248 + $0x28] sm:$0xff] %v3358
        %3367 = vst [vmem:[%s248 + $0x30] sm:$0xff] %v3359
        %3368 = vst [vmem:[%s248 + $0x38] sm:$0xff] %v3360
        %s3369 = sand.u32 %s152, 1
        %s3370 = scalar_lea.sflag [#allocation5], %s3369
        %s3371 = sand.u32 %s152, 1
        %s3372 = smul.addr %s3371, 64
        %s3373 = scalar_lea.vmem [#allocation6], %s3372
        // Predicated region
        $region53: #{tpu_custom_call.1} parent=39 // pred_check
          %p3374 = pneg %p162
        $region54: #{tpu_custom_call.1} parent=39 // pred_check_branch
          %3376 = sbr.rel (%p3374) target = $region56
        $region55: #{tpu_custom_call.1} parent=39 // pred_region
          %s3377 = smul.u32 4, %s25
          %3379 = vsyncadd %s3370, 0
          %s3380 = smul.addr %s3377, 2
          %s3381 = smul.addr %s24, 32
          %s3382 = sadd.s32 %s3380, %s3381
          %s3383 = smul.addr %s3382, 8
          %s3384 = scalar_lea.hbm %s5, %s3383
          %s3385 = sshll.u32 %s3373, 4
          %s3386 = int_to_ptr.vmem [resolvable:$true] %s3385
          %s3387 = sshll.u32 %s3384, 4
          %s3388 = int_to_ptr.hbm [resolvable:$true] %s3387
          %3393 = dma.vmem_to_hbm [thread:$0]  %s3386, 1024, %s3388, %s3370, 128, 128, 8
        $region56: #{tpu_custom_call.1} parent=39 // pred_fallthru
          _
      $region40: #{tpu_custom_call.1} parent=5 // pred_fallthru
        _
      %p3394 = scmp.le.s32.totalorder 2, %s15
      // Predicated region
      $region57: #{tpu_custom_call.1} parent=5 // pred_check
        %p3395 = pneg %p3394
      $region58: #{tpu_custom_call.1} parent=5 // pred_check_branch
        %3397 = sbr.rel (%p3395) target = $region60
      $region59: #{tpu_custom_call.1} parent=5 // pred_region
        %s3398 = ssub.s32 %s15, 2
        // Predicated region
        $region61: #{tpu_custom_call.1} parent=59 // pred_check
          %p3399 = pneg %p168
        $region62: #{tpu_custom_call.1} parent=59 // pred_check_branch
          %3401 = sbr.rel (%p3399) target = $region64
        $region63: #{tpu_custom_call.1} parent=59 // pred_region
          %s3402 = sand.u32 %s153, 1
          %s3403 = scalar_lea.sflag [#allocation5], %s3402
          %s3404 = sand.u32 %s153, 1
          %s3405 = smul.addr %s3404, 64
          %s3406 = scalar_lea.vmem [#allocation6], %s3405
          %3408 = dma.done %s3403, 1024
        $region64: #{tpu_custom_call.1} parent=59 // pred_fallthru
          _
      $region60: #{tpu_custom_call.1} parent=5 // pred_fallthru
        _
    $region6: #{tpu_custom_call.1} parent=1 // loop_footer
      %s19 = sadd.s32 1, %s15
    $region7: #{tpu_custom_call.1} parent=1 // loop_footer_branch
      %14 = sbr.rel target = $region3
    $region8: #{tpu_custom_call.1} parent=1 // loop_exit
      _
    %3409 = vsyncpa [#allocation4], 1
    %s3410 = scalar_lea.sflag [#allocation4], 1
    %3411 = vsyncpa %s3410, 1
    %3412 = vsyncpa [#allocation5], 1
    %s3413 = scalar_lea.sflag [#allocation5], 1
    %3414 = vsyncpa %s3413, 1

</llo_original>
